<compile_context>
chip_gen: v5e
topology: v5e:2x2
jax: 0.10.0
libtpu: 0.0.40
codegen_flags: <defaults>
</compile_context>

<pallas_src>
import functools

import jax
import jax.numpy as jnp
from jax.experimental import pallas as pl
from jax.experimental.pallas import tpu as pltpu


# ------------------------------- helpers ----------------------------------- #

def _round_up(v, m):
    return (v + m - 1) // m * m


def _pad_feature_dim(d):
    # <=128: one full lane tile.  >128: round to 256 so the v6e/v7x MXU
    # (2x256x256) sees full-width RHS tiles.  Zero padding is exact.
    return _round_up(d, 128) if d <= 128 else _round_up(d, 256)


# ------------------------------- kernel ------------------------------------ #

def _mlp_kernel(num_layers, precision, x_ref, *refs):
    """refs = (w0, b0, w1, b1, ..., w{L-1}, b{L-1}, out_ref)."""
    out_ref = refs[-1]

    h = x_ref[...]                                            # [TB, D0p]
    for k in range(num_layers):
        # Load each weight right next to its dot so the scheduler does not
        # keep several 128x128+ weight tiles live at once (vreg-spill guard).
        w = refs[2 * k][...]                                  # [Dkp, Dk+1p]
        b = refs[2 * k + 1][...]                              # [1,   Dk+1p]
        h = jnp.dot(h, w, preferred_element_type=jnp.float32,
                    precision=precision) + b
        if k < num_layers - 1:
            # SiLU: x * sigmoid(x).  exp/recip run on the EUP slot, the
            # multiply on the VPU — cheap next to the MXU matmuls.
            h = h * jax.nn.sigmoid(h)
    out_ref[...] = h.astype(out_ref.dtype)


# ------------------------------- wrapper ------------------------------------ #

_VMEM_BUDGET = 44 * 1024 * 1024       # resident-data budget (v7x has 64 MiB VMEM)
_VMEM_LIMIT_CAP = 56 * 1024 * 1024    # never ask the compiler for more than this


def make_mlp(weights, biases, *, tb=512,
             precision=jax.lax.Precision.HIGHEST, interpret=False):
    """Build a fused, jitted Pallas forward pass for the MLP.

    weights[k]: [layer_vec[k], layer_vec[k+1]]   (x @ W layout, i.e. the
                transpose of torch.nn.Linear.weight)
    biases[k]:  [layer_vec[k+1]]
    """
    num_layers = len(weights)
    dims = [weights[0].shape[0]] + [w.shape[1] for w in weights]
    pdims = [_pad_feature_dim(d) for d in dims]

    # ---- pad parameters ONCE (hoisted out of the per-call path) ----
    padded_params = []
    for k in range(num_layers):
        w_p = jnp.pad(jnp.asarray(weights[k], jnp.float32),
                      ((0, pdims[k] - dims[k]),
                       (0, pdims[k + 1] - dims[k + 1])))
        b_p = jnp.pad(jnp.asarray(biases[k], jnp.float32).reshape(1, -1),
                      ((0, 0), (0, pdims[k + 1] - dims[k + 1])))
        padded_params += [w_p, b_p]

    weight_bytes = 4 * sum(pdims[k] * pdims[k + 1] + pdims[k + 1]
                           for k in range(num_layers))

    def _choose_tb(batch):
        t = max(128, _round_up(min(tb, _round_up(batch, 128)), 128))
        while t > 128:
            act = 4 * t * (pdims[0] + pdims[-1]) * 2      # dbl-buffered in/out
            work = 4 * t * max(pdims) * 2                 # live h working copies
            if weight_bytes + act + work <= _VMEM_BUDGET:
                break
            t //= 2
        return t
        # TODO(synk): on v7x prefer grid lengths that are even multiples of 2
        # so both TensorCores get equal work under "parallel" semantics.

    def _forward_impl(x, weight_buffer_count):
        batch = x.shape[0]
        t = _choose_tb(batch)
        b_pad = _round_up(max(batch, t), t)

        x_p = jnp.pad(x.astype(jnp.float32),
                      ((0, b_pad - batch), (0, pdims[0] - dims[0])))

        in_specs = [pl.BlockSpec((t, pdims[0]), lambda i: (i, 0))]
        pmode = (pl.Buffered(weight_buffer_count)
                 if weight_buffer_count is not None else None)
        for k in range(num_layers):
            if pmode is None:
                in_specs.append(
                    pl.BlockSpec((pdims[k], pdims[k + 1]), lambda i: (0, 0)))
                in_specs.append(
                    pl.BlockSpec((1, pdims[k + 1]), lambda i: (0, 0)))
            else:
                # Constant index_map => single-buffer the resident weights.
                in_specs.append(
                    pl.BlockSpec((pdims[k], pdims[k + 1]), lambda i: (0, 0),
                                 pipeline_mode=pmode))
                in_specs.append(
                    pl.BlockSpec((1, pdims[k + 1]), lambda i: (0, 0),
                                 pipeline_mode=pmode))

        act_bytes = 4 * t * (pdims[0] + pdims[-1]) * 2
        vmem_limit = int(min(_VMEM_LIMIT_CAP,
                             max(32 * 1024 * 1024,
                                 2 * (weight_bytes + act_bytes))))

        out_p = pl.pallas_call(
            functools.partial(_mlp_kernel, num_layers, precision),
            out_shape=jax.ShapeDtypeStruct((b_pad, pdims[-1]), x.dtype),
            grid=(b_pad // t,),
            in_specs=in_specs,
            out_specs=pl.BlockSpec((t, pdims[-1]), lambda i: (i, 0)),
            compiler_params=pltpu.CompilerParams(
                dimension_semantics=("parallel",),   # batch tiles independent
                vmem_limit_bytes=vmem_limit),
            interpret=interpret,
        )(x_p, *padded_params)

        return out_p[:batch, :dims[-1]]

    fwd_1buf = jax.jit(functools.partial(_forward_impl, weight_buffer_count=1))
    fwd_dflt = jax.jit(functools.partial(_forward_impl, weight_buffer_count=None))

    state = {"fn": None}

    def forward(x):
        if state["fn"] is None:
            try:
                out = jax.block_until_ready(fwd_1buf(x))
                state["fn"] = fwd_1buf
                return out
            except Exception:
                # Buffered(1) unsupported on this JAX build: fall back to the
                # default (double-buffered) specs, which are always valid.
                state["fn"] = fwd_dflt
        return state["fn"](x)

    return forward


# Pure-JAX reference (identical math to the PyTorch module).
def mlp_ref(x, weights, biases):
    h = x
    for k, (w, b) in enumerate(zip(weights, biases)):
        h = h @ w + b
        if k < len(weights) - 1:
            h = h * jax.nn.sigmoid(h)
    return h


# --------------------------------- main ------------------------------------- #

if __name__ == "__main__":
    # layer_vec exactly as the PyTorch constructor would receive it.
    layer_vec = [32, 64, 48, 16]
    B = 256

    key = jax.random.PRNGKey(0)
    keys = jax.random.split(key, 2 * (len(layer_vec) - 1) + 1)

    x = jax.random.normal(keys[0], (B, layer_vec[0]), dtype=jnp.float32)

    # torch.nn.Linear default init: U(-1/sqrt(fan_in), 1/sqrt(fan_in)).
    weights, biases = [], []
    for k in range(len(layer_vec) - 1):
        bound = 1.0 / (layer_vec[k] ** 0.5)
        w = jax.random.uniform(keys[2 * k + 1],
                               (layer_vec[k], layer_vec[k + 1]),
                               minval=-bound, maxval=bound, dtype=jnp.float32)
        b = jax.random.uniform(keys[2 * k + 2], (layer_vec[k + 1],),
                               minval=-bound, maxval=bound, dtype=jnp.float32)
        weights.append(w)
        biases.append(b)

    forward = make_mlp(weights, biases)
    out = jax.block_until_ready(forward(x))

    ref = mlp_ref(x, weights, biases)
    assert out.shape == ref.shape
    assert jnp.allclose(out, ref, atol=1e-4, rtol=1e-4), float(
        jnp.max(jnp.abs(out - ref)))

    print("KERNEL_OK")
</pallas_src>

<mosaic_0001>
module attributes {stable_mosaic.version = 11 : i64} {
  func.func @_mlp_kernel(%arg0: i32, %arg1: memref<256x128xf32, #tpu.memory_space<vmem>>, %arg2: memref<128x128xf32, #tpu.memory_space<vmem>>, %arg3: memref<1x128xf32, #tpu.memory_space<vmem>>, %arg4: memref<128x128xf32, #tpu.memory_space<vmem>>, %arg5: memref<1x128xf32, #tpu.memory_space<vmem>>, %arg6: memref<128x128xf32, #tpu.memory_space<vmem>>, %arg7: memref<1x128xf32, #tpu.memory_space<vmem>>, %arg8: memref<256x128xf32, #tpu.memory_space<vmem>>) attributes {dimension_semantics = [#tpu.dimension_semantics<parallel>], iteration_bounds = array<i64: 1>, scalar_prefetch = 0 : i64, scratch_operands = 0 : i64, tpu.core_type = #tpu.core_type<tc>, window_params = [{transform_indices = @transform_0, window_bounds = array<i64: 256, 128>}, {pipeline_mode = #tpu.pipeline_mode<synchronous>, transform_indices = @transform_1, window_bounds = array<i64: 128, 128>}, {pipeline_mode = #tpu.pipeline_mode<synchronous>, transform_indices = @transform_2, window_bounds = array<i64: 1, 128>}, {pipeline_mode = #tpu.pipeline_mode<synchronous>, transform_indices = @transform_3, window_bounds = array<i64: 128, 128>}, {pipeline_mode = #tpu.pipeline_mode<synchronous>, transform_indices = @transform_4, window_bounds = array<i64: 1, 128>}, {pipeline_mode = #tpu.pipeline_mode<synchronous>, transform_indices = @transform_5, window_bounds = array<i64: 128, 128>}, {pipeline_mode = #tpu.pipeline_mode<synchronous>, transform_indices = @transform_6, window_bounds = array<i64: 1, 128>}, {transform_indices = @transform_7, window_bounds = array<i64: 256, 128>}]} {
    %c0 = arith.constant 0 : index
    %c0_0 = arith.constant 0 : index
    %0 = vector.load %arg1[%c0, %c0_0] : memref<256x128xf32, #tpu.memory_space<vmem>>, vector<256x128xf32>
    %c0_1 = arith.constant 0 : index
    %c0_2 = arith.constant 0 : index
    %1 = vector.load %arg2[%c0_1, %c0_2] : memref<128x128xf32, #tpu.memory_space<vmem>>, vector<128x128xf32>
    %c0_3 = arith.constant 0 : index
    %c0_4 = arith.constant 0 : index
    %2 = vector.load %arg3[%c0_3, %c0_4] : memref<1x128xf32, #tpu.memory_space<vmem>>, vector<1x128xf32>
    %cst = arith.constant dense<0.000000e+00> : vector<256x128xf32>
    %3 = tpu.matmul %0, %1, %cst {dimension_numbers = #tpu.dot_dimension_numbers<[1], [0], [0], [1], [0, 0, 1, 1], [], []>, precision = #tpu.contract_precision<fp32>} : vector<256x128xf32>, vector<128x128xf32>, vector<256x128xf32> -> vector<256x128xf32>
    %4 = vector.broadcast %2 : vector<1x128xf32> to vector<256x128xf32>
    %5 = arith.addf %3, %4 : vector<256x128xf32>
    %6 = arith.negf %5 : vector<256x128xf32>
    %7 = math.exp %6 : vector<256x128xf32>
    %cst_5 = arith.constant 1.000000e+00 : f32
    %8 = vector.broadcast %cst_5 : f32 to vector<256x128xf32>
    %9 = arith.addf %8, %7 : vector<256x128xf32>
    %10 = arith.divf %8, %9 : vector<256x128xf32>
    %11 = arith.mulf %5, %10 : vector<256x128xf32>
    %c0_6 = arith.constant 0 : index
    %c0_7 = arith.constant 0 : index
    %12 = vector.load %arg4[%c0_6, %c0_7] : memref<128x128xf32, #tpu.memory_space<vmem>>, vector<128x128xf32>
    %c0_8 = arith.constant 0 : index
    %c0_9 = arith.constant 0 : index
    %13 = vector.load %arg5[%c0_8, %c0_9] : memref<1x128xf32, #tpu.memory_space<vmem>>, vector<1x128xf32>
    %cst_10 = arith.constant dense<0.000000e+00> : vector<256x128xf32>
    %14 = tpu.matmul %11, %12, %cst_10 {dimension_numbers = #tpu.dot_dimension_numbers<[1], [0], [0], [1], [0, 0, 1, 1], [], []>, precision = #tpu.contract_precision<fp32>} : vector<256x128xf32>, vector<128x128xf32>, vector<256x128xf32> -> vector<256x128xf32>
    %15 = vector.broadcast %13 : vector<1x128xf32> to vector<256x128xf32>
    %16 = arith.addf %14, %15 : vector<256x128xf32>
    %17 = arith.negf %16 : vector<256x128xf32>
    %18 = math.exp %17 : vector<256x128xf32>
    %cst_11 = arith.constant 1.000000e+00 : f32
    %19 = vector.broadcast %cst_11 : f32 to vector<256x128xf32>
    %20 = arith.addf %19, %18 : vector<256x128xf32>
    %21 = arith.divf %19, %20 : vector<256x128xf32>
    %22 = arith.mulf %16, %21 : vector<256x128xf32>
    %c0_12 = arith.constant 0 : index
    %c0_13 = arith.constant 0 : index
    %23 = vector.load %arg6[%c0_12, %c0_13] : memref<128x128xf32, #tpu.memory_space<vmem>>, vector<128x128xf32>
    %c0_14 = arith.constant 0 : index
    %c0_15 = arith.constant 0 : index
    %24 = vector.load %arg7[%c0_14, %c0_15] : memref<1x128xf32, #tpu.memory_space<vmem>>, vector<1x128xf32>
    %cst_16 = arith.constant dense<0.000000e+00> : vector<256x128xf32>
    %25 = tpu.matmul %22, %23, %cst_16 {dimension_numbers = #tpu.dot_dimension_numbers<[1], [0], [0], [1], [0, 0, 1, 1], [], []>, precision = #tpu.contract_precision<fp32>} : vector<256x128xf32>, vector<128x128xf32>, vector<256x128xf32> -> vector<256x128xf32>
    %26 = vector.broadcast %24 : vector<1x128xf32> to vector<256x128xf32>
    %27 = arith.addf %25, %26 : vector<256x128xf32>
    %c0_17 = arith.constant 0 : index
    %c0_18 = arith.constant 0 : index
    %28 = vector.load %arg8[%c0_17, %c0_18] : memref<256x128xf32, #tpu.memory_space<vmem>>, vector<256x128xf32>
    tpu.vector_store %arg8[%c0_17, %c0_18], %27 {strides = array<i32>} : memref<256x128xf32, #tpu.memory_space<vmem>>, vector<256x128xf32>,
    return
  }
  func.func @transform_0(%arg0: i32) -> (i32, i32) {
    %c0_i32 = arith.constant 0 : i32
    %c0_i32_0 = arith.constant 0 : i32
    return %arg0, %c0_i32 : i32, i32
  }
  func.func @transform_1(%arg0: i32) -> (i32, i32) {
    %c0_i32 = arith.constant 0 : i32
    %c0_i32_0 = arith.constant 0 : i32
    %c0_i32_1 = arith.constant 0 : i32
    return %c0_i32, %c0_i32_0 : i32, i32
  }
  func.func @transform_2(%arg0: i32) -> (i32, i32) {
    %c0_i32 = arith.constant 0 : i32
    %c0_i32_0 = arith.constant 0 : i32
    %c0_i32_1 = arith.constant 0 : i32
    return %c0_i32, %c0_i32_0 : i32, i32
  }
  func.func @transform_3(%arg0: i32) -> (i32, i32) {
    %c0_i32 = arith.constant 0 : i32
    %c0_i32_0 = arith.constant 0 : i32
    %c0_i32_1 = arith.constant 0 : i32
    return %c0_i32, %c0_i32_0 : i32, i32
  }
  func.func @transform_4(%arg0: i32) -> (i32, i32) {
    %c0_i32 = arith.constant 0 : i32
    %c0_i32_0 = arith.constant 0 : i32
    %c0_i32_1 = arith.constant 0 : i32
    return %c0_i32, %c0_i32_0 : i32, i32
  }
  func.func @transform_5(%arg0: i32) -> (i32, i32) {
    %c0_i32 = arith.constant 0 : i32
    %c0_i32_0 = arith.constant 0 : i32
    %c0_i32_1 = arith.constant 0 : i32
    return %c0_i32, %c0_i32_0 : i32, i32
  }
  func.func @transform_6(%arg0: i32) -> (i32, i32) {
    %c0_i32 = arith.constant 0 : i32
    %c0_i32_0 = arith.constant 0 : i32
    %c0_i32_1 = arith.constant 0 : i32
    return %c0_i32, %c0_i32_0 : i32, i32
  }
  func.func @transform_7(%arg0: i32) -> (i32, i32) {
    %c0_i32 = arith.constant 0 : i32
    %c0_i32_0 = arith.constant 0 : i32
    return %arg0, %c0_i32 : i32, i32
  }
}

module attributes {stable_mosaic.version = 11 : i64} {
  func.func @_mlp_kernel(%arg0: i32, %arg1: memref<256x128xf32, #tpu.memory_space<vmem>>, %arg2: memref<128x128xf32, #tpu.memory_space<vmem>>, %arg3: memref<1x128xf32, #tpu.memory_space<vmem>>, %arg4: memref<128x128xf32, #tpu.memory_space<vmem>>, %arg5: memref<1x128xf32, #tpu.memory_space<vmem>>, %arg6: memref<128x128xf32, #tpu.memory_space<vmem>>, %arg7: memref<1x128xf32, #tpu.memory_space<vmem>>, %arg8: memref<256x128xf32, #tpu.memory_space<vmem>>) attributes {dimension_semantics = [#tpu.dimension_semantics<parallel>], iteration_bounds = array<i64: 1>, scalar_prefetch = 0 : i64, scratch_operands = 0 : i64, tpu.core_type = #tpu.core_type<tc>, window_params = [{transform_indices = @transform_0, window_bounds = array<i64: 256, 128>}, {pipeline_mode = #tpu.pipeline_mode<synchronous>, transform_indices = @transform_1, window_bounds = array<i64: 128, 128>}, {pipeline_mode = #tpu.pipeline_mode<synchronous>, transform_indices = @transform_2, window_bounds = array<i64: 1, 128>}, {pipeline_mode = #tpu.pipeline_mode<synchronous>, transform_indices = @transform_3, window_bounds = array<i64: 128, 128>}, {pipeline_mode = #tpu.pipeline_mode<synchronous>, transform_indices = @transform_4, window_bounds = array<i64: 1, 128>}, {pipeline_mode = #tpu.pipeline_mode<synchronous>, transform_indices = @transform_5, window_bounds = array<i64: 128, 128>}, {pipeline_mode = #tpu.pipeline_mode<synchronous>, transform_indices = @transform_6, window_bounds = array<i64: 1, 128>}, {transform_indices = @transform_7, window_bounds = array<i64: 256, 128>}]} {
    %c0 = arith.constant 0 : index
    %c0_0 = arith.constant 0 : index
    %0 = vector.load %arg1[%c0, %c0_0] : memref<256x128xf32, #tpu.memory_space<vmem>>, vector<256x128xf32>
    %c0_1 = arith.constant 0 : index
    %c0_2 = arith.constant 0 : index
    %1 = vector.load %arg2[%c0_1, %c0_2] : memref<128x128xf32, #tpu.memory_space<vmem>>, vector<128x128xf32>
    %c0_3 = arith.constant 0 : index
    %c0_4 = arith.constant 0 : index
    %2 = vector.load %arg3[%c0_3, %c0_4] : memref<1x128xf32, #tpu.memory_space<vmem>>, vector<1x128xf32>
    %cst = arith.constant dense<0.000000e+00> : vector<256x128xf32>
    %3 = tpu.matmul %0, %1, %cst {dimension_numbers = #tpu.dot_dimension_numbers<[1], [0], [0], [1], [0, 0, 1, 1], [], []>, precision = #tpu.contract_precision<fp32>} : vector<256x128xf32>, vector<128x128xf32>, vector<256x128xf32> -> vector<256x128xf32>
    %4 = vector.broadcast %2 : vector<1x128xf32> to vector<256x128xf32>
    %5 = arith.addf %3, %4 : vector<256x128xf32>
    %6 = arith.negf %5 : vector<256x128xf32>
    %7 = math.exp %6 : vector<256x128xf32>
    %cst_5 = arith.constant 1.000000e+00 : f32
    %8 = vector.broadcast %cst_5 : f32 to vector<256x128xf32>
    %9 = arith.addf %8, %7 : vector<256x128xf32>
    %10 = arith.divf %8, %9 : vector<256x128xf32>
    %11 = arith.mulf %5, %10 : vector<256x128xf32>
    %c0_6 = arith.constant 0 : index
    %c0_7 = arith.constant 0 : index
    %12 = vector.load %arg4[%c0_6, %c0_7] : memref<128x128xf32, #tpu.memory_space<vmem>>, vector<128x128xf32>
    %c0_8 = arith.constant 0 : index
    %c0_9 = arith.constant 0 : index
    %13 = vector.load %arg5[%c0_8, %c0_9] : memref<1x128xf32, #tpu.memory_space<vmem>>, vector<1x128xf32>
    %cst_10 = arith.constant dense<0.000000e+00> : vector<256x128xf32>
    %14 = tpu.matmul %11, %12, %cst_10 {dimension_numbers = #tpu.dot_dimension_numbers<[1], [0], [0], [1], [0, 0, 1, 1], [], []>, precision = #tpu.contract_precision<fp32>} : vector<256x128xf32>, vector<128x128xf32>, vector<256x128xf32> -> vector<256x128xf32>
    %15 = vector.broadcast %13 : vector<1x128xf32> to vector<256x128xf32>
    %16 = arith.addf %14, %15 : vector<256x128xf32>
    %17 = arith.negf %16 : vector<256x128xf32>
    %18 = math.exp %17 : vector<256x128xf32>
    %cst_11 = arith.constant 1.000000e+00 : f32
    %19 = vector.broadcast %cst_11 : f32 to vector<256x128xf32>
    %20 = arith.addf %19, %18 : vector<256x128xf32>
    %21 = arith.divf %19, %20 : vector<256x128xf32>
    %22 = arith.mulf %16, %21 : vector<256x128xf32>
    %c0_12 = arith.constant 0 : index
    %c0_13 = arith.constant 0 : index
    %23 = vector.load %arg6[%c0_12, %c0_13] : memref<128x128xf32, #tpu.memory_space<vmem>>, vector<128x128xf32>
    %c0_14 = arith.constant 0 : index
    %c0_15 = arith.constant 0 : index
    %24 = vector.load %arg7[%c0_14, %c0_15] : memref<1x128xf32, #tpu.memory_space<vmem>>, vector<1x128xf32>
    %cst_16 = arith.constant dense<0.000000e+00> : vector<256x128xf32>
    %25 = tpu.matmul %22, %23, %cst_16 {dimension_numbers = #tpu.dot_dimension_numbers<[1], [0], [0], [1], [0, 0, 1, 1], [], []>, precision = #tpu.contract_precision<fp32>} : vector<256x128xf32>, vector<128x128xf32>, vector<256x128xf32> -> vector<256x128xf32>
    %26 = vector.broadcast %24 : vector<1x128xf32> to vector<256x128xf32>
    %27 = arith.addf %25, %26 : vector<256x128xf32>
    %c0_17 = arith.constant 0 : index
    %c0_18 = arith.constant 0 : index
    %28 = vector.load %arg8[%c0_17, %c0_18] : memref<256x128xf32, #tpu.memory_space<vmem>>, vector<256x128xf32>
    tpu.vector_store %arg8[%c0_17, %c0_18], %27 {strides = array<i32>} : memref<256x128xf32, #tpu.memory_space<vmem>>, vector<256x128xf32>,
    return
  }
  func.func @transform_0(%arg0: i32) -> (i32, i32) {
    %c0_i32 = arith.constant 0 : i32
    %c0_i32_0 = arith.constant 0 : i32
    return %arg0, %c0_i32 : i32, i32
  }
  func.func @transform_1(%arg0: i32) -> (i32, i32) {
    %c0_i32 = arith.constant 0 : i32
    %c0_i32_0 = arith.constant 0 : i32
    %c0_i32_1 = arith.constant 0 : i32
    return %c0_i32, %c0_i32_0 : i32, i32
  }
  func.func @transform_2(%arg0: i32) -> (i32, i32) {
    %c0_i32 = arith.constant 0 : i32
    %c0_i32_0 = arith.constant 0 : i32
    %c0_i32_1 = arith.constant 0 : i32
    return %c0_i32, %c0_i32_0 : i32, i32
  }
  func.func @transform_3(%arg0: i32) -> (i32, i32) {
    %c0_i32 = arith.constant 0 : i32
    %c0_i32_0 = arith.constant 0 : i32
    %c0_i32_1 = arith.constant 0 : i32
    return %c0_i32, %c0_i32_0 : i32, i32
  }
  func.func @transform_4(%arg0: i32) -> (i32, i32) {
    %c0_i32 = arith.constant 0 : i32
    %c0_i32_0 = arith.constant 0 : i32
    %c0_i32_1 = arith.constant 0 : i32
    return %c0_i32, %c0_i32_0 : i32, i32
  }
  func.func @transform_5(%arg0: i32) -> (i32, i32) {
    %c0_i32 = arith.constant 0 : i32
    %c0_i32_0 = arith.constant 0 : i32
    %c0_i32_1 = arith.constant 0 : i32
    return %c0_i32, %c0_i32_0 : i32, i32
  }
  func.func @transform_6(%arg0: i32) -> (i32, i32) {
    %c0_i32 = arith.constant 0 : i32
    %c0_i32_0 = arith.constant 0 : i32
    %c0_i32_1 = arith.constant 0 : i32
    return %c0_i32, %c0_i32_0 : i32, i32
  }
  func.func @transform_7(%arg0: i32) -> (i32, i32) {
    %c0_i32 = arith.constant 0 : i32
    %c0_i32_0 = arith.constant 0 : i32
    return %arg0, %c0_i32 : i32, i32
  }
}

</mosaic_0001>

<llo_original>
// kernel: _forward_impl.1
$region0: #{_forward_impl.1}
  #allocation0 [shape = 'u32[]', space=smem, size = 0x4, offset = 0x4, fixed_abs, tag = 'smem constant byte address 0x4 - core index']
  #allocation1 [shape = 'u32[72,128]{1,0:T(1,128)}', space=vmem, size = 0x9000, scoped, tag = 'internal scratch']
  %s0 = inlined_call_operand.vmem [shape: f32[256,128], index: 0, kind: input, shape index: {}]
  %s1 = inlined_call_operand.vmem [shape: f32[128,128], index: 1, kind: input, shape index: {}]
  %s2 = inlined_call_operand.vmem [shape: f32[1,128], index: 2, kind: input, shape index: {}]
  %s3 = inlined_call_operand.vmem [shape: f32[128,128], index: 3, kind: input, shape index: {}]
  %s4 = inlined_call_operand.vmem [shape: f32[1,128], index: 4, kind: input, shape index: {}]
  %s5 = inlined_call_operand.vmem [shape: f32[128,128], index: 5, kind: input, shape index: {}]
  %s6 = inlined_call_operand.vmem [shape: f32[1,128], index: 6, kind: input, shape index: {}]
  %s7 = inlined_call_operand.vmem [shape: f32[256,128], index: 7, kind: output, shape index: {}]
  %s8 = sld [smem:[#allocation0]]
  $region38: #{_forward_impl.1} parent=0
    _
  %s10 = ssub.s32 1, %s8
  %s11 = scalar_select 0, %s10, %s8
  // Predicated region
  $region2: #{_forward_impl.1} parent=0 // pred_check
    _
  $region3: #{_forward_impl.1} parent=0 // pred_check_branch
    %13 = sbr.rel (0) target = $region5
  $region4: #{_forward_impl.1} parent=0 // pred_region
    _
  $region5: #{_forward_impl.1} parent=0 // pred_fallthru
    _
  // Predicated region
  $region6: #{_forward_impl.1} parent=0 // pred_check
    _
  $region7: #{_forward_impl.1} parent=0 // pred_check_branch
    %15 = sbr.rel (0) target = $region9
  $region8: #{_forward_impl.1} parent=0 // pred_region
    _
  $region9: #{_forward_impl.1} parent=0 // pred_fallthru
    _
  // Predicated region
  $region10: #{_forward_impl.1} parent=0 // pred_check
    _
  $region11: #{_forward_impl.1} parent=0 // pred_check_branch
    %17 = sbr.rel (0) target = $region13
  $region12: #{_forward_impl.1} parent=0 // pred_region
    _
  $region13: #{_forward_impl.1} parent=0 // pred_fallthru
    _
  // Predicated region
  $region14: #{_forward_impl.1} parent=0 // pred_check
    _
  $region15: #{_forward_impl.1} parent=0 // pred_check_branch
    %19 = sbr.rel (0) target = $region17
  $region16: #{_forward_impl.1} parent=0 // pred_region
    _
  $region17: #{_forward_impl.1} parent=0 // pred_fallthru
    _
  // Predicated region
  $region18: #{_forward_impl.1} parent=0 // pred_check
    _
  $region19: #{_forward_impl.1} parent=0 // pred_check_branch
    %21 = sbr.rel (0) target = $region21
  $region20: #{_forward_impl.1} parent=0 // pred_region
    _
  $region21: #{_forward_impl.1} parent=0 // pred_fallthru
    _
  // Predicated region
  $region22: #{_forward_impl.1} parent=0 // pred_check
    _
  $region23: #{_forward_impl.1} parent=0 // pred_check_branch
    %23 = sbr.rel (0) target = $region25
  $region24: #{_forward_impl.1} parent=0 // pred_region
    _
  $region25: #{_forward_impl.1} parent=0 // pred_fallthru
    _
  // Predicated region
  $region26: #{_forward_impl.1} parent=0 // pred_check
    _
  $region27: #{_forward_impl.1} parent=0 // pred_check_branch
    %25 = sbr.rel (0) target = $region29
  $region28: #{_forward_impl.1} parent=0 // pred_region
    _
  $region29: #{_forward_impl.1} parent=0 // pred_fallthru
    _
  %v26 = vld [vmem:[%s0] sm:$0xff]
  %v27 = vld [vmem:[%s0 + $0x8] sm:$0xff]
  %v28 = vld [vmem:[%s0 + $0x10] sm:$0xff]
  %v29 = vld [vmem:[%s0 + $0x18] sm:$0xff]
  %v30 = vld [vmem:[%s0 + $0x20] sm:$0xff]
  %v31 = vld [vmem:[%s0 + $0x28] sm:$0xff]
  %v32 = vld [vmem:[%s0 + $0x30] sm:$0xff]
  %v33 = vld [vmem:[%s0 + $0x38] sm:$0xff]
  %v34 = vld [vmem:[%s0 + $0x40] sm:$0xff]
  %v35 = vld [vmem:[%s0 + $0x48] sm:$0xff]
  %v36 = vld [vmem:[%s0 + $0x50] sm:$0xff]
  %v37 = vld [vmem:[%s0 + $0x58] sm:$0xff]
  %v38 = vld [vmem:[%s0 + $0x60] sm:$0xff]
  %v39 = vld [vmem:[%s0 + $0x68] sm:$0xff]
  %v40 = vld [vmem:[%s0 + $0x70] sm:$0xff]
  %v41 = vld [vmem:[%s0 + $0x78] sm:$0xff]
  %v42 = vld [vmem:[%s0 + $0x80] sm:$0xff]
  %v43 = vld [vmem:[%s0 + $0x88] sm:$0xff]
  %v44 = vld [vmem:[%s0 + $0x90] sm:$0xff]
  %v45 = vld [vmem:[%s0 + $0x98] sm:$0xff]
  %v46 = vld [vmem:[%s0 + $0xa0] sm:$0xff]
  %v47 = vld [vmem:[%s0 + $0xa8] sm:$0xff]
  %v48 = vld [vmem:[%s0 + $0xb0] sm:$0xff]
  %v49 = vld [vmem:[%s0 + $0xb8] sm:$0xff]
  %v50 = vld [vmem:[%s0 + $0xc0] sm:$0xff]
  %v51 = vld [vmem:[%s0 + $0xc8] sm:$0xff]
  %v52 = vld [vmem:[%s0 + $0xd0] sm:$0xff]
  %v53 = vld [vmem:[%s0 + $0xd8] sm:$0xff]
  %v54 = vld [vmem:[%s0 + $0xe0] sm:$0xff]
  %v55 = vld [vmem:[%s0 + $0xe8] sm:$0xff]
  %v56 = vld [vmem:[%s0 + $0xf0] sm:$0xff]
  %v57 = vld [vmem:[%s0 + $0xf8] sm:$0xff]
  %v58 = vld [vmem:[%s1] sm:$0xff]
  %v59 = vld [vmem:[%s1 + $0x8] sm:$0xff]
  %v60 = vld [vmem:[%s1 + $0x10] sm:$0xff]
  %v61 = vld [vmem:[%s1 + $0x18] sm:$0xff]
  %v62 = vld [vmem:[%s1 + $0x20] sm:$0xff]
  %v63 = vld [vmem:[%s1 + $0x28] sm:$0xff]
  %v64 = vld [vmem:[%s1 + $0x30] sm:$0xff]
  %v65 = vld [vmem:[%s1 + $0x38] sm:$0xff]
  %v66 = vld [vmem:[%s1 + $0x40] sm:$0xff]
  %v67 = vld [vmem:[%s1 + $0x48] sm:$0xff]
  %v68 = vld [vmem:[%s1 + $0x50] sm:$0xff]
  %v69 = vld [vmem:[%s1 + $0x58] sm:$0xff]
  %v70 = vld [vmem:[%s1 + $0x60] sm:$0xff]
  %v71 = vld [vmem:[%s1 + $0x68] sm:$0xff]
  %v72 = vld [vmem:[%s1 + $0x70] sm:$0xff]
  %v73 = vld [vmem:[%s1 + $0x78] sm:$0xff]
  %v74 = vld [vmem:[%s2] sm:$0x1]
  %v76 = vperm.slane %v74, 0
  %v78 = vand.u32 %v73, 4294901760
  %79 = vmatpush.msra.mxu0 %v78
  %v80 = vand.u32 %v72, 4294901760
  %81 = vmatpush.msra.mxu0 %v80
  %v82 = vand.u32 %v71, 4294901760
  %83 = vmatpush.msra.mxu0 %v82
  %v84 = vand.u32 %v70, 4294901760
  %85 = vmatpush.msra.mxu0 %v84
  %v86 = vand.u32 %v69, 4294901760
  %87 = vmatpush.msra.mxu0 %v86
  %v88 = vand.u32 %v68, 4294901760
  %89 = vmatpush.msra.mxu0 %v88
  %v90 = vand.u32 %v67, 4294901760
  %91 = vmatpush.msra.mxu0 %v90
  %v92 = vand.u32 %v66, 4294901760
  %93 = vmatpush.msra.mxu0 %v92
  %v94 = vand.u32 %v65, 4294901760
  %95 = vmatpush.msra.mxu0 %v94
  %v96 = vand.u32 %v64, 4294901760
  %97 = vmatpush.msra.mxu0 %v96
  %v98 = vand.u32 %v63, 4294901760
  %99 = vmatpush.msra.mxu0 %v98
  %v100 = vand.u32 %v62, 4294901760
  %101 = vmatpush.msra.mxu0 %v100
  %v102 = vand.u32 %v61, 4294901760
  %103 = vmatpush.msra.mxu0 %v102
  %v104 = vand.u32 %v60, 4294901760
  %105 = vmatpush.msra.mxu0 %v104
  %v106 = vand.u32 %v59, 4294901760
  %107 = vmatpush.msra.mxu0 %v106
  %v108 = vand.u32 %v58, 4294901760
  %109 = vmatpush.msra.mxu0 %v108
  %v110 = vand.u32 %v26, 4294901760
  %v111 = vsub.f32 %v26, %v110
  %v112 = vand.u32 %v111, 4294901760
  %v113 = vsub.f32 %v111, %v112
  %v114 = vand.u32 %v113, 4294901760
  %115 = vmatmul.f32.gmra.mxu0 %v114
  %v116 = vpop.f32.mrf.mxu0
  %v117 = vadd.f32 %v76, %v116
  %v118 = vand.u32 %v27, 4294901760
  %v119 = vsub.f32 %v27, %v118
  %v120 = vand.u32 %v119, 4294901760
  %v121 = vsub.f32 %v119, %v120
  %v122 = vand.u32 %v121, 4294901760
  %123 = vmatmul.f32.gmra.mxu0 %v122
  %v124 = vpop.f32.mrf.mxu0
  %v125 = vadd.f32 %v76, %v124
  %v126 = vand.u32 %v28, 4294901760
  %v127 = vsub.f32 %v28, %v126
  %v128 = vand.u32 %v127, 4294901760
  %v129 = vsub.f32 %v127, %v128
  %v130 = vand.u32 %v129, 4294901760
  %131 = vmatmul.f32.gmra.mxu0 %v130
  %v132 = vpop.f32.mrf.mxu0
  %v133 = vadd.f32 %v76, %v132
  %v134 = vand.u32 %v29, 4294901760
  %v135 = vsub.f32 %v29, %v134
  %v136 = vand.u32 %v135, 4294901760
  %v137 = vsub.f32 %v135, %v136
  %v138 = vand.u32 %v137, 4294901760
  %139 = vmatmul.f32.gmra.mxu0 %v138
  %v140 = vpop.f32.mrf.mxu0
  %v141 = vadd.f32 %v76, %v140
  %v142 = vand.u32 %v30, 4294901760
  %v143 = vsub.f32 %v30, %v142
  %v144 = vand.u32 %v143, 4294901760
  %v145 = vsub.f32 %v143, %v144
  %v146 = vand.u32 %v145, 4294901760
  %147 = vmatmul.f32.gmra.mxu0 %v146
  %v148 = vpop.f32.mrf.mxu0
  %v149 = vadd.f32 %v76, %v148
  %v150 = vand.u32 %v31, 4294901760
  %v151 = vsub.f32 %v31, %v150
  %v152 = vand.u32 %v151, 4294901760
  %v153 = vsub.f32 %v151, %v152
  %v154 = vand.u32 %v153, 4294901760
  %155 = vmatmul.f32.gmra.mxu0 %v154
  %v156 = vpop.f32.mrf.mxu0
  %v157 = vadd.f32 %v76, %v156
  %v158 = vand.u32 %v32, 4294901760
  %v159 = vsub.f32 %v32, %v158
  %v160 = vand.u32 %v159, 4294901760
  %v161 = vsub.f32 %v159, %v160
  %v162 = vand.u32 %v161, 4294901760
  %163 = vmatmul.f32.gmra.mxu0 %v162
  %v164 = vpop.f32.mrf.mxu0
  %v165 = vadd.f32 %v76, %v164
  %v166 = vand.u32 %v33, 4294901760
  %v167 = vsub.f32 %v33, %v166
  %v168 = vand.u32 %v167, 4294901760
  %v169 = vsub.f32 %v167, %v168
  %v170 = vand.u32 %v169, 4294901760
  %171 = vmatmul.f32.gmra.mxu0 %v170
  %v172 = vpop.f32.mrf.mxu0
  %v173 = vadd.f32 %v76, %v172
  %v174 = vand.u32 %v34, 4294901760
  %v175 = vsub.f32 %v34, %v174
  %v176 = vand.u32 %v175, 4294901760
  %v177 = vsub.f32 %v175, %v176
  %v178 = vand.u32 %v177, 4294901760
  %179 = vmatmul.f32.gmra.mxu0 %v178
  %v180 = vpop.f32.mrf.mxu0
  %v181 = vadd.f32 %v76, %v180
  %v182 = vand.u32 %v35, 4294901760
  %v183 = vsub.f32 %v35, %v182
  %v184 = vand.u32 %v183, 4294901760
  %v185 = vsub.f32 %v183, %v184
  %v186 = vand.u32 %v185, 4294901760
  %187 = vmatmul.f32.gmra.mxu0 %v186
  %v188 = vpop.f32.mrf.mxu0
  %v189 = vadd.f32 %v76, %v188
  %v190 = vand.u32 %v36, 4294901760
  %v191 = vsub.f32 %v36, %v190
  %v192 = vand.u32 %v191, 4294901760
  %v193 = vsub.f32 %v191, %v192
  %v194 = vand.u32 %v193, 4294901760
  %195 = vmatmul.f32.gmra.mxu0 %v194
  %v196 = vpop.f32.mrf.mxu0
  %v197 = vadd.f32 %v76, %v196
  %v198 = vand.u32 %v37, 4294901760
  %v199 = vsub.f32 %v37, %v198
  %v200 = vand.u32 %v199, 4294901760
  %v201 = vsub.f32 %v199, %v200
  %v202 = vand.u32 %v201, 4294901760
  %203 = vmatmul.f32.gmra.mxu0 %v202
  %v204 = vpop.f32.mrf.mxu0
  %v205 = vadd.f32 %v76, %v204
  %v206 = vand.u32 %v38, 4294901760
  %v207 = vsub.f32 %v38, %v206
  %v208 = vand.u32 %v207, 4294901760
  %v209 = vsub.f32 %v207, %v208
  %v210 = vand.u32 %v209, 4294901760
  %211 = vmatmul.f32.gmra.mxu0 %v210
  %v212 = vpop.f32.mrf.mxu0
  %v213 = vadd.f32 %v76, %v212
  %v214 = vand.u32 %v39, 4294901760
  %v215 = vsub.f32 %v39, %v214
  %v216 = vand.u32 %v215, 4294901760
  %v217 = vsub.f32 %v215, %v216
  %v218 = vand.u32 %v217, 4294901760
  %219 = vmatmul.f32.gmra.mxu0 %v218
  %v220 = vpop.f32.mrf.mxu0
  %v221 = vadd.f32 %v76, %v220
  %v222 = vand.u32 %v40, 4294901760
  %v223 = vsub.f32 %v40, %v222
  %v224 = vand.u32 %v223, 4294901760
  %v225 = vsub.f32 %v223, %v224
  %v226 = vand.u32 %v225, 4294901760
  %227 = vmatmul.f32.gmra.mxu0 %v226
  %v228 = vpop.f32.mrf.mxu0
  %v229 = vadd.f32 %v76, %v228
  %v230 = vand.u32 %v41, 4294901760
  %v231 = vsub.f32 %v41, %v230
  %v232 = vand.u32 %v231, 4294901760
  %v233 = vsub.f32 %v231, %v232
  %v234 = vand.u32 %v233, 4294901760
  %235 = vmatmul.f32.gmra.mxu0 %v234
  %v236 = vpop.f32.mrf.mxu0
  %v237 = vadd.f32 %v76, %v236
  %v238 = vand.u32 %v42, 4294901760
  %v239 = vsub.f32 %v42, %v238
  %v240 = vand.u32 %v239, 4294901760
  %v241 = vsub.f32 %v239, %v240
  %v242 = vand.u32 %v241, 4294901760
  %243 = vmatmul.f32.gmra.mxu0 %v242
  %v244 = vpop.f32.mrf.mxu0
  %v245 = vadd.f32 %v76, %v244
  %v246 = vand.u32 %v43, 4294901760
  %v247 = vsub.f32 %v43, %v246
  %v248 = vand.u32 %v247, 4294901760
  %v249 = vsub.f32 %v247, %v248
  %v250 = vand.u32 %v249, 4294901760
  %251 = vmatmul.f32.gmra.mxu0 %v250
  %v252 = vpop.f32.mrf.mxu0
  %v253 = vadd.f32 %v76, %v252
  %v254 = vand.u32 %v44, 4294901760
  %v255 = vsub.f32 %v44, %v254
  %v256 = vand.u32 %v255, 4294901760
  %v257 = vsub.f32 %v255, %v256
  %v258 = vand.u32 %v257, 4294901760
  %259 = vmatmul.f32.gmra.mxu0 %v258
  %v260 = vpop.f32.mrf.mxu0
  %v261 = vadd.f32 %v76, %v260
  %v262 = vand.u32 %v45, 4294901760
  %v263 = vsub.f32 %v45, %v262
  %v264 = vand.u32 %v263, 4294901760
  %v265 = vsub.f32 %v263, %v264
  %v266 = vand.u32 %v265, 4294901760
  %267 = vmatmul.f32.gmra.mxu0 %v266
  %v268 = vpop.f32.mrf.mxu0
  %v269 = vadd.f32 %v76, %v268
  %v270 = vand.u32 %v46, 4294901760
  %v271 = vsub.f32 %v46, %v270
  %v272 = vand.u32 %v271, 4294901760
  %v273 = vsub.f32 %v271, %v272
  %v274 = vand.u32 %v273, 4294901760
  %275 = vmatmul.f32.gmra.mxu0 %v274
  %v276 = vpop.f32.mrf.mxu0
  %v277 = vadd.f32 %v76, %v276
  %v278 = vand.u32 %v47, 4294901760
  %v279 = vsub.f32 %v47, %v278
  %v280 = vand.u32 %v279, 4294901760
  %v281 = vsub.f32 %v279, %v280
  %v282 = vand.u32 %v281, 4294901760
  %283 = vmatmul.f32.gmra.mxu0 %v282
  %v284 = vpop.f32.mrf.mxu0
  %v285 = vadd.f32 %v76, %v284
  %v286 = vand.u32 %v48, 4294901760
  %v287 = vsub.f32 %v48, %v286
  %v288 = vand.u32 %v287, 4294901760
  %v289 = vsub.f32 %v287, %v288
  %v290 = vand.u32 %v289, 4294901760
  %291 = vmatmul.f32.gmra.mxu0 %v290
  %v292 = vpop.f32.mrf.mxu0
  %v293 = vadd.f32 %v76, %v292
  %v294 = vand.u32 %v49, 4294901760
  %v295 = vsub.f32 %v49, %v294
  %v296 = vand.u32 %v295, 4294901760
  %v297 = vsub.f32 %v295, %v296
  %v298 = vand.u32 %v297, 4294901760
  %299 = vmatmul.f32.gmra.mxu0 %v298
  %v300 = vpop.f32.mrf.mxu0
  %v301 = vadd.f32 %v76, %v300
  %v302 = vand.u32 %v50, 4294901760
  %v303 = vsub.f32 %v50, %v302
  %v304 = vand.u32 %v303, 4294901760
  %v305 = vsub.f32 %v303, %v304
  %v306 = vand.u32 %v305, 4294901760
  %307 = vmatmul.f32.gmra.mxu0 %v306
  %v308 = vpop.f32.mrf.mxu0
  %v309 = vadd.f32 %v76, %v308
  %v310 = vand.u32 %v51, 4294901760
  %v311 = vsub.f32 %v51, %v310
  %v312 = vand.u32 %v311, 4294901760
  %v313 = vsub.f32 %v311, %v312
  %v314 = vand.u32 %v313, 4294901760
  %315 = vmatmul.f32.gmra.mxu0 %v314
  %v316 = vpop.f32.mrf.mxu0
  %v317 = vadd.f32 %v76, %v316
  %v318 = vand.u32 %v52, 4294901760
  %v319 = vsub.f32 %v52, %v318
  %v320 = vand.u32 %v319, 4294901760
  %v321 = vsub.f32 %v319, %v320
  %v322 = vand.u32 %v321, 4294901760
  %323 = vmatmul.f32.gmra.mxu0 %v322
  %v324 = vpop.f32.mrf.mxu0
  %v325 = vadd.f32 %v76, %v324
  %v326 = vand.u32 %v53, 4294901760
  %v327 = vsub.f32 %v53, %v326
  %v328 = vand.u32 %v327, 4294901760
  %v329 = vsub.f32 %v327, %v328
  %v330 = vand.u32 %v329, 4294901760
  %331 = vmatmul.f32.gmra.mxu0 %v330
  %v332 = vpop.f32.mrf.mxu0
  %v333 = vadd.f32 %v76, %v332
  %v334 = vand.u32 %v54, 4294901760
  %v335 = vsub.f32 %v54, %v334
  %v336 = vand.u32 %v335, 4294901760
  %v337 = vsub.f32 %v335, %v336
  %v338 = vand.u32 %v337, 4294901760
  %339 = vmatmul.f32.gmra.mxu0 %v338
  %v340 = vpop.f32.mrf.mxu0
  %v341 = vadd.f32 %v76, %v340
  %v342 = vand.u32 %v55, 4294901760
  %v343 = vsub.f32 %v55, %v342
  %v344 = vand.u32 %v343, 4294901760
  %v345 = vsub.f32 %v343, %v344
  %v346 = vand.u32 %v345, 4294901760
  %347 = vmatmul.f32.gmra.mxu0 %v346
  %v348 = vpop.f32.mrf.mxu0
  %v349 = vadd.f32 %v76, %v348
  %v350 = vand.u32 %v56, 4294901760
  %v351 = vsub.f32 %v56, %v350
  %v352 = vand.u32 %v351, 4294901760
  %v353 = vsub.f32 %v351, %v352
  %v354 = vand.u32 %v353, 4294901760
  %355 = vmatmul.f32.gmra.mxu0 %v354
  %v356 = vpop.f32.mrf.mxu0
  %v357 = vadd.f32 %v76, %v356
  %v358 = vand.u32 %v57, 4294901760
  %v359 = vsub.f32 %v57, %v358
  %v360 = vand.u32 %v359, 4294901760
  %v361 = vsub.f32 %v359, %v360
  %v362 = vand.u32 %v361, 4294901760
  %363 = vmatmul.f32.gmra.mxu0 %v362
  %v364 = vpop.f32.mrf.mxu0
  %v365 = vadd.f32 %v76, %v364
  %366 = vdwg.mxu0
  %v367 = vand.u32 %v73, 4294901760
  %v368 = vsub.f32 %v73, %v367
  %v369 = vand.u32 %v368, 4294901760
  %v370 = vsub.f32 %v368, %v369
  %v371 = vand.u32 %v370, 4294901760
  %372 = vmatpush.msra.mxu0 %v371
  %v373 = vand.u32 %v72, 4294901760
  %v374 = vsub.f32 %v72, %v373
  %v375 = vand.u32 %v374, 4294901760
  %v376 = vsub.f32 %v374, %v375
  %v377 = vand.u32 %v376, 4294901760
  %378 = vmatpush.msra.mxu0 %v377
  %v379 = vand.u32 %v71, 4294901760
  %v380 = vsub.f32 %v71, %v379
  %v381 = vand.u32 %v380, 4294901760
  %v382 = vsub.f32 %v380, %v381
  %v383 = vand.u32 %v382, 4294901760
  %384 = vmatpush.msra.mxu0 %v383
  %v385 = vand.u32 %v70, 4294901760
  %v386 = vsub.f32 %v70, %v385
  %v387 = vand.u32 %v386, 4294901760
  %v388 = vsub.f32 %v386, %v387
  %v389 = vand.u32 %v388, 4294901760
  %390 = vmatpush.msra.mxu0 %v389
  %v391 = vand.u32 %v69, 4294901760
  %v392 = vsub.f32 %v69, %v391
  %v393 = vand.u32 %v392, 4294901760
  %v394 = vsub.f32 %v392, %v393
  %v395 = vand.u32 %v394, 4294901760
  %396 = vmatpush.msra.mxu0 %v395
  %v397 = vand.u32 %v68, 4294901760
  %v398 = vsub.f32 %v68, %v397
  %v399 = vand.u32 %v398, 4294901760
  %v400 = vsub.f32 %v398, %v399
  %v401 = vand.u32 %v400, 4294901760
  %402 = vmatpush.msra.mxu0 %v401
  %v403 = vand.u32 %v67, 4294901760
  %v404 = vsub.f32 %v67, %v403
  %v405 = vand.u32 %v404, 4294901760
  %v406 = vsub.f32 %v404, %v405
  %v407 = vand.u32 %v406, 4294901760
  %408 = vmatpush.msra.mxu0 %v407
  %v409 = vand.u32 %v66, 4294901760
  %v410 = vsub.f32 %v66, %v409
  %v411 = vand.u32 %v410, 4294901760
  %v412 = vsub.f32 %v410, %v411
  %v413 = vand.u32 %v412, 4294901760
  %414 = vmatpush.msra.mxu0 %v413
  %v415 = vand.u32 %v65, 4294901760
  %v416 = vsub.f32 %v65, %v415
  %v417 = vand.u32 %v416, 4294901760
  %v418 = vsub.f32 %v416, %v417
  %v419 = vand.u32 %v418, 4294901760
  %420 = vmatpush.msra.mxu0 %v419
  %v421 = vand.u32 %v64, 4294901760
  %v422 = vsub.f32 %v64, %v421
  %v423 = vand.u32 %v422, 4294901760
  %v424 = vsub.f32 %v422, %v423
  %v425 = vand.u32 %v424, 4294901760
  %426 = vmatpush.msra.mxu0 %v425
  %v427 = vand.u32 %v63, 4294901760
  %v428 = vsub.f32 %v63, %v427
  %v429 = vand.u32 %v428, 4294901760
  %v430 = vsub.f32 %v428, %v429
  %v431 = vand.u32 %v430, 4294901760
  %432 = vmatpush.msra.mxu0 %v431
  %v433 = vand.u32 %v62, 4294901760
  %v434 = vsub.f32 %v62, %v433
  %v435 = vand.u32 %v434, 4294901760
  %v436 = vsub.f32 %v434, %v435
  %v437 = vand.u32 %v436, 4294901760
  %438 = vmatpush.msra.mxu0 %v437
  %v439 = vand.u32 %v61, 4294901760
  %v440 = vsub.f32 %v61, %v439
  %v441 = vand.u32 %v440, 4294901760
  %v442 = vsub.f32 %v440, %v441
  %v443 = vand.u32 %v442, 4294901760
  %444 = vmatpush.msra.mxu0 %v443
  %v445 = vand.u32 %v60, 4294901760
  %v446 = vsub.f32 %v60, %v445
  %v447 = vand.u32 %v446, 4294901760
  %v448 = vsub.f32 %v446, %v447
  %v449 = vand.u32 %v448, 4294901760
  %450 = vmatpush.msra.mxu0 %v449
  %v451 = vand.u32 %v59, 4294901760
  %v452 = vsub.f32 %v59, %v451
  %v453 = vand.u32 %v452, 4294901760
  %v454 = vsub.f32 %v452, %v453
  %v455 = vand.u32 %v454, 4294901760
  %456 = vmatpush.msra.mxu0 %v455
  %v457 = vand.u32 %v58, 4294901760
  %v458 = vsub.f32 %v58, %v457
  %v459 = vand.u32 %v458, 4294901760
  %v460 = vsub.f32 %v458, %v459
  %v461 = vand.u32 %v460, 4294901760
  %462 = vmatpush.msra.mxu0 %v461
  %v463 = vand.u32 %v26, 4294901760
  %464 = vmatmul.f32.gmra.mxu0 %v463
  %v465 = vpop.f32.mrf.mxu0
  %v466 = vadd.f32 %v117, %v465
  %v467 = vand.u32 %v27, 4294901760
  %468 = vmatmul.f32.gmra.mxu0 %v467
  %v469 = vpop.f32.mrf.mxu0
  %v470 = vadd.f32 %v125, %v469
  %v471 = vand.u32 %v28, 4294901760
  %472 = vmatmul.f32.gmra.mxu0 %v471
  %v473 = vpop.f32.mrf.mxu0
  %v474 = vadd.f32 %v133, %v473
  %v475 = vand.u32 %v29, 4294901760
  %476 = vmatmul.f32.gmra.mxu0 %v475
  %v477 = vpop.f32.mrf.mxu0
  %v478 = vadd.f32 %v141, %v477
  %v479 = vand.u32 %v30, 4294901760
  %480 = vmatmul.f32.gmra.mxu0 %v479
  %v481 = vpop.f32.mrf.mxu0
  %v482 = vadd.f32 %v149, %v481
  %v483 = vand.u32 %v31, 4294901760
  %484 = vmatmul.f32.gmra.mxu0 %v483
  %v485 = vpop.f32.mrf.mxu0
  %v486 = vadd.f32 %v157, %v485
  %v487 = vand.u32 %v32, 4294901760
  %488 = vmatmul.f32.gmra.mxu0 %v487
  %v489 = vpop.f32.mrf.mxu0
  %v490 = vadd.f32 %v165, %v489
  %v491 = vand.u32 %v33, 4294901760
  %492 = vmatmul.f32.gmra.mxu0 %v491
  %v493 = vpop.f32.mrf.mxu0
  %v494 = vadd.f32 %v173, %v493
  %v495 = vand.u32 %v34, 4294901760
  %496 = vmatmul.f32.gmra.mxu0 %v495
  %v497 = vpop.f32.mrf.mxu0
  %v498 = vadd.f32 %v181, %v497
  %v499 = vand.u32 %v35, 4294901760
  %500 = vmatmul.f32.gmra.mxu0 %v499
  %v501 = vpop.f32.mrf.mxu0
  %v502 = vadd.f32 %v189, %v501
  %v503 = vand.u32 %v36, 4294901760
  %504 = vmatmul.f32.gmra.mxu0 %v503
  %v505 = vpop.f32.mrf.mxu0
  %v506 = vadd.f32 %v197, %v505
  %v507 = vand.u32 %v37, 4294901760
  %508 = vmatmul.f32.gmra.mxu0 %v507
  %v509 = vpop.f32.mrf.mxu0
  %v510 = vadd.f32 %v205, %v509
  %v511 = vand.u32 %v38, 4294901760
  %512 = vmatmul.f32.gmra.mxu0 %v511
  %v513 = vpop.f32.mrf.mxu0
  %v514 = vadd.f32 %v213, %v513
  %v515 = vand.u32 %v39, 4294901760
  %516 = vmatmul.f32.gmra.mxu0 %v515
  %v517 = vpop.f32.mrf.mxu0
  %v518 = vadd.f32 %v221, %v517
  %v519 = vand.u32 %v40, 4294901760
  %520 = vmatmul.f32.gmra.mxu0 %v519
  %v521 = vpop.f32.mrf.mxu0
  %v522 = vadd.f32 %v229, %v521
  %v523 = vand.u32 %v41, 4294901760
  %524 = vmatmul.f32.gmra.mxu0 %v523
  %v525 = vpop.f32.mrf.mxu0
  %v526 = vadd.f32 %v237, %v525
  %v527 = vand.u32 %v42, 4294901760
  %528 = vmatmul.f32.gmra.mxu0 %v527
  %v529 = vpop.f32.mrf.mxu0
  %v530 = vadd.f32 %v245, %v529
  %v531 = vand.u32 %v43, 4294901760
  %532 = vmatmul.f32.gmra.mxu0 %v531
  %v533 = vpop.f32.mrf.mxu0
  %v534 = vadd.f32 %v253, %v533
  %v535 = vand.u32 %v44, 4294901760
  %536 = vmatmul.f32.gmra.mxu0 %v535
  %v537 = vpop.f32.mrf.mxu0
  %v538 = vadd.f32 %v261, %v537
  %v539 = vand.u32 %v45, 4294901760
  %540 = vmatmul.f32.gmra.mxu0 %v539
  %v541 = vpop.f32.mrf.mxu0
  %v542 = vadd.f32 %v269, %v541
  %v543 = vand.u32 %v46, 4294901760
  %544 = vmatmul.f32.gmra.mxu0 %v543
  %v545 = vpop.f32.mrf.mxu0
  %v546 = vadd.f32 %v277, %v545
  %v547 = vand.u32 %v47, 4294901760
  %548 = vmatmul.f32.gmra.mxu0 %v547
  %v549 = vpop.f32.mrf.mxu0
  %v550 = vadd.f32 %v285, %v549
  %v551 = vand.u32 %v48, 4294901760
  %552 = vmatmul.f32.gmra.mxu0 %v551
  %v553 = vpop.f32.mrf.mxu0
  %v554 = vadd.f32 %v293, %v553
  %v555 = vand.u32 %v49, 4294901760
  %556 = vmatmul.f32.gmra.mxu0 %v555
  %v557 = vpop.f32.mrf.mxu0
  %v558 = vadd.f32 %v301, %v557
  %v559 = vand.u32 %v50, 4294901760
  %560 = vmatmul.f32.gmra.mxu0 %v559
  %v561 = vpop.f32.mrf.mxu0
  %v562 = vadd.f32 %v309, %v561
  %v563 = vand.u32 %v51, 4294901760
  %564 = vmatmul.f32.gmra.mxu0 %v563
  %v565 = vpop.f32.mrf.mxu0
  %v566 = vadd.f32 %v317, %v565
  %v567 = vand.u32 %v52, 4294901760
  %568 = vmatmul.f32.gmra.mxu0 %v567
  %v569 = vpop.f32.mrf.mxu0
  %v570 = vadd.f32 %v325, %v569
  %v571 = vand.u32 %v53, 4294901760
  %572 = vmatmul.f32.gmra.mxu0 %v571
  %v573 = vpop.f32.mrf.mxu0
  %v574 = vadd.f32 %v333, %v573
  %v575 = vand.u32 %v54, 4294901760
  %576 = vmatmul.f32.gmra.mxu0 %v575
  %v577 = vpop.f32.mrf.mxu0
  %v578 = vadd.f32 %v341, %v577
  %v579 = vand.u32 %v55, 4294901760
  %580 = vmatmul.f32.gmra.mxu0 %v579
  %v581 = vpop.f32.mrf.mxu0
  %v582 = vadd.f32 %v349, %v581
  %v583 = vand.u32 %v56, 4294901760
  %584 = vmatmul.f32.gmra.mxu0 %v583
  %v585 = vpop.f32.mrf.mxu0
  %v586 = vadd.f32 %v357, %v585
  %v587 = vand.u32 %v57, 4294901760
  %588 = vmatmul.f32.gmra.mxu0 %v587
  %v589 = vpop.f32.mrf.mxu0
  %v590 = vadd.f32 %v365, %v589
  %591 = vdwg.mxu0
  %v592 = vand.u32 %v73, 4294901760
  %v593 = vsub.f32 %v73, %v592
  %594 = vmatpush.msra.mxu0 %v593
  %v595 = vand.u32 %v72, 4294901760
  %v596 = vsub.f32 %v72, %v595
  %597 = vmatpush.msra.mxu0 %v596
  %v598 = vand.u32 %v71, 4294901760
  %v599 = vsub.f32 %v71, %v598
  %600 = vmatpush.msra.mxu0 %v599
  %v601 = vand.u32 %v70, 4294901760
  %v602 = vsub.f32 %v70, %v601
  %603 = vmatpush.msra.mxu0 %v602
  %v604 = vand.u32 %v69, 4294901760
  %v605 = vsub.f32 %v69, %v604
  %606 = vmatpush.msra.mxu0 %v605
  %v607 = vand.u32 %v68, 4294901760
  %v608 = vsub.f32 %v68, %v607
  %609 = vmatpush.msra.mxu0 %v608
  %v610 = vand.u32 %v67, 4294901760
  %v611 = vsub.f32 %v67, %v610
  %612 = vmatpush.msra.mxu0 %v611
  %v613 = vand.u32 %v66, 4294901760
  %v614 = vsub.f32 %v66, %v613
  %615 = vmatpush.msra.mxu0 %v614
  %v616 = vand.u32 %v65, 4294901760
  %v617 = vsub.f32 %v65, %v616
  %618 = vmatpush.msra.mxu0 %v617
  %v619 = vand.u32 %v64, 4294901760
  %v620 = vsub.f32 %v64, %v619
  %621 = vmatpush.msra.mxu0 %v620
  %v622 = vand.u32 %v63, 4294901760
  %v623 = vsub.f32 %v63, %v622
  %624 = vmatpush.msra.mxu0 %v623
  %v625 = vand.u32 %v62, 4294901760
  %v626 = vsub.f32 %v62, %v625
  %627 = vmatpush.msra.mxu0 %v626
  %v628 = vand.u32 %v61, 4294901760
  %v629 = vsub.f32 %v61, %v628
  %630 = vmatpush.msra.mxu0 %v629
  %v631 = vand.u32 %v60, 4294901760
  %v632 = vsub.f32 %v60, %v631
  %633 = vmatpush.msra.mxu0 %v632
  %v634 = vand.u32 %v59, 4294901760
  %v635 = vsub.f32 %v59, %v634
  %636 = vmatpush.msra.mxu0 %v635
  %v637 = vand.u32 %v58, 4294901760
  %v638 = vsub.f32 %v58, %v637
  %639 = vmatpush.msra.mxu0 %v638
  %v640 = vand.u32 %v26, 4294901760
  %v641 = vsub.f32 %v26, %v640
  %642 = vmatmul.f32.gmra.mxu0 %v641
  %v643 = vpop.f32.mrf.mxu0
  %v644 = vadd.f32 %v466, %v643
  %v645 = vand.u32 %v27, 4294901760
  %v646 = vsub.f32 %v27, %v645
  %647 = vmatmul.f32.gmra.mxu0 %v646
  %v648 = vpop.f32.mrf.mxu0
  %v649 = vadd.f32 %v470, %v648
  %v650 = vand.u32 %v28, 4294901760
  %v651 = vsub.f32 %v28, %v650
  %652 = vmatmul.f32.gmra.mxu0 %v651
  %v653 = vpop.f32.mrf.mxu0
  %v654 = vadd.f32 %v474, %v653
  %v655 = vand.u32 %v29, 4294901760
  %v656 = vsub.f32 %v29, %v655
  %657 = vmatmul.f32.gmra.mxu0 %v656
  %v658 = vpop.f32.mrf.mxu0
  %v659 = vadd.f32 %v478, %v658
  %v660 = vand.u32 %v30, 4294901760
  %v661 = vsub.f32 %v30, %v660
  %662 = vmatmul.f32.gmra.mxu0 %v661
  %v663 = vpop.f32.mrf.mxu0
  %v664 = vadd.f32 %v482, %v663
  %v665 = vand.u32 %v31, 4294901760
  %v666 = vsub.f32 %v31, %v665
  %667 = vmatmul.f32.gmra.mxu0 %v666
  %v668 = vpop.f32.mrf.mxu0
  %v669 = vadd.f32 %v486, %v668
  %v670 = vand.u32 %v32, 4294901760
  %v671 = vsub.f32 %v32, %v670
  %672 = vmatmul.f32.gmra.mxu0 %v671
  %v673 = vpop.f32.mrf.mxu0
  %v674 = vadd.f32 %v490, %v673
  %v675 = vand.u32 %v33, 4294901760
  %v676 = vsub.f32 %v33, %v675
  %677 = vmatmul.f32.gmra.mxu0 %v676
  %v678 = vpop.f32.mrf.mxu0
  %v679 = vadd.f32 %v494, %v678
  %v680 = vand.u32 %v34, 4294901760
  %v681 = vsub.f32 %v34, %v680
  %682 = vmatmul.f32.gmra.mxu0 %v681
  %v683 = vpop.f32.mrf.mxu0
  %v684 = vadd.f32 %v498, %v683
  %v685 = vand.u32 %v35, 4294901760
  %v686 = vsub.f32 %v35, %v685
  %687 = vmatmul.f32.gmra.mxu0 %v686
  %v688 = vpop.f32.mrf.mxu0
  %v689 = vadd.f32 %v502, %v688
  %v690 = vand.u32 %v36, 4294901760
  %v691 = vsub.f32 %v36, %v690
  %692 = vmatmul.f32.gmra.mxu0 %v691
  %v693 = vpop.f32.mrf.mxu0
  %v694 = vadd.f32 %v506, %v693
  %v695 = vand.u32 %v37, 4294901760
  %v696 = vsub.f32 %v37, %v695
  %697 = vmatmul.f32.gmra.mxu0 %v696
  %v698 = vpop.f32.mrf.mxu0
  %v699 = vadd.f32 %v510, %v698
  %v700 = vand.u32 %v38, 4294901760
  %v701 = vsub.f32 %v38, %v700
  %702 = vmatmul.f32.gmra.mxu0 %v701
  %v703 = vpop.f32.mrf.mxu0
  %v704 = vadd.f32 %v514, %v703
  %v705 = vand.u32 %v39, 4294901760
  %v706 = vsub.f32 %v39, %v705
  %707 = vmatmul.f32.gmra.mxu0 %v706
  %v708 = vpop.f32.mrf.mxu0
  %v709 = vadd.f32 %v518, %v708
  %v710 = vand.u32 %v40, 4294901760
  %v711 = vsub.f32 %v40, %v710
  %712 = vmatmul.f32.gmra.mxu0 %v711
  %v713 = vpop.f32.mrf.mxu0
  %v714 = vadd.f32 %v522, %v713
  %v715 = vand.u32 %v41, 4294901760
  %v716 = vsub.f32 %v41, %v715
  %717 = vmatmul.f32.gmra.mxu0 %v716
  %v718 = vpop.f32.mrf.mxu0
  %v719 = vadd.f32 %v526, %v718
  %v720 = vand.u32 %v42, 4294901760
  %v721 = vsub.f32 %v42, %v720
  %722 = vmatmul.f32.gmra.mxu0 %v721
  %v723 = vpop.f32.mrf.mxu0
  %v724 = vadd.f32 %v530, %v723
  %v725 = vand.u32 %v43, 4294901760
  %v726 = vsub.f32 %v43, %v725
  %727 = vmatmul.f32.gmra.mxu0 %v726
  %v728 = vpop.f32.mrf.mxu0
  %v729 = vadd.f32 %v534, %v728
  %v730 = vand.u32 %v44, 4294901760
  %v731 = vsub.f32 %v44, %v730
  %732 = vmatmul.f32.gmra.mxu0 %v731
  %v733 = vpop.f32.mrf.mxu0
  %v734 = vadd.f32 %v538, %v733
  %v735 = vand.u32 %v45, 4294901760
  %v736 = vsub.f32 %v45, %v735
  %737 = vmatmul.f32.gmra.mxu0 %v736
  %v738 = vpop.f32.mrf.mxu0
  %v739 = vadd.f32 %v542, %v738
  %v740 = vand.u32 %v46, 4294901760
  %v741 = vsub.f32 %v46, %v740
  %742 = vmatmul.f32.gmra.mxu0 %v741
  %v743 = vpop.f32.mrf.mxu0
  %v744 = vadd.f32 %v546, %v743
  %v745 = vand.u32 %v47, 4294901760
  %v746 = vsub.f32 %v47, %v745
  %747 = vmatmul.f32.gmra.mxu0 %v746
  %v748 = vpop.f32.mrf.mxu0
  %v749 = vadd.f32 %v550, %v748
  %v750 = vand.u32 %v48, 4294901760
  %v751 = vsub.f32 %v48, %v750
  %752 = vmatmul.f32.gmra.mxu0 %v751
  %v753 = vpop.f32.mrf.mxu0
  %v754 = vadd.f32 %v554, %v753
  %v755 = vand.u32 %v49, 4294901760
  %v756 = vsub.f32 %v49, %v755
  %757 = vmatmul.f32.gmra.mxu0 %v756
  %v758 = vpop.f32.mrf.mxu0
  %v759 = vadd.f32 %v558, %v758
  %v760 = vand.u32 %v50, 4294901760
  %v761 = vsub.f32 %v50, %v760
  %762 = vmatmul.f32.gmra.mxu0 %v761
  %v763 = vpop.f32.mrf.mxu0
  %v764 = vadd.f32 %v562, %v763
  %v765 = vand.u32 %v51, 4294901760
  %v766 = vsub.f32 %v51, %v765
  %767 = vmatmul.f32.gmra.mxu0 %v766
  %v768 = vpop.f32.mrf.mxu0
  %v769 = vadd.f32 %v566, %v768
  %v770 = vand.u32 %v52, 4294901760
  %v771 = vsub.f32 %v52, %v770
  %772 = vmatmul.f32.gmra.mxu0 %v771
  %v773 = vpop.f32.mrf.mxu0
  %v774 = vadd.f32 %v570, %v773
  %v775 = vand.u32 %v53, 4294901760
  %v776 = vsub.f32 %v53, %v775
  %777 = vmatmul.f32.gmra.mxu0 %v776
  %v778 = vpop.f32.mrf.mxu0
  %v779 = vadd.f32 %v574, %v778
  %v780 = vand.u32 %v54, 4294901760
  %v781 = vsub.f32 %v54, %v780
  %782 = vmatmul.f32.gmra.mxu0 %v781
  %v783 = vpop.f32.mrf.mxu0
  %v784 = vadd.f32 %v578, %v783
  %v785 = vand.u32 %v55, 4294901760
  %v786 = vsub.f32 %v55, %v785
  %787 = vmatmul.f32.gmra.mxu0 %v786
  %v788 = vpop.f32.mrf.mxu0
  %v789 = vadd.f32 %v582, %v788
  %v790 = vand.u32 %v56, 4294901760
  %v791 = vsub.f32 %v56, %v790
  %792 = vmatmul.f32.gmra.mxu0 %v791
  %v793 = vpop.f32.mrf.mxu0
  %v794 = vadd.f32 %v586, %v793
  %v795 = vand.u32 %v57, 4294901760
  %v796 = vsub.f32 %v57, %v795
  %797 = vmatmul.f32.gmra.mxu0 %v796
  %v798 = vpop.f32.mrf.mxu0
  %v799 = vadd.f32 %v590, %v798
  %800 = vdwg.mxu0
  %v801 = vand.u32 %v73, 4294901760
  %802 = vmatpush.msra.mxu0 %v801
  %v803 = vand.u32 %v72, 4294901760
  %804 = vmatpush.msra.mxu0 %v803
  %v805 = vand.u32 %v71, 4294901760
  %806 = vmatpush.msra.mxu0 %v805
  %v807 = vand.u32 %v70, 4294901760
  %808 = vmatpush.msra.mxu0 %v807
  %v809 = vand.u32 %v69, 4294901760
  %810 = vmatpush.msra.mxu0 %v809
  %v811 = vand.u32 %v68, 4294901760
  %812 = vmatpush.msra.mxu0 %v811
  %v813 = vand.u32 %v67, 4294901760
  %814 = vmatpush.msra.mxu0 %v813
  %v815 = vand.u32 %v66, 4294901760
  %816 = vmatpush.msra.mxu0 %v815
  %v817 = vand.u32 %v65, 4294901760
  %818 = vmatpush.msra.mxu0 %v817
  %v819 = vand.u32 %v64, 4294901760
  %820 = vmatpush.msra.mxu0 %v819
  %v821 = vand.u32 %v63, 4294901760
  %822 = vmatpush.msra.mxu0 %v821
  %v823 = vand.u32 %v62, 4294901760
  %824 = vmatpush.msra.mxu0 %v823
  %v825 = vand.u32 %v61, 4294901760
  %826 = vmatpush.msra.mxu0 %v825
  %v827 = vand.u32 %v60, 4294901760
  %828 = vmatpush.msra.mxu0 %v827
  %v829 = vand.u32 %v59, 4294901760
  %830 = vmatpush.msra.mxu0 %v829
  %v831 = vand.u32 %v58, 4294901760
  %832 = vmatpush.msra.mxu0 %v831
  %v833 = vand.u32 %v26, 4294901760
  %v834 = vsub.f32 %v26, %v833
  %v835 = vand.u32 %v834, 4294901760
  %836 = vmatmul.f32.gmra.mxu0 %v835
  %v837 = vpop.f32.mrf.mxu0
  %v838 = vadd.f32 %v644, %v837
  %v839 = vand.u32 %v27, 4294901760
  %v840 = vsub.f32 %v27, %v839
  %v841 = vand.u32 %v840, 4294901760
  %842 = vmatmul.f32.gmra.mxu0 %v841
  %v843 = vpop.f32.mrf.mxu0
  %v844 = vadd.f32 %v649, %v843
  %v845 = vand.u32 %v28, 4294901760
  %v846 = vsub.f32 %v28, %v845
  %v847 = vand.u32 %v846, 4294901760
  %848 = vmatmul.f32.gmra.mxu0 %v847
  %v849 = vpop.f32.mrf.mxu0
  %v850 = vadd.f32 %v654, %v849
  %v851 = vand.u32 %v29, 4294901760
  %v852 = vsub.f32 %v29, %v851
  %v853 = vand.u32 %v852, 4294901760
  %854 = vmatmul.f32.gmra.mxu0 %v853
  %v855 = vpop.f32.mrf.mxu0
  %v856 = vadd.f32 %v659, %v855
  %v857 = vand.u32 %v30, 4294901760
  %v858 = vsub.f32 %v30, %v857
  %v859 = vand.u32 %v858, 4294901760
  %860 = vmatmul.f32.gmra.mxu0 %v859
  %v861 = vpop.f32.mrf.mxu0
  %v862 = vadd.f32 %v664, %v861
  %v863 = vand.u32 %v31, 4294901760
  %v864 = vsub.f32 %v31, %v863
  %v865 = vand.u32 %v864, 4294901760
  %866 = vmatmul.f32.gmra.mxu0 %v865
  %v867 = vpop.f32.mrf.mxu0
  %v868 = vadd.f32 %v669, %v867
  %v869 = vand.u32 %v32, 4294901760
  %v870 = vsub.f32 %v32, %v869
  %v871 = vand.u32 %v870, 4294901760
  %872 = vmatmul.f32.gmra.mxu0 %v871
  %v873 = vpop.f32.mrf.mxu0
  %v874 = vadd.f32 %v674, %v873
  %v875 = vand.u32 %v33, 4294901760
  %v876 = vsub.f32 %v33, %v875
  %v877 = vand.u32 %v876, 4294901760
  %878 = vmatmul.f32.gmra.mxu0 %v877
  %v879 = vpop.f32.mrf.mxu0
  %v880 = vadd.f32 %v679, %v879
  %v881 = vand.u32 %v34, 4294901760
  %v882 = vsub.f32 %v34, %v881
  %v883 = vand.u32 %v882, 4294901760
  %884 = vmatmul.f32.gmra.mxu0 %v883
  %v885 = vpop.f32.mrf.mxu0
  %v886 = vadd.f32 %v684, %v885
  %v887 = vand.u32 %v35, 4294901760
  %v888 = vsub.f32 %v35, %v887
  %v889 = vand.u32 %v888, 4294901760
  %890 = vmatmul.f32.gmra.mxu0 %v889
  %v891 = vpop.f32.mrf.mxu0
  %v892 = vadd.f32 %v689, %v891
  %v893 = vand.u32 %v36, 4294901760
  %v894 = vsub.f32 %v36, %v893
  %v895 = vand.u32 %v894, 4294901760
  %896 = vmatmul.f32.gmra.mxu0 %v895
  %v897 = vpop.f32.mrf.mxu0
  %v898 = vadd.f32 %v694, %v897
  %v899 = vand.u32 %v37, 4294901760
  %v900 = vsub.f32 %v37, %v899
  %v901 = vand.u32 %v900, 4294901760
  %902 = vmatmul.f32.gmra.mxu0 %v901
  %v903 = vpop.f32.mrf.mxu0
  %v904 = vadd.f32 %v699, %v903
  %v905 = vand.u32 %v38, 4294901760
  %v906 = vsub.f32 %v38, %v905
  %v907 = vand.u32 %v906, 4294901760
  %908 = vmatmul.f32.gmra.mxu0 %v907
  %v909 = vpop.f32.mrf.mxu0
  %v910 = vadd.f32 %v704, %v909
  %v911 = vand.u32 %v39, 4294901760
  %v912 = vsub.f32 %v39, %v911
  %v913 = vand.u32 %v912, 4294901760
  %914 = vmatmul.f32.gmra.mxu0 %v913
  %v915 = vpop.f32.mrf.mxu0
  %v916 = vadd.f32 %v709, %v915
  %v917 = vand.u32 %v40, 4294901760
  %v918 = vsub.f32 %v40, %v917
  %v919 = vand.u32 %v918, 4294901760
  %920 = vmatmul.f32.gmra.mxu0 %v919
  %v921 = vpop.f32.mrf.mxu0
  %v922 = vadd.f32 %v714, %v921
  %v923 = vand.u32 %v41, 4294901760
  %v924 = vsub.f32 %v41, %v923
  %v925 = vand.u32 %v924, 4294901760
  %926 = vmatmul.f32.gmra.mxu0 %v925
  %v927 = vpop.f32.mrf.mxu0
  %v928 = vadd.f32 %v719, %v927
  %v929 = vand.u32 %v42, 4294901760
  %v930 = vsub.f32 %v42, %v929
  %v931 = vand.u32 %v930, 4294901760
  %932 = vmatmul.f32.gmra.mxu0 %v931
  %v933 = vpop.f32.mrf.mxu0
  %v934 = vadd.f32 %v724, %v933
  %v935 = vand.u32 %v43, 4294901760
  %v936 = vsub.f32 %v43, %v935
  %v937 = vand.u32 %v936, 4294901760
  %938 = vmatmul.f32.gmra.mxu0 %v937
  %v939 = vpop.f32.mrf.mxu0
  %v940 = vadd.f32 %v729, %v939
  %v941 = vand.u32 %v44, 4294901760
  %v942 = vsub.f32 %v44, %v941
  %v943 = vand.u32 %v942, 4294901760
  %944 = vmatmul.f32.gmra.mxu0 %v943
  %v945 = vpop.f32.mrf.mxu0
  %v946 = vadd.f32 %v734, %v945
  %v947 = vand.u32 %v45, 4294901760
  %v948 = vsub.f32 %v45, %v947
  %v949 = vand.u32 %v948, 4294901760
  %950 = vmatmul.f32.gmra.mxu0 %v949
  %v951 = vpop.f32.mrf.mxu0
  %v952 = vadd.f32 %v739, %v951
  %v953 = vand.u32 %v46, 4294901760
  %v954 = vsub.f32 %v46, %v953
  %v955 = vand.u32 %v954, 4294901760
  %956 = vmatmul.f32.gmra.mxu0 %v955
  %v957 = vpop.f32.mrf.mxu0
  %v958 = vadd.f32 %v744, %v957
  %v959 = vand.u32 %v47, 4294901760
  %v960 = vsub.f32 %v47, %v959
  %v961 = vand.u32 %v960, 4294901760
  %962 = vmatmul.f32.gmra.mxu0 %v961
  %v963 = vpop.f32.mrf.mxu0
  %v964 = vadd.f32 %v749, %v963
  %v965 = vand.u32 %v48, 4294901760
  %v966 = vsub.f32 %v48, %v965
  %v967 = vand.u32 %v966, 4294901760
  %968 = vmatmul.f32.gmra.mxu0 %v967
  %v969 = vpop.f32.mrf.mxu0
  %v970 = vadd.f32 %v754, %v969
  %v971 = vand.u32 %v49, 4294901760
  %v972 = vsub.f32 %v49, %v971
  %v973 = vand.u32 %v972, 4294901760
  %974 = vmatmul.f32.gmra.mxu0 %v973
  %v975 = vpop.f32.mrf.mxu0
  %v976 = vadd.f32 %v759, %v975
  %v977 = vand.u32 %v50, 4294901760
  %v978 = vsub.f32 %v50, %v977
  %v979 = vand.u32 %v978, 4294901760
  %980 = vmatmul.f32.gmra.mxu0 %v979
  %v981 = vpop.f32.mrf.mxu0
  %v982 = vadd.f32 %v764, %v981
  %v983 = vand.u32 %v51, 4294901760
  %v984 = vsub.f32 %v51, %v983
  %v985 = vand.u32 %v984, 4294901760
  %986 = vmatmul.f32.gmra.mxu0 %v985
  %v987 = vpop.f32.mrf.mxu0
  %v988 = vadd.f32 %v769, %v987
  %v989 = vand.u32 %v52, 4294901760
  %v990 = vsub.f32 %v52, %v989
  %v991 = vand.u32 %v990, 4294901760
  %992 = vmatmul.f32.gmra.mxu0 %v991
  %v993 = vpop.f32.mrf.mxu0
  %v994 = vadd.f32 %v774, %v993
  %v995 = vand.u32 %v53, 4294901760
  %v996 = vsub.f32 %v53, %v995
  %v997 = vand.u32 %v996, 4294901760
  %998 = vmatmul.f32.gmra.mxu0 %v997
  %v999 = vpop.f32.mrf.mxu0
  %v1000 = vadd.f32 %v779, %v999
  %v1001 = vand.u32 %v54, 4294901760
  %v1002 = vsub.f32 %v54, %v1001
  %v1003 = vand.u32 %v1002, 4294901760
  %1004 = vmatmul.f32.gmra.mxu0 %v1003
  %v1005 = vpop.f32.mrf.mxu0
  %v1006 = vadd.f32 %v784, %v1005
  %v1007 = vand.u32 %v55, 4294901760
  %v1008 = vsub.f32 %v55, %v1007
  %v1009 = vand.u32 %v1008, 4294901760
  %1010 = vmatmul.f32.gmra.mxu0 %v1009
  %v1011 = vpop.f32.mrf.mxu0
  %v1012 = vadd.f32 %v789, %v1011
  %v1013 = vand.u32 %v56, 4294901760
  %v1014 = vsub.f32 %v56, %v1013
  %v1015 = vand.u32 %v1014, 4294901760
  %1016 = vmatmul.f32.gmra.mxu0 %v1015
  %v1017 = vpop.f32.mrf.mxu0
  %v1018 = vadd.f32 %v794, %v1017
  %v1019 = vand.u32 %v57, 4294901760
  %v1020 = vsub.f32 %v57, %v1019
  %v1021 = vand.u32 %v1020, 4294901760
  %1022 = vmatmul.f32.gmra.mxu0 %v1021
  %v1023 = vpop.f32.mrf.mxu0
  %v1024 = vadd.f32 %v799, %v1023
  %1025 = vdwg.mxu0
  %v1026 = vand.u32 %v73, 4294901760
  %v1027 = vsub.f32 %v73, %v1026
  %v1028 = vand.u32 %v1027, 4294901760
  %1029 = vmatpush.msra.mxu0 %v1028
  %v1030 = vand.u32 %v72, 4294901760
  %v1031 = vsub.f32 %v72, %v1030
  %v1032 = vand.u32 %v1031, 4294901760
  %1033 = vmatpush.msra.mxu0 %v1032
  %v1034 = vand.u32 %v71, 4294901760
  %v1035 = vsub.f32 %v71, %v1034
  %v1036 = vand.u32 %v1035, 4294901760
  %1037 = vmatpush.msra.mxu0 %v1036
  %v1038 = vand.u32 %v70, 4294901760
  %v1039 = vsub.f32 %v70, %v1038
  %v1040 = vand.u32 %v1039, 4294901760
  %1041 = vmatpush.msra.mxu0 %v1040
  %v1042 = vand.u32 %v69, 4294901760
  %v1043 = vsub.f32 %v69, %v1042
  %v1044 = vand.u32 %v1043, 4294901760
  %1045 = vmatpush.msra.mxu0 %v1044
  %v1046 = vand.u32 %v68, 4294901760
  %v1047 = vsub.f32 %v68, %v1046
  %v1048 = vand.u32 %v1047, 4294901760
  %1049 = vmatpush.msra.mxu0 %v1048
  %v1050 = vand.u32 %v67, 4294901760
  %v1051 = vsub.f32 %v67, %v1050
  %v1052 = vand.u32 %v1051, 4294901760
  %1053 = vmatpush.msra.mxu0 %v1052
  %v1054 = vand.u32 %v66, 4294901760
  %v1055 = vsub.f32 %v66, %v1054
  %v1056 = vand.u32 %v1055, 4294901760
  %1057 = vmatpush.msra.mxu0 %v1056
  %v1058 = vand.u32 %v65, 4294901760
  %v1059 = vsub.f32 %v65, %v1058
  %v1060 = vand.u32 %v1059, 4294901760
  %1061 = vmatpush.msra.mxu0 %v1060
  %v1062 = vand.u32 %v64, 4294901760
  %v1063 = vsub.f32 %v64, %v1062
  %v1064 = vand.u32 %v1063, 4294901760
  %1065 = vmatpush.msra.mxu0 %v1064
  %v1066 = vand.u32 %v63, 4294901760
  %v1067 = vsub.f32 %v63, %v1066
  %v1068 = vand.u32 %v1067, 4294901760
  %1069 = vmatpush.msra.mxu0 %v1068
  %v1070 = vand.u32 %v62, 4294901760
  %v1071 = vsub.f32 %v62, %v1070
  %v1072 = vand.u32 %v1071, 4294901760
  %1073 = vmatpush.msra.mxu0 %v1072
  %v1074 = vand.u32 %v61, 4294901760
  %v1075 = vsub.f32 %v61, %v1074
  %v1076 = vand.u32 %v1075, 4294901760
  %1077 = vmatpush.msra.mxu0 %v1076
  %v1078 = vand.u32 %v60, 4294901760
  %v1079 = vsub.f32 %v60, %v1078
  %v1080 = vand.u32 %v1079, 4294901760
  %1081 = vmatpush.msra.mxu0 %v1080
  %v1082 = vand.u32 %v59, 4294901760
  %v1083 = vsub.f32 %v59, %v1082
  %v1084 = vand.u32 %v1083, 4294901760
  %1085 = vmatpush.msra.mxu0 %v1084
  %v1086 = vand.u32 %v58, 4294901760
  %v1087 = vsub.f32 %v58, %v1086
  %v1088 = vand.u32 %v1087, 4294901760
  %1089 = vmatpush.msra.mxu0 %v1088
  %v1090 = vand.u32 %v26, 4294901760
  %1091 = vmatmul.f32.gmra.mxu0 %v1090
  %v1092 = vpop.f32.mrf.mxu0
  %v1093 = vadd.f32 %v838, %v1092
  %v1094 = vand.u32 %v27, 4294901760
  %1095 = vmatmul.f32.gmra.mxu0 %v1094
  %v1096 = vpop.f32.mrf.mxu0
  %v1097 = vadd.f32 %v844, %v1096
  %v1098 = vand.u32 %v28, 4294901760
  %1099 = vmatmul.f32.gmra.mxu0 %v1098
  %v1100 = vpop.f32.mrf.mxu0
  %v1101 = vadd.f32 %v850, %v1100
  %v1102 = vand.u32 %v29, 4294901760
  %1103 = vmatmul.f32.gmra.mxu0 %v1102
  %v1104 = vpop.f32.mrf.mxu0
  %v1105 = vadd.f32 %v856, %v1104
  %v1106 = vand.u32 %v30, 4294901760
  %1107 = vmatmul.f32.gmra.mxu0 %v1106
  %v1108 = vpop.f32.mrf.mxu0
  %v1109 = vadd.f32 %v862, %v1108
  %v1110 = vand.u32 %v31, 4294901760
  %1111 = vmatmul.f32.gmra.mxu0 %v1110
  %v1112 = vpop.f32.mrf.mxu0
  %v1113 = vadd.f32 %v868, %v1112
  %v1114 = vand.u32 %v32, 4294901760
  %1115 = vmatmul.f32.gmra.mxu0 %v1114
  %v1116 = vpop.f32.mrf.mxu0
  %v1117 = vadd.f32 %v874, %v1116
  %v1118 = vand.u32 %v33, 4294901760
  %1119 = vmatmul.f32.gmra.mxu0 %v1118
  %v1120 = vpop.f32.mrf.mxu0
  %v1121 = vadd.f32 %v880, %v1120
  %v1122 = vand.u32 %v34, 4294901760
  %1123 = vmatmul.f32.gmra.mxu0 %v1122
  %v1124 = vpop.f32.mrf.mxu0
  %v1125 = vadd.f32 %v886, %v1124
  %v1126 = vand.u32 %v35, 4294901760
  %1127 = vmatmul.f32.gmra.mxu0 %v1126
  %v1128 = vpop.f32.mrf.mxu0
  %v1129 = vadd.f32 %v892, %v1128
  %v1130 = vand.u32 %v36, 4294901760
  %1131 = vmatmul.f32.gmra.mxu0 %v1130
  %v1132 = vpop.f32.mrf.mxu0
  %v1133 = vadd.f32 %v898, %v1132
  %v1134 = vand.u32 %v37, 4294901760
  %1135 = vmatmul.f32.gmra.mxu0 %v1134
  %v1136 = vpop.f32.mrf.mxu0
  %v1137 = vadd.f32 %v904, %v1136
  %v1138 = vand.u32 %v38, 4294901760
  %1139 = vmatmul.f32.gmra.mxu0 %v1138
  %v1140 = vpop.f32.mrf.mxu0
  %v1141 = vadd.f32 %v910, %v1140
  %v1142 = vand.u32 %v39, 4294901760
  %1143 = vmatmul.f32.gmra.mxu0 %v1142
  %v1144 = vpop.f32.mrf.mxu0
  %v1145 = vadd.f32 %v916, %v1144
  %v1146 = vand.u32 %v40, 4294901760
  %1147 = vmatmul.f32.gmra.mxu0 %v1146
  %v1148 = vpop.f32.mrf.mxu0
  %v1149 = vadd.f32 %v922, %v1148
  %v1150 = vand.u32 %v41, 4294901760
  %1151 = vmatmul.f32.gmra.mxu0 %v1150
  %v1152 = vpop.f32.mrf.mxu0
  %v1153 = vadd.f32 %v928, %v1152
  %v1154 = vand.u32 %v42, 4294901760
  %1155 = vmatmul.f32.gmra.mxu0 %v1154
  %v1156 = vpop.f32.mrf.mxu0
  %v1157 = vadd.f32 %v934, %v1156
  %v1158 = vand.u32 %v43, 4294901760
  %1159 = vmatmul.f32.gmra.mxu0 %v1158
  %v1160 = vpop.f32.mrf.mxu0
  %v1161 = vadd.f32 %v940, %v1160
  %v1162 = vand.u32 %v44, 4294901760
  %1163 = vmatmul.f32.gmra.mxu0 %v1162
  %v1164 = vpop.f32.mrf.mxu0
  %v1165 = vadd.f32 %v946, %v1164
  %v1166 = vand.u32 %v45, 4294901760
  %1167 = vmatmul.f32.gmra.mxu0 %v1166
  %v1168 = vpop.f32.mrf.mxu0
  %v1169 = vadd.f32 %v952, %v1168
  %v1170 = vand.u32 %v46, 4294901760
  %1171 = vmatmul.f32.gmra.mxu0 %v1170
  %v1172 = vpop.f32.mrf.mxu0
  %v1173 = vadd.f32 %v958, %v1172
  %v1174 = vand.u32 %v47, 4294901760
  %1175 = vmatmul.f32.gmra.mxu0 %v1174
  %v1176 = vpop.f32.mrf.mxu0
  %v1177 = vadd.f32 %v964, %v1176
  %v1178 = vand.u32 %v48, 4294901760
  %1179 = vmatmul.f32.gmra.mxu0 %v1178
  %v1180 = vpop.f32.mrf.mxu0
  %v1181 = vadd.f32 %v970, %v1180
  %v1182 = vand.u32 %v49, 4294901760
  %1183 = vmatmul.f32.gmra.mxu0 %v1182
  %v1184 = vpop.f32.mrf.mxu0
  %v1185 = vadd.f32 %v976, %v1184
  %v1186 = vand.u32 %v50, 4294901760
  %1187 = vmatmul.f32.gmra.mxu0 %v1186
  %v1188 = vpop.f32.mrf.mxu0
  %v1189 = vadd.f32 %v982, %v1188
  %v1190 = vand.u32 %v51, 4294901760
  %1191 = vmatmul.f32.gmra.mxu0 %v1190
  %v1192 = vpop.f32.mrf.mxu0
  %v1193 = vadd.f32 %v988, %v1192
  %v1194 = vand.u32 %v52, 4294901760
  %1195 = vmatmul.f32.gmra.mxu0 %v1194
  %v1196 = vpop.f32.mrf.mxu0
  %v1197 = vadd.f32 %v994, %v1196
  %v1198 = vand.u32 %v53, 4294901760
  %1199 = vmatmul.f32.gmra.mxu0 %v1198
  %v1200 = vpop.f32.mrf.mxu0
  %v1201 = vadd.f32 %v1000, %v1200
  %v1202 = vand.u32 %v54, 4294901760
  %1203 = vmatmul.f32.gmra.mxu0 %v1202
  %v1204 = vpop.f32.mrf.mxu0
  %v1205 = vadd.f32 %v1006, %v1204
  %v1206 = vand.u32 %v55, 4294901760
  %1207 = vmatmul.f32.gmra.mxu0 %v1206
  %v1208 = vpop.f32.mrf.mxu0
  %v1209 = vadd.f32 %v1012, %v1208
  %v1210 = vand.u32 %v56, 4294901760
  %1211 = vmatmul.f32.gmra.mxu0 %v1210
  %v1212 = vpop.f32.mrf.mxu0
  %v1213 = vadd.f32 %v1018, %v1212
  %v1214 = vand.u32 %v57, 4294901760
  %1215 = vmatmul.f32.gmra.mxu0 %v1214
  %v1216 = vpop.f32.mrf.mxu0
  %v1217 = vadd.f32 %v1024, %v1216
  %1218 = vdwg.mxu0
  %v1219 = vand.u32 %v73, 4294901760
  %1220 = vmatpush.msra.mxu0 %v1219
  %v1221 = vand.u32 %v72, 4294901760
  %1222 = vmatpush.msra.mxu0 %v1221
  %v1223 = vand.u32 %v71, 4294901760
  %1224 = vmatpush.msra.mxu0 %v1223
  %v1225 = vand.u32 %v70, 4294901760
  %1226 = vmatpush.msra.mxu0 %v1225
  %v1227 = vand.u32 %v69, 4294901760
  %1228 = vmatpush.msra.mxu0 %v1227
  %v1229 = vand.u32 %v68, 4294901760
  %1230 = vmatpush.msra.mxu0 %v1229
  %v1231 = vand.u32 %v67, 4294901760
  %1232 = vmatpush.msra.mxu0 %v1231
  %v1233 = vand.u32 %v66, 4294901760
  %1234 = vmatpush.msra.mxu0 %v1233
  %v1235 = vand.u32 %v65, 4294901760
  %1236 = vmatpush.msra.mxu0 %v1235
  %v1237 = vand.u32 %v64, 4294901760
  %1238 = vmatpush.msra.mxu0 %v1237
  %v1239 = vand.u32 %v63, 4294901760
  %1240 = vmatpush.msra.mxu0 %v1239
  %v1241 = vand.u32 %v62, 4294901760
  %1242 = vmatpush.msra.mxu0 %v1241
  %v1243 = vand.u32 %v61, 4294901760
  %1244 = vmatpush.msra.mxu0 %v1243
  %v1245 = vand.u32 %v60, 4294901760
  %1246 = vmatpush.msra.mxu0 %v1245
  %v1247 = vand.u32 %v59, 4294901760
  %1248 = vmatpush.msra.mxu0 %v1247
  %v1249 = vand.u32 %v58, 4294901760
  %1250 = vmatpush.msra.mxu0 %v1249
  %v1251 = vand.u32 %v26, 4294901760
  %1252 = vmatmul.f32.gmra.mxu0 %v1251
  %v1253 = vpop.f32.mrf.mxu0
  %v1254 = vadd.f32 %v1093, %v1253
  %v1255 = vand.u32 %v27, 4294901760
  %1256 = vmatmul.f32.gmra.mxu0 %v1255
  %v1257 = vpop.f32.mrf.mxu0
  %v1258 = vadd.f32 %v1097, %v1257
  %v1259 = vand.u32 %v28, 4294901760
  %1260 = vmatmul.f32.gmra.mxu0 %v1259
  %v1261 = vpop.f32.mrf.mxu0
  %v1262 = vadd.f32 %v1101, %v1261
  %v1263 = vand.u32 %v29, 4294901760
  %1264 = vmatmul.f32.gmra.mxu0 %v1263
  %v1265 = vpop.f32.mrf.mxu0
  %v1266 = vadd.f32 %v1105, %v1265
  %v1267 = vand.u32 %v30, 4294901760
  %1268 = vmatmul.f32.gmra.mxu0 %v1267
  %v1269 = vpop.f32.mrf.mxu0
  %v1270 = vadd.f32 %v1109, %v1269
  %v1271 = vand.u32 %v31, 4294901760
  %1272 = vmatmul.f32.gmra.mxu0 %v1271
  %v1273 = vpop.f32.mrf.mxu0
  %v1274 = vadd.f32 %v1113, %v1273
  %v1275 = vand.u32 %v32, 4294901760
  %1276 = vmatmul.f32.gmra.mxu0 %v1275
  %v1277 = vpop.f32.mrf.mxu0
  %v1278 = vadd.f32 %v1117, %v1277
  %v1279 = vand.u32 %v33, 4294901760
  %1280 = vmatmul.f32.gmra.mxu0 %v1279
  %v1281 = vpop.f32.mrf.mxu0
  %v1282 = vadd.f32 %v1121, %v1281
  %v1283 = vand.u32 %v34, 4294901760
  %1284 = vmatmul.f32.gmra.mxu0 %v1283
  %v1285 = vpop.f32.mrf.mxu0
  %v1286 = vadd.f32 %v1125, %v1285
  %v1287 = vand.u32 %v35, 4294901760
  %1288 = vmatmul.f32.gmra.mxu0 %v1287
  %v1289 = vpop.f32.mrf.mxu0
  %v1290 = vadd.f32 %v1129, %v1289
  %v1291 = vand.u32 %v36, 4294901760
  %1292 = vmatmul.f32.gmra.mxu0 %v1291
  %v1293 = vpop.f32.mrf.mxu0
  %v1294 = vadd.f32 %v1133, %v1293
  %v1295 = vand.u32 %v37, 4294901760
  %1296 = vmatmul.f32.gmra.mxu0 %v1295
  %v1297 = vpop.f32.mrf.mxu0
  %v1298 = vadd.f32 %v1137, %v1297
  %v1299 = vand.u32 %v38, 4294901760
  %1300 = vmatmul.f32.gmra.mxu0 %v1299
  %v1301 = vpop.f32.mrf.mxu0
  %v1302 = vadd.f32 %v1141, %v1301
  %v1303 = vand.u32 %v39, 4294901760
  %1304 = vmatmul.f32.gmra.mxu0 %v1303
  %v1305 = vpop.f32.mrf.mxu0
  %v1306 = vadd.f32 %v1145, %v1305
  %v1307 = vand.u32 %v40, 4294901760
  %1308 = vmatmul.f32.gmra.mxu0 %v1307
  %v1309 = vpop.f32.mrf.mxu0
  %v1310 = vadd.f32 %v1149, %v1309
  %v1311 = vand.u32 %v41, 4294901760
  %1312 = vmatmul.f32.gmra.mxu0 %v1311
  %v1313 = vpop.f32.mrf.mxu0
  %v1314 = vadd.f32 %v1153, %v1313
  %v1315 = vand.u32 %v42, 4294901760
  %1316 = vmatmul.f32.gmra.mxu0 %v1315
  %v1317 = vpop.f32.mrf.mxu0
  %v1318 = vadd.f32 %v1157, %v1317
  %v1319 = vand.u32 %v43, 4294901760
  %1320 = vmatmul.f32.gmra.mxu0 %v1319
  %v1321 = vpop.f32.mrf.mxu0
  %v1322 = vadd.f32 %v1161, %v1321
  %v1323 = vand.u32 %v44, 4294901760
  %1324 = vmatmul.f32.gmra.mxu0 %v1323
  %v1325 = vpop.f32.mrf.mxu0
  %v1326 = vadd.f32 %v1165, %v1325
  %v1327 = vand.u32 %v45, 4294901760
  %1328 = vmatmul.f32.gmra.mxu0 %v1327
  %v1329 = vpop.f32.mrf.mxu0
  %v1330 = vadd.f32 %v1169, %v1329
  %v1331 = vand.u32 %v46, 4294901760
  %1332 = vmatmul.f32.gmra.mxu0 %v1331
  %v1333 = vpop.f32.mrf.mxu0
  %v1334 = vadd.f32 %v1173, %v1333
  %v1335 = vand.u32 %v47, 4294901760
  %1336 = vmatmul.f32.gmra.mxu0 %v1335
  %v1337 = vpop.f32.mrf.mxu0
  %v1338 = vadd.f32 %v1177, %v1337
  %v1339 = vand.u32 %v48, 4294901760
  %1340 = vmatmul.f32.gmra.mxu0 %v1339
  %v1341 = vpop.f32.mrf.mxu0
  %v1342 = vadd.f32 %v1181, %v1341
  %v1343 = vand.u32 %v49, 4294901760
  %1344 = vmatmul.f32.gmra.mxu0 %v1343
  %v1345 = vpop.f32.mrf.mxu0
  %v1346 = vadd.f32 %v1185, %v1345
  %v1347 = vand.u32 %v50, 4294901760
  %1348 = vmatmul.f32.gmra.mxu0 %v1347
  %v1349 = vpop.f32.mrf.mxu0
  %v1350 = vadd.f32 %v1189, %v1349
  %v1351 = vand.u32 %v51, 4294901760
  %1352 = vmatmul.f32.gmra.mxu0 %v1351
  %v1353 = vpop.f32.mrf.mxu0
  %v1354 = vadd.f32 %v1193, %v1353
  %v1355 = vand.u32 %v52, 4294901760
  %1356 = vmatmul.f32.gmra.mxu0 %v1355
  %v1357 = vpop.f32.mrf.mxu0
  %v1358 = vadd.f32 %v1197, %v1357
  %v1359 = vand.u32 %v53, 4294901760
  %1360 = vmatmul.f32.gmra.mxu0 %v1359
  %v1361 = vpop.f32.mrf.mxu0
  %v1362 = vadd.f32 %v1201, %v1361
  %v1363 = vand.u32 %v54, 4294901760
  %1364 = vmatmul.f32.gmra.mxu0 %v1363
  %v1365 = vpop.f32.mrf.mxu0
  %v1366 = vadd.f32 %v1205, %v1365
  %v1367 = vand.u32 %v55, 4294901760
  %1368 = vmatmul.f32.gmra.mxu0 %v1367
  %v1369 = vpop.f32.mrf.mxu0
  %v1370 = vadd.f32 %v1209, %v1369
  %v1371 = vand.u32 %v56, 4294901760
  %1372 = vmatmul.f32.gmra.mxu0 %v1371
  %v1373 = vpop.f32.mrf.mxu0
  %v1374 = vadd.f32 %v1213, %v1373
  %v1375 = vand.u32 %v57, 4294901760
  %1376 = vmatmul.f32.gmra.mxu0 %v1375
  %v1377 = vpop.f32.mrf.mxu0
  %v1378 = vadd.f32 %v1217, %v1377
  %1379 = vdwg.mxu0
  %v1380 = vxor.u32 %v1254, 2147483648
  %v1381 = vxor.u32 %v1258, 2147483648
  %v1382 = vxor.u32 %v1262, 2147483648
  %v1383 = vxor.u32 %v1266, 2147483648
  %v1384 = vxor.u32 %v1270, 2147483648
  %v1385 = vxor.u32 %v1274, 2147483648
  %v1386 = vxor.u32 %v1278, 2147483648
  %v1387 = vxor.u32 %v1282, 2147483648
  %v1388 = vxor.u32 %v1286, 2147483648
  %v1389 = vxor.u32 %v1290, 2147483648
  %v1390 = vxor.u32 %v1294, 2147483648
  %v1391 = vxor.u32 %v1298, 2147483648
  %v1392 = vxor.u32 %v1302, 2147483648
  %v1393 = vxor.u32 %v1306, 2147483648
  %v1394 = vxor.u32 %v1310, 2147483648
  %v1395 = vxor.u32 %v1314, 2147483648
  %v1396 = vxor.u32 %v1318, 2147483648
  %v1397 = vxor.u32 %v1322, 2147483648
  %v1398 = vxor.u32 %v1326, 2147483648
  %v1399 = vxor.u32 %v1330, 2147483648
  %v1400 = vxor.u32 %v1334, 2147483648
  %v1401 = vxor.u32 %v1338, 2147483648
  %v1402 = vxor.u32 %v1342, 2147483648
  %v1403 = vxor.u32 %v1346, 2147483648
  %v1404 = vxor.u32 %v1350, 2147483648
  %v1405 = vxor.u32 %v1354, 2147483648
  %v1406 = vxor.u32 %v1358, 2147483648
  %v1407 = vxor.u32 %v1362, 2147483648
  %v1408 = vxor.u32 %v1366, 2147483648
  %v1409 = vxor.u32 %v1370, 2147483648
  %v1410 = vxor.u32 %v1374, 2147483648
  %v1411 = vxor.u32 %v1378, 2147483648
  %v1412 = vmul.f32 %v1380, 1.442695
  %v1413 = vpow.pop %v1412
  %v1414 = vmul.f32 %v1381, 1.442695
  %v1415 = vpow.pop %v1414
  %v1416 = vmul.f32 %v1382, 1.442695
  %v1417 = vpow.pop %v1416
  %v1418 = vmul.f32 %v1383, 1.442695
  %v1419 = vpow.pop %v1418
  %v1420 = vmul.f32 %v1384, 1.442695
  %v1421 = vpow.pop %v1420
  %v1422 = vmul.f32 %v1385, 1.442695
  %v1423 = vpow.pop %v1422
  %v1424 = vmul.f32 %v1386, 1.442695
  %v1425 = vpow.pop %v1424
  %v1426 = vmul.f32 %v1387, 1.442695
  %v1427 = vpow.pop %v1426
  %v1428 = vmul.f32 %v1388, 1.442695
  %v1429 = vpow.pop %v1428
  %v1430 = vmul.f32 %v1389, 1.442695
  %v1431 = vpow.pop %v1430
  %v1432 = vmul.f32 %v1390, 1.442695
  %v1433 = vpow.pop %v1432
  %v1434 = vmul.f32 %v1391, 1.442695
  %v1435 = vpow.pop %v1434
  %v1436 = vmul.f32 %v1392, 1.442695
  %v1437 = vpow.pop %v1436
  %v1438 = vmul.f32 %v1393, 1.442695
  %v1439 = vpow.pop %v1438
  %v1440 = vmul.f32 %v1394, 1.442695
  %v1441 = vpow.pop %v1440
  %v1442 = vmul.f32 %v1395, 1.442695
  %v1443 = vpow.pop %v1442
  %v1444 = vmul.f32 %v1396, 1.442695
  %v1445 = vpow.pop %v1444
  %v1446 = vmul.f32 %v1397, 1.442695
  %v1447 = vpow.pop %v1446
  %v1448 = vmul.f32 %v1398, 1.442695
  %v1449 = vpow.pop %v1448
  %v1450 = vmul.f32 %v1399, 1.442695
  %v1451 = vpow.pop %v1450
  %v1452 = vmul.f32 %v1400, 1.442695
  %v1453 = vpow.pop %v1452
  %v1454 = vmul.f32 %v1401, 1.442695
  %v1455 = vpow.pop %v1454
  %v1456 = vmul.f32 %v1402, 1.442695
  %v1457 = vpow.pop %v1456
  %v1458 = vmul.f32 %v1403, 1.442695
  %v1459 = vpow.pop %v1458
  %v1460 = vmul.f32 %v1404, 1.442695
  %v1461 = vpow.pop %v1460
  %v1462 = vmul.f32 %v1405, 1.442695
  %v1463 = vpow.pop %v1462
  %v1464 = vmul.f32 %v1406, 1.442695
  %v1465 = vpow.pop %v1464
  %v1466 = vmul.f32 %v1407, 1.442695
  %v1467 = vpow.pop %v1466
  %v1468 = vmul.f32 %v1408, 1.442695
  %v1469 = vpow.pop %v1468
  %v1470 = vmul.f32 %v1409, 1.442695
  %v1471 = vpow.pop %v1470
  %v1472 = vmul.f32 %v1410, 1.442695
  %v1473 = vpow.pop %v1472
  %v1474 = vmul.f32 %v1411, 1.442695
  %v1475 = vpow.pop %v1474
  %v1476 = vadd.f32 %v1413, 1.0
  %v1477 = vadd.f32 %v1415, 1.0
  %v1478 = vadd.f32 %v1417, 1.0
  %v1479 = vadd.f32 %v1419, 1.0
  %v1480 = vadd.f32 %v1421, 1.0
  %v1481 = vadd.f32 %v1423, 1.0
  %v1482 = vadd.f32 %v1425, 1.0
  %v1483 = vadd.f32 %v1427, 1.0
  %v1484 = vadd.f32 %v1429, 1.0
  %v1485 = vadd.f32 %v1431, 1.0
  %v1486 = vadd.f32 %v1433, 1.0
  %v1487 = vadd.f32 %v1435, 1.0
  %v1488 = vadd.f32 %v1437, 1.0
  %v1489 = vadd.f32 %v1439, 1.0
  %v1490 = vadd.f32 %v1441, 1.0
  %v1491 = vadd.f32 %v1443, 1.0
  %v1492 = vadd.f32 %v1445, 1.0
  %v1493 = vadd.f32 %v1447, 1.0
  %v1494 = vadd.f32 %v1449, 1.0
  %v1495 = vadd.f32 %v1451, 1.0
  %v1496 = vadd.f32 %v1453, 1.0
  %v1497 = vadd.f32 %v1455, 1.0
  %v1498 = vadd.f32 %v1457, 1.0
  %v1499 = vadd.f32 %v1459, 1.0
  %v1500 = vadd.f32 %v1461, 1.0
  %v1501 = vadd.f32 %v1463, 1.0
  %v1502 = vadd.f32 %v1465, 1.0
  %v1503 = vadd.f32 %v1467, 1.0
  %v1504 = vadd.f32 %v1469, 1.0
  %v1505 = vadd.f32 %v1471, 1.0
  %v1506 = vadd.f32 %v1473, 1.0
  %v1507 = vadd.f32 %v1475, 1.0
  %v1508 = vrcp.pop %v1476
  %v1509 = vmul.f32 %v1476, %v1508
  %v1510 = vsub.f32 1.0, %v1509
  %v1511 = vmul.f32 %v1508, %v1510
  %v1512 = vadd.f32 %v1508, %v1511
  %vm1513 = vweird.f32 %v1476
  %vm1514 = vweird.f32 %v1508
  %vm1515 = vmor %vm1513, %vm1514
  %v1516 = vsel %vm1515, %v1508, %v1512
  %v1517 = vand.u32 2147483647, %v1476
  %vm1518 = vcmp.eq.f32.partialorder %v1517, 8.507059e+37
  %v1519 = vand.u32 %v1476, 2147483648
  %v1520 = vor.u32 1.1754944e-38, %v1519
  %v1521 = vsel %vm1518, %v1520, %v1516
  %v1522 = vmul.f32 1.0, %v1521
  %v1523 = vrcp.pop %v1477
  %v1524 = vmul.f32 %v1477, %v1523
  %v1525 = vsub.f32 1.0, %v1524
  %v1526 = vmul.f32 %v1523, %v1525
  %v1527 = vadd.f32 %v1523, %v1526
  %vm1528 = vweird.f32 %v1477
  %vm1529 = vweird.f32 %v1523
  %vm1530 = vmor %vm1528, %vm1529
  %v1531 = vsel %vm1530, %v1523, %v1527
  %v1532 = vand.u32 2147483647, %v1477
  %vm1533 = vcmp.eq.f32.partialorder %v1532, 8.507059e+37
  %v1534 = vand.u32 %v1477, 2147483648
  %v1535 = vor.u32 1.1754944e-38, %v1534
  %v1536 = vsel %vm1533, %v1535, %v1531
  %v1537 = vmul.f32 1.0, %v1536
  %v1538 = vrcp.pop %v1478
  %v1539 = vmul.f32 %v1478, %v1538
  %v1540 = vsub.f32 1.0, %v1539
  %v1541 = vmul.f32 %v1538, %v1540
  %v1542 = vadd.f32 %v1538, %v1541
  %vm1543 = vweird.f32 %v1478
  %vm1544 = vweird.f32 %v1538
  %vm1545 = vmor %vm1543, %vm1544
  %v1546 = vsel %vm1545, %v1538, %v1542
  %v1547 = vand.u32 2147483647, %v1478
  %vm1548 = vcmp.eq.f32.partialorder %v1547, 8.507059e+37
  %v1549 = vand.u32 %v1478, 2147483648
  %v1550 = vor.u32 1.1754944e-38, %v1549
  %v1551 = vsel %vm1548, %v1550, %v1546
  %v1552 = vmul.f32 1.0, %v1551
  %v1553 = vrcp.pop %v1479
  %v1554 = vmul.f32 %v1479, %v1553
  %v1555 = vsub.f32 1.0, %v1554
  %v1556 = vmul.f32 %v1553, %v1555
  %v1557 = vadd.f32 %v1553, %v1556
  %vm1558 = vweird.f32 %v1479
  %vm1559 = vweird.f32 %v1553
  %vm1560 = vmor %vm1558, %vm1559
  %v1561 = vsel %vm1560, %v1553, %v1557
  %v1562 = vand.u32 2147483647, %v1479
  %vm1563 = vcmp.eq.f32.partialorder %v1562, 8.507059e+37
  %v1564 = vand.u32 %v1479, 2147483648
  %v1565 = vor.u32 1.1754944e-38, %v1564
  %v1566 = vsel %vm1563, %v1565, %v1561
  %v1567 = vmul.f32 1.0, %v1566
  %v1568 = vrcp.pop %v1480
  %v1569 = vmul.f32 %v1480, %v1568
  %v1570 = vsub.f32 1.0, %v1569
  %v1571 = vmul.f32 %v1568, %v1570
  %v1572 = vadd.f32 %v1568, %v1571
  %vm1573 = vweird.f32 %v1480
  %vm1574 = vweird.f32 %v1568
  %vm1575 = vmor %vm1573, %vm1574
  %v1576 = vsel %vm1575, %v1568, %v1572
  %v1577 = vand.u32 2147483647, %v1480
  %vm1578 = vcmp.eq.f32.partialorder %v1577, 8.507059e+37
  %v1579 = vand.u32 %v1480, 2147483648
  %v1580 = vor.u32 1.1754944e-38, %v1579
  %v1581 = vsel %vm1578, %v1580, %v1576
  %v1582 = vmul.f32 1.0, %v1581
  %v1583 = vrcp.pop %v1481
  %v1584 = vmul.f32 %v1481, %v1583
  %v1585 = vsub.f32 1.0, %v1584
  %v1586 = vmul.f32 %v1583, %v1585
  %v1587 = vadd.f32 %v1583, %v1586
  %vm1588 = vweird.f32 %v1481
  %vm1589 = vweird.f32 %v1583
  %vm1590 = vmor %vm1588, %vm1589
  %v1591 = vsel %vm1590, %v1583, %v1587
  %v1592 = vand.u32 2147483647, %v1481
  %vm1593 = vcmp.eq.f32.partialorder %v1592, 8.507059e+37
  %v1594 = vand.u32 %v1481, 2147483648
  %v1595 = vor.u32 1.1754944e-38, %v1594
  %v1596 = vsel %vm1593, %v1595, %v1591
  %v1597 = vmul.f32 1.0, %v1596
  %v1598 = vrcp.pop %v1482
  %v1599 = vmul.f32 %v1482, %v1598
  %v1600 = vsub.f32 1.0, %v1599
  %v1601 = vmul.f32 %v1598, %v1600
  %v1602 = vadd.f32 %v1598, %v1601
  %vm1603 = vweird.f32 %v1482
  %vm1604 = vweird.f32 %v1598
  %vm1605 = vmor %vm1603, %vm1604
  %v1606 = vsel %vm1605, %v1598, %v1602
  %v1607 = vand.u32 2147483647, %v1482
  %vm1608 = vcmp.eq.f32.partialorder %v1607, 8.507059e+37
  %v1609 = vand.u32 %v1482, 2147483648
  %v1610 = vor.u32 1.1754944e-38, %v1609
  %v1611 = vsel %vm1608, %v1610, %v1606
  %v1612 = vmul.f32 1.0, %v1611
  %v1613 = vrcp.pop %v1483
  %v1614 = vmul.f32 %v1483, %v1613
  %v1615 = vsub.f32 1.0, %v1614
  %v1616 = vmul.f32 %v1613, %v1615
  %v1617 = vadd.f32 %v1613, %v1616
  %vm1618 = vweird.f32 %v1483
  %vm1619 = vweird.f32 %v1613
  %vm1620 = vmor %vm1618, %vm1619
  %v1621 = vsel %vm1620, %v1613, %v1617
  %v1622 = vand.u32 2147483647, %v1483
  %vm1623 = vcmp.eq.f32.partialorder %v1622, 8.507059e+37
  %v1624 = vand.u32 %v1483, 2147483648
  %v1625 = vor.u32 1.1754944e-38, %v1624
  %v1626 = vsel %vm1623, %v1625, %v1621
  %v1627 = vmul.f32 1.0, %v1626
  %v1628 = vrcp.pop %v1484
  %v1629 = vmul.f32 %v1484, %v1628
  %v1630 = vsub.f32 1.0, %v1629
  %v1631 = vmul.f32 %v1628, %v1630
  %v1632 = vadd.f32 %v1628, %v1631
  %vm1633 = vweird.f32 %v1484
  %vm1634 = vweird.f32 %v1628
  %vm1635 = vmor %vm1633, %vm1634
  %v1636 = vsel %vm1635, %v1628, %v1632
  %v1637 = vand.u32 2147483647, %v1484
  %vm1638 = vcmp.eq.f32.partialorder %v1637, 8.507059e+37
  %v1639 = vand.u32 %v1484, 2147483648
  %v1640 = vor.u32 1.1754944e-38, %v1639
  %v1641 = vsel %vm1638, %v1640, %v1636
  %v1642 = vmul.f32 1.0, %v1641
  %v1643 = vrcp.pop %v1485
  %v1644 = vmul.f32 %v1485, %v1643
  %v1645 = vsub.f32 1.0, %v1644
  %v1646 = vmul.f32 %v1643, %v1645
  %v1647 = vadd.f32 %v1643, %v1646
  %vm1648 = vweird.f32 %v1485
  %vm1649 = vweird.f32 %v1643
  %vm1650 = vmor %vm1648, %vm1649
  %v1651 = vsel %vm1650, %v1643, %v1647
  %v1652 = vand.u32 2147483647, %v1485
  %vm1653 = vcmp.eq.f32.partialorder %v1652, 8.507059e+37
  %v1654 = vand.u32 %v1485, 2147483648
  %v1655 = vor.u32 1.1754944e-38, %v1654
  %v1656 = vsel %vm1653, %v1655, %v1651
  %v1657 = vmul.f32 1.0, %v1656
  %v1658 = vrcp.pop %v1486
  %v1659 = vmul.f32 %v1486, %v1658
  %v1660 = vsub.f32 1.0, %v1659
  %v1661 = vmul.f32 %v1658, %v1660
  %v1662 = vadd.f32 %v1658, %v1661
  %vm1663 = vweird.f32 %v1486
  %vm1664 = vweird.f32 %v1658
  %vm1665 = vmor %vm1663, %vm1664
  %v1666 = vsel %vm1665, %v1658, %v1662
  %v1667 = vand.u32 2147483647, %v1486
  %vm1668 = vcmp.eq.f32.partialorder %v1667, 8.507059e+37
  %v1669 = vand.u32 %v1486, 2147483648
  %v1670 = vor.u32 1.1754944e-38, %v1669
  %v1671 = vsel %vm1668, %v1670, %v1666
  %v1672 = vmul.f32 1.0, %v1671
  %v1673 = vrcp.pop %v1487
  %v1674 = vmul.f32 %v1487, %v1673
  %v1675 = vsub.f32 1.0, %v1674
  %v1676 = vmul.f32 %v1673, %v1675
  %v1677 = vadd.f32 %v1673, %v1676
  %vm1678 = vweird.f32 %v1487
  %vm1679 = vweird.f32 %v1673
  %vm1680 = vmor %vm1678, %vm1679
  %v1681 = vsel %vm1680, %v1673, %v1677
  %v1682 = vand.u32 2147483647, %v1487
  %vm1683 = vcmp.eq.f32.partialorder %v1682, 8.507059e+37
  %v1684 = vand.u32 %v1487, 2147483648
  %v1685 = vor.u32 1.1754944e-38, %v1684
  %v1686 = vsel %vm1683, %v1685, %v1681
  %v1687 = vmul.f32 1.0, %v1686
  %v1688 = vrcp.pop %v1488
  %v1689 = vmul.f32 %v1488, %v1688
  %v1690 = vsub.f32 1.0, %v1689
  %v1691 = vmul.f32 %v1688, %v1690
  %v1692 = vadd.f32 %v1688, %v1691
  %vm1693 = vweird.f32 %v1488
  %vm1694 = vweird.f32 %v1688
  %vm1695 = vmor %vm1693, %vm1694
  %v1696 = vsel %vm1695, %v1688, %v1692
  %v1697 = vand.u32 2147483647, %v1488
  %vm1698 = vcmp.eq.f32.partialorder %v1697, 8.507059e+37
  %v1699 = vand.u32 %v1488, 2147483648
  %v1700 = vor.u32 1.1754944e-38, %v1699
  %v1701 = vsel %vm1698, %v1700, %v1696
  %v1702 = vmul.f32 1.0, %v1701
  %v1703 = vrcp.pop %v1489
  %v1704 = vmul.f32 %v1489, %v1703
  %v1705 = vsub.f32 1.0, %v1704
  %v1706 = vmul.f32 %v1703, %v1705
  %v1707 = vadd.f32 %v1703, %v1706
  %vm1708 = vweird.f32 %v1489
  %vm1709 = vweird.f32 %v1703
  %vm1710 = vmor %vm1708, %vm1709
  %v1711 = vsel %vm1710, %v1703, %v1707
  %v1712 = vand.u32 2147483647, %v1489
  %vm1713 = vcmp.eq.f32.partialorder %v1712, 8.507059e+37
  %v1714 = vand.u32 %v1489, 2147483648
  %v1715 = vor.u32 1.1754944e-38, %v1714
  %v1716 = vsel %vm1713, %v1715, %v1711
  %v1717 = vmul.f32 1.0, %v1716
  %v1718 = vrcp.pop %v1490
  %v1719 = vmul.f32 %v1490, %v1718
  %v1720 = vsub.f32 1.0, %v1719
  %v1721 = vmul.f32 %v1718, %v1720
  %v1722 = vadd.f32 %v1718, %v1721
  %vm1723 = vweird.f32 %v1490
  %vm1724 = vweird.f32 %v1718
  %vm1725 = vmor %vm1723, %vm1724
  %v1726 = vsel %vm1725, %v1718, %v1722
  %v1727 = vand.u32 2147483647, %v1490
  %vm1728 = vcmp.eq.f32.partialorder %v1727, 8.507059e+37
  %v1729 = vand.u32 %v1490, 2147483648
  %v1730 = vor.u32 1.1754944e-38, %v1729
  %v1731 = vsel %vm1728, %v1730, %v1726
  %v1732 = vmul.f32 1.0, %v1731
  %v1733 = vrcp.pop %v1491
  %v1734 = vmul.f32 %v1491, %v1733
  %v1735 = vsub.f32 1.0, %v1734
  %v1736 = vmul.f32 %v1733, %v1735
  %v1737 = vadd.f32 %v1733, %v1736
  %vm1738 = vweird.f32 %v1491
  %vm1739 = vweird.f32 %v1733
  %vm1740 = vmor %vm1738, %vm1739
  %v1741 = vsel %vm1740, %v1733, %v1737
  %v1742 = vand.u32 2147483647, %v1491
  %vm1743 = vcmp.eq.f32.partialorder %v1742, 8.507059e+37
  %v1744 = vand.u32 %v1491, 2147483648
  %v1745 = vor.u32 1.1754944e-38, %v1744
  %v1746 = vsel %vm1743, %v1745, %v1741
  %v1747 = vmul.f32 1.0, %v1746
  %v1748 = vrcp.pop %v1492
  %v1749 = vmul.f32 %v1492, %v1748
  %v1750 = vsub.f32 1.0, %v1749
  %v1751 = vmul.f32 %v1748, %v1750
  %v1752 = vadd.f32 %v1748, %v1751
  %vm1753 = vweird.f32 %v1492
  %vm1754 = vweird.f32 %v1748
  %vm1755 = vmor %vm1753, %vm1754
  %v1756 = vsel %vm1755, %v1748, %v1752
  %v1757 = vand.u32 2147483647, %v1492
  %vm1758 = vcmp.eq.f32.partialorder %v1757, 8.507059e+37
  %v1759 = vand.u32 %v1492, 2147483648
  %v1760 = vor.u32 1.1754944e-38, %v1759
  %v1761 = vsel %vm1758, %v1760, %v1756
  %v1762 = vmul.f32 1.0, %v1761
  %v1763 = vrcp.pop %v1493
  %v1764 = vmul.f32 %v1493, %v1763
  %v1765 = vsub.f32 1.0, %v1764
  %v1766 = vmul.f32 %v1763, %v1765
  %v1767 = vadd.f32 %v1763, %v1766
  %vm1768 = vweird.f32 %v1493
  %vm1769 = vweird.f32 %v1763
  %vm1770 = vmor %vm1768, %vm1769
  %v1771 = vsel %vm1770, %v1763, %v1767
  %v1772 = vand.u32 2147483647, %v1493
  %vm1773 = vcmp.eq.f32.partialorder %v1772, 8.507059e+37
  %v1774 = vand.u32 %v1493, 2147483648
  %v1775 = vor.u32 1.1754944e-38, %v1774
  %v1776 = vsel %vm1773, %v1775, %v1771
  %v1777 = vmul.f32 1.0, %v1776
  %v1778 = vrcp.pop %v1494
  %v1779 = vmul.f32 %v1494, %v1778
  %v1780 = vsub.f32 1.0, %v1779
  %v1781 = vmul.f32 %v1778, %v1780
  %v1782 = vadd.f32 %v1778, %v1781
  %vm1783 = vweird.f32 %v1494
  %vm1784 = vweird.f32 %v1778
  %vm1785 = vmor %vm1783, %vm1784
  %v1786 = vsel %vm1785, %v1778, %v1782
  %v1787 = vand.u32 2147483647, %v1494
  %vm1788 = vcmp.eq.f32.partialorder %v1787, 8.507059e+37
  %v1789 = vand.u32 %v1494, 2147483648
  %v1790 = vor.u32 1.1754944e-38, %v1789
  %v1791 = vsel %vm1788, %v1790, %v1786
  %v1792 = vmul.f32 1.0, %v1791
  %v1793 = vrcp.pop %v1495
  %v1794 = vmul.f32 %v1495, %v1793
  %v1795 = vsub.f32 1.0, %v1794
  %v1796 = vmul.f32 %v1793, %v1795
  %v1797 = vadd.f32 %v1793, %v1796
  %vm1798 = vweird.f32 %v1495
  %vm1799 = vweird.f32 %v1793
  %vm1800 = vmor %vm1798, %vm1799
  %v1801 = vsel %vm1800, %v1793, %v1797
  %v1802 = vand.u32 2147483647, %v1495
  %vm1803 = vcmp.eq.f32.partialorder %v1802, 8.507059e+37
  %v1804 = vand.u32 %v1495, 2147483648
  %v1805 = vor.u32 1.1754944e-38, %v1804
  %v1806 = vsel %vm1803, %v1805, %v1801
  %v1807 = vmul.f32 1.0, %v1806
  %v1808 = vrcp.pop %v1496
  %v1809 = vmul.f32 %v1496, %v1808
  %v1810 = vsub.f32 1.0, %v1809
  %v1811 = vmul.f32 %v1808, %v1810
  %v1812 = vadd.f32 %v1808, %v1811
  %vm1813 = vweird.f32 %v1496
  %vm1814 = vweird.f32 %v1808
  %vm1815 = vmor %vm1813, %vm1814
  %v1816 = vsel %vm1815, %v1808, %v1812
  %v1817 = vand.u32 2147483647, %v1496
  %vm1818 = vcmp.eq.f32.partialorder %v1817, 8.507059e+37
  %v1819 = vand.u32 %v1496, 2147483648
  %v1820 = vor.u32 1.1754944e-38, %v1819
  %v1821 = vsel %vm1818, %v1820, %v1816
  %v1822 = vmul.f32 1.0, %v1821
  %v1823 = vrcp.pop %v1497
  %v1824 = vmul.f32 %v1497, %v1823
  %v1825 = vsub.f32 1.0, %v1824
  %v1826 = vmul.f32 %v1823, %v1825
  %v1827 = vadd.f32 %v1823, %v1826
  %vm1828 = vweird.f32 %v1497
  %vm1829 = vweird.f32 %v1823
  %vm1830 = vmor %vm1828, %vm1829
  %v1831 = vsel %vm1830, %v1823, %v1827
  %v1832 = vand.u32 2147483647, %v1497
  %vm1833 = vcmp.eq.f32.partialorder %v1832, 8.507059e+37
  %v1834 = vand.u32 %v1497, 2147483648
  %v1835 = vor.u32 1.1754944e-38, %v1834
  %v1836 = vsel %vm1833, %v1835, %v1831
  %v1837 = vmul.f32 1.0, %v1836
  %v1838 = vrcp.pop %v1498
  %v1839 = vmul.f32 %v1498, %v1838
  %v1840 = vsub.f32 1.0, %v1839
  %v1841 = vmul.f32 %v1838, %v1840
  %v1842 = vadd.f32 %v1838, %v1841
  %vm1843 = vweird.f32 %v1498
  %vm1844 = vweird.f32 %v1838
  %vm1845 = vmor %vm1843, %vm1844
  %v1846 = vsel %vm1845, %v1838, %v1842
  %v1847 = vand.u32 2147483647, %v1498
  %vm1848 = vcmp.eq.f32.partialorder %v1847, 8.507059e+37
  %v1849 = vand.u32 %v1498, 2147483648
  %v1850 = vor.u32 1.1754944e-38, %v1849
  %v1851 = vsel %vm1848, %v1850, %v1846
  %v1852 = vmul.f32 1.0, %v1851
  %v1853 = vrcp.pop %v1499
  %v1854 = vmul.f32 %v1499, %v1853
  %v1855 = vsub.f32 1.0, %v1854
  %v1856 = vmul.f32 %v1853, %v1855
  %v1857 = vadd.f32 %v1853, %v1856
  %vm1858 = vweird.f32 %v1499
  %vm1859 = vweird.f32 %v1853
  %vm1860 = vmor %vm1858, %vm1859
  %v1861 = vsel %vm1860, %v1853, %v1857
  %v1862 = vand.u32 2147483647, %v1499
  %vm1863 = vcmp.eq.f32.partialorder %v1862, 8.507059e+37
  %v1864 = vand.u32 %v1499, 2147483648
  %v1865 = vor.u32 1.1754944e-38, %v1864
  %v1866 = vsel %vm1863, %v1865, %v1861
  %v1867 = vmul.f32 1.0, %v1866
  %v1868 = vrcp.pop %v1500
  %v1869 = vmul.f32 %v1500, %v1868
  %v1870 = vsub.f32 1.0, %v1869
  %v1871 = vmul.f32 %v1868, %v1870
  %v1872 = vadd.f32 %v1868, %v1871
  %vm1873 = vweird.f32 %v1500
  %vm1874 = vweird.f32 %v1868
  %vm1875 = vmor %vm1873, %vm1874
  %v1876 = vsel %vm1875, %v1868, %v1872
  %v1877 = vand.u32 2147483647, %v1500
  %vm1878 = vcmp.eq.f32.partialorder %v1877, 8.507059e+37
  %v1879 = vand.u32 %v1500, 2147483648
  %v1880 = vor.u32 1.1754944e-38, %v1879
  %v1881 = vsel %vm1878, %v1880, %v1876
  %v1882 = vmul.f32 1.0, %v1881
  %v1883 = vrcp.pop %v1501
  %v1884 = vmul.f32 %v1501, %v1883
  %v1885 = vsub.f32 1.0, %v1884
  %v1886 = vmul.f32 %v1883, %v1885
  %v1887 = vadd.f32 %v1883, %v1886
  %vm1888 = vweird.f32 %v1501
  %vm1889 = vweird.f32 %v1883
  %vm1890 = vmor %vm1888, %vm1889
  %v1891 = vsel %vm1890, %v1883, %v1887
  %v1892 = vand.u32 2147483647, %v1501
  %vm1893 = vcmp.eq.f32.partialorder %v1892, 8.507059e+37
  %v1894 = vand.u32 %v1501, 2147483648
  %v1895 = vor.u32 1.1754944e-38, %v1894
  %v1896 = vsel %vm1893, %v1895, %v1891
  %v1897 = vmul.f32 1.0, %v1896
  %v1898 = vrcp.pop %v1502
  %v1899 = vmul.f32 %v1502, %v1898
  %v1900 = vsub.f32 1.0, %v1899
  %v1901 = vmul.f32 %v1898, %v1900
  %v1902 = vadd.f32 %v1898, %v1901
  %vm1903 = vweird.f32 %v1502
  %vm1904 = vweird.f32 %v1898
  %vm1905 = vmor %vm1903, %vm1904
  %v1906 = vsel %vm1905, %v1898, %v1902
  %v1907 = vand.u32 2147483647, %v1502
  %vm1908 = vcmp.eq.f32.partialorder %v1907, 8.507059e+37
  %v1909 = vand.u32 %v1502, 2147483648
  %v1910 = vor.u32 1.1754944e-38, %v1909
  %v1911 = vsel %vm1908, %v1910, %v1906
  %v1912 = vmul.f32 1.0, %v1911
  %v1913 = vrcp.pop %v1503
  %v1914 = vmul.f32 %v1503, %v1913
  %v1915 = vsub.f32 1.0, %v1914
  %v1916 = vmul.f32 %v1913, %v1915
  %v1917 = vadd.f32 %v1913, %v1916
  %vm1918 = vweird.f32 %v1503
  %vm1919 = vweird.f32 %v1913
  %vm1920 = vmor %vm1918, %vm1919
  %v1921 = vsel %vm1920, %v1913, %v1917
  %v1922 = vand.u32 2147483647, %v1503
  %vm1923 = vcmp.eq.f32.partialorder %v1922, 8.507059e+37
  %v1924 = vand.u32 %v1503, 2147483648
  %v1925 = vor.u32 1.1754944e-38, %v1924
  %v1926 = vsel %vm1923, %v1925, %v1921
  %v1927 = vmul.f32 1.0, %v1926
  %v1928 = vrcp.pop %v1504
  %v1929 = vmul.f32 %v1504, %v1928
  %v1930 = vsub.f32 1.0, %v1929
  %v1931 = vmul.f32 %v1928, %v1930
  %v1932 = vadd.f32 %v1928, %v1931
  %vm1933 = vweird.f32 %v1504
  %vm1934 = vweird.f32 %v1928
  %vm1935 = vmor %vm1933, %vm1934
  %v1936 = vsel %vm1935, %v1928, %v1932
  %v1937 = vand.u32 2147483647, %v1504
  %vm1938 = vcmp.eq.f32.partialorder %v1937, 8.507059e+37
  %v1939 = vand.u32 %v1504, 2147483648
  %v1940 = vor.u32 1.1754944e-38, %v1939
  %v1941 = vsel %vm1938, %v1940, %v1936
  %v1942 = vmul.f32 1.0, %v1941
  %v1943 = vrcp.pop %v1505
  %v1944 = vmul.f32 %v1505, %v1943
  %v1945 = vsub.f32 1.0, %v1944
  %v1946 = vmul.f32 %v1943, %v1945
  %v1947 = vadd.f32 %v1943, %v1946
  %vm1948 = vweird.f32 %v1505
  %vm1949 = vweird.f32 %v1943
  %vm1950 = vmor %vm1948, %vm1949
  %v1951 = vsel %vm1950, %v1943, %v1947
  %v1952 = vand.u32 2147483647, %v1505
  %vm1953 = vcmp.eq.f32.partialorder %v1952, 8.507059e+37
  %v1954 = vand.u32 %v1505, 2147483648
  %v1955 = vor.u32 1.1754944e-38, %v1954
  %v1956 = vsel %vm1953, %v1955, %v1951
  %v1957 = vmul.f32 1.0, %v1956
  %v1958 = vrcp.pop %v1506
  %v1959 = vmul.f32 %v1506, %v1958
  %v1960 = vsub.f32 1.0, %v1959
  %v1961 = vmul.f32 %v1958, %v1960
  %v1962 = vadd.f32 %v1958, %v1961
  %vm1963 = vweird.f32 %v1506
  %vm1964 = vweird.f32 %v1958
  %vm1965 = vmor %vm1963, %vm1964
  %v1966 = vsel %vm1965, %v1958, %v1962
  %v1967 = vand.u32 2147483647, %v1506
  %vm1968 = vcmp.eq.f32.partialorder %v1967, 8.507059e+37
  %v1969 = vand.u32 %v1506, 2147483648
  %v1970 = vor.u32 1.1754944e-38, %v1969
  %v1971 = vsel %vm1968, %v1970, %v1966
  %v1972 = vmul.f32 1.0, %v1971
  %v1973 = vrcp.pop %v1507
  %v1974 = vmul.f32 %v1507, %v1973
  %v1975 = vsub.f32 1.0, %v1974
  %v1976 = vmul.f32 %v1973, %v1975
  %v1977 = vadd.f32 %v1973, %v1976
  %vm1978 = vweird.f32 %v1507
  %vm1979 = vweird.f32 %v1973
  %vm1980 = vmor %vm1978, %vm1979
  %v1981 = vsel %vm1980, %v1973, %v1977
  %v1982 = vand.u32 2147483647, %v1507
  %vm1983 = vcmp.eq.f32.partialorder %v1982, 8.507059e+37
  %v1984 = vand.u32 %v1507, 2147483648
  %v1985 = vor.u32 1.1754944e-38, %v1984
  %v1986 = vsel %vm1983, %v1985, %v1981
  %v1987 = vmul.f32 1.0, %v1986
  %v1988 = vmul.f32 %v1254, %v1522
  %v1989 = vmul.f32 %v1258, %v1537
  %v1990 = vmul.f32 %v1262, %v1552
  %v1991 = vmul.f32 %v1266, %v1567
  %v1992 = vmul.f32 %v1270, %v1582
  %v1993 = vmul.f32 %v1274, %v1597
  %v1994 = vmul.f32 %v1278, %v1612
  %v1995 = vmul.f32 %v1282, %v1627
  %v1996 = vmul.f32 %v1286, %v1642
  %v1997 = vmul.f32 %v1290, %v1657
  %v1998 = vmul.f32 %v1294, %v1672
  %v1999 = vmul.f32 %v1298, %v1687
  %v2000 = vmul.f32 %v1302, %v1702
  %v2001 = vmul.f32 %v1306, %v1717
  %v2002 = vmul.f32 %v1310, %v1732
  %v2003 = vmul.f32 %v1314, %v1747
  %v2004 = vmul.f32 %v1318, %v1762
  %v2005 = vmul.f32 %v1322, %v1777
  %v2006 = vmul.f32 %v1326, %v1792
  %v2007 = vmul.f32 %v1330, %v1807
  %v2008 = vmul.f32 %v1334, %v1822
  %v2009 = vmul.f32 %v1338, %v1837
  %v2010 = vmul.f32 %v1342, %v1852
  %v2011 = vmul.f32 %v1346, %v1867
  %v2012 = vmul.f32 %v1350, %v1882
  %v2013 = vmul.f32 %v1354, %v1897
  %v2014 = vmul.f32 %v1358, %v1912
  %v2015 = vmul.f32 %v1362, %v1927
  %v2016 = vmul.f32 %v1366, %v1942
  %v2017 = vmul.f32 %v1370, %v1957
  %v2018 = vmul.f32 %v1374, %v1972
  %v2019 = vmul.f32 %v1378, %v1987
  %v2020 = vld [vmem:[%s3] sm:$0xff]
  %v2021 = vld [vmem:[%s3 + $0x8] sm:$0xff]
  %v2022 = vld [vmem:[%s3 + $0x10] sm:$0xff]
  %v2023 = vld [vmem:[%s3 + $0x18] sm:$0xff]
  %v2024 = vld [vmem:[%s3 + $0x20] sm:$0xff]
  %v2025 = vld [vmem:[%s3 + $0x28] sm:$0xff]
  %v2026 = vld [vmem:[%s3 + $0x30] sm:$0xff]
  %v2027 = vld [vmem:[%s3 + $0x38] sm:$0xff]
  %v2028 = vld [vmem:[%s3 + $0x40] sm:$0xff]
  %v2029 = vld [vmem:[%s3 + $0x48] sm:$0xff]
  %v2030 = vld [vmem:[%s3 + $0x50] sm:$0xff]
  %v2031 = vld [vmem:[%s3 + $0x58] sm:$0xff]
  %v2032 = vld [vmem:[%s3 + $0x60] sm:$0xff]
  %v2033 = vld [vmem:[%s3 + $0x68] sm:$0xff]
  %v2034 = vld [vmem:[%s3 + $0x70] sm:$0xff]
  %v2035 = vld [vmem:[%s3 + $0x78] sm:$0xff]
  %v2036 = vld [vmem:[%s4] sm:$0x1]
  %v2038 = vperm.slane %v2036, 0
  %v2040 = vand.u32 %v2035, 4294901760
  %2041 = vmatpush.msra.mxu0 %v2040
  %v2042 = vand.u32 %v2034, 4294901760
  %2043 = vmatpush.msra.mxu0 %v2042
  %v2044 = vand.u32 %v2033, 4294901760
  %2045 = vmatpush.msra.mxu0 %v2044
  %v2046 = vand.u32 %v2032, 4294901760
  %2047 = vmatpush.msra.mxu0 %v2046
  %v2048 = vand.u32 %v2031, 4294901760
  %2049 = vmatpush.msra.mxu0 %v2048
  %v2050 = vand.u32 %v2030, 4294901760
  %2051 = vmatpush.msra.mxu0 %v2050
  %v2052 = vand.u32 %v2029, 4294901760
  %2053 = vmatpush.msra.mxu0 %v2052
  %v2054 = vand.u32 %v2028, 4294901760
  %2055 = vmatpush.msra.mxu0 %v2054
  %v2056 = vand.u32 %v2027, 4294901760
  %2057 = vmatpush.msra.mxu0 %v2056
  %v2058 = vand.u32 %v2026, 4294901760
  %2059 = vmatpush.msra.mxu0 %v2058
  %v2060 = vand.u32 %v2025, 4294901760
  %2061 = vmatpush.msra.mxu0 %v2060
  %v2062 = vand.u32 %v2024, 4294901760
  %2063 = vmatpush.msra.mxu0 %v2062
  %v2064 = vand.u32 %v2023, 4294901760
  %2065 = vmatpush.msra.mxu0 %v2064
  %v2066 = vand.u32 %v2022, 4294901760
  %2067 = vmatpush.msra.mxu0 %v2066
  %v2068 = vand.u32 %v2021, 4294901760
  %2069 = vmatpush.msra.mxu0 %v2068
  %v2070 = vand.u32 %v2020, 4294901760
  %2071 = vmatpush.msra.mxu0 %v2070
  %v2072 = vand.u32 %v1988, 4294901760
  %v2073 = vsub.f32 %v1988, %v2072
  %v2074 = vand.u32 %v2073, 4294901760
  %v2075 = vsub.f32 %v2073, %v2074
  %v2076 = vand.u32 %v2075, 4294901760
  %2077 = vmatmul.f32.gmra.mxu0 %v2076
  %v2078 = vpop.f32.mrf.mxu0
  %v2079 = vadd.f32 %v2038, %v2078
  %v2080 = vand.u32 %v1989, 4294901760
  %v2081 = vsub.f32 %v1989, %v2080
  %v2082 = vand.u32 %v2081, 4294901760
  %v2083 = vsub.f32 %v2081, %v2082
  %v2084 = vand.u32 %v2083, 4294901760
  %2085 = vmatmul.f32.gmra.mxu0 %v2084
  %v2086 = vpop.f32.mrf.mxu0
  %v2087 = vadd.f32 %v2038, %v2086
  %v2088 = vand.u32 %v1990, 4294901760
  %v2089 = vsub.f32 %v1990, %v2088
  %v2090 = vand.u32 %v2089, 4294901760
  %v2091 = vsub.f32 %v2089, %v2090
  %v2092 = vand.u32 %v2091, 4294901760
  %2093 = vmatmul.f32.gmra.mxu0 %v2092
  %v2094 = vpop.f32.mrf.mxu0
  %v2095 = vadd.f32 %v2038, %v2094
  %v2096 = vand.u32 %v1991, 4294901760
  %v2097 = vsub.f32 %v1991, %v2096
  %v2098 = vand.u32 %v2097, 4294901760
  %v2099 = vsub.f32 %v2097, %v2098
  %v2100 = vand.u32 %v2099, 4294901760
  %2101 = vmatmul.f32.gmra.mxu0 %v2100
  %v2102 = vpop.f32.mrf.mxu0
  %v2103 = vadd.f32 %v2038, %v2102
  %v2104 = vand.u32 %v1992, 4294901760
  %v2105 = vsub.f32 %v1992, %v2104
  %v2106 = vand.u32 %v2105, 4294901760
  %v2107 = vsub.f32 %v2105, %v2106
  %v2108 = vand.u32 %v2107, 4294901760
  %2109 = vmatmul.f32.gmra.mxu0 %v2108
  %v2110 = vpop.f32.mrf.mxu0
  %v2111 = vadd.f32 %v2038, %v2110
  %v2112 = vand.u32 %v1993, 4294901760
  %v2113 = vsub.f32 %v1993, %v2112
  %v2114 = vand.u32 %v2113, 4294901760
  %v2115 = vsub.f32 %v2113, %v2114
  %v2116 = vand.u32 %v2115, 4294901760
  %2117 = vmatmul.f32.gmra.mxu0 %v2116
  %v2118 = vpop.f32.mrf.mxu0
  %v2119 = vadd.f32 %v2038, %v2118
  %v2120 = vand.u32 %v1994, 4294901760
  %v2121 = vsub.f32 %v1994, %v2120
  %v2122 = vand.u32 %v2121, 4294901760
  %v2123 = vsub.f32 %v2121, %v2122
  %v2124 = vand.u32 %v2123, 4294901760
  %2125 = vmatmul.f32.gmra.mxu0 %v2124
  %v2126 = vpop.f32.mrf.mxu0
  %v2127 = vadd.f32 %v2038, %v2126
  %v2128 = vand.u32 %v1995, 4294901760
  %v2129 = vsub.f32 %v1995, %v2128
  %v2130 = vand.u32 %v2129, 4294901760
  %v2131 = vsub.f32 %v2129, %v2130
  %v2132 = vand.u32 %v2131, 4294901760
  %2133 = vmatmul.f32.gmra.mxu0 %v2132
  %v2134 = vpop.f32.mrf.mxu0
  %v2135 = vadd.f32 %v2038, %v2134
  %v2136 = vand.u32 %v1996, 4294901760
  %v2137 = vsub.f32 %v1996, %v2136
  %v2138 = vand.u32 %v2137, 4294901760
  %v2139 = vsub.f32 %v2137, %v2138
  %v2140 = vand.u32 %v2139, 4294901760
  %2141 = vmatmul.f32.gmra.mxu0 %v2140
  %v2142 = vpop.f32.mrf.mxu0
  %v2143 = vadd.f32 %v2038, %v2142
  %v2144 = vand.u32 %v1997, 4294901760
  %v2145 = vsub.f32 %v1997, %v2144
  %v2146 = vand.u32 %v2145, 4294901760
  %v2147 = vsub.f32 %v2145, %v2146
  %v2148 = vand.u32 %v2147, 4294901760
  %2149 = vmatmul.f32.gmra.mxu0 %v2148
  %v2150 = vpop.f32.mrf.mxu0
  %v2151 = vadd.f32 %v2038, %v2150
  %v2152 = vand.u32 %v1998, 4294901760
  %v2153 = vsub.f32 %v1998, %v2152
  %v2154 = vand.u32 %v2153, 4294901760
  %v2155 = vsub.f32 %v2153, %v2154
  %v2156 = vand.u32 %v2155, 4294901760
  %2157 = vmatmul.f32.gmra.mxu0 %v2156
  %v2158 = vpop.f32.mrf.mxu0
  %v2159 = vadd.f32 %v2038, %v2158
  %v2160 = vand.u32 %v1999, 4294901760
  %v2161 = vsub.f32 %v1999, %v2160
  %v2162 = vand.u32 %v2161, 4294901760
  %v2163 = vsub.f32 %v2161, %v2162
  %v2164 = vand.u32 %v2163, 4294901760
  %2165 = vmatmul.f32.gmra.mxu0 %v2164
  %v2166 = vpop.f32.mrf.mxu0
  %v2167 = vadd.f32 %v2038, %v2166
  %v2168 = vand.u32 %v2000, 4294901760
  %v2169 = vsub.f32 %v2000, %v2168
  %v2170 = vand.u32 %v2169, 4294901760
  %v2171 = vsub.f32 %v2169, %v2170
  %v2172 = vand.u32 %v2171, 4294901760
  %2173 = vmatmul.f32.gmra.mxu0 %v2172
  %v2174 = vpop.f32.mrf.mxu0
  %v2175 = vadd.f32 %v2038, %v2174
  %v2176 = vand.u32 %v2001, 4294901760
  %v2177 = vsub.f32 %v2001, %v2176
  %v2178 = vand.u32 %v2177, 4294901760
  %v2179 = vsub.f32 %v2177, %v2178
  %v2180 = vand.u32 %v2179, 4294901760
  %2181 = vmatmul.f32.gmra.mxu0 %v2180
  %v2182 = vpop.f32.mrf.mxu0
  %v2183 = vadd.f32 %v2038, %v2182
  %v2184 = vand.u32 %v2002, 4294901760
  %v2185 = vsub.f32 %v2002, %v2184
  %v2186 = vand.u32 %v2185, 4294901760
  %v2187 = vsub.f32 %v2185, %v2186
  %v2188 = vand.u32 %v2187, 4294901760
  %2189 = vmatmul.f32.gmra.mxu0 %v2188
  %v2190 = vpop.f32.mrf.mxu0
  %v2191 = vadd.f32 %v2038, %v2190
  %v2192 = vand.u32 %v2003, 4294901760
  %v2193 = vsub.f32 %v2003, %v2192
  %v2194 = vand.u32 %v2193, 4294901760
  %v2195 = vsub.f32 %v2193, %v2194
  %v2196 = vand.u32 %v2195, 4294901760
  %2197 = vmatmul.f32.gmra.mxu0 %v2196
  %v2198 = vpop.f32.mrf.mxu0
  %v2199 = vadd.f32 %v2038, %v2198
  %v2200 = vand.u32 %v2004, 4294901760
  %v2201 = vsub.f32 %v2004, %v2200
  %v2202 = vand.u32 %v2201, 4294901760
  %v2203 = vsub.f32 %v2201, %v2202
  %v2204 = vand.u32 %v2203, 4294901760
  %2205 = vmatmul.f32.gmra.mxu0 %v2204
  %v2206 = vpop.f32.mrf.mxu0
  %v2207 = vadd.f32 %v2038, %v2206
  %v2208 = vand.u32 %v2005, 4294901760
  %v2209 = vsub.f32 %v2005, %v2208
  %v2210 = vand.u32 %v2209, 4294901760
  %v2211 = vsub.f32 %v2209, %v2210
  %v2212 = vand.u32 %v2211, 4294901760
  %2213 = vmatmul.f32.gmra.mxu0 %v2212
  %v2214 = vpop.f32.mrf.mxu0
  %v2215 = vadd.f32 %v2038, %v2214
  %v2216 = vand.u32 %v2006, 4294901760
  %v2217 = vsub.f32 %v2006, %v2216
  %v2218 = vand.u32 %v2217, 4294901760
  %v2219 = vsub.f32 %v2217, %v2218
  %v2220 = vand.u32 %v2219, 4294901760
  %2221 = vmatmul.f32.gmra.mxu0 %v2220
  %v2222 = vpop.f32.mrf.mxu0
  %v2223 = vadd.f32 %v2038, %v2222
  %v2224 = vand.u32 %v2007, 4294901760
  %v2225 = vsub.f32 %v2007, %v2224
  %v2226 = vand.u32 %v2225, 4294901760
  %v2227 = vsub.f32 %v2225, %v2226
  %v2228 = vand.u32 %v2227, 4294901760
  %2229 = vmatmul.f32.gmra.mxu0 %v2228
  %v2230 = vpop.f32.mrf.mxu0
  %v2231 = vadd.f32 %v2038, %v2230
  %v2232 = vand.u32 %v2008, 4294901760
  %v2233 = vsub.f32 %v2008, %v2232
  %v2234 = vand.u32 %v2233, 4294901760
  %v2235 = vsub.f32 %v2233, %v2234
  %v2236 = vand.u32 %v2235, 4294901760
  %2237 = vmatmul.f32.gmra.mxu0 %v2236
  %v2238 = vpop.f32.mrf.mxu0
  %v2239 = vadd.f32 %v2038, %v2238
  %v2240 = vand.u32 %v2009, 4294901760
  %v2241 = vsub.f32 %v2009, %v2240
  %v2242 = vand.u32 %v2241, 4294901760
  %v2243 = vsub.f32 %v2241, %v2242
  %v2244 = vand.u32 %v2243, 4294901760
  %2245 = vmatmul.f32.gmra.mxu0 %v2244
  %v2246 = vpop.f32.mrf.mxu0
  %v2247 = vadd.f32 %v2038, %v2246
  %v2248 = vand.u32 %v2010, 4294901760
  %v2249 = vsub.f32 %v2010, %v2248
  %v2250 = vand.u32 %v2249, 4294901760
  %v2251 = vsub.f32 %v2249, %v2250
  %v2252 = vand.u32 %v2251, 4294901760
  %2253 = vmatmul.f32.gmra.mxu0 %v2252
  %v2254 = vpop.f32.mrf.mxu0
  %v2255 = vadd.f32 %v2038, %v2254
  %v2256 = vand.u32 %v2011, 4294901760
  %v2257 = vsub.f32 %v2011, %v2256
  %v2258 = vand.u32 %v2257, 4294901760
  %v2259 = vsub.f32 %v2257, %v2258
  %v2260 = vand.u32 %v2259, 4294901760
  %2261 = vmatmul.f32.gmra.mxu0 %v2260
  %v2262 = vpop.f32.mrf.mxu0
  %v2263 = vadd.f32 %v2038, %v2262
  %v2264 = vand.u32 %v2012, 4294901760
  %v2265 = vsub.f32 %v2012, %v2264
  %v2266 = vand.u32 %v2265, 4294901760
  %v2267 = vsub.f32 %v2265, %v2266
  %v2268 = vand.u32 %v2267, 4294901760
  %2269 = vmatmul.f32.gmra.mxu0 %v2268
  %v2270 = vpop.f32.mrf.mxu0
  %v2271 = vadd.f32 %v2038, %v2270
  %v2272 = vand.u32 %v2013, 4294901760
  %v2273 = vsub.f32 %v2013, %v2272
  %v2274 = vand.u32 %v2273, 4294901760
  %v2275 = vsub.f32 %v2273, %v2274
  %v2276 = vand.u32 %v2275, 4294901760
  %2277 = vmatmul.f32.gmra.mxu0 %v2276
  %v2278 = vpop.f32.mrf.mxu0
  %v2279 = vadd.f32 %v2038, %v2278
  %v2280 = vand.u32 %v2014, 4294901760
  %v2281 = vsub.f32 %v2014, %v2280
  %v2282 = vand.u32 %v2281, 4294901760
  %v2283 = vsub.f32 %v2281, %v2282
  %v2284 = vand.u32 %v2283, 4294901760
  %2285 = vmatmul.f32.gmra.mxu0 %v2284
  %v2286 = vpop.f32.mrf.mxu0
  %v2287 = vadd.f32 %v2038, %v2286
  %v2288 = vand.u32 %v2015, 4294901760
  %v2289 = vsub.f32 %v2015, %v2288
  %v2290 = vand.u32 %v2289, 4294901760
  %v2291 = vsub.f32 %v2289, %v2290
  %v2292 = vand.u32 %v2291, 4294901760
  %2293 = vmatmul.f32.gmra.mxu0 %v2292
  %v2294 = vpop.f32.mrf.mxu0
  %v2295 = vadd.f32 %v2038, %v2294
  %v2296 = vand.u32 %v2016, 4294901760
  %v2297 = vsub.f32 %v2016, %v2296
  %v2298 = vand.u32 %v2297, 4294901760
  %v2299 = vsub.f32 %v2297, %v2298
  %v2300 = vand.u32 %v2299, 4294901760
  %2301 = vmatmul.f32.gmra.mxu0 %v2300
  %v2302 = vpop.f32.mrf.mxu0
  %v2303 = vadd.f32 %v2038, %v2302
  %v2304 = vand.u32 %v2017, 4294901760
  %v2305 = vsub.f32 %v2017, %v2304
  %v2306 = vand.u32 %v2305, 4294901760
  %v2307 = vsub.f32 %v2305, %v2306
  %v2308 = vand.u32 %v2307, 4294901760
  %2309 = vmatmul.f32.gmra.mxu0 %v2308
  %v2310 = vpop.f32.mrf.mxu0
  %v2311 = vadd.f32 %v2038, %v2310
  %v2312 = vand.u32 %v2018, 4294901760
  %v2313 = vsub.f32 %v2018, %v2312
  %v2314 = vand.u32 %v2313, 4294901760
  %v2315 = vsub.f32 %v2313, %v2314
  %v2316 = vand.u32 %v2315, 4294901760
  %2317 = vmatmul.f32.gmra.mxu0 %v2316
  %v2318 = vpop.f32.mrf.mxu0
  %v2319 = vadd.f32 %v2038, %v2318
  %v2320 = vand.u32 %v2019, 4294901760
  %v2321 = vsub.f32 %v2019, %v2320
  %v2322 = vand.u32 %v2321, 4294901760
  %v2323 = vsub.f32 %v2321, %v2322
  %v2324 = vand.u32 %v2323, 4294901760
  %2325 = vmatmul.f32.gmra.mxu0 %v2324
  %v2326 = vpop.f32.mrf.mxu0
  %v2327 = vadd.f32 %v2038, %v2326
  %2328 = vdwg.mxu0
  %v2329 = vand.u32 %v2035, 4294901760
  %v2330 = vsub.f32 %v2035, %v2329
  %v2331 = vand.u32 %v2330, 4294901760
  %v2332 = vsub.f32 %v2330, %v2331
  %v2333 = vand.u32 %v2332, 4294901760
  %2334 = vmatpush.msra.mxu0 %v2333
  %v2335 = vand.u32 %v2034, 4294901760
  %v2336 = vsub.f32 %v2034, %v2335
  %v2337 = vand.u32 %v2336, 4294901760
  %v2338 = vsub.f32 %v2336, %v2337
  %v2339 = vand.u32 %v2338, 4294901760
  %2340 = vmatpush.msra.mxu0 %v2339
  %v2341 = vand.u32 %v2033, 4294901760
  %v2342 = vsub.f32 %v2033, %v2341
  %v2343 = vand.u32 %v2342, 4294901760
  %v2344 = vsub.f32 %v2342, %v2343
  %v2345 = vand.u32 %v2344, 4294901760
  %2346 = vmatpush.msra.mxu0 %v2345
  %v2347 = vand.u32 %v2032, 4294901760
  %v2348 = vsub.f32 %v2032, %v2347
  %v2349 = vand.u32 %v2348, 4294901760
  %v2350 = vsub.f32 %v2348, %v2349
  %v2351 = vand.u32 %v2350, 4294901760
  %2352 = vmatpush.msra.mxu0 %v2351
  %v2353 = vand.u32 %v2031, 4294901760
  %v2354 = vsub.f32 %v2031, %v2353
  %v2355 = vand.u32 %v2354, 4294901760
  %v2356 = vsub.f32 %v2354, %v2355
  %v2357 = vand.u32 %v2356, 4294901760
  %2358 = vmatpush.msra.mxu0 %v2357
  %v2359 = vand.u32 %v2030, 4294901760
  %v2360 = vsub.f32 %v2030, %v2359
  %v2361 = vand.u32 %v2360, 4294901760
  %v2362 = vsub.f32 %v2360, %v2361
  %v2363 = vand.u32 %v2362, 4294901760
  %2364 = vmatpush.msra.mxu0 %v2363
  %v2365 = vand.u32 %v2029, 4294901760
  %v2366 = vsub.f32 %v2029, %v2365
  %v2367 = vand.u32 %v2366, 4294901760
  %v2368 = vsub.f32 %v2366, %v2367
  %v2369 = vand.u32 %v2368, 4294901760
  %2370 = vmatpush.msra.mxu0 %v2369
  %v2371 = vand.u32 %v2028, 4294901760
  %v2372 = vsub.f32 %v2028, %v2371
  %v2373 = vand.u32 %v2372, 4294901760
  %v2374 = vsub.f32 %v2372, %v2373
  %v2375 = vand.u32 %v2374, 4294901760
  %2376 = vmatpush.msra.mxu0 %v2375
  %v2377 = vand.u32 %v2027, 4294901760
  %v2378 = vsub.f32 %v2027, %v2377
  %v2379 = vand.u32 %v2378, 4294901760
  %v2380 = vsub.f32 %v2378, %v2379
  %v2381 = vand.u32 %v2380, 4294901760
  %2382 = vmatpush.msra.mxu0 %v2381
  %v2383 = vand.u32 %v2026, 4294901760
  %v2384 = vsub.f32 %v2026, %v2383
  %v2385 = vand.u32 %v2384, 4294901760
  %v2386 = vsub.f32 %v2384, %v2385
  %v2387 = vand.u32 %v2386, 4294901760
  %2388 = vmatpush.msra.mxu0 %v2387
  %v2389 = vand.u32 %v2025, 4294901760
  %v2390 = vsub.f32 %v2025, %v2389
  %v2391 = vand.u32 %v2390, 4294901760
  %v2392 = vsub.f32 %v2390, %v2391
  %v2393 = vand.u32 %v2392, 4294901760
  %2394 = vmatpush.msra.mxu0 %v2393
  %v2395 = vand.u32 %v2024, 4294901760
  %v2396 = vsub.f32 %v2024, %v2395
  %v2397 = vand.u32 %v2396, 4294901760
  %v2398 = vsub.f32 %v2396, %v2397
  %v2399 = vand.u32 %v2398, 4294901760
  %2400 = vmatpush.msra.mxu0 %v2399
  %v2401 = vand.u32 %v2023, 4294901760
  %v2402 = vsub.f32 %v2023, %v2401
  %v2403 = vand.u32 %v2402, 4294901760
  %v2404 = vsub.f32 %v2402, %v2403
  %v2405 = vand.u32 %v2404, 4294901760
  %2406 = vmatpush.msra.mxu0 %v2405
  %v2407 = vand.u32 %v2022, 4294901760
  %v2408 = vsub.f32 %v2022, %v2407
  %v2409 = vand.u32 %v2408, 4294901760
  %v2410 = vsub.f32 %v2408, %v2409
  %v2411 = vand.u32 %v2410, 4294901760
  %2412 = vmatpush.msra.mxu0 %v2411
  %v2413 = vand.u32 %v2021, 4294901760
  %v2414 = vsub.f32 %v2021, %v2413
  %v2415 = vand.u32 %v2414, 4294901760
  %v2416 = vsub.f32 %v2414, %v2415
  %v2417 = vand.u32 %v2416, 4294901760
  %2418 = vmatpush.msra.mxu0 %v2417
  %v2419 = vand.u32 %v2020, 4294901760
  %v2420 = vsub.f32 %v2020, %v2419
  %v2421 = vand.u32 %v2420, 4294901760
  %v2422 = vsub.f32 %v2420, %v2421
  %v2423 = vand.u32 %v2422, 4294901760
  %2424 = vmatpush.msra.mxu0 %v2423
  %v2425 = vand.u32 %v1988, 4294901760
  %2426 = vmatmul.f32.gmra.mxu0 %v2425
  %v2427 = vpop.f32.mrf.mxu0
  %v2428 = vadd.f32 %v2079, %v2427
  %v2429 = vand.u32 %v1989, 4294901760
  %2430 = vmatmul.f32.gmra.mxu0 %v2429
  %v2431 = vpop.f32.mrf.mxu0
  %v2432 = vadd.f32 %v2087, %v2431
  %v2433 = vand.u32 %v1990, 4294901760
  %2434 = vmatmul.f32.gmra.mxu0 %v2433
  %v2435 = vpop.f32.mrf.mxu0
  %v2436 = vadd.f32 %v2095, %v2435
  %v2437 = vand.u32 %v1991, 4294901760
  %2438 = vmatmul.f32.gmra.mxu0 %v2437
  %v2439 = vpop.f32.mrf.mxu0
  %v2440 = vadd.f32 %v2103, %v2439
  %v2441 = vand.u32 %v1992, 4294901760
  %2442 = vmatmul.f32.gmra.mxu0 %v2441
  %v2443 = vpop.f32.mrf.mxu0
  %v2444 = vadd.f32 %v2111, %v2443
  %v2445 = vand.u32 %v1993, 4294901760
  %2446 = vmatmul.f32.gmra.mxu0 %v2445
  %v2447 = vpop.f32.mrf.mxu0
  %v2448 = vadd.f32 %v2119, %v2447
  %v2449 = vand.u32 %v1994, 4294901760
  %2450 = vmatmul.f32.gmra.mxu0 %v2449
  %v2451 = vpop.f32.mrf.mxu0
  %v2452 = vadd.f32 %v2127, %v2451
  %v2453 = vand.u32 %v1995, 4294901760
  %2454 = vmatmul.f32.gmra.mxu0 %v2453
  %v2455 = vpop.f32.mrf.mxu0
  %v2456 = vadd.f32 %v2135, %v2455
  %v2457 = vand.u32 %v1996, 4294901760
  %2458 = vmatmul.f32.gmra.mxu0 %v2457
  %v2459 = vpop.f32.mrf.mxu0
  %v2460 = vadd.f32 %v2143, %v2459
  %v2461 = vand.u32 %v1997, 4294901760
  %2462 = vmatmul.f32.gmra.mxu0 %v2461
  %v2463 = vpop.f32.mrf.mxu0
  %v2464 = vadd.f32 %v2151, %v2463
  %v2465 = vand.u32 %v1998, 4294901760
  %2466 = vmatmul.f32.gmra.mxu0 %v2465
  %v2467 = vpop.f32.mrf.mxu0
  %v2468 = vadd.f32 %v2159, %v2467
  %v2469 = vand.u32 %v1999, 4294901760
  %2470 = vmatmul.f32.gmra.mxu0 %v2469
  %v2471 = vpop.f32.mrf.mxu0
  %v2472 = vadd.f32 %v2167, %v2471
  %v2473 = vand.u32 %v2000, 4294901760
  %2474 = vmatmul.f32.gmra.mxu0 %v2473
  %v2475 = vpop.f32.mrf.mxu0
  %v2476 = vadd.f32 %v2175, %v2475
  %v2477 = vand.u32 %v2001, 4294901760
  %2478 = vmatmul.f32.gmra.mxu0 %v2477
  %v2479 = vpop.f32.mrf.mxu0
  %v2480 = vadd.f32 %v2183, %v2479
  %v2481 = vand.u32 %v2002, 4294901760
  %2482 = vmatmul.f32.gmra.mxu0 %v2481
  %v2483 = vpop.f32.mrf.mxu0
  %v2484 = vadd.f32 %v2191, %v2483
  %v2485 = vand.u32 %v2003, 4294901760
  %2486 = vmatmul.f32.gmra.mxu0 %v2485
  %v2487 = vpop.f32.mrf.mxu0
  %v2488 = vadd.f32 %v2199, %v2487
  %v2489 = vand.u32 %v2004, 4294901760
  %2490 = vmatmul.f32.gmra.mxu0 %v2489
  %v2491 = vpop.f32.mrf.mxu0
  %v2492 = vadd.f32 %v2207, %v2491
  %v2493 = vand.u32 %v2005, 4294901760
  %2494 = vmatmul.f32.gmra.mxu0 %v2493
  %v2495 = vpop.f32.mrf.mxu0
  %v2496 = vadd.f32 %v2215, %v2495
  %v2497 = vand.u32 %v2006, 4294901760
  %2498 = vmatmul.f32.gmra.mxu0 %v2497
  %v2499 = vpop.f32.mrf.mxu0
  %v2500 = vadd.f32 %v2223, %v2499
  %v2501 = vand.u32 %v2007, 4294901760
  %2502 = vmatmul.f32.gmra.mxu0 %v2501
  %v2503 = vpop.f32.mrf.mxu0
  %v2504 = vadd.f32 %v2231, %v2503
  %v2505 = vand.u32 %v2008, 4294901760
  %2506 = vmatmul.f32.gmra.mxu0 %v2505
  %v2507 = vpop.f32.mrf.mxu0
  %v2508 = vadd.f32 %v2239, %v2507
  %v2509 = vand.u32 %v2009, 4294901760
  %2510 = vmatmul.f32.gmra.mxu0 %v2509
  %v2511 = vpop.f32.mrf.mxu0
  %v2512 = vadd.f32 %v2247, %v2511
  %v2513 = vand.u32 %v2010, 4294901760
  %2514 = vmatmul.f32.gmra.mxu0 %v2513
  %v2515 = vpop.f32.mrf.mxu0
  %v2516 = vadd.f32 %v2255, %v2515
  %v2517 = vand.u32 %v2011, 4294901760
  %2518 = vmatmul.f32.gmra.mxu0 %v2517
  %v2519 = vpop.f32.mrf.mxu0
  %v2520 = vadd.f32 %v2263, %v2519
  %v2521 = vand.u32 %v2012, 4294901760
  %2522 = vmatmul.f32.gmra.mxu0 %v2521
  %v2523 = vpop.f32.mrf.mxu0
  %v2524 = vadd.f32 %v2271, %v2523
  %v2525 = vand.u32 %v2013, 4294901760
  %2526 = vmatmul.f32.gmra.mxu0 %v2525
  %v2527 = vpop.f32.mrf.mxu0
  %v2528 = vadd.f32 %v2279, %v2527
  %v2529 = vand.u32 %v2014, 4294901760
  %2530 = vmatmul.f32.gmra.mxu0 %v2529
  %v2531 = vpop.f32.mrf.mxu0
  %v2532 = vadd.f32 %v2287, %v2531
  %v2533 = vand.u32 %v2015, 4294901760
  %2534 = vmatmul.f32.gmra.mxu0 %v2533
  %v2535 = vpop.f32.mrf.mxu0
  %v2536 = vadd.f32 %v2295, %v2535
  %v2537 = vand.u32 %v2016, 4294901760
  %2538 = vmatmul.f32.gmra.mxu0 %v2537
  %v2539 = vpop.f32.mrf.mxu0
  %v2540 = vadd.f32 %v2303, %v2539
  %v2541 = vand.u32 %v2017, 4294901760
  %2542 = vmatmul.f32.gmra.mxu0 %v2541
  %v2543 = vpop.f32.mrf.mxu0
  %v2544 = vadd.f32 %v2311, %v2543
  %v2545 = vand.u32 %v2018, 4294901760
  %2546 = vmatmul.f32.gmra.mxu0 %v2545
  %v2547 = vpop.f32.mrf.mxu0
  %v2548 = vadd.f32 %v2319, %v2547
  %v2549 = vand.u32 %v2019, 4294901760
  %2550 = vmatmul.f32.gmra.mxu0 %v2549
  %v2551 = vpop.f32.mrf.mxu0
  %v2552 = vadd.f32 %v2327, %v2551
  %2553 = vdwg.mxu0
  %v2554 = vand.u32 %v2035, 4294901760
  %v2555 = vsub.f32 %v2035, %v2554
  %2556 = vmatpush.msra.mxu0 %v2555
  %v2557 = vand.u32 %v2034, 4294901760
  %v2558 = vsub.f32 %v2034, %v2557
  %2559 = vmatpush.msra.mxu0 %v2558
  %v2560 = vand.u32 %v2033, 4294901760
  %v2561 = vsub.f32 %v2033, %v2560
  %2562 = vmatpush.msra.mxu0 %v2561
  %v2563 = vand.u32 %v2032, 4294901760
  %v2564 = vsub.f32 %v2032, %v2563
  %2565 = vmatpush.msra.mxu0 %v2564
  %v2566 = vand.u32 %v2031, 4294901760
  %v2567 = vsub.f32 %v2031, %v2566
  %2568 = vmatpush.msra.mxu0 %v2567
  %v2569 = vand.u32 %v2030, 4294901760
  %v2570 = vsub.f32 %v2030, %v2569
  %2571 = vmatpush.msra.mxu0 %v2570
  %v2572 = vand.u32 %v2029, 4294901760
  %v2573 = vsub.f32 %v2029, %v2572
  %2574 = vmatpush.msra.mxu0 %v2573
  %v2575 = vand.u32 %v2028, 4294901760
  %v2576 = vsub.f32 %v2028, %v2575
  %2577 = vmatpush.msra.mxu0 %v2576
  %v2578 = vand.u32 %v2027, 4294901760
  %v2579 = vsub.f32 %v2027, %v2578
  %2580 = vmatpush.msra.mxu0 %v2579
  %v2581 = vand.u32 %v2026, 4294901760
  %v2582 = vsub.f32 %v2026, %v2581
  %2583 = vmatpush.msra.mxu0 %v2582
  %v2584 = vand.u32 %v2025, 4294901760
  %v2585 = vsub.f32 %v2025, %v2584
  %2586 = vmatpush.msra.mxu0 %v2585
  %v2587 = vand.u32 %v2024, 4294901760
  %v2588 = vsub.f32 %v2024, %v2587
  %2589 = vmatpush.msra.mxu0 %v2588
  %v2590 = vand.u32 %v2023, 4294901760
  %v2591 = vsub.f32 %v2023, %v2590
  %2592 = vmatpush.msra.mxu0 %v2591
  %v2593 = vand.u32 %v2022, 4294901760
  %v2594 = vsub.f32 %v2022, %v2593
  %2595 = vmatpush.msra.mxu0 %v2594
  %v2596 = vand.u32 %v2021, 4294901760
  %v2597 = vsub.f32 %v2021, %v2596
  %2598 = vmatpush.msra.mxu0 %v2597
  %v2599 = vand.u32 %v2020, 4294901760
  %v2600 = vsub.f32 %v2020, %v2599
  %2601 = vmatpush.msra.mxu0 %v2600
  %v2602 = vand.u32 %v1988, 4294901760
  %v2603 = vsub.f32 %v1988, %v2602
  %2604 = vmatmul.f32.gmra.mxu0 %v2603
  %v2605 = vpop.f32.mrf.mxu0
  %v2606 = vadd.f32 %v2428, %v2605
  %v2607 = vand.u32 %v1989, 4294901760
  %v2608 = vsub.f32 %v1989, %v2607
  %2609 = vmatmul.f32.gmra.mxu0 %v2608
  %v2610 = vpop.f32.mrf.mxu0
  %v2611 = vadd.f32 %v2432, %v2610
  %v2612 = vand.u32 %v1990, 4294901760
  %v2613 = vsub.f32 %v1990, %v2612
  %2614 = vmatmul.f32.gmra.mxu0 %v2613
  %v2615 = vpop.f32.mrf.mxu0
  %v2616 = vadd.f32 %v2436, %v2615
  %v2617 = vand.u32 %v1991, 4294901760
  %v2618 = vsub.f32 %v1991, %v2617
  %2619 = vmatmul.f32.gmra.mxu0 %v2618
  %v2620 = vpop.f32.mrf.mxu0
  %v2621 = vadd.f32 %v2440, %v2620
  %v2622 = vand.u32 %v1992, 4294901760
  %v2623 = vsub.f32 %v1992, %v2622
  %2624 = vmatmul.f32.gmra.mxu0 %v2623
  %v2625 = vpop.f32.mrf.mxu0
  %v2626 = vadd.f32 %v2444, %v2625
  %v2627 = vand.u32 %v1993, 4294901760
  %v2628 = vsub.f32 %v1993, %v2627
  %2629 = vmatmul.f32.gmra.mxu0 %v2628
  %v2630 = vpop.f32.mrf.mxu0
  %v2631 = vadd.f32 %v2448, %v2630
  %v2632 = vand.u32 %v1994, 4294901760
  %v2633 = vsub.f32 %v1994, %v2632
  %2634 = vmatmul.f32.gmra.mxu0 %v2633
  %v2635 = vpop.f32.mrf.mxu0
  %v2636 = vadd.f32 %v2452, %v2635
  %v2637 = vand.u32 %v1995, 4294901760
  %v2638 = vsub.f32 %v1995, %v2637
  %2639 = vmatmul.f32.gmra.mxu0 %v2638
  %v2640 = vpop.f32.mrf.mxu0
  %v2641 = vadd.f32 %v2456, %v2640
  %v2642 = vand.u32 %v1996, 4294901760
  %v2643 = vsub.f32 %v1996, %v2642
  %2644 = vmatmul.f32.gmra.mxu0 %v2643
  %v2645 = vpop.f32.mrf.mxu0
  %v2646 = vadd.f32 %v2460, %v2645
  %v2647 = vand.u32 %v1997, 4294901760
  %v2648 = vsub.f32 %v1997, %v2647
  %2649 = vmatmul.f32.gmra.mxu0 %v2648
  %v2650 = vpop.f32.mrf.mxu0
  %v2651 = vadd.f32 %v2464, %v2650
  %v2652 = vand.u32 %v1998, 4294901760
  %v2653 = vsub.f32 %v1998, %v2652
  %2654 = vmatmul.f32.gmra.mxu0 %v2653
  %v2655 = vpop.f32.mrf.mxu0
  %v2656 = vadd.f32 %v2468, %v2655
  %v2657 = vand.u32 %v1999, 4294901760
  %v2658 = vsub.f32 %v1999, %v2657
  %2659 = vmatmul.f32.gmra.mxu0 %v2658
  %v2660 = vpop.f32.mrf.mxu0
  %v2661 = vadd.f32 %v2472, %v2660
  %v2662 = vand.u32 %v2000, 4294901760
  %v2663 = vsub.f32 %v2000, %v2662
  %2664 = vmatmul.f32.gmra.mxu0 %v2663
  %v2665 = vpop.f32.mrf.mxu0
  %v2666 = vadd.f32 %v2476, %v2665
  %v2667 = vand.u32 %v2001, 4294901760
  %v2668 = vsub.f32 %v2001, %v2667
  %2669 = vmatmul.f32.gmra.mxu0 %v2668
  %v2670 = vpop.f32.mrf.mxu0
  %v2671 = vadd.f32 %v2480, %v2670
  %v2672 = vand.u32 %v2002, 4294901760
  %v2673 = vsub.f32 %v2002, %v2672
  %2674 = vmatmul.f32.gmra.mxu0 %v2673
  %v2675 = vpop.f32.mrf.mxu0
  %v2676 = vadd.f32 %v2484, %v2675
  %v2677 = vand.u32 %v2003, 4294901760
  %v2678 = vsub.f32 %v2003, %v2677
  %2679 = vmatmul.f32.gmra.mxu0 %v2678
  %v2680 = vpop.f32.mrf.mxu0
  %v2681 = vadd.f32 %v2488, %v2680
  %v2682 = vand.u32 %v2004, 4294901760
  %v2683 = vsub.f32 %v2004, %v2682
  %2684 = vmatmul.f32.gmra.mxu0 %v2683
  %v2685 = vpop.f32.mrf.mxu0
  %v2686 = vadd.f32 %v2492, %v2685
  %v2687 = vand.u32 %v2005, 4294901760
  %v2688 = vsub.f32 %v2005, %v2687
  %2689 = vmatmul.f32.gmra.mxu0 %v2688
  %v2690 = vpop.f32.mrf.mxu0
  %v2691 = vadd.f32 %v2496, %v2690
  %v2692 = vand.u32 %v2006, 4294901760
  %v2693 = vsub.f32 %v2006, %v2692
  %2694 = vmatmul.f32.gmra.mxu0 %v2693
  %v2695 = vpop.f32.mrf.mxu0
  %v2696 = vadd.f32 %v2500, %v2695
  %v2697 = vand.u32 %v2007, 4294901760
  %v2698 = vsub.f32 %v2007, %v2697
  %2699 = vmatmul.f32.gmra.mxu0 %v2698
  %v2700 = vpop.f32.mrf.mxu0
  %v2701 = vadd.f32 %v2504, %v2700
  %v2702 = vand.u32 %v2008, 4294901760
  %v2703 = vsub.f32 %v2008, %v2702
  %2704 = vmatmul.f32.gmra.mxu0 %v2703
  %v2705 = vpop.f32.mrf.mxu0
  %v2706 = vadd.f32 %v2508, %v2705
  %v2707 = vand.u32 %v2009, 4294901760
  %v2708 = vsub.f32 %v2009, %v2707
  %2709 = vmatmul.f32.gmra.mxu0 %v2708
  %v2710 = vpop.f32.mrf.mxu0
  %v2711 = vadd.f32 %v2512, %v2710
  %v2712 = vand.u32 %v2010, 4294901760
  %v2713 = vsub.f32 %v2010, %v2712
  %2714 = vmatmul.f32.gmra.mxu0 %v2713
  %v2715 = vpop.f32.mrf.mxu0
  %v2716 = vadd.f32 %v2516, %v2715
  %v2717 = vand.u32 %v2011, 4294901760
  %v2718 = vsub.f32 %v2011, %v2717
  %2719 = vmatmul.f32.gmra.mxu0 %v2718
  %v2720 = vpop.f32.mrf.mxu0
  %v2721 = vadd.f32 %v2520, %v2720
  %v2722 = vand.u32 %v2012, 4294901760
  %v2723 = vsub.f32 %v2012, %v2722
  %2724 = vmatmul.f32.gmra.mxu0 %v2723
  %v2725 = vpop.f32.mrf.mxu0
  %v2726 = vadd.f32 %v2524, %v2725
  %v2727 = vand.u32 %v2013, 4294901760
  %v2728 = vsub.f32 %v2013, %v2727
  %2729 = vmatmul.f32.gmra.mxu0 %v2728
  %v2730 = vpop.f32.mrf.mxu0
  %v2731 = vadd.f32 %v2528, %v2730
  %v2732 = vand.u32 %v2014, 4294901760
  %v2733 = vsub.f32 %v2014, %v2732
  %2734 = vmatmul.f32.gmra.mxu0 %v2733
  %v2735 = vpop.f32.mrf.mxu0
  %v2736 = vadd.f32 %v2532, %v2735
  %v2737 = vand.u32 %v2015, 4294901760
  %v2738 = vsub.f32 %v2015, %v2737
  %2739 = vmatmul.f32.gmra.mxu0 %v2738
  %v2740 = vpop.f32.mrf.mxu0
  %v2741 = vadd.f32 %v2536, %v2740
  %v2742 = vand.u32 %v2016, 4294901760
  %v2743 = vsub.f32 %v2016, %v2742
  %2744 = vmatmul.f32.gmra.mxu0 %v2743
  %v2745 = vpop.f32.mrf.mxu0
  %v2746 = vadd.f32 %v2540, %v2745
  %v2747 = vand.u32 %v2017, 4294901760
  %v2748 = vsub.f32 %v2017, %v2747
  %2749 = vmatmul.f32.gmra.mxu0 %v2748
  %v2750 = vpop.f32.mrf.mxu0
  %v2751 = vadd.f32 %v2544, %v2750
  %v2752 = vand.u32 %v2018, 4294901760
  %v2753 = vsub.f32 %v2018, %v2752
  %2754 = vmatmul.f32.gmra.mxu0 %v2753
  %v2755 = vpop.f32.mrf.mxu0
  %v2756 = vadd.f32 %v2548, %v2755
  %v2757 = vand.u32 %v2019, 4294901760
  %v2758 = vsub.f32 %v2019, %v2757
  %2759 = vmatmul.f32.gmra.mxu0 %v2758
  %v2760 = vpop.f32.mrf.mxu0
  %v2761 = vadd.f32 %v2552, %v2760
  %2762 = vdwg.mxu0
  %v2763 = vand.u32 %v2035, 4294901760
  %2764 = vmatpush.msra.mxu0 %v2763
  %v2765 = vand.u32 %v2034, 4294901760
  %2766 = vmatpush.msra.mxu0 %v2765
  %v2767 = vand.u32 %v2033, 4294901760
  %2768 = vmatpush.msra.mxu0 %v2767
  %v2769 = vand.u32 %v2032, 4294901760
  %2770 = vmatpush.msra.mxu0 %v2769
  %v2771 = vand.u32 %v2031, 4294901760
  %2772 = vmatpush.msra.mxu0 %v2771
  %v2773 = vand.u32 %v2030, 4294901760
  %2774 = vmatpush.msra.mxu0 %v2773
  %v2775 = vand.u32 %v2029, 4294901760
  %2776 = vmatpush.msra.mxu0 %v2775
  %v2777 = vand.u32 %v2028, 4294901760
  %2778 = vmatpush.msra.mxu0 %v2777
  %v2779 = vand.u32 %v2027, 4294901760
  %2780 = vmatpush.msra.mxu0 %v2779
  %v2781 = vand.u32 %v2026, 4294901760
  %2782 = vmatpush.msra.mxu0 %v2781
  %v2783 = vand.u32 %v2025, 4294901760
  %2784 = vmatpush.msra.mxu0 %v2783
  %v2785 = vand.u32 %v2024, 4294901760
  %2786 = vmatpush.msra.mxu0 %v2785
  %v2787 = vand.u32 %v2023, 4294901760
  %2788 = vmatpush.msra.mxu0 %v2787
  %v2789 = vand.u32 %v2022, 4294901760
  %2790 = vmatpush.msra.mxu0 %v2789
  %v2791 = vand.u32 %v2021, 4294901760
  %2792 = vmatpush.msra.mxu0 %v2791
  %v2793 = vand.u32 %v2020, 4294901760
  %2794 = vmatpush.msra.mxu0 %v2793
  %v2795 = vand.u32 %v1988, 4294901760
  %v2796 = vsub.f32 %v1988, %v2795
  %v2797 = vand.u32 %v2796, 4294901760
  %2798 = vmatmul.f32.gmra.mxu0 %v2797
  %v2799 = vpop.f32.mrf.mxu0
  %v2800 = vadd.f32 %v2606, %v2799
  %v2801 = vand.u32 %v1989, 4294901760
  %v2802 = vsub.f32 %v1989, %v2801
  %v2803 = vand.u32 %v2802, 4294901760
  %2804 = vmatmul.f32.gmra.mxu0 %v2803
  %v2805 = vpop.f32.mrf.mxu0
  %v2806 = vadd.f32 %v2611, %v2805
  %v2807 = vand.u32 %v1990, 4294901760
  %v2808 = vsub.f32 %v1990, %v2807
  %v2809 = vand.u32 %v2808, 4294901760
  %2810 = vmatmul.f32.gmra.mxu0 %v2809
  %v2811 = vpop.f32.mrf.mxu0
  %v2812 = vadd.f32 %v2616, %v2811
  %v2813 = vand.u32 %v1991, 4294901760
  %v2814 = vsub.f32 %v1991, %v2813
  %v2815 = vand.u32 %v2814, 4294901760
  %2816 = vmatmul.f32.gmra.mxu0 %v2815
  %v2817 = vpop.f32.mrf.mxu0
  %v2818 = vadd.f32 %v2621, %v2817
  %v2819 = vand.u32 %v1992, 4294901760
  %v2820 = vsub.f32 %v1992, %v2819
  %v2821 = vand.u32 %v2820, 4294901760
  %2822 = vmatmul.f32.gmra.mxu0 %v2821
  %v2823 = vpop.f32.mrf.mxu0
  %v2824 = vadd.f32 %v2626, %v2823
  %v2825 = vand.u32 %v1993, 4294901760
  %v2826 = vsub.f32 %v1993, %v2825
  %v2827 = vand.u32 %v2826, 4294901760
  %2828 = vmatmul.f32.gmra.mxu0 %v2827
  %v2829 = vpop.f32.mrf.mxu0
  %v2830 = vadd.f32 %v2631, %v2829
  %v2831 = vand.u32 %v1994, 4294901760
  %v2832 = vsub.f32 %v1994, %v2831
  %v2833 = vand.u32 %v2832, 4294901760
  %2834 = vmatmul.f32.gmra.mxu0 %v2833
  %v2835 = vpop.f32.mrf.mxu0
  %v2836 = vadd.f32 %v2636, %v2835
  %v2837 = vand.u32 %v1995, 4294901760
  %v2838 = vsub.f32 %v1995, %v2837
  %v2839 = vand.u32 %v2838, 4294901760
  %2840 = vmatmul.f32.gmra.mxu0 %v2839
  %v2841 = vpop.f32.mrf.mxu0
  %v2842 = vadd.f32 %v2641, %v2841
  %v2843 = vand.u32 %v1996, 4294901760
  %v2844 = vsub.f32 %v1996, %v2843
  %v2845 = vand.u32 %v2844, 4294901760
  %2846 = vmatmul.f32.gmra.mxu0 %v2845
  %v2847 = vpop.f32.mrf.mxu0
  %v2848 = vadd.f32 %v2646, %v2847
  %v2849 = vand.u32 %v1997, 4294901760
  %v2850 = vsub.f32 %v1997, %v2849
  %v2851 = vand.u32 %v2850, 4294901760
  %2852 = vmatmul.f32.gmra.mxu0 %v2851
  %v2853 = vpop.f32.mrf.mxu0
  %v2854 = vadd.f32 %v2651, %v2853
  %v2855 = vand.u32 %v1998, 4294901760
  %v2856 = vsub.f32 %v1998, %v2855
  %v2857 = vand.u32 %v2856, 4294901760
  %2858 = vmatmul.f32.gmra.mxu0 %v2857
  %v2859 = vpop.f32.mrf.mxu0
  %v2860 = vadd.f32 %v2656, %v2859
  %v2861 = vand.u32 %v1999, 4294901760
  %v2862 = vsub.f32 %v1999, %v2861
  %v2863 = vand.u32 %v2862, 4294901760
  %2864 = vmatmul.f32.gmra.mxu0 %v2863
  %v2865 = vpop.f32.mrf.mxu0
  %v2866 = vadd.f32 %v2661, %v2865
  %v2867 = vand.u32 %v2000, 4294901760
  %v2868 = vsub.f32 %v2000, %v2867
  %v2869 = vand.u32 %v2868, 4294901760
  %2870 = vmatmul.f32.gmra.mxu0 %v2869
  %v2871 = vpop.f32.mrf.mxu0
  %v2872 = vadd.f32 %v2666, %v2871
  %v2873 = vand.u32 %v2001, 4294901760
  %v2874 = vsub.f32 %v2001, %v2873
  %v2875 = vand.u32 %v2874, 4294901760
  %2876 = vmatmul.f32.gmra.mxu0 %v2875
  %v2877 = vpop.f32.mrf.mxu0
  %v2878 = vadd.f32 %v2671, %v2877
  %v2879 = vand.u32 %v2002, 4294901760
  %v2880 = vsub.f32 %v2002, %v2879
  %v2881 = vand.u32 %v2880, 4294901760
  %2882 = vmatmul.f32.gmra.mxu0 %v2881
  %v2883 = vpop.f32.mrf.mxu0
  %v2884 = vadd.f32 %v2676, %v2883
  %v2885 = vand.u32 %v2003, 4294901760
  %v2886 = vsub.f32 %v2003, %v2885
  %v2887 = vand.u32 %v2886, 4294901760
  %2888 = vmatmul.f32.gmra.mxu0 %v2887
  %v2889 = vpop.f32.mrf.mxu0
  %v2890 = vadd.f32 %v2681, %v2889
  %v2891 = vand.u32 %v2004, 4294901760
  %v2892 = vsub.f32 %v2004, %v2891
  %v2893 = vand.u32 %v2892, 4294901760
  %2894 = vmatmul.f32.gmra.mxu0 %v2893
  %v2895 = vpop.f32.mrf.mxu0
  %v2896 = vadd.f32 %v2686, %v2895
  %v2897 = vand.u32 %v2005, 4294901760
  %v2898 = vsub.f32 %v2005, %v2897
  %v2899 = vand.u32 %v2898, 4294901760
  %2900 = vmatmul.f32.gmra.mxu0 %v2899
  %v2901 = vpop.f32.mrf.mxu0
  %v2902 = vadd.f32 %v2691, %v2901
  %v2903 = vand.u32 %v2006, 4294901760
  %v2904 = vsub.f32 %v2006, %v2903
  %v2905 = vand.u32 %v2904, 4294901760
  %2906 = vmatmul.f32.gmra.mxu0 %v2905
  %v2907 = vpop.f32.mrf.mxu0
  %v2908 = vadd.f32 %v2696, %v2907
  %v2909 = vand.u32 %v2007, 4294901760
  %v2910 = vsub.f32 %v2007, %v2909
  %v2911 = vand.u32 %v2910, 4294901760
  %2912 = vmatmul.f32.gmra.mxu0 %v2911
  %v2913 = vpop.f32.mrf.mxu0
  %v2914 = vadd.f32 %v2701, %v2913
  %v2915 = vand.u32 %v2008, 4294901760
  %v2916 = vsub.f32 %v2008, %v2915
  %v2917 = vand.u32 %v2916, 4294901760
  %2918 = vmatmul.f32.gmra.mxu0 %v2917
  %v2919 = vpop.f32.mrf.mxu0
  %v2920 = vadd.f32 %v2706, %v2919
  %v2921 = vand.u32 %v2009, 4294901760
  %v2922 = vsub.f32 %v2009, %v2921
  %v2923 = vand.u32 %v2922, 4294901760
  %2924 = vmatmul.f32.gmra.mxu0 %v2923
  %v2925 = vpop.f32.mrf.mxu0
  %v2926 = vadd.f32 %v2711, %v2925
  %v2927 = vand.u32 %v2010, 4294901760
  %v2928 = vsub.f32 %v2010, %v2927
  %v2929 = vand.u32 %v2928, 4294901760
  %2930 = vmatmul.f32.gmra.mxu0 %v2929
  %v2931 = vpop.f32.mrf.mxu0
  %v2932 = vadd.f32 %v2716, %v2931
  %v2933 = vand.u32 %v2011, 4294901760
  %v2934 = vsub.f32 %v2011, %v2933
  %v2935 = vand.u32 %v2934, 4294901760
  %2936 = vmatmul.f32.gmra.mxu0 %v2935
  %v2937 = vpop.f32.mrf.mxu0
  %v2938 = vadd.f32 %v2721, %v2937
  %v2939 = vand.u32 %v2012, 4294901760
  %v2940 = vsub.f32 %v2012, %v2939
  %v2941 = vand.u32 %v2940, 4294901760
  %2942 = vmatmul.f32.gmra.mxu0 %v2941
  %v2943 = vpop.f32.mrf.mxu0
  %v2944 = vadd.f32 %v2726, %v2943
  %v2945 = vand.u32 %v2013, 4294901760
  %v2946 = vsub.f32 %v2013, %v2945
  %v2947 = vand.u32 %v2946, 4294901760
  %2948 = vmatmul.f32.gmra.mxu0 %v2947
  %v2949 = vpop.f32.mrf.mxu0
  %v2950 = vadd.f32 %v2731, %v2949
  %v2951 = vand.u32 %v2014, 4294901760
  %v2952 = vsub.f32 %v2014, %v2951
  %v2953 = vand.u32 %v2952, 4294901760
  %2954 = vmatmul.f32.gmra.mxu0 %v2953
  %v2955 = vpop.f32.mrf.mxu0
  %v2956 = vadd.f32 %v2736, %v2955
  %v2957 = vand.u32 %v2015, 4294901760
  %v2958 = vsub.f32 %v2015, %v2957
  %v2959 = vand.u32 %v2958, 4294901760
  %2960 = vmatmul.f32.gmra.mxu0 %v2959
  %v2961 = vpop.f32.mrf.mxu0
  %v2962 = vadd.f32 %v2741, %v2961
  %v2963 = vand.u32 %v2016, 4294901760
  %v2964 = vsub.f32 %v2016, %v2963
  %v2965 = vand.u32 %v2964, 4294901760
  %2966 = vmatmul.f32.gmra.mxu0 %v2965
  %v2967 = vpop.f32.mrf.mxu0
  %v2968 = vadd.f32 %v2746, %v2967
  %v2969 = vand.u32 %v2017, 4294901760
  %v2970 = vsub.f32 %v2017, %v2969
  %v2971 = vand.u32 %v2970, 4294901760
  %2972 = vmatmul.f32.gmra.mxu0 %v2971
  %v2973 = vpop.f32.mrf.mxu0
  %v2974 = vadd.f32 %v2751, %v2973
  %v2975 = vand.u32 %v2018, 4294901760
  %v2976 = vsub.f32 %v2018, %v2975
  %v2977 = vand.u32 %v2976, 4294901760
  %2978 = vmatmul.f32.gmra.mxu0 %v2977
  %v2979 = vpop.f32.mrf.mxu0
  %v2980 = vadd.f32 %v2756, %v2979
  %v2981 = vand.u32 %v2019, 4294901760
  %v2982 = vsub.f32 %v2019, %v2981
  %v2983 = vand.u32 %v2982, 4294901760
  %2984 = vmatmul.f32.gmra.mxu0 %v2983
  %v2985 = vpop.f32.mrf.mxu0
  %v2986 = vadd.f32 %v2761, %v2985
  %2987 = vdwg.mxu0
  %v2988 = vand.u32 %v2035, 4294901760
  %v2989 = vsub.f32 %v2035, %v2988
  %v2990 = vand.u32 %v2989, 4294901760
  %2991 = vmatpush.msra.mxu0 %v2990
  %v2992 = vand.u32 %v2034, 4294901760
  %v2993 = vsub.f32 %v2034, %v2992
  %v2994 = vand.u32 %v2993, 4294901760
  %2995 = vmatpush.msra.mxu0 %v2994
  %v2996 = vand.u32 %v2033, 4294901760
  %v2997 = vsub.f32 %v2033, %v2996
  %v2998 = vand.u32 %v2997, 4294901760
  %2999 = vmatpush.msra.mxu0 %v2998
  %v3000 = vand.u32 %v2032, 4294901760
  %v3001 = vsub.f32 %v2032, %v3000
  %v3002 = vand.u32 %v3001, 4294901760
  %3003 = vmatpush.msra.mxu0 %v3002
  %v3004 = vand.u32 %v2031, 4294901760
  %v3005 = vsub.f32 %v2031, %v3004
  %v3006 = vand.u32 %v3005, 4294901760
  %3007 = vmatpush.msra.mxu0 %v3006
  %v3008 = vand.u32 %v2030, 4294901760
  %v3009 = vsub.f32 %v2030, %v3008
  %v3010 = vand.u32 %v3009, 4294901760
  %3011 = vmatpush.msra.mxu0 %v3010
  %v3012 = vand.u32 %v2029, 4294901760
  %v3013 = vsub.f32 %v2029, %v3012
  %v3014 = vand.u32 %v3013, 4294901760
  %3015 = vmatpush.msra.mxu0 %v3014
  %v3016 = vand.u32 %v2028, 4294901760
  %v3017 = vsub.f32 %v2028, %v3016
  %v3018 = vand.u32 %v3017, 4294901760
  %3019 = vmatpush.msra.mxu0 %v3018
  %v3020 = vand.u32 %v2027, 4294901760
  %v3021 = vsub.f32 %v2027, %v3020
  %v3022 = vand.u32 %v3021, 4294901760
  %3023 = vmatpush.msra.mxu0 %v3022
  %v3024 = vand.u32 %v2026, 4294901760
  %v3025 = vsub.f32 %v2026, %v3024
  %v3026 = vand.u32 %v3025, 4294901760
  %3027 = vmatpush.msra.mxu0 %v3026
  %v3028 = vand.u32 %v2025, 4294901760
  %v3029 = vsub.f32 %v2025, %v3028
  %v3030 = vand.u32 %v3029, 4294901760
  %3031 = vmatpush.msra.mxu0 %v3030
  %v3032 = vand.u32 %v2024, 4294901760
  %v3033 = vsub.f32 %v2024, %v3032
  %v3034 = vand.u32 %v3033, 4294901760
  %3035 = vmatpush.msra.mxu0 %v3034
  %v3036 = vand.u32 %v2023, 4294901760
  %v3037 = vsub.f32 %v2023, %v3036
  %v3038 = vand.u32 %v3037, 4294901760
  %3039 = vmatpush.msra.mxu0 %v3038
  %v3040 = vand.u32 %v2022, 4294901760
  %v3041 = vsub.f32 %v2022, %v3040
  %v3042 = vand.u32 %v3041, 4294901760
  %3043 = vmatpush.msra.mxu0 %v3042
  %v3044 = vand.u32 %v2021, 4294901760
  %v3045 = vsub.f32 %v2021, %v3044
  %v3046 = vand.u32 %v3045, 4294901760
  %3047 = vmatpush.msra.mxu0 %v3046
  %v3048 = vand.u32 %v2020, 4294901760
  %v3049 = vsub.f32 %v2020, %v3048
  %v3050 = vand.u32 %v3049, 4294901760
  %3051 = vmatpush.msra.mxu0 %v3050
  %v3052 = vand.u32 %v1988, 4294901760
  %3053 = vmatmul.f32.gmra.mxu0 %v3052
  %v3054 = vpop.f32.mrf.mxu0
  %v3055 = vadd.f32 %v2800, %v3054
  %v3056 = vand.u32 %v1989, 4294901760
  %3057 = vmatmul.f32.gmra.mxu0 %v3056
  %v3058 = vpop.f32.mrf.mxu0
  %v3059 = vadd.f32 %v2806, %v3058
  %v3060 = vand.u32 %v1990, 4294901760
  %3061 = vmatmul.f32.gmra.mxu0 %v3060
  %v3062 = vpop.f32.mrf.mxu0
  %v3063 = vadd.f32 %v2812, %v3062
  %v3064 = vand.u32 %v1991, 4294901760
  %3065 = vmatmul.f32.gmra.mxu0 %v3064
  %v3066 = vpop.f32.mrf.mxu0
  %v3067 = vadd.f32 %v2818, %v3066
  %v3068 = vand.u32 %v1992, 4294901760
  %3069 = vmatmul.f32.gmra.mxu0 %v3068
  %v3070 = vpop.f32.mrf.mxu0
  %v3071 = vadd.f32 %v2824, %v3070
  %v3072 = vand.u32 %v1993, 4294901760
  %3073 = vmatmul.f32.gmra.mxu0 %v3072
  %v3074 = vpop.f32.mrf.mxu0
  %v3075 = vadd.f32 %v2830, %v3074
  %v3076 = vand.u32 %v1994, 4294901760
  %3077 = vmatmul.f32.gmra.mxu0 %v3076
  %v3078 = vpop.f32.mrf.mxu0
  %v3079 = vadd.f32 %v2836, %v3078
  %v3080 = vand.u32 %v1995, 4294901760
  %3081 = vmatmul.f32.gmra.mxu0 %v3080
  %v3082 = vpop.f32.mrf.mxu0
  %v3083 = vadd.f32 %v2842, %v3082
  %v3084 = vand.u32 %v1996, 4294901760
  %3085 = vmatmul.f32.gmra.mxu0 %v3084
  %v3086 = vpop.f32.mrf.mxu0
  %v3087 = vadd.f32 %v2848, %v3086
  %v3088 = vand.u32 %v1997, 4294901760
  %3089 = vmatmul.f32.gmra.mxu0 %v3088
  %v3090 = vpop.f32.mrf.mxu0
  %v3091 = vadd.f32 %v2854, %v3090
  %v3092 = vand.u32 %v1998, 4294901760
  %3093 = vmatmul.f32.gmra.mxu0 %v3092
  %v3094 = vpop.f32.mrf.mxu0
  %v3095 = vadd.f32 %v2860, %v3094
  %v3096 = vand.u32 %v1999, 4294901760
  %3097 = vmatmul.f32.gmra.mxu0 %v3096
  %v3098 = vpop.f32.mrf.mxu0
  %v3099 = vadd.f32 %v2866, %v3098
  %v3100 = vand.u32 %v2000, 4294901760
  %3101 = vmatmul.f32.gmra.mxu0 %v3100
  %v3102 = vpop.f32.mrf.mxu0
  %v3103 = vadd.f32 %v2872, %v3102
  %v3104 = vand.u32 %v2001, 4294901760
  %3105 = vmatmul.f32.gmra.mxu0 %v3104
  %v3106 = vpop.f32.mrf.mxu0
  %v3107 = vadd.f32 %v2878, %v3106
  %v3108 = vand.u32 %v2002, 4294901760
  %3109 = vmatmul.f32.gmra.mxu0 %v3108
  %v3110 = vpop.f32.mrf.mxu0
  %v3111 = vadd.f32 %v2884, %v3110
  %v3112 = vand.u32 %v2003, 4294901760
  %3113 = vmatmul.f32.gmra.mxu0 %v3112
  %v3114 = vpop.f32.mrf.mxu0
  %v3115 = vadd.f32 %v2890, %v3114
  %v3116 = vand.u32 %v2004, 4294901760
  %3117 = vmatmul.f32.gmra.mxu0 %v3116
  %v3118 = vpop.f32.mrf.mxu0
  %v3119 = vadd.f32 %v2896, %v3118
  %v3120 = vand.u32 %v2005, 4294901760
  %3121 = vmatmul.f32.gmra.mxu0 %v3120
  %v3122 = vpop.f32.mrf.mxu0
  %v3123 = vadd.f32 %v2902, %v3122
  %v3124 = vand.u32 %v2006, 4294901760
  %3125 = vmatmul.f32.gmra.mxu0 %v3124
  %v3126 = vpop.f32.mrf.mxu0
  %v3127 = vadd.f32 %v2908, %v3126
  %v3128 = vand.u32 %v2007, 4294901760
  %3129 = vmatmul.f32.gmra.mxu0 %v3128
  %v3130 = vpop.f32.mrf.mxu0
  %v3131 = vadd.f32 %v2914, %v3130
  %v3132 = vand.u32 %v2008, 4294901760
  %3133 = vmatmul.f32.gmra.mxu0 %v3132
  %v3134 = vpop.f32.mrf.mxu0
  %v3135 = vadd.f32 %v2920, %v3134
  %v3136 = vand.u32 %v2009, 4294901760
  %3137 = vmatmul.f32.gmra.mxu0 %v3136
  %v3138 = vpop.f32.mrf.mxu0
  %v3139 = vadd.f32 %v2926, %v3138
  %v3140 = vand.u32 %v2010, 4294901760
  %3141 = vmatmul.f32.gmra.mxu0 %v3140
  %v3142 = vpop.f32.mrf.mxu0
  %v3143 = vadd.f32 %v2932, %v3142
  %v3144 = vand.u32 %v2011, 4294901760
  %3145 = vmatmul.f32.gmra.mxu0 %v3144
  %v3146 = vpop.f32.mrf.mxu0
  %v3147 = vadd.f32 %v2938, %v3146
  %v3148 = vand.u32 %v2012, 4294901760
  %3149 = vmatmul.f32.gmra.mxu0 %v3148
  %v3150 = vpop.f32.mrf.mxu0
  %v3151 = vadd.f32 %v2944, %v3150
  %v3152 = vand.u32 %v2013, 4294901760
  %3153 = vmatmul.f32.gmra.mxu0 %v3152
  %v3154 = vpop.f32.mrf.mxu0
  %v3155 = vadd.f32 %v2950, %v3154
  %v3156 = vand.u32 %v2014, 4294901760
  %3157 = vmatmul.f32.gmra.mxu0 %v3156
  %v3158 = vpop.f32.mrf.mxu0
  %v3159 = vadd.f32 %v2956, %v3158
  %v3160 = vand.u32 %v2015, 4294901760
  %3161 = vmatmul.f32.gmra.mxu0 %v3160
  %v3162 = vpop.f32.mrf.mxu0
  %v3163 = vadd.f32 %v2962, %v3162
  %v3164 = vand.u32 %v2016, 4294901760
  %3165 = vmatmul.f32.gmra.mxu0 %v3164
  %v3166 = vpop.f32.mrf.mxu0
  %v3167 = vadd.f32 %v2968, %v3166
  %v3168 = vand.u32 %v2017, 4294901760
  %3169 = vmatmul.f32.gmra.mxu0 %v3168
  %v3170 = vpop.f32.mrf.mxu0
  %v3171 = vadd.f32 %v2974, %v3170
  %v3172 = vand.u32 %v2018, 4294901760
  %3173 = vmatmul.f32.gmra.mxu0 %v3172
  %v3174 = vpop.f32.mrf.mxu0
  %v3175 = vadd.f32 %v2980, %v3174
  %v3176 = vand.u32 %v2019, 4294901760
  %3177 = vmatmul.f32.gmra.mxu0 %v3176
  %v3178 = vpop.f32.mrf.mxu0
  %v3179 = vadd.f32 %v2986, %v3178
  %3180 = vdwg.mxu0
  %v3181 = vand.u32 %v2035, 4294901760
  %3182 = vmatpush.msra.mxu0 %v3181
  %v3183 = vand.u32 %v2034, 4294901760
  %3184 = vmatpush.msra.mxu0 %v3183
  %v3185 = vand.u32 %v2033, 4294901760
  %3186 = vmatpush.msra.mxu0 %v3185
  %v3187 = vand.u32 %v2032, 4294901760
  %3188 = vmatpush.msra.mxu0 %v3187
  %v3189 = vand.u32 %v2031, 4294901760
  %3190 = vmatpush.msra.mxu0 %v3189
  %v3191 = vand.u32 %v2030, 4294901760
  %3192 = vmatpush.msra.mxu0 %v3191
  %v3193 = vand.u32 %v2029, 4294901760
  %3194 = vmatpush.msra.mxu0 %v3193
  %v3195 = vand.u32 %v2028, 4294901760
  %3196 = vmatpush.msra.mxu0 %v3195
  %v3197 = vand.u32 %v2027, 4294901760
  %3198 = vmatpush.msra.mxu0 %v3197
  %v3199 = vand.u32 %v2026, 4294901760
  %3200 = vmatpush.msra.mxu0 %v3199
  %v3201 = vand.u32 %v2025, 4294901760
  %3202 = vmatpush.msra.mxu0 %v3201
  %v3203 = vand.u32 %v2024, 4294901760
  %3204 = vmatpush.msra.mxu0 %v3203
  %v3205 = vand.u32 %v2023, 4294901760
  %3206 = vmatpush.msra.mxu0 %v3205
  %v3207 = vand.u32 %v2022, 4294901760
  %3208 = vmatpush.msra.mxu0 %v3207
  %v3209 = vand.u32 %v2021, 4294901760
  %3210 = vmatpush.msra.mxu0 %v3209
  %v3211 = vand.u32 %v2020, 4294901760
  %3212 = vmatpush.msra.mxu0 %v3211
  %v3213 = vand.u32 %v1988, 4294901760
  %3214 = vmatmul.f32.gmra.mxu0 %v3213
  %v3215 = vpop.f32.mrf.mxu0
  %v3216 = vadd.f32 %v3055, %v3215
  %v3217 = vand.u32 %v1989, 4294901760
  %3218 = vmatmul.f32.gmra.mxu0 %v3217
  %v3219 = vpop.f32.mrf.mxu0
  %v3220 = vadd.f32 %v3059, %v3219
  %v3221 = vand.u32 %v1990, 4294901760
  %3222 = vmatmul.f32.gmra.mxu0 %v3221
  %v3223 = vpop.f32.mrf.mxu0
  %v3224 = vadd.f32 %v3063, %v3223
  %v3225 = vand.u32 %v1991, 4294901760
  %3226 = vmatmul.f32.gmra.mxu0 %v3225
  %v3227 = vpop.f32.mrf.mxu0
  %v3228 = vadd.f32 %v3067, %v3227
  %v3229 = vand.u32 %v1992, 4294901760
  %3230 = vmatmul.f32.gmra.mxu0 %v3229
  %v3231 = vpop.f32.mrf.mxu0
  %v3232 = vadd.f32 %v3071, %v3231
  %v3233 = vand.u32 %v1993, 4294901760
  %3234 = vmatmul.f32.gmra.mxu0 %v3233
  %v3235 = vpop.f32.mrf.mxu0
  %v3236 = vadd.f32 %v3075, %v3235
  %v3237 = vand.u32 %v1994, 4294901760
  %3238 = vmatmul.f32.gmra.mxu0 %v3237
  %v3239 = vpop.f32.mrf.mxu0
  %v3240 = vadd.f32 %v3079, %v3239
  %v3241 = vand.u32 %v1995, 4294901760
  %3242 = vmatmul.f32.gmra.mxu0 %v3241
  %v3243 = vpop.f32.mrf.mxu0
  %v3244 = vadd.f32 %v3083, %v3243
  %v3245 = vand.u32 %v1996, 4294901760
  %3246 = vmatmul.f32.gmra.mxu0 %v3245
  %v3247 = vpop.f32.mrf.mxu0
  %v3248 = vadd.f32 %v3087, %v3247
  %v3249 = vand.u32 %v1997, 4294901760
  %3250 = vmatmul.f32.gmra.mxu0 %v3249
  %v3251 = vpop.f32.mrf.mxu0
  %v3252 = vadd.f32 %v3091, %v3251
  %v3253 = vand.u32 %v1998, 4294901760
  %3254 = vmatmul.f32.gmra.mxu0 %v3253
  %v3255 = vpop.f32.mrf.mxu0
  %v3256 = vadd.f32 %v3095, %v3255
  %v3257 = vand.u32 %v1999, 4294901760
  %3258 = vmatmul.f32.gmra.mxu0 %v3257
  %v3259 = vpop.f32.mrf.mxu0
  %v3260 = vadd.f32 %v3099, %v3259
  %v3261 = vand.u32 %v2000, 4294901760
  %3262 = vmatmul.f32.gmra.mxu0 %v3261
  %v3263 = vpop.f32.mrf.mxu0
  %v3264 = vadd.f32 %v3103, %v3263
  %v3265 = vand.u32 %v2001, 4294901760
  %3266 = vmatmul.f32.gmra.mxu0 %v3265
  %v3267 = vpop.f32.mrf.mxu0
  %v3268 = vadd.f32 %v3107, %v3267
  %v3269 = vand.u32 %v2002, 4294901760
  %3270 = vmatmul.f32.gmra.mxu0 %v3269
  %v3271 = vpop.f32.mrf.mxu0
  %v3272 = vadd.f32 %v3111, %v3271
  %v3273 = vand.u32 %v2003, 4294901760
  %3274 = vmatmul.f32.gmra.mxu0 %v3273
  %v3275 = vpop.f32.mrf.mxu0
  %v3276 = vadd.f32 %v3115, %v3275
  %v3277 = vand.u32 %v2004, 4294901760
  %3278 = vmatmul.f32.gmra.mxu0 %v3277
  %v3279 = vpop.f32.mrf.mxu0
  %v3280 = vadd.f32 %v3119, %v3279
  %v3281 = vand.u32 %v2005, 4294901760
  %3282 = vmatmul.f32.gmra.mxu0 %v3281
  %v3283 = vpop.f32.mrf.mxu0
  %v3284 = vadd.f32 %v3123, %v3283
  %v3285 = vand.u32 %v2006, 4294901760
  %3286 = vmatmul.f32.gmra.mxu0 %v3285
  %v3287 = vpop.f32.mrf.mxu0
  %v3288 = vadd.f32 %v3127, %v3287
  %v3289 = vand.u32 %v2007, 4294901760
  %3290 = vmatmul.f32.gmra.mxu0 %v3289
  %v3291 = vpop.f32.mrf.mxu0
  %v3292 = vadd.f32 %v3131, %v3291
  %v3293 = vand.u32 %v2008, 4294901760
  %3294 = vmatmul.f32.gmra.mxu0 %v3293
  %v3295 = vpop.f32.mrf.mxu0
  %v3296 = vadd.f32 %v3135, %v3295
  %v3297 = vand.u32 %v2009, 4294901760
  %3298 = vmatmul.f32.gmra.mxu0 %v3297
  %v3299 = vpop.f32.mrf.mxu0
  %v3300 = vadd.f32 %v3139, %v3299
  %v3301 = vand.u32 %v2010, 4294901760
  %3302 = vmatmul.f32.gmra.mxu0 %v3301
  %v3303 = vpop.f32.mrf.mxu0
  %v3304 = vadd.f32 %v3143, %v3303
  %v3305 = vand.u32 %v2011, 4294901760
  %3306 = vmatmul.f32.gmra.mxu0 %v3305
  %v3307 = vpop.f32.mrf.mxu0
  %v3308 = vadd.f32 %v3147, %v3307
  %v3309 = vand.u32 %v2012, 4294901760
  %3310 = vmatmul.f32.gmra.mxu0 %v3309
  %v3311 = vpop.f32.mrf.mxu0
  %v3312 = vadd.f32 %v3151, %v3311
  %v3313 = vand.u32 %v2013, 4294901760
  %3314 = vmatmul.f32.gmra.mxu0 %v3313
  %v3315 = vpop.f32.mrf.mxu0
  %v3316 = vadd.f32 %v3155, %v3315
  %v3317 = vand.u32 %v2014, 4294901760
  %3318 = vmatmul.f32.gmra.mxu0 %v3317
  %v3319 = vpop.f32.mrf.mxu0
  %v3320 = vadd.f32 %v3159, %v3319
  %v3321 = vand.u32 %v2015, 4294901760
  %3322 = vmatmul.f32.gmra.mxu0 %v3321
  %v3323 = vpop.f32.mrf.mxu0
  %v3324 = vadd.f32 %v3163, %v3323
  %v3325 = vand.u32 %v2016, 4294901760
  %3326 = vmatmul.f32.gmra.mxu0 %v3325
  %v3327 = vpop.f32.mrf.mxu0
  %v3328 = vadd.f32 %v3167, %v3327
  %v3329 = vand.u32 %v2017, 4294901760
  %3330 = vmatmul.f32.gmra.mxu0 %v3329
  %v3331 = vpop.f32.mrf.mxu0
  %v3332 = vadd.f32 %v3171, %v3331
  %v3333 = vand.u32 %v2018, 4294901760
  %3334 = vmatmul.f32.gmra.mxu0 %v3333
  %v3335 = vpop.f32.mrf.mxu0
  %v3336 = vadd.f32 %v3175, %v3335
  %v3337 = vand.u32 %v2019, 4294901760
  %3338 = vmatmul.f32.gmra.mxu0 %v3337
  %v3339 = vpop.f32.mrf.mxu0
  %v3340 = vadd.f32 %v3179, %v3339
  %3341 = vdwg.mxu0
  %v3342 = vxor.u32 %v3216, 2147483648
  %v3343 = vxor.u32 %v3220, 2147483648
  %v3344 = vxor.u32 %v3224, 2147483648
  %v3345 = vxor.u32 %v3228, 2147483648
  %v3346 = vxor.u32 %v3232, 2147483648
  %v3347 = vxor.u32 %v3236, 2147483648
  %v3348 = vxor.u32 %v3240, 2147483648
  %v3349 = vxor.u32 %v3244, 2147483648
  %v3350 = vxor.u32 %v3248, 2147483648
  %v3351 = vxor.u32 %v3252, 2147483648
  %v3352 = vxor.u32 %v3256, 2147483648
  %v3353 = vxor.u32 %v3260, 2147483648
  %v3354 = vxor.u32 %v3264, 2147483648
  %v3355 = vxor.u32 %v3268, 2147483648
  %v3356 = vxor.u32 %v3272, 2147483648
  %v3357 = vxor.u32 %v3276, 2147483648
  %v3358 = vxor.u32 %v3280, 2147483648
  %v3359 = vxor.u32 %v3284, 2147483648
  %v3360 = vxor.u32 %v3288, 2147483648
  %v3361 = vxor.u32 %v3292, 2147483648
  %v3362 = vxor.u32 %v3296, 2147483648
  %v3363 = vxor.u32 %v3300, 2147483648
  %v3364 = vxor.u32 %v3304, 2147483648
  %v3365 = vxor.u32 %v3308, 2147483648
  %v3366 = vxor.u32 %v3312, 2147483648
  %v3367 = vxor.u32 %v3316, 2147483648
  %v3368 = vxor.u32 %v3320, 2147483648
  %v3369 = vxor.u32 %v3324, 2147483648
  %v3370 = vxor.u32 %v3328, 2147483648
  %v3371 = vxor.u32 %v3332, 2147483648
  %v3372 = vxor.u32 %v3336, 2147483648
  %v3373 = vxor.u32 %v3340, 2147483648
  %v3374 = vmul.f32 %v3342, 1.442695
  %v3375 = vpow.pop %v3374
  %v3376 = vmul.f32 %v3343, 1.442695
  %v3377 = vpow.pop %v3376
  %v3378 = vmul.f32 %v3344, 1.442695
  %v3379 = vpow.pop %v3378
  %v3380 = vmul.f32 %v3345, 1.442695
  %v3381 = vpow.pop %v3380
  %v3382 = vmul.f32 %v3346, 1.442695
  %v3383 = vpow.pop %v3382
  %v3384 = vmul.f32 %v3347, 1.442695
  %v3385 = vpow.pop %v3384
  %v3386 = vmul.f32 %v3348, 1.442695
  %v3387 = vpow.pop %v3386
  %v3388 = vmul.f32 %v3349, 1.442695
  %v3389 = vpow.pop %v3388
  %v3390 = vmul.f32 %v3350, 1.442695
  %v3391 = vpow.pop %v3390
  %v3392 = vmul.f32 %v3351, 1.442695
  %v3393 = vpow.pop %v3392
  %v3394 = vmul.f32 %v3352, 1.442695
  %v3395 = vpow.pop %v3394
  %v3396 = vmul.f32 %v3353, 1.442695
  %v3397 = vpow.pop %v3396
  %v3398 = vmul.f32 %v3354, 1.442695
  %v3399 = vpow.pop %v3398
  %v3400 = vmul.f32 %v3355, 1.442695
  %v3401 = vpow.pop %v3400
  %v3402 = vmul.f32 %v3356, 1.442695
  %v3403 = vpow.pop %v3402
  %v3404 = vmul.f32 %v3357, 1.442695
  %v3405 = vpow.pop %v3404
  %v3406 = vmul.f32 %v3358, 1.442695
  %v3407 = vpow.pop %v3406
  %v3408 = vmul.f32 %v3359, 1.442695
  %v3409 = vpow.pop %v3408
  %v3410 = vmul.f32 %v3360, 1.442695
  %v3411 = vpow.pop %v3410
  %v3412 = vmul.f32 %v3361, 1.442695
  %v3413 = vpow.pop %v3412
  %v3414 = vmul.f32 %v3362, 1.442695
  %v3415 = vpow.pop %v3414
  %v3416 = vmul.f32 %v3363, 1.442695
  %v3417 = vpow.pop %v3416
  %v3418 = vmul.f32 %v3364, 1.442695
  %v3419 = vpow.pop %v3418
  %v3420 = vmul.f32 %v3365, 1.442695
  %v3421 = vpow.pop %v3420
  %v3422 = vmul.f32 %v3366, 1.442695
  %v3423 = vpow.pop %v3422
  %v3424 = vmul.f32 %v3367, 1.442695
  %v3425 = vpow.pop %v3424
  %v3426 = vmul.f32 %v3368, 1.442695
  %v3427 = vpow.pop %v3426
  %v3428 = vmul.f32 %v3369, 1.442695
  %v3429 = vpow.pop %v3428
  %v3430 = vmul.f32 %v3370, 1.442695
  %v3431 = vpow.pop %v3430
  %v3432 = vmul.f32 %v3371, 1.442695
  %v3433 = vpow.pop %v3432
  %v3434 = vmul.f32 %v3372, 1.442695
  %v3435 = vpow.pop %v3434
  %v3436 = vmul.f32 %v3373, 1.442695
  %v3437 = vpow.pop %v3436
  %v3438 = vadd.f32 %v3375, 1.0
  %v3439 = vadd.f32 %v3377, 1.0
  %v3440 = vadd.f32 %v3379, 1.0
  %v3441 = vadd.f32 %v3381, 1.0
  %v3442 = vadd.f32 %v3383, 1.0
  %v3443 = vadd.f32 %v3385, 1.0
  %v3444 = vadd.f32 %v3387, 1.0
  %v3445 = vadd.f32 %v3389, 1.0
  %v3446 = vadd.f32 %v3391, 1.0
  %v3447 = vadd.f32 %v3393, 1.0
  %v3448 = vadd.f32 %v3395, 1.0
  %v3449 = vadd.f32 %v3397, 1.0
  %v3450 = vadd.f32 %v3399, 1.0
  %v3451 = vadd.f32 %v3401, 1.0
  %v3452 = vadd.f32 %v3403, 1.0
  %v3453 = vadd.f32 %v3405, 1.0
  %v3454 = vadd.f32 %v3407, 1.0
  %v3455 = vadd.f32 %v3409, 1.0
  %v3456 = vadd.f32 %v3411, 1.0
  %v3457 = vadd.f32 %v3413, 1.0
  %v3458 = vadd.f32 %v3415, 1.0
  %v3459 = vadd.f32 %v3417, 1.0
  %v3460 = vadd.f32 %v3419, 1.0
  %v3461 = vadd.f32 %v3421, 1.0
  %v3462 = vadd.f32 %v3423, 1.0
  %v3463 = vadd.f32 %v3425, 1.0
  %v3464 = vadd.f32 %v3427, 1.0
  %v3465 = vadd.f32 %v3429, 1.0
  %v3466 = vadd.f32 %v3431, 1.0
  %v3467 = vadd.f32 %v3433, 1.0
  %v3468 = vadd.f32 %v3435, 1.0
  %v3469 = vadd.f32 %v3437, 1.0
  %v3470 = vrcp.pop %v3438
  %v3471 = vmul.f32 %v3438, %v3470
  %v3472 = vsub.f32 1.0, %v3471
  %v3473 = vmul.f32 %v3470, %v3472
  %v3474 = vadd.f32 %v3470, %v3473
  %vm3475 = vweird.f32 %v3438
  %vm3476 = vweird.f32 %v3470
  %vm3477 = vmor %vm3475, %vm3476
  %v3478 = vsel %vm3477, %v3470, %v3474
  %v3479 = vand.u32 2147483647, %v3438
  %vm3480 = vcmp.eq.f32.partialorder %v3479, 8.507059e+37
  %v3481 = vand.u32 %v3438, 2147483648
  %v3482 = vor.u32 1.1754944e-38, %v3481
  %v3483 = vsel %vm3480, %v3482, %v3478
  %v3484 = vmul.f32 1.0, %v3483
  %v3485 = vrcp.pop %v3439
  %v3486 = vmul.f32 %v3439, %v3485
  %v3487 = vsub.f32 1.0, %v3486
  %v3488 = vmul.f32 %v3485, %v3487
  %v3489 = vadd.f32 %v3485, %v3488
  %vm3490 = vweird.f32 %v3439
  %vm3491 = vweird.f32 %v3485
  %vm3492 = vmor %vm3490, %vm3491
  %v3493 = vsel %vm3492, %v3485, %v3489
  %v3494 = vand.u32 2147483647, %v3439
  %vm3495 = vcmp.eq.f32.partialorder %v3494, 8.507059e+37
  %v3496 = vand.u32 %v3439, 2147483648
  %v3497 = vor.u32 1.1754944e-38, %v3496
  %v3498 = vsel %vm3495, %v3497, %v3493
  %v3499 = vmul.f32 1.0, %v3498
  %v3500 = vrcp.pop %v3440
  %v3501 = vmul.f32 %v3440, %v3500
  %v3502 = vsub.f32 1.0, %v3501
  %v3503 = vmul.f32 %v3500, %v3502
  %v3504 = vadd.f32 %v3500, %v3503
  %vm3505 = vweird.f32 %v3440
  %vm3506 = vweird.f32 %v3500
  %vm3507 = vmor %vm3505, %vm3506
  %v3508 = vsel %vm3507, %v3500, %v3504
  %v3509 = vand.u32 2147483647, %v3440
  %vm3510 = vcmp.eq.f32.partialorder %v3509, 8.507059e+37
  %v3511 = vand.u32 %v3440, 2147483648
  %v3512 = vor.u32 1.1754944e-38, %v3511
  %v3513 = vsel %vm3510, %v3512, %v3508
  %v3514 = vmul.f32 1.0, %v3513
  %v3515 = vrcp.pop %v3441
  %v3516 = vmul.f32 %v3441, %v3515
  %v3517 = vsub.f32 1.0, %v3516
  %v3518 = vmul.f32 %v3515, %v3517
  %v3519 = vadd.f32 %v3515, %v3518
  %vm3520 = vweird.f32 %v3441
  %vm3521 = vweird.f32 %v3515
  %vm3522 = vmor %vm3520, %vm3521
  %v3523 = vsel %vm3522, %v3515, %v3519
  %v3524 = vand.u32 2147483647, %v3441
  %vm3525 = vcmp.eq.f32.partialorder %v3524, 8.507059e+37
  %v3526 = vand.u32 %v3441, 2147483648
  %v3527 = vor.u32 1.1754944e-38, %v3526
  %v3528 = vsel %vm3525, %v3527, %v3523
  %v3529 = vmul.f32 1.0, %v3528
  %v3530 = vrcp.pop %v3442
  %v3531 = vmul.f32 %v3442, %v3530
  %v3532 = vsub.f32 1.0, %v3531
  %v3533 = vmul.f32 %v3530, %v3532
  %v3534 = vadd.f32 %v3530, %v3533
  %vm3535 = vweird.f32 %v3442
  %vm3536 = vweird.f32 %v3530
  %vm3537 = vmor %vm3535, %vm3536
  %v3538 = vsel %vm3537, %v3530, %v3534
  %v3539 = vand.u32 2147483647, %v3442
  %vm3540 = vcmp.eq.f32.partialorder %v3539, 8.507059e+37
  %v3541 = vand.u32 %v3442, 2147483648
  %v3542 = vor.u32 1.1754944e-38, %v3541
  %v3543 = vsel %vm3540, %v3542, %v3538
  %v3544 = vmul.f32 1.0, %v3543
  %v3545 = vrcp.pop %v3443
  %v3546 = vmul.f32 %v3443, %v3545
  %v3547 = vsub.f32 1.0, %v3546
  %v3548 = vmul.f32 %v3545, %v3547
  %v3549 = vadd.f32 %v3545, %v3548
  %vm3550 = vweird.f32 %v3443
  %vm3551 = vweird.f32 %v3545
  %vm3552 = vmor %vm3550, %vm3551
  %v3553 = vsel %vm3552, %v3545, %v3549
  %v3554 = vand.u32 2147483647, %v3443
  %vm3555 = vcmp.eq.f32.partialorder %v3554, 8.507059e+37
  %v3556 = vand.u32 %v3443, 2147483648
  %v3557 = vor.u32 1.1754944e-38, %v3556
  %v3558 = vsel %vm3555, %v3557, %v3553
  %v3559 = vmul.f32 1.0, %v3558
  %v3560 = vrcp.pop %v3444
  %v3561 = vmul.f32 %v3444, %v3560
  %v3562 = vsub.f32 1.0, %v3561
  %v3563 = vmul.f32 %v3560, %v3562
  %v3564 = vadd.f32 %v3560, %v3563
  %vm3565 = vweird.f32 %v3444
  %vm3566 = vweird.f32 %v3560
  %vm3567 = vmor %vm3565, %vm3566
  %v3568 = vsel %vm3567, %v3560, %v3564
  %v3569 = vand.u32 2147483647, %v3444
  %vm3570 = vcmp.eq.f32.partialorder %v3569, 8.507059e+37
  %v3571 = vand.u32 %v3444, 2147483648
  %v3572 = vor.u32 1.1754944e-38, %v3571
  %v3573 = vsel %vm3570, %v3572, %v3568
  %v3574 = vmul.f32 1.0, %v3573
  %v3575 = vrcp.pop %v3445
  %v3576 = vmul.f32 %v3445, %v3575
  %v3577 = vsub.f32 1.0, %v3576
  %v3578 = vmul.f32 %v3575, %v3577
  %v3579 = vadd.f32 %v3575, %v3578
  %vm3580 = vweird.f32 %v3445
  %vm3581 = vweird.f32 %v3575
  %vm3582 = vmor %vm3580, %vm3581
  %v3583 = vsel %vm3582, %v3575, %v3579
  %v3584 = vand.u32 2147483647, %v3445
  %vm3585 = vcmp.eq.f32.partialorder %v3584, 8.507059e+37
  %v3586 = vand.u32 %v3445, 2147483648
  %v3587 = vor.u32 1.1754944e-38, %v3586
  %v3588 = vsel %vm3585, %v3587, %v3583
  %v3589 = vmul.f32 1.0, %v3588
  %v3590 = vrcp.pop %v3446
  %v3591 = vmul.f32 %v3446, %v3590
  %v3592 = vsub.f32 1.0, %v3591
  %v3593 = vmul.f32 %v3590, %v3592
  %v3594 = vadd.f32 %v3590, %v3593
  %vm3595 = vweird.f32 %v3446
  %vm3596 = vweird.f32 %v3590
  %vm3597 = vmor %vm3595, %vm3596
  %v3598 = vsel %vm3597, %v3590, %v3594
  %v3599 = vand.u32 2147483647, %v3446
  %vm3600 = vcmp.eq.f32.partialorder %v3599, 8.507059e+37
  %v3601 = vand.u32 %v3446, 2147483648
  %v3602 = vor.u32 1.1754944e-38, %v3601
  %v3603 = vsel %vm3600, %v3602, %v3598
  %v3604 = vmul.f32 1.0, %v3603
  %v3605 = vrcp.pop %v3447
  %v3606 = vmul.f32 %v3447, %v3605
  %v3607 = vsub.f32 1.0, %v3606
  %v3608 = vmul.f32 %v3605, %v3607
  %v3609 = vadd.f32 %v3605, %v3608
  %vm3610 = vweird.f32 %v3447
  %vm3611 = vweird.f32 %v3605
  %vm3612 = vmor %vm3610, %vm3611
  %v3613 = vsel %vm3612, %v3605, %v3609
  %v3614 = vand.u32 2147483647, %v3447
  %vm3615 = vcmp.eq.f32.partialorder %v3614, 8.507059e+37
  %v3616 = vand.u32 %v3447, 2147483648
  %v3617 = vor.u32 1.1754944e-38, %v3616
  %v3618 = vsel %vm3615, %v3617, %v3613
  %v3619 = vmul.f32 1.0, %v3618
  %v3620 = vrcp.pop %v3448
  %v3621 = vmul.f32 %v3448, %v3620
  %v3622 = vsub.f32 1.0, %v3621
  %v3623 = vmul.f32 %v3620, %v3622
  %v3624 = vadd.f32 %v3620, %v3623
  %vm3625 = vweird.f32 %v3448
  %vm3626 = vweird.f32 %v3620
  %vm3627 = vmor %vm3625, %vm3626
  %v3628 = vsel %vm3627, %v3620, %v3624
  %v3629 = vand.u32 2147483647, %v3448
  %vm3630 = vcmp.eq.f32.partialorder %v3629, 8.507059e+37
  %v3631 = vand.u32 %v3448, 2147483648
  %v3632 = vor.u32 1.1754944e-38, %v3631
  %v3633 = vsel %vm3630, %v3632, %v3628
  %v3634 = vmul.f32 1.0, %v3633
  %v3635 = vrcp.pop %v3449
  %v3636 = vmul.f32 %v3449, %v3635
  %v3637 = vsub.f32 1.0, %v3636
  %v3638 = vmul.f32 %v3635, %v3637
  %v3639 = vadd.f32 %v3635, %v3638
  %vm3640 = vweird.f32 %v3449
  %vm3641 = vweird.f32 %v3635
  %vm3642 = vmor %vm3640, %vm3641
  %v3643 = vsel %vm3642, %v3635, %v3639
  %v3644 = vand.u32 2147483647, %v3449
  %vm3645 = vcmp.eq.f32.partialorder %v3644, 8.507059e+37
  %v3646 = vand.u32 %v3449, 2147483648
  %v3647 = vor.u32 1.1754944e-38, %v3646
  %v3648 = vsel %vm3645, %v3647, %v3643
  %v3649 = vmul.f32 1.0, %v3648
  %v3650 = vrcp.pop %v3450
  %v3651 = vmul.f32 %v3450, %v3650
  %v3652 = vsub.f32 1.0, %v3651
  %v3653 = vmul.f32 %v3650, %v3652
  %v3654 = vadd.f32 %v3650, %v3653
  %vm3655 = vweird.f32 %v3450
  %vm3656 = vweird.f32 %v3650
  %vm3657 = vmor %vm3655, %vm3656
  %v3658 = vsel %vm3657, %v3650, %v3654
  %v3659 = vand.u32 2147483647, %v3450
  %vm3660 = vcmp.eq.f32.partialorder %v3659, 8.507059e+37
  %v3661 = vand.u32 %v3450, 2147483648
  %v3662 = vor.u32 1.1754944e-38, %v3661
  %v3663 = vsel %vm3660, %v3662, %v3658
  %v3664 = vmul.f32 1.0, %v3663
  %v3665 = vrcp.pop %v3451
  %v3666 = vmul.f32 %v3451, %v3665
  %v3667 = vsub.f32 1.0, %v3666
  %v3668 = vmul.f32 %v3665, %v3667
  %v3669 = vadd.f32 %v3665, %v3668
  %vm3670 = vweird.f32 %v3451
  %vm3671 = vweird.f32 %v3665
  %vm3672 = vmor %vm3670, %vm3671
  %v3673 = vsel %vm3672, %v3665, %v3669
  %v3674 = vand.u32 2147483647, %v3451
  %vm3675 = vcmp.eq.f32.partialorder %v3674, 8.507059e+37
  %v3676 = vand.u32 %v3451, 2147483648
  %v3677 = vor.u32 1.1754944e-38, %v3676
  %v3678 = vsel %vm3675, %v3677, %v3673
  %v3679 = vmul.f32 1.0, %v3678
  %v3680 = vrcp.pop %v3452
  %v3681 = vmul.f32 %v3452, %v3680
  %v3682 = vsub.f32 1.0, %v3681
  %v3683 = vmul.f32 %v3680, %v3682
  %v3684 = vadd.f32 %v3680, %v3683
  %vm3685 = vweird.f32 %v3452
  %vm3686 = vweird.f32 %v3680
  %vm3687 = vmor %vm3685, %vm3686
  %v3688 = vsel %vm3687, %v3680, %v3684
  %v3689 = vand.u32 2147483647, %v3452
  %vm3690 = vcmp.eq.f32.partialorder %v3689, 8.507059e+37
  %v3691 = vand.u32 %v3452, 2147483648
  %v3692 = vor.u32 1.1754944e-38, %v3691
  %v3693 = vsel %vm3690, %v3692, %v3688
  %v3694 = vmul.f32 1.0, %v3693
  %v3695 = vrcp.pop %v3453
  %v3696 = vmul.f32 %v3453, %v3695
  %v3697 = vsub.f32 1.0, %v3696
  %v3698 = vmul.f32 %v3695, %v3697
  %v3699 = vadd.f32 %v3695, %v3698
  %vm3700 = vweird.f32 %v3453
  %vm3701 = vweird.f32 %v3695
  %vm3702 = vmor %vm3700, %vm3701
  %v3703 = vsel %vm3702, %v3695, %v3699
  %v3704 = vand.u32 2147483647, %v3453
  %vm3705 = vcmp.eq.f32.partialorder %v3704, 8.507059e+37
  %v3706 = vand.u32 %v3453, 2147483648
  %v3707 = vor.u32 1.1754944e-38, %v3706
  %v3708 = vsel %vm3705, %v3707, %v3703
  %v3709 = vmul.f32 1.0, %v3708
  %v3710 = vrcp.pop %v3454
  %v3711 = vmul.f32 %v3454, %v3710
  %v3712 = vsub.f32 1.0, %v3711
  %v3713 = vmul.f32 %v3710, %v3712
  %v3714 = vadd.f32 %v3710, %v3713
  %vm3715 = vweird.f32 %v3454
  %vm3716 = vweird.f32 %v3710
  %vm3717 = vmor %vm3715, %vm3716
  %v3718 = vsel %vm3717, %v3710, %v3714
  %v3719 = vand.u32 2147483647, %v3454
  %vm3720 = vcmp.eq.f32.partialorder %v3719, 8.507059e+37
  %v3721 = vand.u32 %v3454, 2147483648
  %v3722 = vor.u32 1.1754944e-38, %v3721
  %v3723 = vsel %vm3720, %v3722, %v3718
  %v3724 = vmul.f32 1.0, %v3723
  %v3725 = vrcp.pop %v3455
  %v3726 = vmul.f32 %v3455, %v3725
  %v3727 = vsub.f32 1.0, %v3726
  %v3728 = vmul.f32 %v3725, %v3727
  %v3729 = vadd.f32 %v3725, %v3728
  %vm3730 = vweird.f32 %v3455
  %vm3731 = vweird.f32 %v3725
  %vm3732 = vmor %vm3730, %vm3731
  %v3733 = vsel %vm3732, %v3725, %v3729
  %v3734 = vand.u32 2147483647, %v3455
  %vm3735 = vcmp.eq.f32.partialorder %v3734, 8.507059e+37
  %v3736 = vand.u32 %v3455, 2147483648
  %v3737 = vor.u32 1.1754944e-38, %v3736
  %v3738 = vsel %vm3735, %v3737, %v3733
  %v3739 = vmul.f32 1.0, %v3738
  %v3740 = vrcp.pop %v3456
  %v3741 = vmul.f32 %v3456, %v3740
  %v3742 = vsub.f32 1.0, %v3741
  %v3743 = vmul.f32 %v3740, %v3742
  %v3744 = vadd.f32 %v3740, %v3743
  %vm3745 = vweird.f32 %v3456
  %vm3746 = vweird.f32 %v3740
  %vm3747 = vmor %vm3745, %vm3746
  %v3748 = vsel %vm3747, %v3740, %v3744
  %v3749 = vand.u32 2147483647, %v3456
  %vm3750 = vcmp.eq.f32.partialorder %v3749, 8.507059e+37
  %v3751 = vand.u32 %v3456, 2147483648
  %v3752 = vor.u32 1.1754944e-38, %v3751
  %v3753 = vsel %vm3750, %v3752, %v3748
  %v3754 = vmul.f32 1.0, %v3753
  %v3755 = vrcp.pop %v3457
  %v3756 = vmul.f32 %v3457, %v3755
  %v3757 = vsub.f32 1.0, %v3756
  %v3758 = vmul.f32 %v3755, %v3757
  %v3759 = vadd.f32 %v3755, %v3758
  %vm3760 = vweird.f32 %v3457
  %vm3761 = vweird.f32 %v3755
  %vm3762 = vmor %vm3760, %vm3761
  %v3763 = vsel %vm3762, %v3755, %v3759
  %v3764 = vand.u32 2147483647, %v3457
  %vm3765 = vcmp.eq.f32.partialorder %v3764, 8.507059e+37
  %v3766 = vand.u32 %v3457, 2147483648
  %v3767 = vor.u32 1.1754944e-38, %v3766
  %v3768 = vsel %vm3765, %v3767, %v3763
  %v3769 = vmul.f32 1.0, %v3768
  %v3770 = vrcp.pop %v3458
  %v3771 = vmul.f32 %v3458, %v3770
  %v3772 = vsub.f32 1.0, %v3771
  %v3773 = vmul.f32 %v3770, %v3772
  %v3774 = vadd.f32 %v3770, %v3773
  %vm3775 = vweird.f32 %v3458
  %vm3776 = vweird.f32 %v3770
  %vm3777 = vmor %vm3775, %vm3776
  %v3778 = vsel %vm3777, %v3770, %v3774
  %v3779 = vand.u32 2147483647, %v3458
  %vm3780 = vcmp.eq.f32.partialorder %v3779, 8.507059e+37
  %v3781 = vand.u32 %v3458, 2147483648
  %v3782 = vor.u32 1.1754944e-38, %v3781
  %v3783 = vsel %vm3780, %v3782, %v3778
  %v3784 = vmul.f32 1.0, %v3783
  %v3785 = vrcp.pop %v3459
  %v3786 = vmul.f32 %v3459, %v3785
  %v3787 = vsub.f32 1.0, %v3786
  %v3788 = vmul.f32 %v3785, %v3787
  %v3789 = vadd.f32 %v3785, %v3788
  %vm3790 = vweird.f32 %v3459
  %vm3791 = vweird.f32 %v3785
  %vm3792 = vmor %vm3790, %vm3791
  %v3793 = vsel %vm3792, %v3785, %v3789
  %v3794 = vand.u32 2147483647, %v3459
  %vm3795 = vcmp.eq.f32.partialorder %v3794, 8.507059e+37
  %v3796 = vand.u32 %v3459, 2147483648
  %v3797 = vor.u32 1.1754944e-38, %v3796
  %v3798 = vsel %vm3795, %v3797, %v3793
  %v3799 = vmul.f32 1.0, %v3798
  %v3800 = vrcp.pop %v3460
  %v3801 = vmul.f32 %v3460, %v3800
  %v3802 = vsub.f32 1.0, %v3801
  %v3803 = vmul.f32 %v3800, %v3802
  %v3804 = vadd.f32 %v3800, %v3803
  %vm3805 = vweird.f32 %v3460
  %vm3806 = vweird.f32 %v3800
  %vm3807 = vmor %vm3805, %vm3806
  %v3808 = vsel %vm3807, %v3800, %v3804
  %v3809 = vand.u32 2147483647, %v3460
  %vm3810 = vcmp.eq.f32.partialorder %v3809, 8.507059e+37
  %v3811 = vand.u32 %v3460, 2147483648
  %v3812 = vor.u32 1.1754944e-38, %v3811
  %v3813 = vsel %vm3810, %v3812, %v3808
  %v3814 = vmul.f32 1.0, %v3813
  %v3815 = vrcp.pop %v3461
  %v3816 = vmul.f32 %v3461, %v3815
  %v3817 = vsub.f32 1.0, %v3816
  %v3818 = vmul.f32 %v3815, %v3817
  %v3819 = vadd.f32 %v3815, %v3818
  %vm3820 = vweird.f32 %v3461
  %vm3821 = vweird.f32 %v3815
  %vm3822 = vmor %vm3820, %vm3821
  %v3823 = vsel %vm3822, %v3815, %v3819
  %v3824 = vand.u32 2147483647, %v3461
  %vm3825 = vcmp.eq.f32.partialorder %v3824, 8.507059e+37
  %v3826 = vand.u32 %v3461, 2147483648
  %v3827 = vor.u32 1.1754944e-38, %v3826
  %v3828 = vsel %vm3825, %v3827, %v3823
  %v3829 = vmul.f32 1.0, %v3828
  %v3830 = vrcp.pop %v3462
  %v3831 = vmul.f32 %v3462, %v3830
  %v3832 = vsub.f32 1.0, %v3831
  %v3833 = vmul.f32 %v3830, %v3832
  %v3834 = vadd.f32 %v3830, %v3833
  %vm3835 = vweird.f32 %v3462
  %vm3836 = vweird.f32 %v3830
  %vm3837 = vmor %vm3835, %vm3836
  %v3838 = vsel %vm3837, %v3830, %v3834
  %v3839 = vand.u32 2147483647, %v3462
  %vm3840 = vcmp.eq.f32.partialorder %v3839, 8.507059e+37
  %v3841 = vand.u32 %v3462, 2147483648
  %v3842 = vor.u32 1.1754944e-38, %v3841
  %v3843 = vsel %vm3840, %v3842, %v3838
  %v3844 = vmul.f32 1.0, %v3843
  %v3845 = vrcp.pop %v3463
  %v3846 = vmul.f32 %v3463, %v3845
  %v3847 = vsub.f32 1.0, %v3846
  %v3848 = vmul.f32 %v3845, %v3847
  %v3849 = vadd.f32 %v3845, %v3848
  %vm3850 = vweird.f32 %v3463
  %vm3851 = vweird.f32 %v3845
  %vm3852 = vmor %vm3850, %vm3851
  %v3853 = vsel %vm3852, %v3845, %v3849
  %v3854 = vand.u32 2147483647, %v3463
  %vm3855 = vcmp.eq.f32.partialorder %v3854, 8.507059e+37
  %v3856 = vand.u32 %v3463, 2147483648
  %v3857 = vor.u32 1.1754944e-38, %v3856
  %v3858 = vsel %vm3855, %v3857, %v3853
  %v3859 = vmul.f32 1.0, %v3858
  %v3860 = vrcp.pop %v3464
  %v3861 = vmul.f32 %v3464, %v3860
  %v3862 = vsub.f32 1.0, %v3861
  %v3863 = vmul.f32 %v3860, %v3862
  %v3864 = vadd.f32 %v3860, %v3863
  %vm3865 = vweird.f32 %v3464
  %vm3866 = vweird.f32 %v3860
  %vm3867 = vmor %vm3865, %vm3866
  %v3868 = vsel %vm3867, %v3860, %v3864
  %v3869 = vand.u32 2147483647, %v3464
  %vm3870 = vcmp.eq.f32.partialorder %v3869, 8.507059e+37
  %v3871 = vand.u32 %v3464, 2147483648
  %v3872 = vor.u32 1.1754944e-38, %v3871
  %v3873 = vsel %vm3870, %v3872, %v3868
  %v3874 = vmul.f32 1.0, %v3873
  %v3875 = vrcp.pop %v3465
  %v3876 = vmul.f32 %v3465, %v3875
  %v3877 = vsub.f32 1.0, %v3876
  %v3878 = vmul.f32 %v3875, %v3877
  %v3879 = vadd.f32 %v3875, %v3878
  %vm3880 = vweird.f32 %v3465
  %vm3881 = vweird.f32 %v3875
  %vm3882 = vmor %vm3880, %vm3881
  %v3883 = vsel %vm3882, %v3875, %v3879
  %v3884 = vand.u32 2147483647, %v3465
  %vm3885 = vcmp.eq.f32.partialorder %v3884, 8.507059e+37
  %v3886 = vand.u32 %v3465, 2147483648
  %v3887 = vor.u32 1.1754944e-38, %v3886
  %v3888 = vsel %vm3885, %v3887, %v3883
  %v3889 = vmul.f32 1.0, %v3888
  %v3890 = vrcp.pop %v3466
  %v3891 = vmul.f32 %v3466, %v3890
  %v3892 = vsub.f32 1.0, %v3891
  %v3893 = vmul.f32 %v3890, %v3892
  %v3894 = vadd.f32 %v3890, %v3893
  %vm3895 = vweird.f32 %v3466
  %vm3896 = vweird.f32 %v3890
  %vm3897 = vmor %vm3895, %vm3896
  %v3898 = vsel %vm3897, %v3890, %v3894
  %v3899 = vand.u32 2147483647, %v3466
  %vm3900 = vcmp.eq.f32.partialorder %v3899, 8.507059e+37
  %v3901 = vand.u32 %v3466, 2147483648
  %v3902 = vor.u32 1.1754944e-38, %v3901
  %v3903 = vsel %vm3900, %v3902, %v3898
  %v3904 = vmul.f32 1.0, %v3903
  %v3905 = vrcp.pop %v3467
  %v3906 = vmul.f32 %v3467, %v3905
  %v3907 = vsub.f32 1.0, %v3906
  %v3908 = vmul.f32 %v3905, %v3907
  %v3909 = vadd.f32 %v3905, %v3908
  %vm3910 = vweird.f32 %v3467
  %vm3911 = vweird.f32 %v3905
  %vm3912 = vmor %vm3910, %vm3911
  %v3913 = vsel %vm3912, %v3905, %v3909
  %v3914 = vand.u32 2147483647, %v3467
  %vm3915 = vcmp.eq.f32.partialorder %v3914, 8.507059e+37
  %v3916 = vand.u32 %v3467, 2147483648
  %v3917 = vor.u32 1.1754944e-38, %v3916
  %v3918 = vsel %vm3915, %v3917, %v3913
  %v3919 = vmul.f32 1.0, %v3918
  %v3920 = vrcp.pop %v3468
  %v3921 = vmul.f32 %v3468, %v3920
  %v3922 = vsub.f32 1.0, %v3921
  %v3923 = vmul.f32 %v3920, %v3922
  %v3924 = vadd.f32 %v3920, %v3923
  %vm3925 = vweird.f32 %v3468
  %vm3926 = vweird.f32 %v3920
  %vm3927 = vmor %vm3925, %vm3926
  %v3928 = vsel %vm3927, %v3920, %v3924
  %v3929 = vand.u32 2147483647, %v3468
  %vm3930 = vcmp.eq.f32.partialorder %v3929, 8.507059e+37
  %v3931 = vand.u32 %v3468, 2147483648
  %v3932 = vor.u32 1.1754944e-38, %v3931
  %v3933 = vsel %vm3930, %v3932, %v3928
  %v3934 = vmul.f32 1.0, %v3933
  %v3935 = vrcp.pop %v3469
  %v3936 = vmul.f32 %v3469, %v3935
  %v3937 = vsub.f32 1.0, %v3936
  %v3938 = vmul.f32 %v3935, %v3937
  %v3939 = vadd.f32 %v3935, %v3938
  %vm3940 = vweird.f32 %v3469
  %vm3941 = vweird.f32 %v3935
  %vm3942 = vmor %vm3940, %vm3941
  %v3943 = vsel %vm3942, %v3935, %v3939
  %v3944 = vand.u32 2147483647, %v3469
  %vm3945 = vcmp.eq.f32.partialorder %v3944, 8.507059e+37
  %v3946 = vand.u32 %v3469, 2147483648
  %v3947 = vor.u32 1.1754944e-38, %v3946
  %v3948 = vsel %vm3945, %v3947, %v3943
  %v3949 = vmul.f32 1.0, %v3948
  %v3950 = vmul.f32 %v3216, %v3484
  %v3951 = vmul.f32 %v3220, %v3499
  %v3952 = vmul.f32 %v3224, %v3514
  %v3953 = vmul.f32 %v3228, %v3529
  %v3954 = vmul.f32 %v3232, %v3544
  %v3955 = vmul.f32 %v3236, %v3559
  %v3956 = vmul.f32 %v3240, %v3574
  %v3957 = vmul.f32 %v3244, %v3589
  %v3958 = vmul.f32 %v3248, %v3604
  %v3959 = vmul.f32 %v3252, %v3619
  %v3960 = vmul.f32 %v3256, %v3634
  %v3961 = vmul.f32 %v3260, %v3649
  %v3962 = vmul.f32 %v3264, %v3664
  %v3963 = vmul.f32 %v3268, %v3679
  %v3964 = vmul.f32 %v3272, %v3694
  %v3965 = vmul.f32 %v3276, %v3709
  %v3966 = vmul.f32 %v3280, %v3724
  %v3967 = vmul.f32 %v3284, %v3739
  %v3968 = vmul.f32 %v3288, %v3754
  %v3969 = vmul.f32 %v3292, %v3769
  %v3970 = vmul.f32 %v3296, %v3784
  %v3971 = vmul.f32 %v3300, %v3799
  %v3972 = vmul.f32 %v3304, %v3814
  %v3973 = vmul.f32 %v3308, %v3829
  %v3974 = vmul.f32 %v3312, %v3844
  %v3975 = vmul.f32 %v3316, %v3859
  %v3976 = vmul.f32 %v3320, %v3874
  %v3977 = vmul.f32 %v3324, %v3889
  %v3978 = vmul.f32 %v3328, %v3904
  %v3979 = vmul.f32 %v3332, %v3919
  %v3980 = vmul.f32 %v3336, %v3934
  %v3981 = vmul.f32 %v3340, %v3949
  %v3982 = vld [vmem:[%s5] sm:$0xff]
  %v3983 = vld [vmem:[%s5 + $0x8] sm:$0xff]
  %v3984 = vld [vmem:[%s5 + $0x10] sm:$0xff]
  %v3985 = vld [vmem:[%s5 + $0x18] sm:$0xff]
  %v3986 = vld [vmem:[%s5 + $0x20] sm:$0xff]
  %v3987 = vld [vmem:[%s5 + $0x28] sm:$0xff]
  %v3988 = vld [vmem:[%s5 + $0x30] sm:$0xff]
  %v3989 = vld [vmem:[%s5 + $0x38] sm:$0xff]
  %v3990 = vld [vmem:[%s5 + $0x40] sm:$0xff]
  %v3991 = vld [vmem:[%s5 + $0x48] sm:$0xff]
  %v3992 = vld [vmem:[%s5 + $0x50] sm:$0xff]
  %v3993 = vld [vmem:[%s5 + $0x58] sm:$0xff]
  %v3994 = vld [vmem:[%s5 + $0x60] sm:$0xff]
  %v3995 = vld [vmem:[%s5 + $0x68] sm:$0xff]
  %v3996 = vld [vmem:[%s5 + $0x70] sm:$0xff]
  %v3997 = vld [vmem:[%s5 + $0x78] sm:$0xff]
  %v3998 = vld [vmem:[%s6] sm:$0x1]
  %v4000 = vperm.slane %v3998, 0
  %v4002 = vand.u32 %v3997, 4294901760
  %4003 = vmatpush.msra.mxu0 %v4002
  %v4004 = vand.u32 %v3996, 4294901760
  %4005 = vmatpush.msra.mxu0 %v4004
  %v4006 = vand.u32 %v3995, 4294901760
  %4007 = vmatpush.msra.mxu0 %v4006
  %v4008 = vand.u32 %v3994, 4294901760
  %4009 = vmatpush.msra.mxu0 %v4008
  %v4010 = vand.u32 %v3993, 4294901760
  %4011 = vmatpush.msra.mxu0 %v4010
  %v4012 = vand.u32 %v3992, 4294901760
  %4013 = vmatpush.msra.mxu0 %v4012
  %v4014 = vand.u32 %v3991, 4294901760
  %4015 = vmatpush.msra.mxu0 %v4014
  %v4016 = vand.u32 %v3990, 4294901760
  %4017 = vmatpush.msra.mxu0 %v4016
  %v4018 = vand.u32 %v3989, 4294901760
  %4019 = vmatpush.msra.mxu0 %v4018
  %v4020 = vand.u32 %v3988, 4294901760
  %4021 = vmatpush.msra.mxu0 %v4020
  %v4022 = vand.u32 %v3987, 4294901760
  %4023 = vmatpush.msra.mxu0 %v4022
  %v4024 = vand.u32 %v3986, 4294901760
  %4025 = vmatpush.msra.mxu0 %v4024
  %v4026 = vand.u32 %v3985, 4294901760
  %4027 = vmatpush.msra.mxu0 %v4026
  %v4028 = vand.u32 %v3984, 4294901760
  %4029 = vmatpush.msra.mxu0 %v4028
  %v4030 = vand.u32 %v3983, 4294901760
  %4031 = vmatpush.msra.mxu0 %v4030
  %v4032 = vand.u32 %v3982, 4294901760
  %4033 = vmatpush.msra.mxu0 %v4032
  %v4034 = vand.u32 %v3950, 4294901760
  %v4035 = vsub.f32 %v3950, %v4034
  %v4036 = vand.u32 %v4035, 4294901760
  %v4037 = vsub.f32 %v4035, %v4036
  %v4038 = vand.u32 %v4037, 4294901760
  %4039 = vmatmul.f32.gmra.mxu0 %v4038
  %v4040 = vpop.f32.mrf.mxu0
  %v4041 = vadd.f32 %v4000, %v4040
  %v4042 = vand.u32 %v3951, 4294901760
  %v4043 = vsub.f32 %v3951, %v4042
  %v4044 = vand.u32 %v4043, 4294901760
  %v4045 = vsub.f32 %v4043, %v4044
  %v4046 = vand.u32 %v4045, 4294901760
  %4047 = vmatmul.f32.gmra.mxu0 %v4046
  %v4048 = vpop.f32.mrf.mxu0
  %v4049 = vadd.f32 %v4000, %v4048
  %v4050 = vand.u32 %v3952, 4294901760
  %v4051 = vsub.f32 %v3952, %v4050
  %v4052 = vand.u32 %v4051, 4294901760
  %v4053 = vsub.f32 %v4051, %v4052
  %v4054 = vand.u32 %v4053, 4294901760
  %4055 = vmatmul.f32.gmra.mxu0 %v4054
  %v4056 = vpop.f32.mrf.mxu0
  %v4057 = vadd.f32 %v4000, %v4056
  %v4058 = vand.u32 %v3953, 4294901760
  %v4059 = vsub.f32 %v3953, %v4058
  %v4060 = vand.u32 %v4059, 4294901760
  %v4061 = vsub.f32 %v4059, %v4060
  %v4062 = vand.u32 %v4061, 4294901760
  %4063 = vmatmul.f32.gmra.mxu0 %v4062
  %v4064 = vpop.f32.mrf.mxu0
  %v4065 = vadd.f32 %v4000, %v4064
  %v4066 = vand.u32 %v3954, 4294901760
  %v4067 = vsub.f32 %v3954, %v4066
  %v4068 = vand.u32 %v4067, 4294901760
  %v4069 = vsub.f32 %v4067, %v4068
  %v4070 = vand.u32 %v4069, 4294901760
  %4071 = vmatmul.f32.gmra.mxu0 %v4070
  %v4072 = vpop.f32.mrf.mxu0
  %v4073 = vadd.f32 %v4000, %v4072
  %v4074 = vand.u32 %v3955, 4294901760
  %v4075 = vsub.f32 %v3955, %v4074
  %v4076 = vand.u32 %v4075, 4294901760
  %v4077 = vsub.f32 %v4075, %v4076
  %v4078 = vand.u32 %v4077, 4294901760
  %4079 = vmatmul.f32.gmra.mxu0 %v4078
  %v4080 = vpop.f32.mrf.mxu0
  %v4081 = vadd.f32 %v4000, %v4080
  %v4082 = vand.u32 %v3956, 4294901760
  %v4083 = vsub.f32 %v3956, %v4082
  %v4084 = vand.u32 %v4083, 4294901760
  %v4085 = vsub.f32 %v4083, %v4084
  %v4086 = vand.u32 %v4085, 4294901760
  %4087 = vmatmul.f32.gmra.mxu0 %v4086
  %v4088 = vpop.f32.mrf.mxu0
  %v4089 = vadd.f32 %v4000, %v4088
  %v4090 = vand.u32 %v3957, 4294901760
  %v4091 = vsub.f32 %v3957, %v4090
  %v4092 = vand.u32 %v4091, 4294901760
  %v4093 = vsub.f32 %v4091, %v4092
  %v4094 = vand.u32 %v4093, 4294901760
  %4095 = vmatmul.f32.gmra.mxu0 %v4094
  %v4096 = vpop.f32.mrf.mxu0
  %v4097 = vadd.f32 %v4000, %v4096
  %v4098 = vand.u32 %v3958, 4294901760
  %v4099 = vsub.f32 %v3958, %v4098
  %v4100 = vand.u32 %v4099, 4294901760
  %v4101 = vsub.f32 %v4099, %v4100
  %v4102 = vand.u32 %v4101, 4294901760
  %4103 = vmatmul.f32.gmra.mxu0 %v4102
  %v4104 = vpop.f32.mrf.mxu0
  %v4105 = vadd.f32 %v4000, %v4104
  %v4106 = vand.u32 %v3959, 4294901760
  %v4107 = vsub.f32 %v3959, %v4106
  %v4108 = vand.u32 %v4107, 4294901760
  %v4109 = vsub.f32 %v4107, %v4108
  %v4110 = vand.u32 %v4109, 4294901760
  %4111 = vmatmul.f32.gmra.mxu0 %v4110
  %v4112 = vpop.f32.mrf.mxu0
  %v4113 = vadd.f32 %v4000, %v4112
  %v4114 = vand.u32 %v3960, 4294901760
  %v4115 = vsub.f32 %v3960, %v4114
  %v4116 = vand.u32 %v4115, 4294901760
  %v4117 = vsub.f32 %v4115, %v4116
  %v4118 = vand.u32 %v4117, 4294901760
  %4119 = vmatmul.f32.gmra.mxu0 %v4118
  %v4120 = vpop.f32.mrf.mxu0
  %v4121 = vadd.f32 %v4000, %v4120
  %v4122 = vand.u32 %v3961, 4294901760
  %v4123 = vsub.f32 %v3961, %v4122
  %v4124 = vand.u32 %v4123, 4294901760
  %v4125 = vsub.f32 %v4123, %v4124
  %v4126 = vand.u32 %v4125, 4294901760
  %4127 = vmatmul.f32.gmra.mxu0 %v4126
  %v4128 = vpop.f32.mrf.mxu0
  %v4129 = vadd.f32 %v4000, %v4128
  %v4130 = vand.u32 %v3962, 4294901760
  %v4131 = vsub.f32 %v3962, %v4130
  %v4132 = vand.u32 %v4131, 4294901760
  %v4133 = vsub.f32 %v4131, %v4132
  %v4134 = vand.u32 %v4133, 4294901760
  %4135 = vmatmul.f32.gmra.mxu0 %v4134
  %v4136 = vpop.f32.mrf.mxu0
  %v4137 = vadd.f32 %v4000, %v4136
  %v4138 = vand.u32 %v3963, 4294901760
  %v4139 = vsub.f32 %v3963, %v4138
  %v4140 = vand.u32 %v4139, 4294901760
  %v4141 = vsub.f32 %v4139, %v4140
  %v4142 = vand.u32 %v4141, 4294901760
  %4143 = vmatmul.f32.gmra.mxu0 %v4142
  %v4144 = vpop.f32.mrf.mxu0
  %v4145 = vadd.f32 %v4000, %v4144
  %v4146 = vand.u32 %v3964, 4294901760
  %v4147 = vsub.f32 %v3964, %v4146
  %v4148 = vand.u32 %v4147, 4294901760
  %v4149 = vsub.f32 %v4147, %v4148
  %v4150 = vand.u32 %v4149, 4294901760
  %4151 = vmatmul.f32.gmra.mxu0 %v4150
  %v4152 = vpop.f32.mrf.mxu0
  %v4153 = vadd.f32 %v4000, %v4152
  %v4154 = vand.u32 %v3965, 4294901760
  %v4155 = vsub.f32 %v3965, %v4154
  %v4156 = vand.u32 %v4155, 4294901760
  %v4157 = vsub.f32 %v4155, %v4156
  %v4158 = vand.u32 %v4157, 4294901760
  %4159 = vmatmul.f32.gmra.mxu0 %v4158
  %v4160 = vpop.f32.mrf.mxu0
  %v4161 = vadd.f32 %v4000, %v4160
  %v4162 = vand.u32 %v3966, 4294901760
  %v4163 = vsub.f32 %v3966, %v4162
  %v4164 = vand.u32 %v4163, 4294901760
  %v4165 = vsub.f32 %v4163, %v4164
  %v4166 = vand.u32 %v4165, 4294901760
  %4167 = vmatmul.f32.gmra.mxu0 %v4166
  %v4168 = vpop.f32.mrf.mxu0
  %v4169 = vadd.f32 %v4000, %v4168
  %v4170 = vand.u32 %v3967, 4294901760
  %v4171 = vsub.f32 %v3967, %v4170
  %v4172 = vand.u32 %v4171, 4294901760
  %v4173 = vsub.f32 %v4171, %v4172
  %v4174 = vand.u32 %v4173, 4294901760
  %4175 = vmatmul.f32.gmra.mxu0 %v4174
  %v4176 = vpop.f32.mrf.mxu0
  %v4177 = vadd.f32 %v4000, %v4176
  %v4178 = vand.u32 %v3968, 4294901760
  %v4179 = vsub.f32 %v3968, %v4178
  %v4180 = vand.u32 %v4179, 4294901760
  %v4181 = vsub.f32 %v4179, %v4180
  %v4182 = vand.u32 %v4181, 4294901760
  %4183 = vmatmul.f32.gmra.mxu0 %v4182
  %v4184 = vpop.f32.mrf.mxu0
  %v4185 = vadd.f32 %v4000, %v4184
  %v4186 = vand.u32 %v3969, 4294901760
  %v4187 = vsub.f32 %v3969, %v4186
  %v4188 = vand.u32 %v4187, 4294901760
  %v4189 = vsub.f32 %v4187, %v4188
  %v4190 = vand.u32 %v4189, 4294901760
  %4191 = vmatmul.f32.gmra.mxu0 %v4190
  %v4192 = vpop.f32.mrf.mxu0
  %v4193 = vadd.f32 %v4000, %v4192
  %v4194 = vand.u32 %v3970, 4294901760
  %v4195 = vsub.f32 %v3970, %v4194
  %v4196 = vand.u32 %v4195, 4294901760
  %v4197 = vsub.f32 %v4195, %v4196
  %v4198 = vand.u32 %v4197, 4294901760
  %4199 = vmatmul.f32.gmra.mxu0 %v4198
  %v4200 = vpop.f32.mrf.mxu0
  %v4201 = vadd.f32 %v4000, %v4200
  %v4202 = vand.u32 %v3971, 4294901760
  %v4203 = vsub.f32 %v3971, %v4202
  %v4204 = vand.u32 %v4203, 4294901760
  %v4205 = vsub.f32 %v4203, %v4204
  %v4206 = vand.u32 %v4205, 4294901760
  %4207 = vmatmul.f32.gmra.mxu0 %v4206
  %v4208 = vpop.f32.mrf.mxu0
  %v4209 = vadd.f32 %v4000, %v4208
  %v4210 = vand.u32 %v3972, 4294901760
  %v4211 = vsub.f32 %v3972, %v4210
  %v4212 = vand.u32 %v4211, 4294901760
  %v4213 = vsub.f32 %v4211, %v4212
  %v4214 = vand.u32 %v4213, 4294901760
  %4215 = vmatmul.f32.gmra.mxu0 %v4214
  %v4216 = vpop.f32.mrf.mxu0
  %v4217 = vadd.f32 %v4000, %v4216
  %v4218 = vand.u32 %v3973, 4294901760
  %v4219 = vsub.f32 %v3973, %v4218
  %v4220 = vand.u32 %v4219, 4294901760
  %v4221 = vsub.f32 %v4219, %v4220
  %v4222 = vand.u32 %v4221, 4294901760
  %4223 = vmatmul.f32.gmra.mxu0 %v4222
  %v4224 = vpop.f32.mrf.mxu0
  %v4225 = vadd.f32 %v4000, %v4224
  %v4226 = vand.u32 %v3974, 4294901760
  %v4227 = vsub.f32 %v3974, %v4226
  %v4228 = vand.u32 %v4227, 4294901760
  %v4229 = vsub.f32 %v4227, %v4228
  %v4230 = vand.u32 %v4229, 4294901760
  %4231 = vmatmul.f32.gmra.mxu0 %v4230
  %v4232 = vpop.f32.mrf.mxu0
  %v4233 = vadd.f32 %v4000, %v4232
  %v4234 = vand.u32 %v3975, 4294901760
  %v4235 = vsub.f32 %v3975, %v4234
  %v4236 = vand.u32 %v4235, 4294901760
  %v4237 = vsub.f32 %v4235, %v4236
  %v4238 = vand.u32 %v4237, 4294901760
  %4239 = vmatmul.f32.gmra.mxu0 %v4238
  %v4240 = vpop.f32.mrf.mxu0
  %v4241 = vadd.f32 %v4000, %v4240
  %v4242 = vand.u32 %v3976, 4294901760
  %v4243 = vsub.f32 %v3976, %v4242
  %v4244 = vand.u32 %v4243, 4294901760
  %v4245 = vsub.f32 %v4243, %v4244
  %v4246 = vand.u32 %v4245, 4294901760
  %4247 = vmatmul.f32.gmra.mxu0 %v4246
  %v4248 = vpop.f32.mrf.mxu0
  %v4249 = vadd.f32 %v4000, %v4248
  %v4250 = vand.u32 %v3977, 4294901760
  %v4251 = vsub.f32 %v3977, %v4250
  %v4252 = vand.u32 %v4251, 4294901760
  %v4253 = vsub.f32 %v4251, %v4252
  %v4254 = vand.u32 %v4253, 4294901760
  %4255 = vmatmul.f32.gmra.mxu0 %v4254
  %v4256 = vpop.f32.mrf.mxu0
  %v4257 = vadd.f32 %v4000, %v4256
  %v4258 = vand.u32 %v3978, 4294901760
  %v4259 = vsub.f32 %v3978, %v4258
  %v4260 = vand.u32 %v4259, 4294901760
  %v4261 = vsub.f32 %v4259, %v4260
  %v4262 = vand.u32 %v4261, 4294901760
  %4263 = vmatmul.f32.gmra.mxu0 %v4262
  %v4264 = vpop.f32.mrf.mxu0
  %v4265 = vadd.f32 %v4000, %v4264
  %v4266 = vand.u32 %v3979, 4294901760
  %v4267 = vsub.f32 %v3979, %v4266
  %v4268 = vand.u32 %v4267, 4294901760
  %v4269 = vsub.f32 %v4267, %v4268
  %v4270 = vand.u32 %v4269, 4294901760
  %4271 = vmatmul.f32.gmra.mxu0 %v4270
  %v4272 = vpop.f32.mrf.mxu0
  %v4273 = vadd.f32 %v4000, %v4272
  %v4274 = vand.u32 %v3980, 4294901760
  %v4275 = vsub.f32 %v3980, %v4274
  %v4276 = vand.u32 %v4275, 4294901760
  %v4277 = vsub.f32 %v4275, %v4276
  %v4278 = vand.u32 %v4277, 4294901760
  %4279 = vmatmul.f32.gmra.mxu0 %v4278
  %v4280 = vpop.f32.mrf.mxu0
  %v4281 = vadd.f32 %v4000, %v4280
  %v4282 = vand.u32 %v3981, 4294901760
  %v4283 = vsub.f32 %v3981, %v4282
  %v4284 = vand.u32 %v4283, 4294901760
  %v4285 = vsub.f32 %v4283, %v4284
  %v4286 = vand.u32 %v4285, 4294901760
  %4287 = vmatmul.f32.gmra.mxu0 %v4286
  %v4288 = vpop.f32.mrf.mxu0
  %v4289 = vadd.f32 %v4000, %v4288
  %4290 = vdwg.mxu0
  %v4291 = vand.u32 %v3997, 4294901760
  %v4292 = vsub.f32 %v3997, %v4291
  %v4293 = vand.u32 %v4292, 4294901760
  %v4294 = vsub.f32 %v4292, %v4293
  %v4295 = vand.u32 %v4294, 4294901760
  %4296 = vmatpush.msra.mxu0 %v4295
  %v4297 = vand.u32 %v3996, 4294901760
  %v4298 = vsub.f32 %v3996, %v4297
  %v4299 = vand.u32 %v4298, 4294901760
  %v4300 = vsub.f32 %v4298, %v4299
  %v4301 = vand.u32 %v4300, 4294901760
  %4302 = vmatpush.msra.mxu0 %v4301
  %v4303 = vand.u32 %v3995, 4294901760
  %v4304 = vsub.f32 %v3995, %v4303
  %v4305 = vand.u32 %v4304, 4294901760
  %v4306 = vsub.f32 %v4304, %v4305
  %v4307 = vand.u32 %v4306, 4294901760
  %4308 = vmatpush.msra.mxu0 %v4307
  %v4309 = vand.u32 %v3994, 4294901760
  %v4310 = vsub.f32 %v3994, %v4309
  %v4311 = vand.u32 %v4310, 4294901760
  %v4312 = vsub.f32 %v4310, %v4311
  %v4313 = vand.u32 %v4312, 4294901760
  %4314 = vmatpush.msra.mxu0 %v4313
  %v4315 = vand.u32 %v3993, 4294901760
  %v4316 = vsub.f32 %v3993, %v4315
  %v4317 = vand.u32 %v4316, 4294901760
  %v4318 = vsub.f32 %v4316, %v4317
  %v4319 = vand.u32 %v4318, 4294901760
  %4320 = vmatpush.msra.mxu0 %v4319
  %v4321 = vand.u32 %v3992, 4294901760
  %v4322 = vsub.f32 %v3992, %v4321
  %v4323 = vand.u32 %v4322, 4294901760
  %v4324 = vsub.f32 %v4322, %v4323
  %v4325 = vand.u32 %v4324, 4294901760
  %4326 = vmatpush.msra.mxu0 %v4325
  %v4327 = vand.u32 %v3991, 4294901760
  %v4328 = vsub.f32 %v3991, %v4327
  %v4329 = vand.u32 %v4328, 4294901760
  %v4330 = vsub.f32 %v4328, %v4329
  %v4331 = vand.u32 %v4330, 4294901760
  %4332 = vmatpush.msra.mxu0 %v4331
  %v4333 = vand.u32 %v3990, 4294901760
  %v4334 = vsub.f32 %v3990, %v4333
  %v4335 = vand.u32 %v4334, 4294901760
  %v4336 = vsub.f32 %v4334, %v4335
  %v4337 = vand.u32 %v4336, 4294901760
  %4338 = vmatpush.msra.mxu0 %v4337
  %v4339 = vand.u32 %v3989, 4294901760
  %v4340 = vsub.f32 %v3989, %v4339
  %v4341 = vand.u32 %v4340, 4294901760
  %v4342 = vsub.f32 %v4340, %v4341
  %v4343 = vand.u32 %v4342, 4294901760
  %4344 = vmatpush.msra.mxu0 %v4343
  %v4345 = vand.u32 %v3988, 4294901760
  %v4346 = vsub.f32 %v3988, %v4345
  %v4347 = vand.u32 %v4346, 4294901760
  %v4348 = vsub.f32 %v4346, %v4347
  %v4349 = vand.u32 %v4348, 4294901760
  %4350 = vmatpush.msra.mxu0 %v4349
  %v4351 = vand.u32 %v3987, 4294901760
  %v4352 = vsub.f32 %v3987, %v4351
  %v4353 = vand.u32 %v4352, 4294901760
  %v4354 = vsub.f32 %v4352, %v4353
  %v4355 = vand.u32 %v4354, 4294901760
  %4356 = vmatpush.msra.mxu0 %v4355
  %v4357 = vand.u32 %v3986, 4294901760
  %v4358 = vsub.f32 %v3986, %v4357
  %v4359 = vand.u32 %v4358, 4294901760
  %v4360 = vsub.f32 %v4358, %v4359
  %v4361 = vand.u32 %v4360, 4294901760
  %4362 = vmatpush.msra.mxu0 %v4361
  %v4363 = vand.u32 %v3985, 4294901760
  %v4364 = vsub.f32 %v3985, %v4363
  %v4365 = vand.u32 %v4364, 4294901760
  %v4366 = vsub.f32 %v4364, %v4365
  %v4367 = vand.u32 %v4366, 4294901760
  %4368 = vmatpush.msra.mxu0 %v4367
  %v4369 = vand.u32 %v3984, 4294901760
  %v4370 = vsub.f32 %v3984, %v4369
  %v4371 = vand.u32 %v4370, 4294901760
  %v4372 = vsub.f32 %v4370, %v4371
  %v4373 = vand.u32 %v4372, 4294901760
  %4374 = vmatpush.msra.mxu0 %v4373
  %v4375 = vand.u32 %v3983, 4294901760
  %v4376 = vsub.f32 %v3983, %v4375
  %v4377 = vand.u32 %v4376, 4294901760
  %v4378 = vsub.f32 %v4376, %v4377
  %v4379 = vand.u32 %v4378, 4294901760
  %4380 = vmatpush.msra.mxu0 %v4379
  %v4381 = vand.u32 %v3982, 4294901760
  %v4382 = vsub.f32 %v3982, %v4381
  %v4383 = vand.u32 %v4382, 4294901760
  %v4384 = vsub.f32 %v4382, %v4383
  %v4385 = vand.u32 %v4384, 4294901760
  %4386 = vmatpush.msra.mxu0 %v4385
  %v4387 = vand.u32 %v3950, 4294901760
  %4388 = vmatmul.f32.gmra.mxu0 %v4387
  %v4389 = vpop.f32.mrf.mxu0
  %v4390 = vadd.f32 %v4041, %v4389
  %v4391 = vand.u32 %v3951, 4294901760
  %4392 = vmatmul.f32.gmra.mxu0 %v4391
  %v4393 = vpop.f32.mrf.mxu0
  %v4394 = vadd.f32 %v4049, %v4393
  %v4395 = vand.u32 %v3952, 4294901760
  %4396 = vmatmul.f32.gmra.mxu0 %v4395
  %v4397 = vpop.f32.mrf.mxu0
  %v4398 = vadd.f32 %v4057, %v4397
  %v4399 = vand.u32 %v3953, 4294901760
  %4400 = vmatmul.f32.gmra.mxu0 %v4399
  %v4401 = vpop.f32.mrf.mxu0
  %v4402 = vadd.f32 %v4065, %v4401
  %v4403 = vand.u32 %v3954, 4294901760
  %4404 = vmatmul.f32.gmra.mxu0 %v4403
  %v4405 = vpop.f32.mrf.mxu0
  %v4406 = vadd.f32 %v4073, %v4405
  %v4407 = vand.u32 %v3955, 4294901760
  %4408 = vmatmul.f32.gmra.mxu0 %v4407
  %v4409 = vpop.f32.mrf.mxu0
  %v4410 = vadd.f32 %v4081, %v4409
  %v4411 = vand.u32 %v3956, 4294901760
  %4412 = vmatmul.f32.gmra.mxu0 %v4411
  %v4413 = vpop.f32.mrf.mxu0
  %v4414 = vadd.f32 %v4089, %v4413
  %v4415 = vand.u32 %v3957, 4294901760
  %4416 = vmatmul.f32.gmra.mxu0 %v4415
  %v4417 = vpop.f32.mrf.mxu0
  %v4418 = vadd.f32 %v4097, %v4417
  %v4419 = vand.u32 %v3958, 4294901760
  %4420 = vmatmul.f32.gmra.mxu0 %v4419
  %v4421 = vpop.f32.mrf.mxu0
  %v4422 = vadd.f32 %v4105, %v4421
  %v4423 = vand.u32 %v3959, 4294901760
  %4424 = vmatmul.f32.gmra.mxu0 %v4423
  %v4425 = vpop.f32.mrf.mxu0
  %v4426 = vadd.f32 %v4113, %v4425
  %v4427 = vand.u32 %v3960, 4294901760
  %4428 = vmatmul.f32.gmra.mxu0 %v4427
  %v4429 = vpop.f32.mrf.mxu0
  %v4430 = vadd.f32 %v4121, %v4429
  %v4431 = vand.u32 %v3961, 4294901760
  %4432 = vmatmul.f32.gmra.mxu0 %v4431
  %v4433 = vpop.f32.mrf.mxu0
  %v4434 = vadd.f32 %v4129, %v4433
  %v4435 = vand.u32 %v3962, 4294901760
  %4436 = vmatmul.f32.gmra.mxu0 %v4435
  %v4437 = vpop.f32.mrf.mxu0
  %v4438 = vadd.f32 %v4137, %v4437
  %v4439 = vand.u32 %v3963, 4294901760
  %4440 = vmatmul.f32.gmra.mxu0 %v4439
  %v4441 = vpop.f32.mrf.mxu0
  %v4442 = vadd.f32 %v4145, %v4441
  %v4443 = vand.u32 %v3964, 4294901760
  %4444 = vmatmul.f32.gmra.mxu0 %v4443
  %v4445 = vpop.f32.mrf.mxu0
  %v4446 = vadd.f32 %v4153, %v4445
  %v4447 = vand.u32 %v3965, 4294901760
  %4448 = vmatmul.f32.gmra.mxu0 %v4447
  %v4449 = vpop.f32.mrf.mxu0
  %v4450 = vadd.f32 %v4161, %v4449
  %v4451 = vand.u32 %v3966, 4294901760
  %4452 = vmatmul.f32.gmra.mxu0 %v4451
  %v4453 = vpop.f32.mrf.mxu0
  %v4454 = vadd.f32 %v4169, %v4453
  %v4455 = vand.u32 %v3967, 4294901760
  %4456 = vmatmul.f32.gmra.mxu0 %v4455
  %v4457 = vpop.f32.mrf.mxu0
  %v4458 = vadd.f32 %v4177, %v4457
  %v4459 = vand.u32 %v3968, 4294901760
  %4460 = vmatmul.f32.gmra.mxu0 %v4459
  %v4461 = vpop.f32.mrf.mxu0
  %v4462 = vadd.f32 %v4185, %v4461
  %v4463 = vand.u32 %v3969, 4294901760
  %4464 = vmatmul.f32.gmra.mxu0 %v4463
  %v4465 = vpop.f32.mrf.mxu0
  %v4466 = vadd.f32 %v4193, %v4465
  %v4467 = vand.u32 %v3970, 4294901760
  %4468 = vmatmul.f32.gmra.mxu0 %v4467
  %v4469 = vpop.f32.mrf.mxu0
  %v4470 = vadd.f32 %v4201, %v4469
  %v4471 = vand.u32 %v3971, 4294901760
  %4472 = vmatmul.f32.gmra.mxu0 %v4471
  %v4473 = vpop.f32.mrf.mxu0
  %v4474 = vadd.f32 %v4209, %v4473
  %v4475 = vand.u32 %v3972, 4294901760
  %4476 = vmatmul.f32.gmra.mxu0 %v4475
  %v4477 = vpop.f32.mrf.mxu0
  %v4478 = vadd.f32 %v4217, %v4477
  %v4479 = vand.u32 %v3973, 4294901760
  %4480 = vmatmul.f32.gmra.mxu0 %v4479
  %v4481 = vpop.f32.mrf.mxu0
  %v4482 = vadd.f32 %v4225, %v4481
  %v4483 = vand.u32 %v3974, 4294901760
  %4484 = vmatmul.f32.gmra.mxu0 %v4483
  %v4485 = vpop.f32.mrf.mxu0
  %v4486 = vadd.f32 %v4233, %v4485
  %v4487 = vand.u32 %v3975, 4294901760
  %4488 = vmatmul.f32.gmra.mxu0 %v4487
  %v4489 = vpop.f32.mrf.mxu0
  %v4490 = vadd.f32 %v4241, %v4489
  %v4491 = vand.u32 %v3976, 4294901760
  %4492 = vmatmul.f32.gmra.mxu0 %v4491
  %v4493 = vpop.f32.mrf.mxu0
  %v4494 = vadd.f32 %v4249, %v4493
  %v4495 = vand.u32 %v3977, 4294901760
  %4496 = vmatmul.f32.gmra.mxu0 %v4495
  %v4497 = vpop.f32.mrf.mxu0
  %v4498 = vadd.f32 %v4257, %v4497
  %v4499 = vand.u32 %v3978, 4294901760
  %4500 = vmatmul.f32.gmra.mxu0 %v4499
  %v4501 = vpop.f32.mrf.mxu0
  %v4502 = vadd.f32 %v4265, %v4501
  %v4503 = vand.u32 %v3979, 4294901760
  %4504 = vmatmul.f32.gmra.mxu0 %v4503
  %v4505 = vpop.f32.mrf.mxu0
  %v4506 = vadd.f32 %v4273, %v4505
  %v4507 = vand.u32 %v3980, 4294901760
  %4508 = vmatmul.f32.gmra.mxu0 %v4507
  %v4509 = vpop.f32.mrf.mxu0
  %v4510 = vadd.f32 %v4281, %v4509
  %v4511 = vand.u32 %v3981, 4294901760
  %4512 = vmatmul.f32.gmra.mxu0 %v4511
  %v4513 = vpop.f32.mrf.mxu0
  %v4514 = vadd.f32 %v4289, %v4513
  %4515 = vdwg.mxu0
  %v4516 = vand.u32 %v3997, 4294901760
  %v4517 = vsub.f32 %v3997, %v4516
  %4518 = vmatpush.msra.mxu0 %v4517
  %v4519 = vand.u32 %v3996, 4294901760
  %v4520 = vsub.f32 %v3996, %v4519
  %4521 = vmatpush.msra.mxu0 %v4520
  %v4522 = vand.u32 %v3995, 4294901760
  %v4523 = vsub.f32 %v3995, %v4522
  %4524 = vmatpush.msra.mxu0 %v4523
  %v4525 = vand.u32 %v3994, 4294901760
  %v4526 = vsub.f32 %v3994, %v4525
  %4527 = vmatpush.msra.mxu0 %v4526
  %v4528 = vand.u32 %v3993, 4294901760
  %v4529 = vsub.f32 %v3993, %v4528
  %4530 = vmatpush.msra.mxu0 %v4529
  %v4531 = vand.u32 %v3992, 4294901760
  %v4532 = vsub.f32 %v3992, %v4531
  %4533 = vmatpush.msra.mxu0 %v4532
  %v4534 = vand.u32 %v3991, 4294901760
  %v4535 = vsub.f32 %v3991, %v4534
  %4536 = vmatpush.msra.mxu0 %v4535
  %v4537 = vand.u32 %v3990, 4294901760
  %v4538 = vsub.f32 %v3990, %v4537
  %4539 = vmatpush.msra.mxu0 %v4538
  %v4540 = vand.u32 %v3989, 4294901760
  %v4541 = vsub.f32 %v3989, %v4540
  %4542 = vmatpush.msra.mxu0 %v4541
  %v4543 = vand.u32 %v3988, 4294901760
  %v4544 = vsub.f32 %v3988, %v4543
  %4545 = vmatpush.msra.mxu0 %v4544
  %v4546 = vand.u32 %v3987, 4294901760
  %v4547 = vsub.f32 %v3987, %v4546
  %4548 = vmatpush.msra.mxu0 %v4547
  %v4549 = vand.u32 %v3986, 4294901760
  %v4550 = vsub.f32 %v3986, %v4549
  %4551 = vmatpush.msra.mxu0 %v4550
  %v4552 = vand.u32 %v3985, 4294901760
  %v4553 = vsub.f32 %v3985, %v4552
  %4554 = vmatpush.msra.mxu0 %v4553
  %v4555 = vand.u32 %v3984, 4294901760
  %v4556 = vsub.f32 %v3984, %v4555
  %4557 = vmatpush.msra.mxu0 %v4556
  %v4558 = vand.u32 %v3983, 4294901760
  %v4559 = vsub.f32 %v3983, %v4558
  %4560 = vmatpush.msra.mxu0 %v4559
  %v4561 = vand.u32 %v3982, 4294901760
  %v4562 = vsub.f32 %v3982, %v4561
  %4563 = vmatpush.msra.mxu0 %v4562
  %v4564 = vand.u32 %v3950, 4294901760
  %v4565 = vsub.f32 %v3950, %v4564
  %4566 = vmatmul.f32.gmra.mxu0 %v4565
  %v4567 = vpop.f32.mrf.mxu0
  %v4568 = vadd.f32 %v4390, %v4567
  %v4569 = vand.u32 %v3951, 4294901760
  %v4570 = vsub.f32 %v3951, %v4569
  %4571 = vmatmul.f32.gmra.mxu0 %v4570
  %v4572 = vpop.f32.mrf.mxu0
  %v4573 = vadd.f32 %v4394, %v4572
  %v4574 = vand.u32 %v3952, 4294901760
  %v4575 = vsub.f32 %v3952, %v4574
  %4576 = vmatmul.f32.gmra.mxu0 %v4575
  %v4577 = vpop.f32.mrf.mxu0
  %v4578 = vadd.f32 %v4398, %v4577
  %v4579 = vand.u32 %v3953, 4294901760
  %v4580 = vsub.f32 %v3953, %v4579
  %4581 = vmatmul.f32.gmra.mxu0 %v4580
  %v4582 = vpop.f32.mrf.mxu0
  %v4583 = vadd.f32 %v4402, %v4582
  %v4584 = vand.u32 %v3954, 4294901760
  %v4585 = vsub.f32 %v3954, %v4584
  %4586 = vmatmul.f32.gmra.mxu0 %v4585
  %v4587 = vpop.f32.mrf.mxu0
  %v4588 = vadd.f32 %v4406, %v4587
  %v4589 = vand.u32 %v3955, 4294901760
  %v4590 = vsub.f32 %v3955, %v4589
  %4591 = vmatmul.f32.gmra.mxu0 %v4590
  %v4592 = vpop.f32.mrf.mxu0
  %v4593 = vadd.f32 %v4410, %v4592
  %v4594 = vand.u32 %v3956, 4294901760
  %v4595 = vsub.f32 %v3956, %v4594
  %4596 = vmatmul.f32.gmra.mxu0 %v4595
  %v4597 = vpop.f32.mrf.mxu0
  %v4598 = vadd.f32 %v4414, %v4597
  %v4599 = vand.u32 %v3957, 4294901760
  %v4600 = vsub.f32 %v3957, %v4599
  %4601 = vmatmul.f32.gmra.mxu0 %v4600
  %v4602 = vpop.f32.mrf.mxu0
  %v4603 = vadd.f32 %v4418, %v4602
  %v4604 = vand.u32 %v3958, 4294901760
  %v4605 = vsub.f32 %v3958, %v4604
  %4606 = vmatmul.f32.gmra.mxu0 %v4605
  %v4607 = vpop.f32.mrf.mxu0
  %v4608 = vadd.f32 %v4422, %v4607
  %v4609 = vand.u32 %v3959, 4294901760
  %v4610 = vsub.f32 %v3959, %v4609
  %4611 = vmatmul.f32.gmra.mxu0 %v4610
  %v4612 = vpop.f32.mrf.mxu0
  %v4613 = vadd.f32 %v4426, %v4612
  %v4614 = vand.u32 %v3960, 4294901760
  %v4615 = vsub.f32 %v3960, %v4614
  %4616 = vmatmul.f32.gmra.mxu0 %v4615
  %v4617 = vpop.f32.mrf.mxu0
  %v4618 = vadd.f32 %v4430, %v4617
  %v4619 = vand.u32 %v3961, 4294901760
  %v4620 = vsub.f32 %v3961, %v4619
  %4621 = vmatmul.f32.gmra.mxu0 %v4620
  %v4622 = vpop.f32.mrf.mxu0
  %v4623 = vadd.f32 %v4434, %v4622
  %v4624 = vand.u32 %v3962, 4294901760
  %v4625 = vsub.f32 %v3962, %v4624
  %4626 = vmatmul.f32.gmra.mxu0 %v4625
  %v4627 = vpop.f32.mrf.mxu0
  %v4628 = vadd.f32 %v4438, %v4627
  %v4629 = vand.u32 %v3963, 4294901760
  %v4630 = vsub.f32 %v3963, %v4629
  %4631 = vmatmul.f32.gmra.mxu0 %v4630
  %v4632 = vpop.f32.mrf.mxu0
  %v4633 = vadd.f32 %v4442, %v4632
  %v4634 = vand.u32 %v3964, 4294901760
  %v4635 = vsub.f32 %v3964, %v4634
  %4636 = vmatmul.f32.gmra.mxu0 %v4635
  %v4637 = vpop.f32.mrf.mxu0
  %v4638 = vadd.f32 %v4446, %v4637
  %v4639 = vand.u32 %v3965, 4294901760
  %v4640 = vsub.f32 %v3965, %v4639
  %4641 = vmatmul.f32.gmra.mxu0 %v4640
  %v4642 = vpop.f32.mrf.mxu0
  %v4643 = vadd.f32 %v4450, %v4642
  %v4644 = vand.u32 %v3966, 4294901760
  %v4645 = vsub.f32 %v3966, %v4644
  %4646 = vmatmul.f32.gmra.mxu0 %v4645
  %v4647 = vpop.f32.mrf.mxu0
  %v4648 = vadd.f32 %v4454, %v4647
  %v4649 = vand.u32 %v3967, 4294901760
  %v4650 = vsub.f32 %v3967, %v4649
  %4651 = vmatmul.f32.gmra.mxu0 %v4650
  %v4652 = vpop.f32.mrf.mxu0
  %v4653 = vadd.f32 %v4458, %v4652
  %v4654 = vand.u32 %v3968, 4294901760
  %v4655 = vsub.f32 %v3968, %v4654
  %4656 = vmatmul.f32.gmra.mxu0 %v4655
  %v4657 = vpop.f32.mrf.mxu0
  %v4658 = vadd.f32 %v4462, %v4657
  %v4659 = vand.u32 %v3969, 4294901760
  %v4660 = vsub.f32 %v3969, %v4659
  %4661 = vmatmul.f32.gmra.mxu0 %v4660
  %v4662 = vpop.f32.mrf.mxu0
  %v4663 = vadd.f32 %v4466, %v4662
  %v4664 = vand.u32 %v3970, 4294901760
  %v4665 = vsub.f32 %v3970, %v4664
  %4666 = vmatmul.f32.gmra.mxu0 %v4665
  %v4667 = vpop.f32.mrf.mxu0
  %v4668 = vadd.f32 %v4470, %v4667
  %v4669 = vand.u32 %v3971, 4294901760
  %v4670 = vsub.f32 %v3971, %v4669
  %4671 = vmatmul.f32.gmra.mxu0 %v4670
  %v4672 = vpop.f32.mrf.mxu0
  %v4673 = vadd.f32 %v4474, %v4672
  %v4674 = vand.u32 %v3972, 4294901760
  %v4675 = vsub.f32 %v3972, %v4674
  %4676 = vmatmul.f32.gmra.mxu0 %v4675
  %v4677 = vpop.f32.mrf.mxu0
  %v4678 = vadd.f32 %v4478, %v4677
  %v4679 = vand.u32 %v3973, 4294901760
  %v4680 = vsub.f32 %v3973, %v4679
  %4681 = vmatmul.f32.gmra.mxu0 %v4680
  %v4682 = vpop.f32.mrf.mxu0
  %v4683 = vadd.f32 %v4482, %v4682
  %v4684 = vand.u32 %v3974, 4294901760
  %v4685 = vsub.f32 %v3974, %v4684
  %4686 = vmatmul.f32.gmra.mxu0 %v4685
  %v4687 = vpop.f32.mrf.mxu0
  %v4688 = vadd.f32 %v4486, %v4687
  %v4689 = vand.u32 %v3975, 4294901760
  %v4690 = vsub.f32 %v3975, %v4689
  %4691 = vmatmul.f32.gmra.mxu0 %v4690
  %v4692 = vpop.f32.mrf.mxu0
  %v4693 = vadd.f32 %v4490, %v4692
  %v4694 = vand.u32 %v3976, 4294901760
  %v4695 = vsub.f32 %v3976, %v4694
  %4696 = vmatmul.f32.gmra.mxu0 %v4695
  %v4697 = vpop.f32.mrf.mxu0
  %v4698 = vadd.f32 %v4494, %v4697
  %v4699 = vand.u32 %v3977, 4294901760
  %v4700 = vsub.f32 %v3977, %v4699
  %4701 = vmatmul.f32.gmra.mxu0 %v4700
  %v4702 = vpop.f32.mrf.mxu0
  %v4703 = vadd.f32 %v4498, %v4702
  %v4704 = vand.u32 %v3978, 4294901760
  %v4705 = vsub.f32 %v3978, %v4704
  %4706 = vmatmul.f32.gmra.mxu0 %v4705
  %v4707 = vpop.f32.mrf.mxu0
  %v4708 = vadd.f32 %v4502, %v4707
  %v4709 = vand.u32 %v3979, 4294901760
  %v4710 = vsub.f32 %v3979, %v4709
  %4711 = vmatmul.f32.gmra.mxu0 %v4710
  %v4712 = vpop.f32.mrf.mxu0
  %v4713 = vadd.f32 %v4506, %v4712
  %v4714 = vand.u32 %v3980, 4294901760
  %v4715 = vsub.f32 %v3980, %v4714
  %4716 = vmatmul.f32.gmra.mxu0 %v4715
  %v4717 = vpop.f32.mrf.mxu0
  %v4718 = vadd.f32 %v4510, %v4717
  %v4719 = vand.u32 %v3981, 4294901760
  %v4720 = vsub.f32 %v3981, %v4719
  %4721 = vmatmul.f32.gmra.mxu0 %v4720
  %v4722 = vpop.f32.mrf.mxu0
  %v4723 = vadd.f32 %v4514, %v4722
  %4724 = vdwg.mxu0
  %v4725 = vand.u32 %v3997, 4294901760
  %4726 = vmatpush.msra.mxu0 %v4725
  %v4727 = vand.u32 %v3996, 4294901760
  %4728 = vmatpush.msra.mxu0 %v4727
  %v4729 = vand.u32 %v3995, 4294901760
  %4730 = vmatpush.msra.mxu0 %v4729
  %v4731 = vand.u32 %v3994, 4294901760
  %4732 = vmatpush.msra.mxu0 %v4731
  %v4733 = vand.u32 %v3993, 4294901760
  %4734 = vmatpush.msra.mxu0 %v4733
  %v4735 = vand.u32 %v3992, 4294901760
  %4736 = vmatpush.msra.mxu0 %v4735
  %v4737 = vand.u32 %v3991, 4294901760
  %4738 = vmatpush.msra.mxu0 %v4737
  %v4739 = vand.u32 %v3990, 4294901760
  %4740 = vmatpush.msra.mxu0 %v4739
  %v4741 = vand.u32 %v3989, 4294901760
  %4742 = vmatpush.msra.mxu0 %v4741
  %v4743 = vand.u32 %v3988, 4294901760
  %4744 = vmatpush.msra.mxu0 %v4743
  %v4745 = vand.u32 %v3987, 4294901760
  %4746 = vmatpush.msra.mxu0 %v4745
  %v4747 = vand.u32 %v3986, 4294901760
  %4748 = vmatpush.msra.mxu0 %v4747
  %v4749 = vand.u32 %v3985, 4294901760
  %4750 = vmatpush.msra.mxu0 %v4749
  %v4751 = vand.u32 %v3984, 4294901760
  %4752 = vmatpush.msra.mxu0 %v4751
  %v4753 = vand.u32 %v3983, 4294901760
  %4754 = vmatpush.msra.mxu0 %v4753
  %v4755 = vand.u32 %v3982, 4294901760
  %4756 = vmatpush.msra.mxu0 %v4755
  %v4757 = vand.u32 %v3950, 4294901760
  %v4758 = vsub.f32 %v3950, %v4757
  %v4759 = vand.u32 %v4758, 4294901760
  %4760 = vmatmul.f32.gmra.mxu0 %v4759
  %v4761 = vpop.f32.mrf.mxu0
  %v4762 = vadd.f32 %v4568, %v4761
  %v4763 = vand.u32 %v3951, 4294901760
  %v4764 = vsub.f32 %v3951, %v4763
  %v4765 = vand.u32 %v4764, 4294901760
  %4766 = vmatmul.f32.gmra.mxu0 %v4765
  %v4767 = vpop.f32.mrf.mxu0
  %v4768 = vadd.f32 %v4573, %v4767
  %v4769 = vand.u32 %v3952, 4294901760
  %v4770 = vsub.f32 %v3952, %v4769
  %v4771 = vand.u32 %v4770, 4294901760
  %4772 = vmatmul.f32.gmra.mxu0 %v4771
  %v4773 = vpop.f32.mrf.mxu0
  %v4774 = vadd.f32 %v4578, %v4773
  %v4775 = vand.u32 %v3953, 4294901760
  %v4776 = vsub.f32 %v3953, %v4775
  %v4777 = vand.u32 %v4776, 4294901760
  %4778 = vmatmul.f32.gmra.mxu0 %v4777
  %v4779 = vpop.f32.mrf.mxu0
  %v4780 = vadd.f32 %v4583, %v4779
  %v4781 = vand.u32 %v3954, 4294901760
  %v4782 = vsub.f32 %v3954, %v4781
  %v4783 = vand.u32 %v4782, 4294901760
  %4784 = vmatmul.f32.gmra.mxu0 %v4783
  %v4785 = vpop.f32.mrf.mxu0
  %v4786 = vadd.f32 %v4588, %v4785
  %v4787 = vand.u32 %v3955, 4294901760
  %v4788 = vsub.f32 %v3955, %v4787
  %v4789 = vand.u32 %v4788, 4294901760
  %4790 = vmatmul.f32.gmra.mxu0 %v4789
  %v4791 = vpop.f32.mrf.mxu0
  %v4792 = vadd.f32 %v4593, %v4791
  %v4793 = vand.u32 %v3956, 4294901760
  %v4794 = vsub.f32 %v3956, %v4793
  %v4795 = vand.u32 %v4794, 4294901760
  %4796 = vmatmul.f32.gmra.mxu0 %v4795
  %v4797 = vpop.f32.mrf.mxu0
  %v4798 = vadd.f32 %v4598, %v4797
  %v4799 = vand.u32 %v3957, 4294901760
  %v4800 = vsub.f32 %v3957, %v4799
  %v4801 = vand.u32 %v4800, 4294901760
  %4802 = vmatmul.f32.gmra.mxu0 %v4801
  %v4803 = vpop.f32.mrf.mxu0
  %v4804 = vadd.f32 %v4603, %v4803
  %v4805 = vand.u32 %v3958, 4294901760
  %v4806 = vsub.f32 %v3958, %v4805
  %v4807 = vand.u32 %v4806, 4294901760
  %4808 = vmatmul.f32.gmra.mxu0 %v4807
  %v4809 = vpop.f32.mrf.mxu0
  %v4810 = vadd.f32 %v4608, %v4809
  %v4811 = vand.u32 %v3959, 4294901760
  %v4812 = vsub.f32 %v3959, %v4811
  %v4813 = vand.u32 %v4812, 4294901760
  %4814 = vmatmul.f32.gmra.mxu0 %v4813
  %v4815 = vpop.f32.mrf.mxu0
  %v4816 = vadd.f32 %v4613, %v4815
  %v4817 = vand.u32 %v3960, 4294901760
  %v4818 = vsub.f32 %v3960, %v4817
  %v4819 = vand.u32 %v4818, 4294901760
  %4820 = vmatmul.f32.gmra.mxu0 %v4819
  %v4821 = vpop.f32.mrf.mxu0
  %v4822 = vadd.f32 %v4618, %v4821
  %v4823 = vand.u32 %v3961, 4294901760
  %v4824 = vsub.f32 %v3961, %v4823
  %v4825 = vand.u32 %v4824, 4294901760
  %4826 = vmatmul.f32.gmra.mxu0 %v4825
  %v4827 = vpop.f32.mrf.mxu0
  %v4828 = vadd.f32 %v4623, %v4827
  %v4829 = vand.u32 %v3962, 4294901760
  %v4830 = vsub.f32 %v3962, %v4829
  %v4831 = vand.u32 %v4830, 4294901760
  %4832 = vmatmul.f32.gmra.mxu0 %v4831
  %v4833 = vpop.f32.mrf.mxu0
  %v4834 = vadd.f32 %v4628, %v4833
  %v4835 = vand.u32 %v3963, 4294901760
  %v4836 = vsub.f32 %v3963, %v4835
  %v4837 = vand.u32 %v4836, 4294901760
  %4838 = vmatmul.f32.gmra.mxu0 %v4837
  %v4839 = vpop.f32.mrf.mxu0
  %v4840 = vadd.f32 %v4633, %v4839
  %v4841 = vand.u32 %v3964, 4294901760
  %v4842 = vsub.f32 %v3964, %v4841
  %v4843 = vand.u32 %v4842, 4294901760
  %4844 = vmatmul.f32.gmra.mxu0 %v4843
  %v4845 = vpop.f32.mrf.mxu0
  %v4846 = vadd.f32 %v4638, %v4845
  %v4847 = vand.u32 %v3965, 4294901760
  %v4848 = vsub.f32 %v3965, %v4847
  %v4849 = vand.u32 %v4848, 4294901760
  %4850 = vmatmul.f32.gmra.mxu0 %v4849
  %v4851 = vpop.f32.mrf.mxu0
  %v4852 = vadd.f32 %v4643, %v4851
  %v4853 = vand.u32 %v3966, 4294901760
  %v4854 = vsub.f32 %v3966, %v4853
  %v4855 = vand.u32 %v4854, 4294901760
  %4856 = vmatmul.f32.gmra.mxu0 %v4855
  %v4857 = vpop.f32.mrf.mxu0
  %v4858 = vadd.f32 %v4648, %v4857
  %v4859 = vand.u32 %v3967, 4294901760
  %v4860 = vsub.f32 %v3967, %v4859
  %v4861 = vand.u32 %v4860, 4294901760
  %4862 = vmatmul.f32.gmra.mxu0 %v4861
  %v4863 = vpop.f32.mrf.mxu0
  %v4864 = vadd.f32 %v4653, %v4863
  %v4865 = vand.u32 %v3968, 4294901760
  %v4866 = vsub.f32 %v3968, %v4865
  %v4867 = vand.u32 %v4866, 4294901760
  %4868 = vmatmul.f32.gmra.mxu0 %v4867
  %v4869 = vpop.f32.mrf.mxu0
  %v4870 = vadd.f32 %v4658, %v4869
  %v4871 = vand.u32 %v3969, 4294901760
  %v4872 = vsub.f32 %v3969, %v4871
  %v4873 = vand.u32 %v4872, 4294901760
  %4874 = vmatmul.f32.gmra.mxu0 %v4873
  %v4875 = vpop.f32.mrf.mxu0
  %v4876 = vadd.f32 %v4663, %v4875
  %v4877 = vand.u32 %v3970, 4294901760
  %v4878 = vsub.f32 %v3970, %v4877
  %v4879 = vand.u32 %v4878, 4294901760
  %4880 = vmatmul.f32.gmra.mxu0 %v4879
  %v4881 = vpop.f32.mrf.mxu0
  %v4882 = vadd.f32 %v4668, %v4881
  %v4883 = vand.u32 %v3971, 4294901760
  %v4884 = vsub.f32 %v3971, %v4883
  %v4885 = vand.u32 %v4884, 4294901760
  %4886 = vmatmul.f32.gmra.mxu0 %v4885
  %v4887 = vpop.f32.mrf.mxu0
  %v4888 = vadd.f32 %v4673, %v4887
  %v4889 = vand.u32 %v3972, 4294901760
  %v4890 = vsub.f32 %v3972, %v4889
  %v4891 = vand.u32 %v4890, 4294901760
  %4892 = vmatmul.f32.gmra.mxu0 %v4891
  %v4893 = vpop.f32.mrf.mxu0
  %v4894 = vadd.f32 %v4678, %v4893
  %v4895 = vand.u32 %v3973, 4294901760
  %v4896 = vsub.f32 %v3973, %v4895
  %v4897 = vand.u32 %v4896, 4294901760
  %4898 = vmatmul.f32.gmra.mxu0 %v4897
  %v4899 = vpop.f32.mrf.mxu0
  %v4900 = vadd.f32 %v4683, %v4899
  %v4901 = vand.u32 %v3974, 4294901760
  %v4902 = vsub.f32 %v3974, %v4901
  %v4903 = vand.u32 %v4902, 4294901760
  %4904 = vmatmul.f32.gmra.mxu0 %v4903
  %v4905 = vpop.f32.mrf.mxu0
  %v4906 = vadd.f32 %v4688, %v4905
  %v4907 = vand.u32 %v3975, 4294901760
  %v4908 = vsub.f32 %v3975, %v4907
  %v4909 = vand.u32 %v4908, 4294901760
  %4910 = vmatmul.f32.gmra.mxu0 %v4909
  %v4911 = vpop.f32.mrf.mxu0
  %v4912 = vadd.f32 %v4693, %v4911
  %v4913 = vand.u32 %v3976, 4294901760
  %v4914 = vsub.f32 %v3976, %v4913
  %v4915 = vand.u32 %v4914, 4294901760
  %4916 = vmatmul.f32.gmra.mxu0 %v4915
  %v4917 = vpop.f32.mrf.mxu0
  %v4918 = vadd.f32 %v4698, %v4917
  %v4919 = vand.u32 %v3977, 4294901760
  %v4920 = vsub.f32 %v3977, %v4919
  %v4921 = vand.u32 %v4920, 4294901760
  %4922 = vmatmul.f32.gmra.mxu0 %v4921
  %v4923 = vpop.f32.mrf.mxu0
  %v4924 = vadd.f32 %v4703, %v4923
  %v4925 = vand.u32 %v3978, 4294901760
  %v4926 = vsub.f32 %v3978, %v4925
  %v4927 = vand.u32 %v4926, 4294901760
  %4928 = vmatmul.f32.gmra.mxu0 %v4927
  %v4929 = vpop.f32.mrf.mxu0
  %v4930 = vadd.f32 %v4708, %v4929
  %v4931 = vand.u32 %v3979, 4294901760
  %v4932 = vsub.f32 %v3979, %v4931
  %v4933 = vand.u32 %v4932, 4294901760
  %4934 = vmatmul.f32.gmra.mxu0 %v4933
  %v4935 = vpop.f32.mrf.mxu0
  %v4936 = vadd.f32 %v4713, %v4935
  %v4937 = vand.u32 %v3980, 4294901760
  %v4938 = vsub.f32 %v3980, %v4937
  %v4939 = vand.u32 %v4938, 4294901760
  %4940 = vmatmul.f32.gmra.mxu0 %v4939
  %v4941 = vpop.f32.mrf.mxu0
  %v4942 = vadd.f32 %v4718, %v4941
  %v4943 = vand.u32 %v3981, 4294901760
  %v4944 = vsub.f32 %v3981, %v4943
  %v4945 = vand.u32 %v4944, 4294901760
  %4946 = vmatmul.f32.gmra.mxu0 %v4945
  %v4947 = vpop.f32.mrf.mxu0
  %v4948 = vadd.f32 %v4723, %v4947
  %4949 = vdwg.mxu0
  %v4950 = vand.u32 %v3997, 4294901760
  %v4951 = vsub.f32 %v3997, %v4950
  %v4952 = vand.u32 %v4951, 4294901760
  %4953 = vmatpush.msra.mxu0 %v4952
  %v4954 = vand.u32 %v3996, 4294901760
  %v4955 = vsub.f32 %v3996, %v4954
  %v4956 = vand.u32 %v4955, 4294901760
  %4957 = vmatpush.msra.mxu0 %v4956
  %v4958 = vand.u32 %v3995, 4294901760
  %v4959 = vsub.f32 %v3995, %v4958
  %v4960 = vand.u32 %v4959, 4294901760
  %4961 = vmatpush.msra.mxu0 %v4960
  %v4962 = vand.u32 %v3994, 4294901760
  %v4963 = vsub.f32 %v3994, %v4962
  %v4964 = vand.u32 %v4963, 4294901760
  %4965 = vmatpush.msra.mxu0 %v4964
  %v4966 = vand.u32 %v3993, 4294901760
  %v4967 = vsub.f32 %v3993, %v4966
  %v4968 = vand.u32 %v4967, 4294901760
  %4969 = vmatpush.msra.mxu0 %v4968
  %v4970 = vand.u32 %v3992, 4294901760
  %v4971 = vsub.f32 %v3992, %v4970
  %v4972 = vand.u32 %v4971, 4294901760
  %4973 = vmatpush.msra.mxu0 %v4972
  %v4974 = vand.u32 %v3991, 4294901760
  %v4975 = vsub.f32 %v3991, %v4974
  %v4976 = vand.u32 %v4975, 4294901760
  %4977 = vmatpush.msra.mxu0 %v4976
  %v4978 = vand.u32 %v3990, 4294901760
  %v4979 = vsub.f32 %v3990, %v4978
  %v4980 = vand.u32 %v4979, 4294901760
  %4981 = vmatpush.msra.mxu0 %v4980
  %v4982 = vand.u32 %v3989, 4294901760
  %v4983 = vsub.f32 %v3989, %v4982
  %v4984 = vand.u32 %v4983, 4294901760
  %4985 = vmatpush.msra.mxu0 %v4984
  %v4986 = vand.u32 %v3988, 4294901760
  %v4987 = vsub.f32 %v3988, %v4986
  %v4988 = vand.u32 %v4987, 4294901760
  %4989 = vmatpush.msra.mxu0 %v4988
  %v4990 = vand.u32 %v3987, 4294901760
  %v4991 = vsub.f32 %v3987, %v4990
  %v4992 = vand.u32 %v4991, 4294901760
  %4993 = vmatpush.msra.mxu0 %v4992
  %v4994 = vand.u32 %v3986, 4294901760
  %v4995 = vsub.f32 %v3986, %v4994
  %v4996 = vand.u32 %v4995, 4294901760
  %4997 = vmatpush.msra.mxu0 %v4996
  %v4998 = vand.u32 %v3985, 4294901760
  %v4999 = vsub.f32 %v3985, %v4998
  %v5000 = vand.u32 %v4999, 4294901760
  %5001 = vmatpush.msra.mxu0 %v5000
  %v5002 = vand.u32 %v3984, 4294901760
  %v5003 = vsub.f32 %v3984, %v5002
  %v5004 = vand.u32 %v5003, 4294901760
  %5005 = vmatpush.msra.mxu0 %v5004
  %v5006 = vand.u32 %v3983, 4294901760
  %v5007 = vsub.f32 %v3983, %v5006
  %v5008 = vand.u32 %v5007, 4294901760
  %5009 = vmatpush.msra.mxu0 %v5008
  %v5010 = vand.u32 %v3982, 4294901760
  %v5011 = vsub.f32 %v3982, %v5010
  %v5012 = vand.u32 %v5011, 4294901760
  %5013 = vmatpush.msra.mxu0 %v5012
  %v5014 = vand.u32 %v3950, 4294901760
  %5015 = vmatmul.f32.gmra.mxu0 %v5014
  %v5016 = vpop.f32.mrf.mxu0
  %v5017 = vadd.f32 %v4762, %v5016
  %v5018 = vand.u32 %v3951, 4294901760
  %5019 = vmatmul.f32.gmra.mxu0 %v5018
  %v5020 = vpop.f32.mrf.mxu0
  %v5021 = vadd.f32 %v4768, %v5020
  %v5022 = vand.u32 %v3952, 4294901760
  %5023 = vmatmul.f32.gmra.mxu0 %v5022
  %v5024 = vpop.f32.mrf.mxu0
  %v5025 = vadd.f32 %v4774, %v5024
  %v5026 = vand.u32 %v3953, 4294901760
  %5027 = vmatmul.f32.gmra.mxu0 %v5026
  %v5028 = vpop.f32.mrf.mxu0
  %v5029 = vadd.f32 %v4780, %v5028
  %v5030 = vand.u32 %v3954, 4294901760
  %5031 = vmatmul.f32.gmra.mxu0 %v5030
  %v5032 = vpop.f32.mrf.mxu0
  %v5033 = vadd.f32 %v4786, %v5032
  %v5034 = vand.u32 %v3955, 4294901760
  %5035 = vmatmul.f32.gmra.mxu0 %v5034
  %v5036 = vpop.f32.mrf.mxu0
  %v5037 = vadd.f32 %v4792, %v5036
  %v5038 = vand.u32 %v3956, 4294901760
  %5039 = vmatmul.f32.gmra.mxu0 %v5038
  %v5040 = vpop.f32.mrf.mxu0
  %v5041 = vadd.f32 %v4798, %v5040
  %v5042 = vand.u32 %v3957, 4294901760
  %5043 = vmatmul.f32.gmra.mxu0 %v5042
  %v5044 = vpop.f32.mrf.mxu0
  %v5045 = vadd.f32 %v4804, %v5044
  %v5046 = vand.u32 %v3958, 4294901760
  %5047 = vmatmul.f32.gmra.mxu0 %v5046
  %v5048 = vpop.f32.mrf.mxu0
  %v5049 = vadd.f32 %v4810, %v5048
  %v5050 = vand.u32 %v3959, 4294901760
  %5051 = vmatmul.f32.gmra.mxu0 %v5050
  %v5052 = vpop.f32.mrf.mxu0
  %v5053 = vadd.f32 %v4816, %v5052
  %v5054 = vand.u32 %v3960, 4294901760
  %5055 = vmatmul.f32.gmra.mxu0 %v5054
  %v5056 = vpop.f32.mrf.mxu0
  %v5057 = vadd.f32 %v4822, %v5056
  %v5058 = vand.u32 %v3961, 4294901760
  %5059 = vmatmul.f32.gmra.mxu0 %v5058
  %v5060 = vpop.f32.mrf.mxu0
  %v5061 = vadd.f32 %v4828, %v5060
  %v5062 = vand.u32 %v3962, 4294901760
  %5063 = vmatmul.f32.gmra.mxu0 %v5062
  %v5064 = vpop.f32.mrf.mxu0
  %v5065 = vadd.f32 %v4834, %v5064
  %v5066 = vand.u32 %v3963, 4294901760
  %5067 = vmatmul.f32.gmra.mxu0 %v5066
  %v5068 = vpop.f32.mrf.mxu0
  %v5069 = vadd.f32 %v4840, %v5068
  %v5070 = vand.u32 %v3964, 4294901760
  %5071 = vmatmul.f32.gmra.mxu0 %v5070
  %v5072 = vpop.f32.mrf.mxu0
  %v5073 = vadd.f32 %v4846, %v5072
  %v5074 = vand.u32 %v3965, 4294901760
  %5075 = vmatmul.f32.gmra.mxu0 %v5074
  %v5076 = vpop.f32.mrf.mxu0
  %v5077 = vadd.f32 %v4852, %v5076
  %v5078 = vand.u32 %v3966, 4294901760
  %5079 = vmatmul.f32.gmra.mxu0 %v5078
  %v5080 = vpop.f32.mrf.mxu0
  %v5081 = vadd.f32 %v4858, %v5080
  %v5082 = vand.u32 %v3967, 4294901760
  %5083 = vmatmul.f32.gmra.mxu0 %v5082
  %v5084 = vpop.f32.mrf.mxu0
  %v5085 = vadd.f32 %v4864, %v5084
  %v5086 = vand.u32 %v3968, 4294901760
  %5087 = vmatmul.f32.gmra.mxu0 %v5086
  %v5088 = vpop.f32.mrf.mxu0
  %v5089 = vadd.f32 %v4870, %v5088
  %v5090 = vand.u32 %v3969, 4294901760
  %5091 = vmatmul.f32.gmra.mxu0 %v5090
  %v5092 = vpop.f32.mrf.mxu0
  %v5093 = vadd.f32 %v4876, %v5092
  %v5094 = vand.u32 %v3970, 4294901760
  %5095 = vmatmul.f32.gmra.mxu0 %v5094
  %v5096 = vpop.f32.mrf.mxu0
  %v5097 = vadd.f32 %v4882, %v5096
  %v5098 = vand.u32 %v3971, 4294901760
  %5099 = vmatmul.f32.gmra.mxu0 %v5098
  %v5100 = vpop.f32.mrf.mxu0
  %v5101 = vadd.f32 %v4888, %v5100
  %v5102 = vand.u32 %v3972, 4294901760
  %5103 = vmatmul.f32.gmra.mxu0 %v5102
  %v5104 = vpop.f32.mrf.mxu0
  %v5105 = vadd.f32 %v4894, %v5104
  %v5106 = vand.u32 %v3973, 4294901760
  %5107 = vmatmul.f32.gmra.mxu0 %v5106
  %v5108 = vpop.f32.mrf.mxu0
  %v5109 = vadd.f32 %v4900, %v5108
  %v5110 = vand.u32 %v3974, 4294901760
  %5111 = vmatmul.f32.gmra.mxu0 %v5110
  %v5112 = vpop.f32.mrf.mxu0
  %v5113 = vadd.f32 %v4906, %v5112
  %v5114 = vand.u32 %v3975, 4294901760
  %5115 = vmatmul.f32.gmra.mxu0 %v5114
  %v5116 = vpop.f32.mrf.mxu0
  %v5117 = vadd.f32 %v4912, %v5116
  %v5118 = vand.u32 %v3976, 4294901760
  %5119 = vmatmul.f32.gmra.mxu0 %v5118
  %v5120 = vpop.f32.mrf.mxu0
  %v5121 = vadd.f32 %v4918, %v5120
  %v5122 = vand.u32 %v3977, 4294901760
  %5123 = vmatmul.f32.gmra.mxu0 %v5122
  %v5124 = vpop.f32.mrf.mxu0
  %v5125 = vadd.f32 %v4924, %v5124
  %v5126 = vand.u32 %v3978, 4294901760
  %5127 = vmatmul.f32.gmra.mxu0 %v5126
  %v5128 = vpop.f32.mrf.mxu0
  %v5129 = vadd.f32 %v4930, %v5128
  %v5130 = vand.u32 %v3979, 4294901760
  %5131 = vmatmul.f32.gmra.mxu0 %v5130
  %v5132 = vpop.f32.mrf.mxu0
  %v5133 = vadd.f32 %v4936, %v5132
  %v5134 = vand.u32 %v3980, 4294901760
  %5135 = vmatmul.f32.gmra.mxu0 %v5134
  %v5136 = vpop.f32.mrf.mxu0
  %v5137 = vadd.f32 %v4942, %v5136
  %v5138 = vand.u32 %v3981, 4294901760
  %5139 = vmatmul.f32.gmra.mxu0 %v5138
  %v5140 = vpop.f32.mrf.mxu0
  %v5141 = vadd.f32 %v4948, %v5140
  %5142 = vdwg.mxu0
  %v5143 = vand.u32 %v3997, 4294901760
  %5144 = vmatpush.msra.mxu0 %v5143
  %v5145 = vand.u32 %v3996, 4294901760
  %5146 = vmatpush.msra.mxu0 %v5145
  %v5147 = vand.u32 %v3995, 4294901760
  %5148 = vmatpush.msra.mxu0 %v5147
  %v5149 = vand.u32 %v3994, 4294901760
  %5150 = vmatpush.msra.mxu0 %v5149
  %v5151 = vand.u32 %v3993, 4294901760
  %5152 = vmatpush.msra.mxu0 %v5151
  %v5153 = vand.u32 %v3992, 4294901760
  %5154 = vmatpush.msra.mxu0 %v5153
  %v5155 = vand.u32 %v3991, 4294901760
  %5156 = vmatpush.msra.mxu0 %v5155
  %v5157 = vand.u32 %v3990, 4294901760
  %5158 = vmatpush.msra.mxu0 %v5157
  %v5159 = vand.u32 %v3989, 4294901760
  %5160 = vmatpush.msra.mxu0 %v5159
  %v5161 = vand.u32 %v3988, 4294901760
  %5162 = vmatpush.msra.mxu0 %v5161
  %v5163 = vand.u32 %v3987, 4294901760
  %5164 = vmatpush.msra.mxu0 %v5163
  %v5165 = vand.u32 %v3986, 4294901760
  %5166 = vmatpush.msra.mxu0 %v5165
  %v5167 = vand.u32 %v3985, 4294901760
  %5168 = vmatpush.msra.mxu0 %v5167
  %v5169 = vand.u32 %v3984, 4294901760
  %5170 = vmatpush.msra.mxu0 %v5169
  %v5171 = vand.u32 %v3983, 4294901760
  %5172 = vmatpush.msra.mxu0 %v5171
  %v5173 = vand.u32 %v3982, 4294901760
  %5174 = vmatpush.msra.mxu0 %v5173
  %v5175 = vand.u32 %v3950, 4294901760
  %5176 = vmatmul.f32.gmra.mxu0 %v5175
  %v5177 = vpop.f32.mrf.mxu0
  %v5178 = vadd.f32 %v5017, %v5177
  %v5179 = vand.u32 %v3951, 4294901760
  %5180 = vmatmul.f32.gmra.mxu0 %v5179
  %v5181 = vpop.f32.mrf.mxu0
  %v5182 = vadd.f32 %v5021, %v5181
  %v5183 = vand.u32 %v3952, 4294901760
  %5184 = vmatmul.f32.gmra.mxu0 %v5183
  %v5185 = vpop.f32.mrf.mxu0
  %v5186 = vadd.f32 %v5025, %v5185
  %v5187 = vand.u32 %v3953, 4294901760
  %5188 = vmatmul.f32.gmra.mxu0 %v5187
  %v5189 = vpop.f32.mrf.mxu0
  %v5190 = vadd.f32 %v5029, %v5189
  %v5191 = vand.u32 %v3954, 4294901760
  %5192 = vmatmul.f32.gmra.mxu0 %v5191
  %v5193 = vpop.f32.mrf.mxu0
  %v5194 = vadd.f32 %v5033, %v5193
  %v5195 = vand.u32 %v3955, 4294901760
  %5196 = vmatmul.f32.gmra.mxu0 %v5195
  %v5197 = vpop.f32.mrf.mxu0
  %v5198 = vadd.f32 %v5037, %v5197
  %v5199 = vand.u32 %v3956, 4294901760
  %5200 = vmatmul.f32.gmra.mxu0 %v5199
  %v5201 = vpop.f32.mrf.mxu0
  %v5202 = vadd.f32 %v5041, %v5201
  %v5203 = vand.u32 %v3957, 4294901760
  %5204 = vmatmul.f32.gmra.mxu0 %v5203
  %v5205 = vpop.f32.mrf.mxu0
  %v5206 = vadd.f32 %v5045, %v5205
  %v5207 = vand.u32 %v3958, 4294901760
  %5208 = vmatmul.f32.gmra.mxu0 %v5207
  %v5209 = vpop.f32.mrf.mxu0
  %v5210 = vadd.f32 %v5049, %v5209
  %v5211 = vand.u32 %v3959, 4294901760
  %5212 = vmatmul.f32.gmra.mxu0 %v5211
  %v5213 = vpop.f32.mrf.mxu0
  %v5214 = vadd.f32 %v5053, %v5213
  %v5215 = vand.u32 %v3960, 4294901760
  %5216 = vmatmul.f32.gmra.mxu0 %v5215
  %v5217 = vpop.f32.mrf.mxu0
  %v5218 = vadd.f32 %v5057, %v5217
  %v5219 = vand.u32 %v3961, 4294901760
  %5220 = vmatmul.f32.gmra.mxu0 %v5219
  %v5221 = vpop.f32.mrf.mxu0
  %v5222 = vadd.f32 %v5061, %v5221
  %v5223 = vand.u32 %v3962, 4294901760
  %5224 = vmatmul.f32.gmra.mxu0 %v5223
  %v5225 = vpop.f32.mrf.mxu0
  %v5226 = vadd.f32 %v5065, %v5225
  %v5227 = vand.u32 %v3963, 4294901760
  %5228 = vmatmul.f32.gmra.mxu0 %v5227
  %v5229 = vpop.f32.mrf.mxu0
  %v5230 = vadd.f32 %v5069, %v5229
  %v5231 = vand.u32 %v3964, 4294901760
  %5232 = vmatmul.f32.gmra.mxu0 %v5231
  %v5233 = vpop.f32.mrf.mxu0
  %v5234 = vadd.f32 %v5073, %v5233
  %v5235 = vand.u32 %v3965, 4294901760
  %5236 = vmatmul.f32.gmra.mxu0 %v5235
  %v5237 = vpop.f32.mrf.mxu0
  %v5238 = vadd.f32 %v5077, %v5237
  %v5239 = vand.u32 %v3966, 4294901760
  %5240 = vmatmul.f32.gmra.mxu0 %v5239
  %v5241 = vpop.f32.mrf.mxu0
  %v5242 = vadd.f32 %v5081, %v5241
  %v5243 = vand.u32 %v3967, 4294901760
  %5244 = vmatmul.f32.gmra.mxu0 %v5243
  %v5245 = vpop.f32.mrf.mxu0
  %v5246 = vadd.f32 %v5085, %v5245
  %v5247 = vand.u32 %v3968, 4294901760
  %5248 = vmatmul.f32.gmra.mxu0 %v5247
  %v5249 = vpop.f32.mrf.mxu0
  %v5250 = vadd.f32 %v5089, %v5249
  %v5251 = vand.u32 %v3969, 4294901760
  %5252 = vmatmul.f32.gmra.mxu0 %v5251
  %v5253 = vpop.f32.mrf.mxu0
  %v5254 = vadd.f32 %v5093, %v5253
  %v5255 = vand.u32 %v3970, 4294901760
  %5256 = vmatmul.f32.gmra.mxu0 %v5255
  %v5257 = vpop.f32.mrf.mxu0
  %v5258 = vadd.f32 %v5097, %v5257
  %v5259 = vand.u32 %v3971, 4294901760
  %5260 = vmatmul.f32.gmra.mxu0 %v5259
  %v5261 = vpop.f32.mrf.mxu0
  %v5262 = vadd.f32 %v5101, %v5261
  %v5263 = vand.u32 %v3972, 4294901760
  %5264 = vmatmul.f32.gmra.mxu0 %v5263
  %v5265 = vpop.f32.mrf.mxu0
  %v5266 = vadd.f32 %v5105, %v5265
  %v5267 = vand.u32 %v3973, 4294901760
  %5268 = vmatmul.f32.gmra.mxu0 %v5267
  %v5269 = vpop.f32.mrf.mxu0
  %v5270 = vadd.f32 %v5109, %v5269
  %v5271 = vand.u32 %v3974, 4294901760
  %5272 = vmatmul.f32.gmra.mxu0 %v5271
  %v5273 = vpop.f32.mrf.mxu0
  %v5274 = vadd.f32 %v5113, %v5273
  %v5275 = vand.u32 %v3975, 4294901760
  %5276 = vmatmul.f32.gmra.mxu0 %v5275
  %v5277 = vpop.f32.mrf.mxu0
  %v5278 = vadd.f32 %v5117, %v5277
  %v5279 = vand.u32 %v3976, 4294901760
  %5280 = vmatmul.f32.gmra.mxu0 %v5279
  %v5281 = vpop.f32.mrf.mxu0
  %v5282 = vadd.f32 %v5121, %v5281
  %v5283 = vand.u32 %v3977, 4294901760
  %5284 = vmatmul.f32.gmra.mxu0 %v5283
  %v5285 = vpop.f32.mrf.mxu0
  %v5286 = vadd.f32 %v5125, %v5285
  %v5287 = vand.u32 %v3978, 4294901760
  %5288 = vmatmul.f32.gmra.mxu0 %v5287
  %v5289 = vpop.f32.mrf.mxu0
  %v5290 = vadd.f32 %v5129, %v5289
  %v5291 = vand.u32 %v3979, 4294901760
  %5292 = vmatmul.f32.gmra.mxu0 %v5291
  %v5293 = vpop.f32.mrf.mxu0
  %v5294 = vadd.f32 %v5133, %v5293
  %v5295 = vand.u32 %v3980, 4294901760
  %5296 = vmatmul.f32.gmra.mxu0 %v5295
  %v5297 = vpop.f32.mrf.mxu0
  %v5298 = vadd.f32 %v5137, %v5297
  %v5299 = vand.u32 %v3981, 4294901760
  %5300 = vmatmul.f32.gmra.mxu0 %v5299
  %v5301 = vpop.f32.mrf.mxu0
  %v5302 = vadd.f32 %v5141, %v5301
  %5303 = vdwg.mxu0
  %5304 = vst [vmem:[%s7] sm:$0xff] %v5178
  %5305 = vst [vmem:[%s7 + $0x8] sm:$0xff] %v5182
  %5306 = vst [vmem:[%s7 + $0x10] sm:$0xff] %v5186
  %5307 = vst [vmem:[%s7 + $0x18] sm:$0xff] %v5190
  %5308 = vst [vmem:[%s7 + $0x20] sm:$0xff] %v5194
  %5309 = vst [vmem:[%s7 + $0x28] sm:$0xff] %v5198
  %5310 = vst [vmem:[%s7 + $0x30] sm:$0xff] %v5202
  %5311 = vst [vmem:[%s7 + $0x38] sm:$0xff] %v5206
  %5312 = vst [vmem:[%s7 + $0x40] sm:$0xff] %v5210
  %5313 = vst [vmem:[%s7 + $0x48] sm:$0xff] %v5214
  %5314 = vst [vmem:[%s7 + $0x50] sm:$0xff] %v5218
  %5315 = vst [vmem:[%s7 + $0x58] sm:$0xff] %v5222
  %5316 = vst [vmem:[%s7 + $0x60] sm:$0xff] %v5226
  %5317 = vst [vmem:[%s7 + $0x68] sm:$0xff] %v5230
  %5318 = vst [vmem:[%s7 + $0x70] sm:$0xff] %v5234
  %5319 = vst [vmem:[%s7 + $0x78] sm:$0xff] %v5238
  %5320 = vst [vmem:[%s7 + $0x80] sm:$0xff] %v5242
  %5321 = vst [vmem:[%s7 + $0x88] sm:$0xff] %v5246
  %5322 = vst [vmem:[%s7 + $0x90] sm:$0xff] %v5250
  %5323 = vst [vmem:[%s7 + $0x98] sm:$0xff] %v5254
  %5324 = vst [vmem:[%s7 + $0xa0] sm:$0xff] %v5258
  %5325 = vst [vmem:[%s7 + $0xa8] sm:$0xff] %v5262
  %5326 = vst [vmem:[%s7 + $0xb0] sm:$0xff] %v5266
  %5327 = vst [vmem:[%s7 + $0xb8] sm:$0xff] %v5270
  %5328 = vst [vmem:[%s7 + $0xc0] sm:$0xff] %v5274
  %5329 = vst [vmem:[%s7 + $0xc8] sm:$0xff] %v5278
  %5330 = vst [vmem:[%s7 + $0xd0] sm:$0xff] %v5282
  %5331 = vst [vmem:[%s7 + $0xd8] sm:$0xff] %v5286
  %5332 = vst [vmem:[%s7 + $0xe0] sm:$0xff] %v5290
  %5333 = vst [vmem:[%s7 + $0xe8] sm:$0xff] %v5294
  %5334 = vst [vmem:[%s7 + $0xf0] sm:$0xff] %v5298
  %5335 = vst [vmem:[%s7 + $0xf8] sm:$0xff] %v5302
  // Predicated region
  $region30: #{_forward_impl.1} parent=0 // pred_check
    _
  $region31: #{_forward_impl.1} parent=0 // pred_check_branch
    %5337 = sbr.rel (0) target = $region33
  $region32: #{_forward_impl.1} parent=0 // pred_region
    _
  $region33: #{_forward_impl.1} parent=0 // pred_fallthru
    _
  // Predicated region
  $region34: #{_forward_impl.1} parent=0 // pred_check
    _
  $region35: #{_forward_impl.1} parent=0 // pred_check_branch
    %5339 = sbr.rel (0) target = $region37
  $region36: #{_forward_impl.1} parent=0 // pred_region
    _
  $region37: #{_forward_impl.1} parent=0 // pred_fallthru
    _

// kernel: _forward_impl.1
$region0: #{_forward_impl.1}
  #allocation0 [shape = 'u32[]', space=smem, size = 0x4, offset = 0x4, fixed_abs, tag = 'smem constant byte address 0x4 - core index']
  #allocation1 [shape = 'u32[72,128]{1,0:T(1,128)}', space=vmem, size = 0x9000, scoped, tag = 'internal scratch']
  %s0 = inlined_call_operand.vmem [shape: f32[256,128], index: 0, kind: input, shape index: {}]
  %s1 = inlined_call_operand.vmem [shape: f32[128,128], index: 1, kind: input, shape index: {}]
  %s2 = inlined_call_operand.vmem [shape: f32[1,128], index: 2, kind: input, shape index: {}]
  %s3 = inlined_call_operand.vmem [shape: f32[128,128], index: 3, kind: input, shape index: {}]
  %s4 = inlined_call_operand.vmem [shape: f32[1,128], index: 4, kind: input, shape index: {}]
  %s5 = inlined_call_operand.vmem [shape: f32[128,128], index: 5, kind: input, shape index: {}]
  %s6 = inlined_call_operand.vmem [shape: f32[1,128], index: 6, kind: input, shape index: {}]
  %s7 = inlined_call_operand.vmem [shape: f32[256,128], index: 7, kind: output, shape index: {}]
  %s8 = sld [smem:[#allocation0]]
  $region38: #{_forward_impl.1} parent=0
    _
  %s10 = ssub.s32 1, %s8
  %s11 = scalar_select 0, %s10, %s8
  // Predicated region
  $region2: #{_forward_impl.1} parent=0 // pred_check
    _
  $region3: #{_forward_impl.1} parent=0 // pred_check_branch
    %13 = sbr.rel (0) target = $region5
  $region4: #{_forward_impl.1} parent=0 // pred_region
    _
  $region5: #{_forward_impl.1} parent=0 // pred_fallthru
    _
  // Predicated region
  $region6: #{_forward_impl.1} parent=0 // pred_check
    _
  $region7: #{_forward_impl.1} parent=0 // pred_check_branch
    %15 = sbr.rel (0) target = $region9
  $region8: #{_forward_impl.1} parent=0 // pred_region
    _
  $region9: #{_forward_impl.1} parent=0 // pred_fallthru
    _
  // Predicated region
  $region10: #{_forward_impl.1} parent=0 // pred_check
    _
  $region11: #{_forward_impl.1} parent=0 // pred_check_branch
    %17 = sbr.rel (0) target = $region13
  $region12: #{_forward_impl.1} parent=0 // pred_region
    _
  $region13: #{_forward_impl.1} parent=0 // pred_fallthru
    _
  // Predicated region
  $region14: #{_forward_impl.1} parent=0 // pred_check
    _
  $region15: #{_forward_impl.1} parent=0 // pred_check_branch
    %19 = sbr.rel (0) target = $region17
  $region16: #{_forward_impl.1} parent=0 // pred_region
    _
  $region17: #{_forward_impl.1} parent=0 // pred_fallthru
    _
  // Predicated region
  $region18: #{_forward_impl.1} parent=0 // pred_check
    _
  $region19: #{_forward_impl.1} parent=0 // pred_check_branch
    %21 = sbr.rel (0) target = $region21
  $region20: #{_forward_impl.1} parent=0 // pred_region
    _
  $region21: #{_forward_impl.1} parent=0 // pred_fallthru
    _
  // Predicated region
  $region22: #{_forward_impl.1} parent=0 // pred_check
    _
  $region23: #{_forward_impl.1} parent=0 // pred_check_branch
    %23 = sbr.rel (0) target = $region25
  $region24: #{_forward_impl.1} parent=0 // pred_region
    _
  $region25: #{_forward_impl.1} parent=0 // pred_fallthru
    _
  // Predicated region
  $region26: #{_forward_impl.1} parent=0 // pred_check
    _
  $region27: #{_forward_impl.1} parent=0 // pred_check_branch
    %25 = sbr.rel (0) target = $region29
  $region28: #{_forward_impl.1} parent=0 // pred_region
    _
  $region29: #{_forward_impl.1} parent=0 // pred_fallthru
    _
  %v26 = vld [vmem:[%s0] sm:$0xff]
  %v27 = vld [vmem:[%s0 + $0x8] sm:$0xff]
  %v28 = vld [vmem:[%s0 + $0x10] sm:$0xff]
  %v29 = vld [vmem:[%s0 + $0x18] sm:$0xff]
  %v30 = vld [vmem:[%s0 + $0x20] sm:$0xff]
  %v31 = vld [vmem:[%s0 + $0x28] sm:$0xff]
  %v32 = vld [vmem:[%s0 + $0x30] sm:$0xff]
  %v33 = vld [vmem:[%s0 + $0x38] sm:$0xff]
  %v34 = vld [vmem:[%s0 + $0x40] sm:$0xff]
  %v35 = vld [vmem:[%s0 + $0x48] sm:$0xff]
  %v36 = vld [vmem:[%s0 + $0x50] sm:$0xff]
  %v37 = vld [vmem:[%s0 + $0x58] sm:$0xff]
  %v38 = vld [vmem:[%s0 + $0x60] sm:$0xff]
  %v39 = vld [vmem:[%s0 + $0x68] sm:$0xff]
  %v40 = vld [vmem:[%s0 + $0x70] sm:$0xff]
  %v41 = vld [vmem:[%s0 + $0x78] sm:$0xff]
  %v42 = vld [vmem:[%s0 + $0x80] sm:$0xff]
  %v43 = vld [vmem:[%s0 + $0x88] sm:$0xff]
  %v44 = vld [vmem:[%s0 + $0x90] sm:$0xff]
  %v45 = vld [vmem:[%s0 + $0x98] sm:$0xff]
  %v46 = vld [vmem:[%s0 + $0xa0] sm:$0xff]
  %v47 = vld [vmem:[%s0 + $0xa8] sm:$0xff]
  %v48 = vld [vmem:[%s0 + $0xb0] sm:$0xff]
  %v49 = vld [vmem:[%s0 + $0xb8] sm:$0xff]
  %v50 = vld [vmem:[%s0 + $0xc0] sm:$0xff]
  %v51 = vld [vmem:[%s0 + $0xc8] sm:$0xff]
  %v52 = vld [vmem:[%s0 + $0xd0] sm:$0xff]
  %v53 = vld [vmem:[%s0 + $0xd8] sm:$0xff]
  %v54 = vld [vmem:[%s0 + $0xe0] sm:$0xff]
  %v55 = vld [vmem:[%s0 + $0xe8] sm:$0xff]
  %v56 = vld [vmem:[%s0 + $0xf0] sm:$0xff]
  %v57 = vld [vmem:[%s0 + $0xf8] sm:$0xff]
  %v58 = vld [vmem:[%s1] sm:$0xff]
  %v59 = vld [vmem:[%s1 + $0x8] sm:$0xff]
  %v60 = vld [vmem:[%s1 + $0x10] sm:$0xff]
  %v61 = vld [vmem:[%s1 + $0x18] sm:$0xff]
  %v62 = vld [vmem:[%s1 + $0x20] sm:$0xff]
  %v63 = vld [vmem:[%s1 + $0x28] sm:$0xff]
  %v64 = vld [vmem:[%s1 + $0x30] sm:$0xff]
  %v65 = vld [vmem:[%s1 + $0x38] sm:$0xff]
  %v66 = vld [vmem:[%s1 + $0x40] sm:$0xff]
  %v67 = vld [vmem:[%s1 + $0x48] sm:$0xff]
  %v68 = vld [vmem:[%s1 + $0x50] sm:$0xff]
  %v69 = vld [vmem:[%s1 + $0x58] sm:$0xff]
  %v70 = vld [vmem:[%s1 + $0x60] sm:$0xff]
  %v71 = vld [vmem:[%s1 + $0x68] sm:$0xff]
  %v72 = vld [vmem:[%s1 + $0x70] sm:$0xff]
  %v73 = vld [vmem:[%s1 + $0x78] sm:$0xff]
  %v74 = vld [vmem:[%s2] sm:$0x1]
  %v76 = vperm.slane %v74, 0
  %v78 = vand.u32 %v73, 4294901760
  %79 = vmatpush.msra.mxu0 %v78
  %v80 = vand.u32 %v72, 4294901760
  %81 = vmatpush.msra.mxu0 %v80
  %v82 = vand.u32 %v71, 4294901760
  %83 = vmatpush.msra.mxu0 %v82
  %v84 = vand.u32 %v70, 4294901760
  %85 = vmatpush.msra.mxu0 %v84
  %v86 = vand.u32 %v69, 4294901760
  %87 = vmatpush.msra.mxu0 %v86
  %v88 = vand.u32 %v68, 4294901760
  %89 = vmatpush.msra.mxu0 %v88
  %v90 = vand.u32 %v67, 4294901760
  %91 = vmatpush.msra.mxu0 %v90
  %v92 = vand.u32 %v66, 4294901760
  %93 = vmatpush.msra.mxu0 %v92
  %v94 = vand.u32 %v65, 4294901760
  %95 = vmatpush.msra.mxu0 %v94
  %v96 = vand.u32 %v64, 4294901760
  %97 = vmatpush.msra.mxu0 %v96
  %v98 = vand.u32 %v63, 4294901760
  %99 = vmatpush.msra.mxu0 %v98
  %v100 = vand.u32 %v62, 4294901760
  %101 = vmatpush.msra.mxu0 %v100
  %v102 = vand.u32 %v61, 4294901760
  %103 = vmatpush.msra.mxu0 %v102
  %v104 = vand.u32 %v60, 4294901760
  %105 = vmatpush.msra.mxu0 %v104
  %v106 = vand.u32 %v59, 4294901760
  %107 = vmatpush.msra.mxu0 %v106
  %v108 = vand.u32 %v58, 4294901760
  %109 = vmatpush.msra.mxu0 %v108
  %v110 = vand.u32 %v26, 4294901760
  %v111 = vsub.f32 %v26, %v110
  %v112 = vand.u32 %v111, 4294901760
  %v113 = vsub.f32 %v111, %v112
  %v114 = vand.u32 %v113, 4294901760
  %115 = vmatmul.f32.gmra.mxu0 %v114
  %v116 = vpop.f32.mrf.mxu0
  %v117 = vadd.f32 %v76, %v116
  %v118 = vand.u32 %v27, 4294901760
  %v119 = vsub.f32 %v27, %v118
  %v120 = vand.u32 %v119, 4294901760
  %v121 = vsub.f32 %v119, %v120
  %v122 = vand.u32 %v121, 4294901760
  %123 = vmatmul.f32.gmra.mxu0 %v122
  %v124 = vpop.f32.mrf.mxu0
  %v125 = vadd.f32 %v76, %v124
  %v126 = vand.u32 %v28, 4294901760
  %v127 = vsub.f32 %v28, %v126
  %v128 = vand.u32 %v127, 4294901760
  %v129 = vsub.f32 %v127, %v128
  %v130 = vand.u32 %v129, 4294901760
  %131 = vmatmul.f32.gmra.mxu0 %v130
  %v132 = vpop.f32.mrf.mxu0
  %v133 = vadd.f32 %v76, %v132
  %v134 = vand.u32 %v29, 4294901760
  %v135 = vsub.f32 %v29, %v134
  %v136 = vand.u32 %v135, 4294901760
  %v137 = vsub.f32 %v135, %v136
  %v138 = vand.u32 %v137, 4294901760
  %139 = vmatmul.f32.gmra.mxu0 %v138
  %v140 = vpop.f32.mrf.mxu0
  %v141 = vadd.f32 %v76, %v140
  %v142 = vand.u32 %v30, 4294901760
  %v143 = vsub.f32 %v30, %v142
  %v144 = vand.u32 %v143, 4294901760
  %v145 = vsub.f32 %v143, %v144
  %v146 = vand.u32 %v145, 4294901760
  %147 = vmatmul.f32.gmra.mxu0 %v146
  %v148 = vpop.f32.mrf.mxu0
  %v149 = vadd.f32 %v76, %v148
  %v150 = vand.u32 %v31, 4294901760
  %v151 = vsub.f32 %v31, %v150
  %v152 = vand.u32 %v151, 4294901760
  %v153 = vsub.f32 %v151, %v152
  %v154 = vand.u32 %v153, 4294901760
  %155 = vmatmul.f32.gmra.mxu0 %v154
  %v156 = vpop.f32.mrf.mxu0
  %v157 = vadd.f32 %v76, %v156
  %v158 = vand.u32 %v32, 4294901760
  %v159 = vsub.f32 %v32, %v158
  %v160 = vand.u32 %v159, 4294901760
  %v161 = vsub.f32 %v159, %v160
  %v162 = vand.u32 %v161, 4294901760
  %163 = vmatmul.f32.gmra.mxu0 %v162
  %v164 = vpop.f32.mrf.mxu0
  %v165 = vadd.f32 %v76, %v164
  %v166 = vand.u32 %v33, 4294901760
  %v167 = vsub.f32 %v33, %v166
  %v168 = vand.u32 %v167, 4294901760
  %v169 = vsub.f32 %v167, %v168
  %v170 = vand.u32 %v169, 4294901760
  %171 = vmatmul.f32.gmra.mxu0 %v170
  %v172 = vpop.f32.mrf.mxu0
  %v173 = vadd.f32 %v76, %v172
  %v174 = vand.u32 %v34, 4294901760
  %v175 = vsub.f32 %v34, %v174
  %v176 = vand.u32 %v175, 4294901760
  %v177 = vsub.f32 %v175, %v176
  %v178 = vand.u32 %v177, 4294901760
  %179 = vmatmul.f32.gmra.mxu0 %v178
  %v180 = vpop.f32.mrf.mxu0
  %v181 = vadd.f32 %v76, %v180
  %v182 = vand.u32 %v35, 4294901760
  %v183 = vsub.f32 %v35, %v182
  %v184 = vand.u32 %v183, 4294901760
  %v185 = vsub.f32 %v183, %v184
  %v186 = vand.u32 %v185, 4294901760
  %187 = vmatmul.f32.gmra.mxu0 %v186
  %v188 = vpop.f32.mrf.mxu0
  %v189 = vadd.f32 %v76, %v188
  %v190 = vand.u32 %v36, 4294901760
  %v191 = vsub.f32 %v36, %v190
  %v192 = vand.u32 %v191, 4294901760
  %v193 = vsub.f32 %v191, %v192
  %v194 = vand.u32 %v193, 4294901760
  %195 = vmatmul.f32.gmra.mxu0 %v194
  %v196 = vpop.f32.mrf.mxu0
  %v197 = vadd.f32 %v76, %v196
  %v198 = vand.u32 %v37, 4294901760
  %v199 = vsub.f32 %v37, %v198
  %v200 = vand.u32 %v199, 4294901760
  %v201 = vsub.f32 %v199, %v200
  %v202 = vand.u32 %v201, 4294901760
  %203 = vmatmul.f32.gmra.mxu0 %v202
  %v204 = vpop.f32.mrf.mxu0
  %v205 = vadd.f32 %v76, %v204
  %v206 = vand.u32 %v38, 4294901760
  %v207 = vsub.f32 %v38, %v206
  %v208 = vand.u32 %v207, 4294901760
  %v209 = vsub.f32 %v207, %v208
  %v210 = vand.u32 %v209, 4294901760
  %211 = vmatmul.f32.gmra.mxu0 %v210
  %v212 = vpop.f32.mrf.mxu0
  %v213 = vadd.f32 %v76, %v212
  %v214 = vand.u32 %v39, 4294901760
  %v215 = vsub.f32 %v39, %v214
  %v216 = vand.u32 %v215, 4294901760
  %v217 = vsub.f32 %v215, %v216
  %v218 = vand.u32 %v217, 4294901760
  %219 = vmatmul.f32.gmra.mxu0 %v218
  %v220 = vpop.f32.mrf.mxu0
  %v221 = vadd.f32 %v76, %v220
  %v222 = vand.u32 %v40, 4294901760
  %v223 = vsub.f32 %v40, %v222
  %v224 = vand.u32 %v223, 4294901760
  %v225 = vsub.f32 %v223, %v224
  %v226 = vand.u32 %v225, 4294901760
  %227 = vmatmul.f32.gmra.mxu0 %v226
  %v228 = vpop.f32.mrf.mxu0
  %v229 = vadd.f32 %v76, %v228
  %v230 = vand.u32 %v41, 4294901760
  %v231 = vsub.f32 %v41, %v230
  %v232 = vand.u32 %v231, 4294901760
  %v233 = vsub.f32 %v231, %v232
  %v234 = vand.u32 %v233, 4294901760
  %235 = vmatmul.f32.gmra.mxu0 %v234
  %v236 = vpop.f32.mrf.mxu0
  %v237 = vadd.f32 %v76, %v236
  %v238 = vand.u32 %v42, 4294901760
  %v239 = vsub.f32 %v42, %v238
  %v240 = vand.u32 %v239, 4294901760
  %v241 = vsub.f32 %v239, %v240
  %v242 = vand.u32 %v241, 4294901760
  %243 = vmatmul.f32.gmra.mxu0 %v242
  %v244 = vpop.f32.mrf.mxu0
  %v245 = vadd.f32 %v76, %v244
  %v246 = vand.u32 %v43, 4294901760
  %v247 = vsub.f32 %v43, %v246
  %v248 = vand.u32 %v247, 4294901760
  %v249 = vsub.f32 %v247, %v248
  %v250 = vand.u32 %v249, 4294901760
  %251 = vmatmul.f32.gmra.mxu0 %v250
  %v252 = vpop.f32.mrf.mxu0
  %v253 = vadd.f32 %v76, %v252
  %v254 = vand.u32 %v44, 4294901760
  %v255 = vsub.f32 %v44, %v254
  %v256 = vand.u32 %v255, 4294901760
  %v257 = vsub.f32 %v255, %v256
  %v258 = vand.u32 %v257, 4294901760
  %259 = vmatmul.f32.gmra.mxu0 %v258
  %v260 = vpop.f32.mrf.mxu0
  %v261 = vadd.f32 %v76, %v260
  %v262 = vand.u32 %v45, 4294901760
  %v263 = vsub.f32 %v45, %v262
  %v264 = vand.u32 %v263, 4294901760
  %v265 = vsub.f32 %v263, %v264
  %v266 = vand.u32 %v265, 4294901760
  %267 = vmatmul.f32.gmra.mxu0 %v266
  %v268 = vpop.f32.mrf.mxu0
  %v269 = vadd.f32 %v76, %v268
  %v270 = vand.u32 %v46, 4294901760
  %v271 = vsub.f32 %v46, %v270
  %v272 = vand.u32 %v271, 4294901760
  %v273 = vsub.f32 %v271, %v272
  %v274 = vand.u32 %v273, 4294901760
  %275 = vmatmul.f32.gmra.mxu0 %v274
  %v276 = vpop.f32.mrf.mxu0
  %v277 = vadd.f32 %v76, %v276
  %v278 = vand.u32 %v47, 4294901760
  %v279 = vsub.f32 %v47, %v278
  %v280 = vand.u32 %v279, 4294901760
  %v281 = vsub.f32 %v279, %v280
  %v282 = vand.u32 %v281, 4294901760
  %283 = vmatmul.f32.gmra.mxu0 %v282
  %v284 = vpop.f32.mrf.mxu0
  %v285 = vadd.f32 %v76, %v284
  %v286 = vand.u32 %v48, 4294901760
  %v287 = vsub.f32 %v48, %v286
  %v288 = vand.u32 %v287, 4294901760
  %v289 = vsub.f32 %v287, %v288
  %v290 = vand.u32 %v289, 4294901760
  %291 = vmatmul.f32.gmra.mxu0 %v290
  %v292 = vpop.f32.mrf.mxu0
  %v293 = vadd.f32 %v76, %v292
  %v294 = vand.u32 %v49, 4294901760
  %v295 = vsub.f32 %v49, %v294
  %v296 = vand.u32 %v295, 4294901760
  %v297 = vsub.f32 %v295, %v296
  %v298 = vand.u32 %v297, 4294901760
  %299 = vmatmul.f32.gmra.mxu0 %v298
  %v300 = vpop.f32.mrf.mxu0
  %v301 = vadd.f32 %v76, %v300
  %v302 = vand.u32 %v50, 4294901760
  %v303 = vsub.f32 %v50, %v302
  %v304 = vand.u32 %v303, 4294901760
  %v305 = vsub.f32 %v303, %v304
  %v306 = vand.u32 %v305, 4294901760
  %307 = vmatmul.f32.gmra.mxu0 %v306
  %v308 = vpop.f32.mrf.mxu0
  %v309 = vadd.f32 %v76, %v308
  %v310 = vand.u32 %v51, 4294901760
  %v311 = vsub.f32 %v51, %v310
  %v312 = vand.u32 %v311, 4294901760
  %v313 = vsub.f32 %v311, %v312
  %v314 = vand.u32 %v313, 4294901760
  %315 = vmatmul.f32.gmra.mxu0 %v314
  %v316 = vpop.f32.mrf.mxu0
  %v317 = vadd.f32 %v76, %v316
  %v318 = vand.u32 %v52, 4294901760
  %v319 = vsub.f32 %v52, %v318
  %v320 = vand.u32 %v319, 4294901760
  %v321 = vsub.f32 %v319, %v320
  %v322 = vand.u32 %v321, 4294901760
  %323 = vmatmul.f32.gmra.mxu0 %v322
  %v324 = vpop.f32.mrf.mxu0
  %v325 = vadd.f32 %v76, %v324
  %v326 = vand.u32 %v53, 4294901760
  %v327 = vsub.f32 %v53, %v326
  %v328 = vand.u32 %v327, 4294901760
  %v329 = vsub.f32 %v327, %v328
  %v330 = vand.u32 %v329, 4294901760
  %331 = vmatmul.f32.gmra.mxu0 %v330
  %v332 = vpop.f32.mrf.mxu0
  %v333 = vadd.f32 %v76, %v332
  %v334 = vand.u32 %v54, 4294901760
  %v335 = vsub.f32 %v54, %v334
  %v336 = vand.u32 %v335, 4294901760
  %v337 = vsub.f32 %v335, %v336
  %v338 = vand.u32 %v337, 4294901760
  %339 = vmatmul.f32.gmra.mxu0 %v338
  %v340 = vpop.f32.mrf.mxu0
  %v341 = vadd.f32 %v76, %v340
  %v342 = vand.u32 %v55, 4294901760
  %v343 = vsub.f32 %v55, %v342
  %v344 = vand.u32 %v343, 4294901760
  %v345 = vsub.f32 %v343, %v344
  %v346 = vand.u32 %v345, 4294901760
  %347 = vmatmul.f32.gmra.mxu0 %v346
  %v348 = vpop.f32.mrf.mxu0
  %v349 = vadd.f32 %v76, %v348
  %v350 = vand.u32 %v56, 4294901760
  %v351 = vsub.f32 %v56, %v350
  %v352 = vand.u32 %v351, 4294901760
  %v353 = vsub.f32 %v351, %v352
  %v354 = vand.u32 %v353, 4294901760
  %355 = vmatmul.f32.gmra.mxu0 %v354
  %v356 = vpop.f32.mrf.mxu0
  %v357 = vadd.f32 %v76, %v356
  %v358 = vand.u32 %v57, 4294901760
  %v359 = vsub.f32 %v57, %v358
  %v360 = vand.u32 %v359, 4294901760
  %v361 = vsub.f32 %v359, %v360
  %v362 = vand.u32 %v361, 4294901760
  %363 = vmatmul.f32.gmra.mxu0 %v362
  %v364 = vpop.f32.mrf.mxu0
  %v365 = vadd.f32 %v76, %v364
  %366 = vdwg.mxu0
  %v367 = vand.u32 %v73, 4294901760
  %v368 = vsub.f32 %v73, %v367
  %v369 = vand.u32 %v368, 4294901760
  %v370 = vsub.f32 %v368, %v369
  %v371 = vand.u32 %v370, 4294901760
  %372 = vmatpush.msra.mxu0 %v371
  %v373 = vand.u32 %v72, 4294901760
  %v374 = vsub.f32 %v72, %v373
  %v375 = vand.u32 %v374, 4294901760
  %v376 = vsub.f32 %v374, %v375
  %v377 = vand.u32 %v376, 4294901760
  %378 = vmatpush.msra.mxu0 %v377
  %v379 = vand.u32 %v71, 4294901760
  %v380 = vsub.f32 %v71, %v379
  %v381 = vand.u32 %v380, 4294901760
  %v382 = vsub.f32 %v380, %v381
  %v383 = vand.u32 %v382, 4294901760
  %384 = vmatpush.msra.mxu0 %v383
  %v385 = vand.u32 %v70, 4294901760
  %v386 = vsub.f32 %v70, %v385
  %v387 = vand.u32 %v386, 4294901760
  %v388 = vsub.f32 %v386, %v387
  %v389 = vand.u32 %v388, 4294901760
  %390 = vmatpush.msra.mxu0 %v389
  %v391 = vand.u32 %v69, 4294901760
  %v392 = vsub.f32 %v69, %v391
  %v393 = vand.u32 %v392, 4294901760
  %v394 = vsub.f32 %v392, %v393
  %v395 = vand.u32 %v394, 4294901760
  %396 = vmatpush.msra.mxu0 %v395
  %v397 = vand.u32 %v68, 4294901760
  %v398 = vsub.f32 %v68, %v397
  %v399 = vand.u32 %v398, 4294901760
  %v400 = vsub.f32 %v398, %v399
  %v401 = vand.u32 %v400, 4294901760
  %402 = vmatpush.msra.mxu0 %v401
  %v403 = vand.u32 %v67, 4294901760
  %v404 = vsub.f32 %v67, %v403
  %v405 = vand.u32 %v404, 4294901760
  %v406 = vsub.f32 %v404, %v405
  %v407 = vand.u32 %v406, 4294901760
  %408 = vmatpush.msra.mxu0 %v407
  %v409 = vand.u32 %v66, 4294901760
  %v410 = vsub.f32 %v66, %v409
  %v411 = vand.u32 %v410, 4294901760
  %v412 = vsub.f32 %v410, %v411
  %v413 = vand.u32 %v412, 4294901760
  %414 = vmatpush.msra.mxu0 %v413
  %v415 = vand.u32 %v65, 4294901760
  %v416 = vsub.f32 %v65, %v415
  %v417 = vand.u32 %v416, 4294901760
  %v418 = vsub.f32 %v416, %v417
  %v419 = vand.u32 %v418, 4294901760
  %420 = vmatpush.msra.mxu0 %v419
  %v421 = vand.u32 %v64, 4294901760
  %v422 = vsub.f32 %v64, %v421
  %v423 = vand.u32 %v422, 4294901760
  %v424 = vsub.f32 %v422, %v423
  %v425 = vand.u32 %v424, 4294901760
  %426 = vmatpush.msra.mxu0 %v425
  %v427 = vand.u32 %v63, 4294901760
  %v428 = vsub.f32 %v63, %v427
  %v429 = vand.u32 %v428, 4294901760
  %v430 = vsub.f32 %v428, %v429
  %v431 = vand.u32 %v430, 4294901760
  %432 = vmatpush.msra.mxu0 %v431
  %v433 = vand.u32 %v62, 4294901760
  %v434 = vsub.f32 %v62, %v433
  %v435 = vand.u32 %v434, 4294901760
  %v436 = vsub.f32 %v434, %v435
  %v437 = vand.u32 %v436, 4294901760
  %438 = vmatpush.msra.mxu0 %v437
  %v439 = vand.u32 %v61, 4294901760
  %v440 = vsub.f32 %v61, %v439
  %v441 = vand.u32 %v440, 4294901760
  %v442 = vsub.f32 %v440, %v441
  %v443 = vand.u32 %v442, 4294901760
  %444 = vmatpush.msra.mxu0 %v443
  %v445 = vand.u32 %v60, 4294901760
  %v446 = vsub.f32 %v60, %v445
  %v447 = vand.u32 %v446, 4294901760
  %v448 = vsub.f32 %v446, %v447
  %v449 = vand.u32 %v448, 4294901760
  %450 = vmatpush.msra.mxu0 %v449
  %v451 = vand.u32 %v59, 4294901760
  %v452 = vsub.f32 %v59, %v451
  %v453 = vand.u32 %v452, 4294901760
  %v454 = vsub.f32 %v452, %v453
  %v455 = vand.u32 %v454, 4294901760
  %456 = vmatpush.msra.mxu0 %v455
  %v457 = vand.u32 %v58, 4294901760
  %v458 = vsub.f32 %v58, %v457
  %v459 = vand.u32 %v458, 4294901760
  %v460 = vsub.f32 %v458, %v459
  %v461 = vand.u32 %v460, 4294901760
  %462 = vmatpush.msra.mxu0 %v461
  %v463 = vand.u32 %v26, 4294901760
  %464 = vmatmul.f32.gmra.mxu0 %v463
  %v465 = vpop.f32.mrf.mxu0
  %v466 = vadd.f32 %v117, %v465
  %v467 = vand.u32 %v27, 4294901760
  %468 = vmatmul.f32.gmra.mxu0 %v467
  %v469 = vpop.f32.mrf.mxu0
  %v470 = vadd.f32 %v125, %v469
  %v471 = vand.u32 %v28, 4294901760
  %472 = vmatmul.f32.gmra.mxu0 %v471
  %v473 = vpop.f32.mrf.mxu0
  %v474 = vadd.f32 %v133, %v473
  %v475 = vand.u32 %v29, 4294901760
  %476 = vmatmul.f32.gmra.mxu0 %v475
  %v477 = vpop.f32.mrf.mxu0
  %v478 = vadd.f32 %v141, %v477
  %v479 = vand.u32 %v30, 4294901760
  %480 = vmatmul.f32.gmra.mxu0 %v479
  %v481 = vpop.f32.mrf.mxu0
  %v482 = vadd.f32 %v149, %v481
  %v483 = vand.u32 %v31, 4294901760
  %484 = vmatmul.f32.gmra.mxu0 %v483
  %v485 = vpop.f32.mrf.mxu0
  %v486 = vadd.f32 %v157, %v485
  %v487 = vand.u32 %v32, 4294901760
  %488 = vmatmul.f32.gmra.mxu0 %v487
  %v489 = vpop.f32.mrf.mxu0
  %v490 = vadd.f32 %v165, %v489
  %v491 = vand.u32 %v33, 4294901760
  %492 = vmatmul.f32.gmra.mxu0 %v491
  %v493 = vpop.f32.mrf.mxu0
  %v494 = vadd.f32 %v173, %v493
  %v495 = vand.u32 %v34, 4294901760
  %496 = vmatmul.f32.gmra.mxu0 %v495
  %v497 = vpop.f32.mrf.mxu0
  %v498 = vadd.f32 %v181, %v497
  %v499 = vand.u32 %v35, 4294901760
  %500 = vmatmul.f32.gmra.mxu0 %v499
  %v501 = vpop.f32.mrf.mxu0
  %v502 = vadd.f32 %v189, %v501
  %v503 = vand.u32 %v36, 4294901760
  %504 = vmatmul.f32.gmra.mxu0 %v503
  %v505 = vpop.f32.mrf.mxu0
  %v506 = vadd.f32 %v197, %v505
  %v507 = vand.u32 %v37, 4294901760
  %508 = vmatmul.f32.gmra.mxu0 %v507
  %v509 = vpop.f32.mrf.mxu0
  %v510 = vadd.f32 %v205, %v509
  %v511 = vand.u32 %v38, 4294901760
  %512 = vmatmul.f32.gmra.mxu0 %v511
  %v513 = vpop.f32.mrf.mxu0
  %v514 = vadd.f32 %v213, %v513
  %v515 = vand.u32 %v39, 4294901760
  %516 = vmatmul.f32.gmra.mxu0 %v515
  %v517 = vpop.f32.mrf.mxu0
  %v518 = vadd.f32 %v221, %v517
  %v519 = vand.u32 %v40, 4294901760
  %520 = vmatmul.f32.gmra.mxu0 %v519
  %v521 = vpop.f32.mrf.mxu0
  %v522 = vadd.f32 %v229, %v521
  %v523 = vand.u32 %v41, 4294901760
  %524 = vmatmul.f32.gmra.mxu0 %v523
  %v525 = vpop.f32.mrf.mxu0
  %v526 = vadd.f32 %v237, %v525
  %v527 = vand.u32 %v42, 4294901760
  %528 = vmatmul.f32.gmra.mxu0 %v527
  %v529 = vpop.f32.mrf.mxu0
  %v530 = vadd.f32 %v245, %v529
  %v531 = vand.u32 %v43, 4294901760
  %532 = vmatmul.f32.gmra.mxu0 %v531
  %v533 = vpop.f32.mrf.mxu0
  %v534 = vadd.f32 %v253, %v533
  %v535 = vand.u32 %v44, 4294901760
  %536 = vmatmul.f32.gmra.mxu0 %v535
  %v537 = vpop.f32.mrf.mxu0
  %v538 = vadd.f32 %v261, %v537
  %v539 = vand.u32 %v45, 4294901760
  %540 = vmatmul.f32.gmra.mxu0 %v539
  %v541 = vpop.f32.mrf.mxu0
  %v542 = vadd.f32 %v269, %v541
  %v543 = vand.u32 %v46, 4294901760
  %544 = vmatmul.f32.gmra.mxu0 %v543
  %v545 = vpop.f32.mrf.mxu0
  %v546 = vadd.f32 %v277, %v545
  %v547 = vand.u32 %v47, 4294901760
  %548 = vmatmul.f32.gmra.mxu0 %v547
  %v549 = vpop.f32.mrf.mxu0
  %v550 = vadd.f32 %v285, %v549
  %v551 = vand.u32 %v48, 4294901760
  %552 = vmatmul.f32.gmra.mxu0 %v551
  %v553 = vpop.f32.mrf.mxu0
  %v554 = vadd.f32 %v293, %v553
  %v555 = vand.u32 %v49, 4294901760
  %556 = vmatmul.f32.gmra.mxu0 %v555
  %v557 = vpop.f32.mrf.mxu0
  %v558 = vadd.f32 %v301, %v557
  %v559 = vand.u32 %v50, 4294901760
  %560 = vmatmul.f32.gmra.mxu0 %v559
  %v561 = vpop.f32.mrf.mxu0
  %v562 = vadd.f32 %v309, %v561
  %v563 = vand.u32 %v51, 4294901760
  %564 = vmatmul.f32.gmra.mxu0 %v563
  %v565 = vpop.f32.mrf.mxu0
  %v566 = vadd.f32 %v317, %v565
  %v567 = vand.u32 %v52, 4294901760
  %568 = vmatmul.f32.gmra.mxu0 %v567
  %v569 = vpop.f32.mrf.mxu0
  %v570 = vadd.f32 %v325, %v569
  %v571 = vand.u32 %v53, 4294901760
  %572 = vmatmul.f32.gmra.mxu0 %v571
  %v573 = vpop.f32.mrf.mxu0
  %v574 = vadd.f32 %v333, %v573
  %v575 = vand.u32 %v54, 4294901760
  %576 = vmatmul.f32.gmra.mxu0 %v575
  %v577 = vpop.f32.mrf.mxu0
  %v578 = vadd.f32 %v341, %v577
  %v579 = vand.u32 %v55, 4294901760
  %580 = vmatmul.f32.gmra.mxu0 %v579
  %v581 = vpop.f32.mrf.mxu0
  %v582 = vadd.f32 %v349, %v581
  %v583 = vand.u32 %v56, 4294901760
  %584 = vmatmul.f32.gmra.mxu0 %v583
  %v585 = vpop.f32.mrf.mxu0
  %v586 = vadd.f32 %v357, %v585
  %v587 = vand.u32 %v57, 4294901760
  %588 = vmatmul.f32.gmra.mxu0 %v587
  %v589 = vpop.f32.mrf.mxu0
  %v590 = vadd.f32 %v365, %v589
  %591 = vdwg.mxu0
  %v592 = vand.u32 %v73, 4294901760
  %v593 = vsub.f32 %v73, %v592
  %594 = vmatpush.msra.mxu0 %v593
  %v595 = vand.u32 %v72, 4294901760
  %v596 = vsub.f32 %v72, %v595
  %597 = vmatpush.msra.mxu0 %v596
  %v598 = vand.u32 %v71, 4294901760
  %v599 = vsub.f32 %v71, %v598
  %600 = vmatpush.msra.mxu0 %v599
  %v601 = vand.u32 %v70, 4294901760
  %v602 = vsub.f32 %v70, %v601
  %603 = vmatpush.msra.mxu0 %v602
  %v604 = vand.u32 %v69, 4294901760
  %v605 = vsub.f32 %v69, %v604
  %606 = vmatpush.msra.mxu0 %v605
  %v607 = vand.u32 %v68, 4294901760
  %v608 = vsub.f32 %v68, %v607
  %609 = vmatpush.msra.mxu0 %v608
  %v610 = vand.u32 %v67, 4294901760
  %v611 = vsub.f32 %v67, %v610
  %612 = vmatpush.msra.mxu0 %v611
  %v613 = vand.u32 %v66, 4294901760
  %v614 = vsub.f32 %v66, %v613
  %615 = vmatpush.msra.mxu0 %v614
  %v616 = vand.u32 %v65, 4294901760
  %v617 = vsub.f32 %v65, %v616
  %618 = vmatpush.msra.mxu0 %v617
  %v619 = vand.u32 %v64, 4294901760
  %v620 = vsub.f32 %v64, %v619
  %621 = vmatpush.msra.mxu0 %v620
  %v622 = vand.u32 %v63, 4294901760
  %v623 = vsub.f32 %v63, %v622
  %624 = vmatpush.msra.mxu0 %v623
  %v625 = vand.u32 %v62, 4294901760
  %v626 = vsub.f32 %v62, %v625
  %627 = vmatpush.msra.mxu0 %v626
  %v628 = vand.u32 %v61, 4294901760
  %v629 = vsub.f32 %v61, %v628
  %630 = vmatpush.msra.mxu0 %v629
  %v631 = vand.u32 %v60, 4294901760
  %v632 = vsub.f32 %v60, %v631
  %633 = vmatpush.msra.mxu0 %v632
  %v634 = vand.u32 %v59, 4294901760
  %v635 = vsub.f32 %v59, %v634
  %636 = vmatpush.msra.mxu0 %v635
  %v637 = vand.u32 %v58, 4294901760
  %v638 = vsub.f32 %v58, %v637
  %639 = vmatpush.msra.mxu0 %v638
  %v640 = vand.u32 %v26, 4294901760
  %v641 = vsub.f32 %v26, %v640
  %642 = vmatmul.f32.gmra.mxu0 %v641
  %v643 = vpop.f32.mrf.mxu0
  %v644 = vadd.f32 %v466, %v643
  %v645 = vand.u32 %v27, 4294901760
  %v646 = vsub.f32 %v27, %v645
  %647 = vmatmul.f32.gmra.mxu0 %v646
  %v648 = vpop.f32.mrf.mxu0
  %v649 = vadd.f32 %v470, %v648
  %v650 = vand.u32 %v28, 4294901760
  %v651 = vsub.f32 %v28, %v650
  %652 = vmatmul.f32.gmra.mxu0 %v651
  %v653 = vpop.f32.mrf.mxu0
  %v654 = vadd.f32 %v474, %v653
  %v655 = vand.u32 %v29, 4294901760
  %v656 = vsub.f32 %v29, %v655
  %657 = vmatmul.f32.gmra.mxu0 %v656
  %v658 = vpop.f32.mrf.mxu0
  %v659 = vadd.f32 %v478, %v658
  %v660 = vand.u32 %v30, 4294901760
  %v661 = vsub.f32 %v30, %v660
  %662 = vmatmul.f32.gmra.mxu0 %v661
  %v663 = vpop.f32.mrf.mxu0
  %v664 = vadd.f32 %v482, %v663
  %v665 = vand.u32 %v31, 4294901760
  %v666 = vsub.f32 %v31, %v665
  %667 = vmatmul.f32.gmra.mxu0 %v666
  %v668 = vpop.f32.mrf.mxu0
  %v669 = vadd.f32 %v486, %v668
  %v670 = vand.u32 %v32, 4294901760
  %v671 = vsub.f32 %v32, %v670
  %672 = vmatmul.f32.gmra.mxu0 %v671
  %v673 = vpop.f32.mrf.mxu0
  %v674 = vadd.f32 %v490, %v673
  %v675 = vand.u32 %v33, 4294901760
  %v676 = vsub.f32 %v33, %v675
  %677 = vmatmul.f32.gmra.mxu0 %v676
  %v678 = vpop.f32.mrf.mxu0
  %v679 = vadd.f32 %v494, %v678
  %v680 = vand.u32 %v34, 4294901760
  %v681 = vsub.f32 %v34, %v680
  %682 = vmatmul.f32.gmra.mxu0 %v681
  %v683 = vpop.f32.mrf.mxu0
  %v684 = vadd.f32 %v498, %v683
  %v685 = vand.u32 %v35, 4294901760
  %v686 = vsub.f32 %v35, %v685
  %687 = vmatmul.f32.gmra.mxu0 %v686
  %v688 = vpop.f32.mrf.mxu0
  %v689 = vadd.f32 %v502, %v688
  %v690 = vand.u32 %v36, 4294901760
  %v691 = vsub.f32 %v36, %v690
  %692 = vmatmul.f32.gmra.mxu0 %v691
  %v693 = vpop.f32.mrf.mxu0
  %v694 = vadd.f32 %v506, %v693
  %v695 = vand.u32 %v37, 4294901760
  %v696 = vsub.f32 %v37, %v695
  %697 = vmatmul.f32.gmra.mxu0 %v696
  %v698 = vpop.f32.mrf.mxu0
  %v699 = vadd.f32 %v510, %v698
  %v700 = vand.u32 %v38, 4294901760
  %v701 = vsub.f32 %v38, %v700
  %702 = vmatmul.f32.gmra.mxu0 %v701
  %v703 = vpop.f32.mrf.mxu0
  %v704 = vadd.f32 %v514, %v703
  %v705 = vand.u32 %v39, 4294901760
  %v706 = vsub.f32 %v39, %v705
  %707 = vmatmul.f32.gmra.mxu0 %v706
  %v708 = vpop.f32.mrf.mxu0
  %v709 = vadd.f32 %v518, %v708
  %v710 = vand.u32 %v40, 4294901760
  %v711 = vsub.f32 %v40, %v710
  %712 = vmatmul.f32.gmra.mxu0 %v711
  %v713 = vpop.f32.mrf.mxu0
  %v714 = vadd.f32 %v522, %v713
  %v715 = vand.u32 %v41, 4294901760
  %v716 = vsub.f32 %v41, %v715
  %717 = vmatmul.f32.gmra.mxu0 %v716
  %v718 = vpop.f32.mrf.mxu0
  %v719 = vadd.f32 %v526, %v718
  %v720 = vand.u32 %v42, 4294901760
  %v721 = vsub.f32 %v42, %v720
  %722 = vmatmul.f32.gmra.mxu0 %v721
  %v723 = vpop.f32.mrf.mxu0
  %v724 = vadd.f32 %v530, %v723
  %v725 = vand.u32 %v43, 4294901760
  %v726 = vsub.f32 %v43, %v725
  %727 = vmatmul.f32.gmra.mxu0 %v726
  %v728 = vpop.f32.mrf.mxu0
  %v729 = vadd.f32 %v534, %v728
  %v730 = vand.u32 %v44, 4294901760
  %v731 = vsub.f32 %v44, %v730
  %732 = vmatmul.f32.gmra.mxu0 %v731
  %v733 = vpop.f32.mrf.mxu0
  %v734 = vadd.f32 %v538, %v733
  %v735 = vand.u32 %v45, 4294901760
  %v736 = vsub.f32 %v45, %v735
  %737 = vmatmul.f32.gmra.mxu0 %v736
  %v738 = vpop.f32.mrf.mxu0
  %v739 = vadd.f32 %v542, %v738
  %v740 = vand.u32 %v46, 4294901760
  %v741 = vsub.f32 %v46, %v740
  %742 = vmatmul.f32.gmra.mxu0 %v741
  %v743 = vpop.f32.mrf.mxu0
  %v744 = vadd.f32 %v546, %v743
  %v745 = vand.u32 %v47, 4294901760
  %v746 = vsub.f32 %v47, %v745
  %747 = vmatmul.f32.gmra.mxu0 %v746
  %v748 = vpop.f32.mrf.mxu0
  %v749 = vadd.f32 %v550, %v748
  %v750 = vand.u32 %v48, 4294901760
  %v751 = vsub.f32 %v48, %v750
  %752 = vmatmul.f32.gmra.mxu0 %v751
  %v753 = vpop.f32.mrf.mxu0
  %v754 = vadd.f32 %v554, %v753
  %v755 = vand.u32 %v49, 4294901760
  %v756 = vsub.f32 %v49, %v755
  %757 = vmatmul.f32.gmra.mxu0 %v756
  %v758 = vpop.f32.mrf.mxu0
  %v759 = vadd.f32 %v558, %v758
  %v760 = vand.u32 %v50, 4294901760
  %v761 = vsub.f32 %v50, %v760
  %762 = vmatmul.f32.gmra.mxu0 %v761
  %v763 = vpop.f32.mrf.mxu0
  %v764 = vadd.f32 %v562, %v763
  %v765 = vand.u32 %v51, 4294901760
  %v766 = vsub.f32 %v51, %v765
  %767 = vmatmul.f32.gmra.mxu0 %v766
  %v768 = vpop.f32.mrf.mxu0
  %v769 = vadd.f32 %v566, %v768
  %v770 = vand.u32 %v52, 4294901760
  %v771 = vsub.f32 %v52, %v770
  %772 = vmatmul.f32.gmra.mxu0 %v771
  %v773 = vpop.f32.mrf.mxu0
  %v774 = vadd.f32 %v570, %v773
  %v775 = vand.u32 %v53, 4294901760
  %v776 = vsub.f32 %v53, %v775
  %777 = vmatmul.f32.gmra.mxu0 %v776
  %v778 = vpop.f32.mrf.mxu0
  %v779 = vadd.f32 %v574, %v778
  %v780 = vand.u32 %v54, 4294901760
  %v781 = vsub.f32 %v54, %v780
  %782 = vmatmul.f32.gmra.mxu0 %v781
  %v783 = vpop.f32.mrf.mxu0
  %v784 = vadd.f32 %v578, %v783
  %v785 = vand.u32 %v55, 4294901760
  %v786 = vsub.f32 %v55, %v785
  %787 = vmatmul.f32.gmra.mxu0 %v786
  %v788 = vpop.f32.mrf.mxu0
  %v789 = vadd.f32 %v582, %v788
  %v790 = vand.u32 %v56, 4294901760
  %v791 = vsub.f32 %v56, %v790
  %792 = vmatmul.f32.gmra.mxu0 %v791
  %v793 = vpop.f32.mrf.mxu0
  %v794 = vadd.f32 %v586, %v793
  %v795 = vand.u32 %v57, 4294901760
  %v796 = vsub.f32 %v57, %v795
  %797 = vmatmul.f32.gmra.mxu0 %v796
  %v798 = vpop.f32.mrf.mxu0
  %v799 = vadd.f32 %v590, %v798
  %800 = vdwg.mxu0
  %v801 = vand.u32 %v73, 4294901760
  %802 = vmatpush.msra.mxu0 %v801
  %v803 = vand.u32 %v72, 4294901760
  %804 = vmatpush.msra.mxu0 %v803
  %v805 = vand.u32 %v71, 4294901760
  %806 = vmatpush.msra.mxu0 %v805
  %v807 = vand.u32 %v70, 4294901760
  %808 = vmatpush.msra.mxu0 %v807
  %v809 = vand.u32 %v69, 4294901760
  %810 = vmatpush.msra.mxu0 %v809
  %v811 = vand.u32 %v68, 4294901760
  %812 = vmatpush.msra.mxu0 %v811
  %v813 = vand.u32 %v67, 4294901760
  %814 = vmatpush.msra.mxu0 %v813
  %v815 = vand.u32 %v66, 4294901760
  %816 = vmatpush.msra.mxu0 %v815
  %v817 = vand.u32 %v65, 4294901760
  %818 = vmatpush.msra.mxu0 %v817
  %v819 = vand.u32 %v64, 4294901760
  %820 = vmatpush.msra.mxu0 %v819
  %v821 = vand.u32 %v63, 4294901760
  %822 = vmatpush.msra.mxu0 %v821
  %v823 = vand.u32 %v62, 4294901760
  %824 = vmatpush.msra.mxu0 %v823
  %v825 = vand.u32 %v61, 4294901760
  %826 = vmatpush.msra.mxu0 %v825
  %v827 = vand.u32 %v60, 4294901760
  %828 = vmatpush.msra.mxu0 %v827
  %v829 = vand.u32 %v59, 4294901760
  %830 = vmatpush.msra.mxu0 %v829
  %v831 = vand.u32 %v58, 4294901760
  %832 = vmatpush.msra.mxu0 %v831
  %v833 = vand.u32 %v26, 4294901760
  %v834 = vsub.f32 %v26, %v833
  %v835 = vand.u32 %v834, 4294901760
  %836 = vmatmul.f32.gmra.mxu0 %v835
  %v837 = vpop.f32.mrf.mxu0
  %v838 = vadd.f32 %v644, %v837
  %v839 = vand.u32 %v27, 4294901760
  %v840 = vsub.f32 %v27, %v839
  %v841 = vand.u32 %v840, 4294901760
  %842 = vmatmul.f32.gmra.mxu0 %v841
  %v843 = vpop.f32.mrf.mxu0
  %v844 = vadd.f32 %v649, %v843
  %v845 = vand.u32 %v28, 4294901760
  %v846 = vsub.f32 %v28, %v845
  %v847 = vand.u32 %v846, 4294901760
  %848 = vmatmul.f32.gmra.mxu0 %v847
  %v849 = vpop.f32.mrf.mxu0
  %v850 = vadd.f32 %v654, %v849
  %v851 = vand.u32 %v29, 4294901760
  %v852 = vsub.f32 %v29, %v851
  %v853 = vand.u32 %v852, 4294901760
  %854 = vmatmul.f32.gmra.mxu0 %v853
  %v855 = vpop.f32.mrf.mxu0
  %v856 = vadd.f32 %v659, %v855
  %v857 = vand.u32 %v30, 4294901760
  %v858 = vsub.f32 %v30, %v857
  %v859 = vand.u32 %v858, 4294901760
  %860 = vmatmul.f32.gmra.mxu0 %v859
  %v861 = vpop.f32.mrf.mxu0
  %v862 = vadd.f32 %v664, %v861
  %v863 = vand.u32 %v31, 4294901760
  %v864 = vsub.f32 %v31, %v863
  %v865 = vand.u32 %v864, 4294901760
  %866 = vmatmul.f32.gmra.mxu0 %v865
  %v867 = vpop.f32.mrf.mxu0
  %v868 = vadd.f32 %v669, %v867
  %v869 = vand.u32 %v32, 4294901760
  %v870 = vsub.f32 %v32, %v869
  %v871 = vand.u32 %v870, 4294901760
  %872 = vmatmul.f32.gmra.mxu0 %v871
  %v873 = vpop.f32.mrf.mxu0
  %v874 = vadd.f32 %v674, %v873
  %v875 = vand.u32 %v33, 4294901760
  %v876 = vsub.f32 %v33, %v875
  %v877 = vand.u32 %v876, 4294901760
  %878 = vmatmul.f32.gmra.mxu0 %v877
  %v879 = vpop.f32.mrf.mxu0
  %v880 = vadd.f32 %v679, %v879
  %v881 = vand.u32 %v34, 4294901760
  %v882 = vsub.f32 %v34, %v881
  %v883 = vand.u32 %v882, 4294901760
  %884 = vmatmul.f32.gmra.mxu0 %v883
  %v885 = vpop.f32.mrf.mxu0
  %v886 = vadd.f32 %v684, %v885
  %v887 = vand.u32 %v35, 4294901760
  %v888 = vsub.f32 %v35, %v887
  %v889 = vand.u32 %v888, 4294901760
  %890 = vmatmul.f32.gmra.mxu0 %v889
  %v891 = vpop.f32.mrf.mxu0
  %v892 = vadd.f32 %v689, %v891
  %v893 = vand.u32 %v36, 4294901760
  %v894 = vsub.f32 %v36, %v893
  %v895 = vand.u32 %v894, 4294901760
  %896 = vmatmul.f32.gmra.mxu0 %v895
  %v897 = vpop.f32.mrf.mxu0
  %v898 = vadd.f32 %v694, %v897
  %v899 = vand.u32 %v37, 4294901760
  %v900 = vsub.f32 %v37, %v899
  %v901 = vand.u32 %v900, 4294901760
  %902 = vmatmul.f32.gmra.mxu0 %v901
  %v903 = vpop.f32.mrf.mxu0
  %v904 = vadd.f32 %v699, %v903
  %v905 = vand.u32 %v38, 4294901760
  %v906 = vsub.f32 %v38, %v905
  %v907 = vand.u32 %v906, 4294901760
  %908 = vmatmul.f32.gmra.mxu0 %v907
  %v909 = vpop.f32.mrf.mxu0
  %v910 = vadd.f32 %v704, %v909
  %v911 = vand.u32 %v39, 4294901760
  %v912 = vsub.f32 %v39, %v911
  %v913 = vand.u32 %v912, 4294901760
  %914 = vmatmul.f32.gmra.mxu0 %v913
  %v915 = vpop.f32.mrf.mxu0
  %v916 = vadd.f32 %v709, %v915
  %v917 = vand.u32 %v40, 4294901760
  %v918 = vsub.f32 %v40, %v917
  %v919 = vand.u32 %v918, 4294901760
  %920 = vmatmul.f32.gmra.mxu0 %v919
  %v921 = vpop.f32.mrf.mxu0
  %v922 = vadd.f32 %v714, %v921
  %v923 = vand.u32 %v41, 4294901760
  %v924 = vsub.f32 %v41, %v923
  %v925 = vand.u32 %v924, 4294901760
  %926 = vmatmul.f32.gmra.mxu0 %v925
  %v927 = vpop.f32.mrf.mxu0
  %v928 = vadd.f32 %v719, %v927
  %v929 = vand.u32 %v42, 4294901760
  %v930 = vsub.f32 %v42, %v929
  %v931 = vand.u32 %v930, 4294901760
  %932 = vmatmul.f32.gmra.mxu0 %v931
  %v933 = vpop.f32.mrf.mxu0
  %v934 = vadd.f32 %v724, %v933
  %v935 = vand.u32 %v43, 4294901760
  %v936 = vsub.f32 %v43, %v935
  %v937 = vand.u32 %v936, 4294901760
  %938 = vmatmul.f32.gmra.mxu0 %v937
  %v939 = vpop.f32.mrf.mxu0
  %v940 = vadd.f32 %v729, %v939
  %v941 = vand.u32 %v44, 4294901760
  %v942 = vsub.f32 %v44, %v941
  %v943 = vand.u32 %v942, 4294901760
  %944 = vmatmul.f32.gmra.mxu0 %v943
  %v945 = vpop.f32.mrf.mxu0
  %v946 = vadd.f32 %v734, %v945
  %v947 = vand.u32 %v45, 4294901760
  %v948 = vsub.f32 %v45, %v947
  %v949 = vand.u32 %v948, 4294901760
  %950 = vmatmul.f32.gmra.mxu0 %v949
  %v951 = vpop.f32.mrf.mxu0
  %v952 = vadd.f32 %v739, %v951
  %v953 = vand.u32 %v46, 4294901760
  %v954 = vsub.f32 %v46, %v953
  %v955 = vand.u32 %v954, 4294901760
  %956 = vmatmul.f32.gmra.mxu0 %v955
  %v957 = vpop.f32.mrf.mxu0
  %v958 = vadd.f32 %v744, %v957
  %v959 = vand.u32 %v47, 4294901760
  %v960 = vsub.f32 %v47, %v959
  %v961 = vand.u32 %v960, 4294901760
  %962 = vmatmul.f32.gmra.mxu0 %v961
  %v963 = vpop.f32.mrf.mxu0
  %v964 = vadd.f32 %v749, %v963
  %v965 = vand.u32 %v48, 4294901760
  %v966 = vsub.f32 %v48, %v965
  %v967 = vand.u32 %v966, 4294901760
  %968 = vmatmul.f32.gmra.mxu0 %v967
  %v969 = vpop.f32.mrf.mxu0
  %v970 = vadd.f32 %v754, %v969
  %v971 = vand.u32 %v49, 4294901760
  %v972 = vsub.f32 %v49, %v971
  %v973 = vand.u32 %v972, 4294901760
  %974 = vmatmul.f32.gmra.mxu0 %v973
  %v975 = vpop.f32.mrf.mxu0
  %v976 = vadd.f32 %v759, %v975
  %v977 = vand.u32 %v50, 4294901760
  %v978 = vsub.f32 %v50, %v977
  %v979 = vand.u32 %v978, 4294901760
  %980 = vmatmul.f32.gmra.mxu0 %v979
  %v981 = vpop.f32.mrf.mxu0
  %v982 = vadd.f32 %v764, %v981
  %v983 = vand.u32 %v51, 4294901760
  %v984 = vsub.f32 %v51, %v983
  %v985 = vand.u32 %v984, 4294901760
  %986 = vmatmul.f32.gmra.mxu0 %v985
  %v987 = vpop.f32.mrf.mxu0
  %v988 = vadd.f32 %v769, %v987
  %v989 = vand.u32 %v52, 4294901760
  %v990 = vsub.f32 %v52, %v989
  %v991 = vand.u32 %v990, 4294901760
  %992 = vmatmul.f32.gmra.mxu0 %v991
  %v993 = vpop.f32.mrf.mxu0
  %v994 = vadd.f32 %v774, %v993
  %v995 = vand.u32 %v53, 4294901760
  %v996 = vsub.f32 %v53, %v995
  %v997 = vand.u32 %v996, 4294901760
  %998 = vmatmul.f32.gmra.mxu0 %v997
  %v999 = vpop.f32.mrf.mxu0
  %v1000 = vadd.f32 %v779, %v999
  %v1001 = vand.u32 %v54, 4294901760
  %v1002 = vsub.f32 %v54, %v1001
  %v1003 = vand.u32 %v1002, 4294901760
  %1004 = vmatmul.f32.gmra.mxu0 %v1003
  %v1005 = vpop.f32.mrf.mxu0
  %v1006 = vadd.f32 %v784, %v1005
  %v1007 = vand.u32 %v55, 4294901760
  %v1008 = vsub.f32 %v55, %v1007
  %v1009 = vand.u32 %v1008, 4294901760
  %1010 = vmatmul.f32.gmra.mxu0 %v1009
  %v1011 = vpop.f32.mrf.mxu0
  %v1012 = vadd.f32 %v789, %v1011
  %v1013 = vand.u32 %v56, 4294901760
  %v1014 = vsub.f32 %v56, %v1013
  %v1015 = vand.u32 %v1014, 4294901760
  %1016 = vmatmul.f32.gmra.mxu0 %v1015
  %v1017 = vpop.f32.mrf.mxu0
  %v1018 = vadd.f32 %v794, %v1017
  %v1019 = vand.u32 %v57, 4294901760
  %v1020 = vsub.f32 %v57, %v1019
  %v1021 = vand.u32 %v1020, 4294901760
  %1022 = vmatmul.f32.gmra.mxu0 %v1021
  %v1023 = vpop.f32.mrf.mxu0
  %v1024 = vadd.f32 %v799, %v1023
  %1025 = vdwg.mxu0
  %v1026 = vand.u32 %v73, 4294901760
  %v1027 = vsub.f32 %v73, %v1026
  %v1028 = vand.u32 %v1027, 4294901760
  %1029 = vmatpush.msra.mxu0 %v1028
  %v1030 = vand.u32 %v72, 4294901760
  %v1031 = vsub.f32 %v72, %v1030
  %v1032 = vand.u32 %v1031, 4294901760
  %1033 = vmatpush.msra.mxu0 %v1032
  %v1034 = vand.u32 %v71, 4294901760
  %v1035 = vsub.f32 %v71, %v1034
  %v1036 = vand.u32 %v1035, 4294901760
  %1037 = vmatpush.msra.mxu0 %v1036
  %v1038 = vand.u32 %v70, 4294901760
  %v1039 = vsub.f32 %v70, %v1038
  %v1040 = vand.u32 %v1039, 4294901760
  %1041 = vmatpush.msra.mxu0 %v1040
  %v1042 = vand.u32 %v69, 4294901760
  %v1043 = vsub.f32 %v69, %v1042
  %v1044 = vand.u32 %v1043, 4294901760
  %1045 = vmatpush.msra.mxu0 %v1044
  %v1046 = vand.u32 %v68, 4294901760
  %v1047 = vsub.f32 %v68, %v1046
  %v1048 = vand.u32 %v1047, 4294901760
  %1049 = vmatpush.msra.mxu0 %v1048
  %v1050 = vand.u32 %v67, 4294901760
  %v1051 = vsub.f32 %v67, %v1050
  %v1052 = vand.u32 %v1051, 4294901760
  %1053 = vmatpush.msra.mxu0 %v1052
  %v1054 = vand.u32 %v66, 4294901760
  %v1055 = vsub.f32 %v66, %v1054
  %v1056 = vand.u32 %v1055, 4294901760
  %1057 = vmatpush.msra.mxu0 %v1056
  %v1058 = vand.u32 %v65, 4294901760
  %v1059 = vsub.f32 %v65, %v1058
  %v1060 = vand.u32 %v1059, 4294901760
  %1061 = vmatpush.msra.mxu0 %v1060
  %v1062 = vand.u32 %v64, 4294901760
  %v1063 = vsub.f32 %v64, %v1062
  %v1064 = vand.u32 %v1063, 4294901760
  %1065 = vmatpush.msra.mxu0 %v1064
  %v1066 = vand.u32 %v63, 4294901760
  %v1067 = vsub.f32 %v63, %v1066
  %v1068 = vand.u32 %v1067, 4294901760
  %1069 = vmatpush.msra.mxu0 %v1068
  %v1070 = vand.u32 %v62, 4294901760
  %v1071 = vsub.f32 %v62, %v1070
  %v1072 = vand.u32 %v1071, 4294901760
  %1073 = vmatpush.msra.mxu0 %v1072
  %v1074 = vand.u32 %v61, 4294901760
  %v1075 = vsub.f32 %v61, %v1074
  %v1076 = vand.u32 %v1075, 4294901760
  %1077 = vmatpush.msra.mxu0 %v1076
  %v1078 = vand.u32 %v60, 4294901760
  %v1079 = vsub.f32 %v60, %v1078
  %v1080 = vand.u32 %v1079, 4294901760
  %1081 = vmatpush.msra.mxu0 %v1080
  %v1082 = vand.u32 %v59, 4294901760
  %v1083 = vsub.f32 %v59, %v1082
  %v1084 = vand.u32 %v1083, 4294901760
  %1085 = vmatpush.msra.mxu0 %v1084
  %v1086 = vand.u32 %v58, 4294901760
  %v1087 = vsub.f32 %v58, %v1086
  %v1088 = vand.u32 %v1087, 4294901760
  %1089 = vmatpush.msra.mxu0 %v1088
  %v1090 = vand.u32 %v26, 4294901760
  %1091 = vmatmul.f32.gmra.mxu0 %v1090
  %v1092 = vpop.f32.mrf.mxu0
  %v1093 = vadd.f32 %v838, %v1092
  %v1094 = vand.u32 %v27, 4294901760
  %1095 = vmatmul.f32.gmra.mxu0 %v1094
  %v1096 = vpop.f32.mrf.mxu0
  %v1097 = vadd.f32 %v844, %v1096
  %v1098 = vand.u32 %v28, 4294901760
  %1099 = vmatmul.f32.gmra.mxu0 %v1098
  %v1100 = vpop.f32.mrf.mxu0
  %v1101 = vadd.f32 %v850, %v1100
  %v1102 = vand.u32 %v29, 4294901760
  %1103 = vmatmul.f32.gmra.mxu0 %v1102
  %v1104 = vpop.f32.mrf.mxu0
  %v1105 = vadd.f32 %v856, %v1104
  %v1106 = vand.u32 %v30, 4294901760
  %1107 = vmatmul.f32.gmra.mxu0 %v1106
  %v1108 = vpop.f32.mrf.mxu0
  %v1109 = vadd.f32 %v862, %v1108
  %v1110 = vand.u32 %v31, 4294901760
  %1111 = vmatmul.f32.gmra.mxu0 %v1110
  %v1112 = vpop.f32.mrf.mxu0
  %v1113 = vadd.f32 %v868, %v1112
  %v1114 = vand.u32 %v32, 4294901760
  %1115 = vmatmul.f32.gmra.mxu0 %v1114
  %v1116 = vpop.f32.mrf.mxu0
  %v1117 = vadd.f32 %v874, %v1116
  %v1118 = vand.u32 %v33, 4294901760
  %1119 = vmatmul.f32.gmra.mxu0 %v1118
  %v1120 = vpop.f32.mrf.mxu0
  %v1121 = vadd.f32 %v880, %v1120
  %v1122 = vand.u32 %v34, 4294901760
  %1123 = vmatmul.f32.gmra.mxu0 %v1122
  %v1124 = vpop.f32.mrf.mxu0
  %v1125 = vadd.f32 %v886, %v1124
  %v1126 = vand.u32 %v35, 4294901760
  %1127 = vmatmul.f32.gmra.mxu0 %v1126
  %v1128 = vpop.f32.mrf.mxu0
  %v1129 = vadd.f32 %v892, %v1128
  %v1130 = vand.u32 %v36, 4294901760
  %1131 = vmatmul.f32.gmra.mxu0 %v1130
  %v1132 = vpop.f32.mrf.mxu0
  %v1133 = vadd.f32 %v898, %v1132
  %v1134 = vand.u32 %v37, 4294901760
  %1135 = vmatmul.f32.gmra.mxu0 %v1134
  %v1136 = vpop.f32.mrf.mxu0
  %v1137 = vadd.f32 %v904, %v1136
  %v1138 = vand.u32 %v38, 4294901760
  %1139 = vmatmul.f32.gmra.mxu0 %v1138
  %v1140 = vpop.f32.mrf.mxu0
  %v1141 = vadd.f32 %v910, %v1140
  %v1142 = vand.u32 %v39, 4294901760
  %1143 = vmatmul.f32.gmra.mxu0 %v1142
  %v1144 = vpop.f32.mrf.mxu0
  %v1145 = vadd.f32 %v916, %v1144
  %v1146 = vand.u32 %v40, 4294901760
  %1147 = vmatmul.f32.gmra.mxu0 %v1146
  %v1148 = vpop.f32.mrf.mxu0
  %v1149 = vadd.f32 %v922, %v1148
  %v1150 = vand.u32 %v41, 4294901760
  %1151 = vmatmul.f32.gmra.mxu0 %v1150
  %v1152 = vpop.f32.mrf.mxu0
  %v1153 = vadd.f32 %v928, %v1152
  %v1154 = vand.u32 %v42, 4294901760
  %1155 = vmatmul.f32.gmra.mxu0 %v1154
  %v1156 = vpop.f32.mrf.mxu0
  %v1157 = vadd.f32 %v934, %v1156
  %v1158 = vand.u32 %v43, 4294901760
  %1159 = vmatmul.f32.gmra.mxu0 %v1158
  %v1160 = vpop.f32.mrf.mxu0
  %v1161 = vadd.f32 %v940, %v1160
  %v1162 = vand.u32 %v44, 4294901760
  %1163 = vmatmul.f32.gmra.mxu0 %v1162
  %v1164 = vpop.f32.mrf.mxu0
  %v1165 = vadd.f32 %v946, %v1164
  %v1166 = vand.u32 %v45, 4294901760
  %1167 = vmatmul.f32.gmra.mxu0 %v1166
  %v1168 = vpop.f32.mrf.mxu0
  %v1169 = vadd.f32 %v952, %v1168
  %v1170 = vand.u32 %v46, 4294901760
  %1171 = vmatmul.f32.gmra.mxu0 %v1170
  %v1172 = vpop.f32.mrf.mxu0
  %v1173 = vadd.f32 %v958, %v1172
  %v1174 = vand.u32 %v47, 4294901760
  %1175 = vmatmul.f32.gmra.mxu0 %v1174
  %v1176 = vpop.f32.mrf.mxu0
  %v1177 = vadd.f32 %v964, %v1176
  %v1178 = vand.u32 %v48, 4294901760
  %1179 = vmatmul.f32.gmra.mxu0 %v1178
  %v1180 = vpop.f32.mrf.mxu0
  %v1181 = vadd.f32 %v970, %v1180
  %v1182 = vand.u32 %v49, 4294901760
  %1183 = vmatmul.f32.gmra.mxu0 %v1182
  %v1184 = vpop.f32.mrf.mxu0
  %v1185 = vadd.f32 %v976, %v1184
  %v1186 = vand.u32 %v50, 4294901760
  %1187 = vmatmul.f32.gmra.mxu0 %v1186
  %v1188 = vpop.f32.mrf.mxu0
  %v1189 = vadd.f32 %v982, %v1188
  %v1190 = vand.u32 %v51, 4294901760
  %1191 = vmatmul.f32.gmra.mxu0 %v1190
  %v1192 = vpop.f32.mrf.mxu0
  %v1193 = vadd.f32 %v988, %v1192
  %v1194 = vand.u32 %v52, 4294901760
  %1195 = vmatmul.f32.gmra.mxu0 %v1194
  %v1196 = vpop.f32.mrf.mxu0
  %v1197 = vadd.f32 %v994, %v1196
  %v1198 = vand.u32 %v53, 4294901760
  %1199 = vmatmul.f32.gmra.mxu0 %v1198
  %v1200 = vpop.f32.mrf.mxu0
  %v1201 = vadd.f32 %v1000, %v1200
  %v1202 = vand.u32 %v54, 4294901760
  %1203 = vmatmul.f32.gmra.mxu0 %v1202
  %v1204 = vpop.f32.mrf.mxu0
  %v1205 = vadd.f32 %v1006, %v1204
  %v1206 = vand.u32 %v55, 4294901760
  %1207 = vmatmul.f32.gmra.mxu0 %v1206
  %v1208 = vpop.f32.mrf.mxu0
  %v1209 = vadd.f32 %v1012, %v1208
  %v1210 = vand.u32 %v56, 4294901760
  %1211 = vmatmul.f32.gmra.mxu0 %v1210
  %v1212 = vpop.f32.mrf.mxu0
  %v1213 = vadd.f32 %v1018, %v1212
  %v1214 = vand.u32 %v57, 4294901760
  %1215 = vmatmul.f32.gmra.mxu0 %v1214
  %v1216 = vpop.f32.mrf.mxu0
  %v1217 = vadd.f32 %v1024, %v1216
  %1218 = vdwg.mxu0
  %v1219 = vand.u32 %v73, 4294901760
  %1220 = vmatpush.msra.mxu0 %v1219
  %v1221 = vand.u32 %v72, 4294901760
  %1222 = vmatpush.msra.mxu0 %v1221
  %v1223 = vand.u32 %v71, 4294901760
  %1224 = vmatpush.msra.mxu0 %v1223
  %v1225 = vand.u32 %v70, 4294901760
  %1226 = vmatpush.msra.mxu0 %v1225
  %v1227 = vand.u32 %v69, 4294901760
  %1228 = vmatpush.msra.mxu0 %v1227
  %v1229 = vand.u32 %v68, 4294901760
  %1230 = vmatpush.msra.mxu0 %v1229
  %v1231 = vand.u32 %v67, 4294901760
  %1232 = vmatpush.msra.mxu0 %v1231
  %v1233 = vand.u32 %v66, 4294901760
  %1234 = vmatpush.msra.mxu0 %v1233
  %v1235 = vand.u32 %v65, 4294901760
  %1236 = vmatpush.msra.mxu0 %v1235
  %v1237 = vand.u32 %v64, 4294901760
  %1238 = vmatpush.msra.mxu0 %v1237
  %v1239 = vand.u32 %v63, 4294901760
  %1240 = vmatpush.msra.mxu0 %v1239
  %v1241 = vand.u32 %v62, 4294901760
  %1242 = vmatpush.msra.mxu0 %v1241
  %v1243 = vand.u32 %v61, 4294901760
  %1244 = vmatpush.msra.mxu0 %v1243
  %v1245 = vand.u32 %v60, 4294901760
  %1246 = vmatpush.msra.mxu0 %v1245
  %v1247 = vand.u32 %v59, 4294901760
  %1248 = vmatpush.msra.mxu0 %v1247
  %v1249 = vand.u32 %v58, 4294901760
  %1250 = vmatpush.msra.mxu0 %v1249
  %v1251 = vand.u32 %v26, 4294901760
  %1252 = vmatmul.f32.gmra.mxu0 %v1251
  %v1253 = vpop.f32.mrf.mxu0
  %v1254 = vadd.f32 %v1093, %v1253
  %v1255 = vand.u32 %v27, 4294901760
  %1256 = vmatmul.f32.gmra.mxu0 %v1255
  %v1257 = vpop.f32.mrf.mxu0
  %v1258 = vadd.f32 %v1097, %v1257
  %v1259 = vand.u32 %v28, 4294901760
  %1260 = vmatmul.f32.gmra.mxu0 %v1259
  %v1261 = vpop.f32.mrf.mxu0
  %v1262 = vadd.f32 %v1101, %v1261
  %v1263 = vand.u32 %v29, 4294901760
  %1264 = vmatmul.f32.gmra.mxu0 %v1263
  %v1265 = vpop.f32.mrf.mxu0
  %v1266 = vadd.f32 %v1105, %v1265
  %v1267 = vand.u32 %v30, 4294901760
  %1268 = vmatmul.f32.gmra.mxu0 %v1267
  %v1269 = vpop.f32.mrf.mxu0
  %v1270 = vadd.f32 %v1109, %v1269
  %v1271 = vand.u32 %v31, 4294901760
  %1272 = vmatmul.f32.gmra.mxu0 %v1271
  %v1273 = vpop.f32.mrf.mxu0
  %v1274 = vadd.f32 %v1113, %v1273
  %v1275 = vand.u32 %v32, 4294901760
  %1276 = vmatmul.f32.gmra.mxu0 %v1275
  %v1277 = vpop.f32.mrf.mxu0
  %v1278 = vadd.f32 %v1117, %v1277
  %v1279 = vand.u32 %v33, 4294901760
  %1280 = vmatmul.f32.gmra.mxu0 %v1279
  %v1281 = vpop.f32.mrf.mxu0
  %v1282 = vadd.f32 %v1121, %v1281
  %v1283 = vand.u32 %v34, 4294901760
  %1284 = vmatmul.f32.gmra.mxu0 %v1283
  %v1285 = vpop.f32.mrf.mxu0
  %v1286 = vadd.f32 %v1125, %v1285
  %v1287 = vand.u32 %v35, 4294901760
  %1288 = vmatmul.f32.gmra.mxu0 %v1287
  %v1289 = vpop.f32.mrf.mxu0
  %v1290 = vadd.f32 %v1129, %v1289
  %v1291 = vand.u32 %v36, 4294901760
  %1292 = vmatmul.f32.gmra.mxu0 %v1291
  %v1293 = vpop.f32.mrf.mxu0
  %v1294 = vadd.f32 %v1133, %v1293
  %v1295 = vand.u32 %v37, 4294901760
  %1296 = vmatmul.f32.gmra.mxu0 %v1295
  %v1297 = vpop.f32.mrf.mxu0
  %v1298 = vadd.f32 %v1137, %v1297
  %v1299 = vand.u32 %v38, 4294901760
  %1300 = vmatmul.f32.gmra.mxu0 %v1299
  %v1301 = vpop.f32.mrf.mxu0
  %v1302 = vadd.f32 %v1141, %v1301
  %v1303 = vand.u32 %v39, 4294901760
  %1304 = vmatmul.f32.gmra.mxu0 %v1303
  %v1305 = vpop.f32.mrf.mxu0
  %v1306 = vadd.f32 %v1145, %v1305
  %v1307 = vand.u32 %v40, 4294901760
  %1308 = vmatmul.f32.gmra.mxu0 %v1307
  %v1309 = vpop.f32.mrf.mxu0
  %v1310 = vadd.f32 %v1149, %v1309
  %v1311 = vand.u32 %v41, 4294901760
  %1312 = vmatmul.f32.gmra.mxu0 %v1311
  %v1313 = vpop.f32.mrf.mxu0
  %v1314 = vadd.f32 %v1153, %v1313
  %v1315 = vand.u32 %v42, 4294901760
  %1316 = vmatmul.f32.gmra.mxu0 %v1315
  %v1317 = vpop.f32.mrf.mxu0
  %v1318 = vadd.f32 %v1157, %v1317
  %v1319 = vand.u32 %v43, 4294901760
  %1320 = vmatmul.f32.gmra.mxu0 %v1319
  %v1321 = vpop.f32.mrf.mxu0
  %v1322 = vadd.f32 %v1161, %v1321
  %v1323 = vand.u32 %v44, 4294901760
  %1324 = vmatmul.f32.gmra.mxu0 %v1323
  %v1325 = vpop.f32.mrf.mxu0
  %v1326 = vadd.f32 %v1165, %v1325
  %v1327 = vand.u32 %v45, 4294901760
  %1328 = vmatmul.f32.gmra.mxu0 %v1327
  %v1329 = vpop.f32.mrf.mxu0
  %v1330 = vadd.f32 %v1169, %v1329
  %v1331 = vand.u32 %v46, 4294901760
  %1332 = vmatmul.f32.gmra.mxu0 %v1331
  %v1333 = vpop.f32.mrf.mxu0
  %v1334 = vadd.f32 %v1173, %v1333
  %v1335 = vand.u32 %v47, 4294901760
  %1336 = vmatmul.f32.gmra.mxu0 %v1335
  %v1337 = vpop.f32.mrf.mxu0
  %v1338 = vadd.f32 %v1177, %v1337
  %v1339 = vand.u32 %v48, 4294901760
  %1340 = vmatmul.f32.gmra.mxu0 %v1339
  %v1341 = vpop.f32.mrf.mxu0
  %v1342 = vadd.f32 %v1181, %v1341
  %v1343 = vand.u32 %v49, 4294901760
  %1344 = vmatmul.f32.gmra.mxu0 %v1343
  %v1345 = vpop.f32.mrf.mxu0
  %v1346 = vadd.f32 %v1185, %v1345
  %v1347 = vand.u32 %v50, 4294901760
  %1348 = vmatmul.f32.gmra.mxu0 %v1347
  %v1349 = vpop.f32.mrf.mxu0
  %v1350 = vadd.f32 %v1189, %v1349
  %v1351 = vand.u32 %v51, 4294901760
  %1352 = vmatmul.f32.gmra.mxu0 %v1351
  %v1353 = vpop.f32.mrf.mxu0
  %v1354 = vadd.f32 %v1193, %v1353
  %v1355 = vand.u32 %v52, 4294901760
  %1356 = vmatmul.f32.gmra.mxu0 %v1355
  %v1357 = vpop.f32.mrf.mxu0
  %v1358 = vadd.f32 %v1197, %v1357
  %v1359 = vand.u32 %v53, 4294901760
  %1360 = vmatmul.f32.gmra.mxu0 %v1359
  %v1361 = vpop.f32.mrf.mxu0
  %v1362 = vadd.f32 %v1201, %v1361
  %v1363 = vand.u32 %v54, 4294901760
  %1364 = vmatmul.f32.gmra.mxu0 %v1363
  %v1365 = vpop.f32.mrf.mxu0
  %v1366 = vadd.f32 %v1205, %v1365
  %v1367 = vand.u32 %v55, 4294901760
  %1368 = vmatmul.f32.gmra.mxu0 %v1367
  %v1369 = vpop.f32.mrf.mxu0
  %v1370 = vadd.f32 %v1209, %v1369
  %v1371 = vand.u32 %v56, 4294901760
  %1372 = vmatmul.f32.gmra.mxu0 %v1371
  %v1373 = vpop.f32.mrf.mxu0
  %v1374 = vadd.f32 %v1213, %v1373
  %v1375 = vand.u32 %v57, 4294901760
  %1376 = vmatmul.f32.gmra.mxu0 %v1375
  %v1377 = vpop.f32.mrf.mxu0
  %v1378 = vadd.f32 %v1217, %v1377
  %1379 = vdwg.mxu0
  %v1380 = vxor.u32 %v1254, 2147483648
  %v1381 = vxor.u32 %v1258, 2147483648
  %v1382 = vxor.u32 %v1262, 2147483648
  %v1383 = vxor.u32 %v1266, 2147483648
  %v1384 = vxor.u32 %v1270, 2147483648
  %v1385 = vxor.u32 %v1274, 2147483648
  %v1386 = vxor.u32 %v1278, 2147483648
  %v1387 = vxor.u32 %v1282, 2147483648
  %v1388 = vxor.u32 %v1286, 2147483648
  %v1389 = vxor.u32 %v1290, 2147483648
  %v1390 = vxor.u32 %v1294, 2147483648
  %v1391 = vxor.u32 %v1298, 2147483648
  %v1392 = vxor.u32 %v1302, 2147483648
  %v1393 = vxor.u32 %v1306, 2147483648
  %v1394 = vxor.u32 %v1310, 2147483648
  %v1395 = vxor.u32 %v1314, 2147483648
  %v1396 = vxor.u32 %v1318, 2147483648
  %v1397 = vxor.u32 %v1322, 2147483648
  %v1398 = vxor.u32 %v1326, 2147483648
  %v1399 = vxor.u32 %v1330, 2147483648
  %v1400 = vxor.u32 %v1334, 2147483648
  %v1401 = vxor.u32 %v1338, 2147483648
  %v1402 = vxor.u32 %v1342, 2147483648
  %v1403 = vxor.u32 %v1346, 2147483648
  %v1404 = vxor.u32 %v1350, 2147483648
  %v1405 = vxor.u32 %v1354, 2147483648
  %v1406 = vxor.u32 %v1358, 2147483648
  %v1407 = vxor.u32 %v1362, 2147483648
  %v1408 = vxor.u32 %v1366, 2147483648
  %v1409 = vxor.u32 %v1370, 2147483648
  %v1410 = vxor.u32 %v1374, 2147483648
  %v1411 = vxor.u32 %v1378, 2147483648
  %v1412 = vmul.f32 %v1380, 1.442695
  %v1413 = vpow.pop %v1412
  %v1414 = vmul.f32 %v1381, 1.442695
  %v1415 = vpow.pop %v1414
  %v1416 = vmul.f32 %v1382, 1.442695
  %v1417 = vpow.pop %v1416
  %v1418 = vmul.f32 %v1383, 1.442695
  %v1419 = vpow.pop %v1418
  %v1420 = vmul.f32 %v1384, 1.442695
  %v1421 = vpow.pop %v1420
  %v1422 = vmul.f32 %v1385, 1.442695
  %v1423 = vpow.pop %v1422
  %v1424 = vmul.f32 %v1386, 1.442695
  %v1425 = vpow.pop %v1424
  %v1426 = vmul.f32 %v1387, 1.442695
  %v1427 = vpow.pop %v1426
  %v1428 = vmul.f32 %v1388, 1.442695
  %v1429 = vpow.pop %v1428
  %v1430 = vmul.f32 %v1389, 1.442695
  %v1431 = vpow.pop %v1430
  %v1432 = vmul.f32 %v1390, 1.442695
  %v1433 = vpow.pop %v1432
  %v1434 = vmul.f32 %v1391, 1.442695
  %v1435 = vpow.pop %v1434
  %v1436 = vmul.f32 %v1392, 1.442695
  %v1437 = vpow.pop %v1436
  %v1438 = vmul.f32 %v1393, 1.442695
  %v1439 = vpow.pop %v1438
  %v1440 = vmul.f32 %v1394, 1.442695
  %v1441 = vpow.pop %v1440
  %v1442 = vmul.f32 %v1395, 1.442695
  %v1443 = vpow.pop %v1442
  %v1444 = vmul.f32 %v1396, 1.442695
  %v1445 = vpow.pop %v1444
  %v1446 = vmul.f32 %v1397, 1.442695
  %v1447 = vpow.pop %v1446
  %v1448 = vmul.f32 %v1398, 1.442695
  %v1449 = vpow.pop %v1448
  %v1450 = vmul.f32 %v1399, 1.442695
  %v1451 = vpow.pop %v1450
  %v1452 = vmul.f32 %v1400, 1.442695
  %v1453 = vpow.pop %v1452
  %v1454 = vmul.f32 %v1401, 1.442695
  %v1455 = vpow.pop %v1454
  %v1456 = vmul.f32 %v1402, 1.442695
  %v1457 = vpow.pop %v1456
  %v1458 = vmul.f32 %v1403, 1.442695
  %v1459 = vpow.pop %v1458
  %v1460 = vmul.f32 %v1404, 1.442695
  %v1461 = vpow.pop %v1460
  %v1462 = vmul.f32 %v1405, 1.442695
  %v1463 = vpow.pop %v1462
  %v1464 = vmul.f32 %v1406, 1.442695
  %v1465 = vpow.pop %v1464
  %v1466 = vmul.f32 %v1407, 1.442695
  %v1467 = vpow.pop %v1466
  %v1468 = vmul.f32 %v1408, 1.442695
  %v1469 = vpow.pop %v1468
  %v1470 = vmul.f32 %v1409, 1.442695
  %v1471 = vpow.pop %v1470
  %v1472 = vmul.f32 %v1410, 1.442695
  %v1473 = vpow.pop %v1472
  %v1474 = vmul.f32 %v1411, 1.442695
  %v1475 = vpow.pop %v1474
  %v1476 = vadd.f32 %v1413, 1.0
  %v1477 = vadd.f32 %v1415, 1.0
  %v1478 = vadd.f32 %v1417, 1.0
  %v1479 = vadd.f32 %v1419, 1.0
  %v1480 = vadd.f32 %v1421, 1.0
  %v1481 = vadd.f32 %v1423, 1.0
  %v1482 = vadd.f32 %v1425, 1.0
  %v1483 = vadd.f32 %v1427, 1.0
  %v1484 = vadd.f32 %v1429, 1.0
  %v1485 = vadd.f32 %v1431, 1.0
  %v1486 = vadd.f32 %v1433, 1.0
  %v1487 = vadd.f32 %v1435, 1.0
  %v1488 = vadd.f32 %v1437, 1.0
  %v1489 = vadd.f32 %v1439, 1.0
  %v1490 = vadd.f32 %v1441, 1.0
  %v1491 = vadd.f32 %v1443, 1.0
  %v1492 = vadd.f32 %v1445, 1.0
  %v1493 = vadd.f32 %v1447, 1.0
  %v1494 = vadd.f32 %v1449, 1.0
  %v1495 = vadd.f32 %v1451, 1.0
  %v1496 = vadd.f32 %v1453, 1.0
  %v1497 = vadd.f32 %v1455, 1.0
  %v1498 = vadd.f32 %v1457, 1.0
  %v1499 = vadd.f32 %v1459, 1.0
  %v1500 = vadd.f32 %v1461, 1.0
  %v1501 = vadd.f32 %v1463, 1.0
  %v1502 = vadd.f32 %v1465, 1.0
  %v1503 = vadd.f32 %v1467, 1.0
  %v1504 = vadd.f32 %v1469, 1.0
  %v1505 = vadd.f32 %v1471, 1.0
  %v1506 = vadd.f32 %v1473, 1.0
  %v1507 = vadd.f32 %v1475, 1.0
  %v1508 = vrcp.pop %v1476
  %v1509 = vmul.f32 %v1476, %v1508
  %v1510 = vsub.f32 1.0, %v1509
  %v1511 = vmul.f32 %v1508, %v1510
  %v1512 = vadd.f32 %v1508, %v1511
  %vm1513 = vweird.f32 %v1476
  %vm1514 = vweird.f32 %v1508
  %vm1515 = vmor %vm1513, %vm1514
  %v1516 = vsel %vm1515, %v1508, %v1512
  %v1517 = vand.u32 2147483647, %v1476
  %vm1518 = vcmp.eq.f32.partialorder %v1517, 8.507059e+37
  %v1519 = vand.u32 %v1476, 2147483648
  %v1520 = vor.u32 1.1754944e-38, %v1519
  %v1521 = vsel %vm1518, %v1520, %v1516
  %v1522 = vmul.f32 1.0, %v1521
  %v1523 = vrcp.pop %v1477
  %v1524 = vmul.f32 %v1477, %v1523
  %v1525 = vsub.f32 1.0, %v1524
  %v1526 = vmul.f32 %v1523, %v1525
  %v1527 = vadd.f32 %v1523, %v1526
  %vm1528 = vweird.f32 %v1477
  %vm1529 = vweird.f32 %v1523
  %vm1530 = vmor %vm1528, %vm1529
  %v1531 = vsel %vm1530, %v1523, %v1527
  %v1532 = vand.u32 2147483647, %v1477
  %vm1533 = vcmp.eq.f32.partialorder %v1532, 8.507059e+37
  %v1534 = vand.u32 %v1477, 2147483648
  %v1535 = vor.u32 1.1754944e-38, %v1534
  %v1536 = vsel %vm1533, %v1535, %v1531
  %v1537 = vmul.f32 1.0, %v1536
  %v1538 = vrcp.pop %v1478
  %v1539 = vmul.f32 %v1478, %v1538
  %v1540 = vsub.f32 1.0, %v1539
  %v1541 = vmul.f32 %v1538, %v1540
  %v1542 = vadd.f32 %v1538, %v1541
  %vm1543 = vweird.f32 %v1478
  %vm1544 = vweird.f32 %v1538
  %vm1545 = vmor %vm1543, %vm1544
  %v1546 = vsel %vm1545, %v1538, %v1542
  %v1547 = vand.u32 2147483647, %v1478
  %vm1548 = vcmp.eq.f32.partialorder %v1547, 8.507059e+37
  %v1549 = vand.u32 %v1478, 2147483648
  %v1550 = vor.u32 1.1754944e-38, %v1549
  %v1551 = vsel %vm1548, %v1550, %v1546
  %v1552 = vmul.f32 1.0, %v1551
  %v1553 = vrcp.pop %v1479
  %v1554 = vmul.f32 %v1479, %v1553
  %v1555 = vsub.f32 1.0, %v1554
  %v1556 = vmul.f32 %v1553, %v1555
  %v1557 = vadd.f32 %v1553, %v1556
  %vm1558 = vweird.f32 %v1479
  %vm1559 = vweird.f32 %v1553
  %vm1560 = vmor %vm1558, %vm1559
  %v1561 = vsel %vm1560, %v1553, %v1557
  %v1562 = vand.u32 2147483647, %v1479
  %vm1563 = vcmp.eq.f32.partialorder %v1562, 8.507059e+37
  %v1564 = vand.u32 %v1479, 2147483648
  %v1565 = vor.u32 1.1754944e-38, %v1564
  %v1566 = vsel %vm1563, %v1565, %v1561
  %v1567 = vmul.f32 1.0, %v1566
  %v1568 = vrcp.pop %v1480
  %v1569 = vmul.f32 %v1480, %v1568
  %v1570 = vsub.f32 1.0, %v1569
  %v1571 = vmul.f32 %v1568, %v1570
  %v1572 = vadd.f32 %v1568, %v1571
  %vm1573 = vweird.f32 %v1480
  %vm1574 = vweird.f32 %v1568
  %vm1575 = vmor %vm1573, %vm1574
  %v1576 = vsel %vm1575, %v1568, %v1572
  %v1577 = vand.u32 2147483647, %v1480
  %vm1578 = vcmp.eq.f32.partialorder %v1577, 8.507059e+37
  %v1579 = vand.u32 %v1480, 2147483648
  %v1580 = vor.u32 1.1754944e-38, %v1579
  %v1581 = vsel %vm1578, %v1580, %v1576
  %v1582 = vmul.f32 1.0, %v1581
  %v1583 = vrcp.pop %v1481
  %v1584 = vmul.f32 %v1481, %v1583
  %v1585 = vsub.f32 1.0, %v1584
  %v1586 = vmul.f32 %v1583, %v1585
  %v1587 = vadd.f32 %v1583, %v1586
  %vm1588 = vweird.f32 %v1481
  %vm1589 = vweird.f32 %v1583
  %vm1590 = vmor %vm1588, %vm1589
  %v1591 = vsel %vm1590, %v1583, %v1587
  %v1592 = vand.u32 2147483647, %v1481
  %vm1593 = vcmp.eq.f32.partialorder %v1592, 8.507059e+37
  %v1594 = vand.u32 %v1481, 2147483648
  %v1595 = vor.u32 1.1754944e-38, %v1594
  %v1596 = vsel %vm1593, %v1595, %v1591
  %v1597 = vmul.f32 1.0, %v1596
  %v1598 = vrcp.pop %v1482
  %v1599 = vmul.f32 %v1482, %v1598
  %v1600 = vsub.f32 1.0, %v1599
  %v1601 = vmul.f32 %v1598, %v1600
  %v1602 = vadd.f32 %v1598, %v1601
  %vm1603 = vweird.f32 %v1482
  %vm1604 = vweird.f32 %v1598
  %vm1605 = vmor %vm1603, %vm1604
  %v1606 = vsel %vm1605, %v1598, %v1602
  %v1607 = vand.u32 2147483647, %v1482
  %vm1608 = vcmp.eq.f32.partialorder %v1607, 8.507059e+37
  %v1609 = vand.u32 %v1482, 2147483648
  %v1610 = vor.u32 1.1754944e-38, %v1609
  %v1611 = vsel %vm1608, %v1610, %v1606
  %v1612 = vmul.f32 1.0, %v1611
  %v1613 = vrcp.pop %v1483
  %v1614 = vmul.f32 %v1483, %v1613
  %v1615 = vsub.f32 1.0, %v1614
  %v1616 = vmul.f32 %v1613, %v1615
  %v1617 = vadd.f32 %v1613, %v1616
  %vm1618 = vweird.f32 %v1483
  %vm1619 = vweird.f32 %v1613
  %vm1620 = vmor %vm1618, %vm1619
  %v1621 = vsel %vm1620, %v1613, %v1617
  %v1622 = vand.u32 2147483647, %v1483
  %vm1623 = vcmp.eq.f32.partialorder %v1622, 8.507059e+37
  %v1624 = vand.u32 %v1483, 2147483648
  %v1625 = vor.u32 1.1754944e-38, %v1624
  %v1626 = vsel %vm1623, %v1625, %v1621
  %v1627 = vmul.f32 1.0, %v1626
  %v1628 = vrcp.pop %v1484
  %v1629 = vmul.f32 %v1484, %v1628
  %v1630 = vsub.f32 1.0, %v1629
  %v1631 = vmul.f32 %v1628, %v1630
  %v1632 = vadd.f32 %v1628, %v1631
  %vm1633 = vweird.f32 %v1484
  %vm1634 = vweird.f32 %v1628
  %vm1635 = vmor %vm1633, %vm1634
  %v1636 = vsel %vm1635, %v1628, %v1632
  %v1637 = vand.u32 2147483647, %v1484
  %vm1638 = vcmp.eq.f32.partialorder %v1637, 8.507059e+37
  %v1639 = vand.u32 %v1484, 2147483648
  %v1640 = vor.u32 1.1754944e-38, %v1639
  %v1641 = vsel %vm1638, %v1640, %v1636
  %v1642 = vmul.f32 1.0, %v1641
  %v1643 = vrcp.pop %v1485
  %v1644 = vmul.f32 %v1485, %v1643
  %v1645 = vsub.f32 1.0, %v1644
  %v1646 = vmul.f32 %v1643, %v1645
  %v1647 = vadd.f32 %v1643, %v1646
  %vm1648 = vweird.f32 %v1485
  %vm1649 = vweird.f32 %v1643
  %vm1650 = vmor %vm1648, %vm1649
  %v1651 = vsel %vm1650, %v1643, %v1647
  %v1652 = vand.u32 2147483647, %v1485
  %vm1653 = vcmp.eq.f32.partialorder %v1652, 8.507059e+37
  %v1654 = vand.u32 %v1485, 2147483648
  %v1655 = vor.u32 1.1754944e-38, %v1654
  %v1656 = vsel %vm1653, %v1655, %v1651
  %v1657 = vmul.f32 1.0, %v1656
  %v1658 = vrcp.pop %v1486
  %v1659 = vmul.f32 %v1486, %v1658
  %v1660 = vsub.f32 1.0, %v1659
  %v1661 = vmul.f32 %v1658, %v1660
  %v1662 = vadd.f32 %v1658, %v1661
  %vm1663 = vweird.f32 %v1486
  %vm1664 = vweird.f32 %v1658
  %vm1665 = vmor %vm1663, %vm1664
  %v1666 = vsel %vm1665, %v1658, %v1662
  %v1667 = vand.u32 2147483647, %v1486
  %vm1668 = vcmp.eq.f32.partialorder %v1667, 8.507059e+37
  %v1669 = vand.u32 %v1486, 2147483648
  %v1670 = vor.u32 1.1754944e-38, %v1669
  %v1671 = vsel %vm1668, %v1670, %v1666
  %v1672 = vmul.f32 1.0, %v1671
  %v1673 = vrcp.pop %v1487
  %v1674 = vmul.f32 %v1487, %v1673
  %v1675 = vsub.f32 1.0, %v1674
  %v1676 = vmul.f32 %v1673, %v1675
  %v1677 = vadd.f32 %v1673, %v1676
  %vm1678 = vweird.f32 %v1487
  %vm1679 = vweird.f32 %v1673
  %vm1680 = vmor %vm1678, %vm1679
  %v1681 = vsel %vm1680, %v1673, %v1677
  %v1682 = vand.u32 2147483647, %v1487
  %vm1683 = vcmp.eq.f32.partialorder %v1682, 8.507059e+37
  %v1684 = vand.u32 %v1487, 2147483648
  %v1685 = vor.u32 1.1754944e-38, %v1684
  %v1686 = vsel %vm1683, %v1685, %v1681
  %v1687 = vmul.f32 1.0, %v1686
  %v1688 = vrcp.pop %v1488
  %v1689 = vmul.f32 %v1488, %v1688
  %v1690 = vsub.f32 1.0, %v1689
  %v1691 = vmul.f32 %v1688, %v1690
  %v1692 = vadd.f32 %v1688, %v1691
  %vm1693 = vweird.f32 %v1488
  %vm1694 = vweird.f32 %v1688
  %vm1695 = vmor %vm1693, %vm1694
  %v1696 = vsel %vm1695, %v1688, %v1692
  %v1697 = vand.u32 2147483647, %v1488
  %vm1698 = vcmp.eq.f32.partialorder %v1697, 8.507059e+37
  %v1699 = vand.u32 %v1488, 2147483648
  %v1700 = vor.u32 1.1754944e-38, %v1699
  %v1701 = vsel %vm1698, %v1700, %v1696
  %v1702 = vmul.f32 1.0, %v1701
  %v1703 = vrcp.pop %v1489
  %v1704 = vmul.f32 %v1489, %v1703
  %v1705 = vsub.f32 1.0, %v1704
  %v1706 = vmul.f32 %v1703, %v1705
  %v1707 = vadd.f32 %v1703, %v1706
  %vm1708 = vweird.f32 %v1489
  %vm1709 = vweird.f32 %v1703
  %vm1710 = vmor %vm1708, %vm1709
  %v1711 = vsel %vm1710, %v1703, %v1707
  %v1712 = vand.u32 2147483647, %v1489
  %vm1713 = vcmp.eq.f32.partialorder %v1712, 8.507059e+37
  %v1714 = vand.u32 %v1489, 2147483648
  %v1715 = vor.u32 1.1754944e-38, %v1714
  %v1716 = vsel %vm1713, %v1715, %v1711
  %v1717 = vmul.f32 1.0, %v1716
  %v1718 = vrcp.pop %v1490
  %v1719 = vmul.f32 %v1490, %v1718
  %v1720 = vsub.f32 1.0, %v1719
  %v1721 = vmul.f32 %v1718, %v1720
  %v1722 = vadd.f32 %v1718, %v1721
  %vm1723 = vweird.f32 %v1490
  %vm1724 = vweird.f32 %v1718
  %vm1725 = vmor %vm1723, %vm1724
  %v1726 = vsel %vm1725, %v1718, %v1722
  %v1727 = vand.u32 2147483647, %v1490
  %vm1728 = vcmp.eq.f32.partialorder %v1727, 8.507059e+37
  %v1729 = vand.u32 %v1490, 2147483648
  %v1730 = vor.u32 1.1754944e-38, %v1729
  %v1731 = vsel %vm1728, %v1730, %v1726
  %v1732 = vmul.f32 1.0, %v1731
  %v1733 = vrcp.pop %v1491
  %v1734 = vmul.f32 %v1491, %v1733
  %v1735 = vsub.f32 1.0, %v1734
  %v1736 = vmul.f32 %v1733, %v1735
  %v1737 = vadd.f32 %v1733, %v1736
  %vm1738 = vweird.f32 %v1491
  %vm1739 = vweird.f32 %v1733
  %vm1740 = vmor %vm1738, %vm1739
  %v1741 = vsel %vm1740, %v1733, %v1737
  %v1742 = vand.u32 2147483647, %v1491
  %vm1743 = vcmp.eq.f32.partialorder %v1742, 8.507059e+37
  %v1744 = vand.u32 %v1491, 2147483648
  %v1745 = vor.u32 1.1754944e-38, %v1744
  %v1746 = vsel %vm1743, %v1745, %v1741
  %v1747 = vmul.f32 1.0, %v1746
  %v1748 = vrcp.pop %v1492
  %v1749 = vmul.f32 %v1492, %v1748
  %v1750 = vsub.f32 1.0, %v1749
  %v1751 = vmul.f32 %v1748, %v1750
  %v1752 = vadd.f32 %v1748, %v1751
  %vm1753 = vweird.f32 %v1492
  %vm1754 = vweird.f32 %v1748
  %vm1755 = vmor %vm1753, %vm1754
  %v1756 = vsel %vm1755, %v1748, %v1752
  %v1757 = vand.u32 2147483647, %v1492
  %vm1758 = vcmp.eq.f32.partialorder %v1757, 8.507059e+37
  %v1759 = vand.u32 %v1492, 2147483648
  %v1760 = vor.u32 1.1754944e-38, %v1759
  %v1761 = vsel %vm1758, %v1760, %v1756
  %v1762 = vmul.f32 1.0, %v1761
  %v1763 = vrcp.pop %v1493
  %v1764 = vmul.f32 %v1493, %v1763
  %v1765 = vsub.f32 1.0, %v1764
  %v1766 = vmul.f32 %v1763, %v1765
  %v1767 = vadd.f32 %v1763, %v1766
  %vm1768 = vweird.f32 %v1493
  %vm1769 = vweird.f32 %v1763
  %vm1770 = vmor %vm1768, %vm1769
  %v1771 = vsel %vm1770, %v1763, %v1767
  %v1772 = vand.u32 2147483647, %v1493
  %vm1773 = vcmp.eq.f32.partialorder %v1772, 8.507059e+37
  %v1774 = vand.u32 %v1493, 2147483648
  %v1775 = vor.u32 1.1754944e-38, %v1774
  %v1776 = vsel %vm1773, %v1775, %v1771
  %v1777 = vmul.f32 1.0, %v1776
  %v1778 = vrcp.pop %v1494
  %v1779 = vmul.f32 %v1494, %v1778
  %v1780 = vsub.f32 1.0, %v1779
  %v1781 = vmul.f32 %v1778, %v1780
  %v1782 = vadd.f32 %v1778, %v1781
  %vm1783 = vweird.f32 %v1494
  %vm1784 = vweird.f32 %v1778
  %vm1785 = vmor %vm1783, %vm1784
  %v1786 = vsel %vm1785, %v1778, %v1782
  %v1787 = vand.u32 2147483647, %v1494
  %vm1788 = vcmp.eq.f32.partialorder %v1787, 8.507059e+37
  %v1789 = vand.u32 %v1494, 2147483648
  %v1790 = vor.u32 1.1754944e-38, %v1789
  %v1791 = vsel %vm1788, %v1790, %v1786
  %v1792 = vmul.f32 1.0, %v1791
  %v1793 = vrcp.pop %v1495
  %v1794 = vmul.f32 %v1495, %v1793
  %v1795 = vsub.f32 1.0, %v1794
  %v1796 = vmul.f32 %v1793, %v1795
  %v1797 = vadd.f32 %v1793, %v1796
  %vm1798 = vweird.f32 %v1495
  %vm1799 = vweird.f32 %v1793
  %vm1800 = vmor %vm1798, %vm1799
  %v1801 = vsel %vm1800, %v1793, %v1797
  %v1802 = vand.u32 2147483647, %v1495
  %vm1803 = vcmp.eq.f32.partialorder %v1802, 8.507059e+37
  %v1804 = vand.u32 %v1495, 2147483648
  %v1805 = vor.u32 1.1754944e-38, %v1804
  %v1806 = vsel %vm1803, %v1805, %v1801
  %v1807 = vmul.f32 1.0, %v1806
  %v1808 = vrcp.pop %v1496
  %v1809 = vmul.f32 %v1496, %v1808
  %v1810 = vsub.f32 1.0, %v1809
  %v1811 = vmul.f32 %v1808, %v1810
  %v1812 = vadd.f32 %v1808, %v1811
  %vm1813 = vweird.f32 %v1496
  %vm1814 = vweird.f32 %v1808
  %vm1815 = vmor %vm1813, %vm1814
  %v1816 = vsel %vm1815, %v1808, %v1812
  %v1817 = vand.u32 2147483647, %v1496
  %vm1818 = vcmp.eq.f32.partialorder %v1817, 8.507059e+37
  %v1819 = vand.u32 %v1496, 2147483648
  %v1820 = vor.u32 1.1754944e-38, %v1819
  %v1821 = vsel %vm1818, %v1820, %v1816
  %v1822 = vmul.f32 1.0, %v1821
  %v1823 = vrcp.pop %v1497
  %v1824 = vmul.f32 %v1497, %v1823
  %v1825 = vsub.f32 1.0, %v1824
  %v1826 = vmul.f32 %v1823, %v1825
  %v1827 = vadd.f32 %v1823, %v1826
  %vm1828 = vweird.f32 %v1497
  %vm1829 = vweird.f32 %v1823
  %vm1830 = vmor %vm1828, %vm1829
  %v1831 = vsel %vm1830, %v1823, %v1827
  %v1832 = vand.u32 2147483647, %v1497
  %vm1833 = vcmp.eq.f32.partialorder %v1832, 8.507059e+37
  %v1834 = vand.u32 %v1497, 2147483648
  %v1835 = vor.u32 1.1754944e-38, %v1834
  %v1836 = vsel %vm1833, %v1835, %v1831
  %v1837 = vmul.f32 1.0, %v1836
  %v1838 = vrcp.pop %v1498
  %v1839 = vmul.f32 %v1498, %v1838
  %v1840 = vsub.f32 1.0, %v1839
  %v1841 = vmul.f32 %v1838, %v1840
  %v1842 = vadd.f32 %v1838, %v1841
  %vm1843 = vweird.f32 %v1498
  %vm1844 = vweird.f32 %v1838
  %vm1845 = vmor %vm1843, %vm1844
  %v1846 = vsel %vm1845, %v1838, %v1842
  %v1847 = vand.u32 2147483647, %v1498
  %vm1848 = vcmp.eq.f32.partialorder %v1847, 8.507059e+37
  %v1849 = vand.u32 %v1498, 2147483648
  %v1850 = vor.u32 1.1754944e-38, %v1849
  %v1851 = vsel %vm1848, %v1850, %v1846
  %v1852 = vmul.f32 1.0, %v1851
  %v1853 = vrcp.pop %v1499
  %v1854 = vmul.f32 %v1499, %v1853
  %v1855 = vsub.f32 1.0, %v1854
  %v1856 = vmul.f32 %v1853, %v1855
  %v1857 = vadd.f32 %v1853, %v1856
  %vm1858 = vweird.f32 %v1499
  %vm1859 = vweird.f32 %v1853
  %vm1860 = vmor %vm1858, %vm1859
  %v1861 = vsel %vm1860, %v1853, %v1857
  %v1862 = vand.u32 2147483647, %v1499
  %vm1863 = vcmp.eq.f32.partialorder %v1862, 8.507059e+37
  %v1864 = vand.u32 %v1499, 2147483648
  %v1865 = vor.u32 1.1754944e-38, %v1864
  %v1866 = vsel %vm1863, %v1865, %v1861
  %v1867 = vmul.f32 1.0, %v1866
  %v1868 = vrcp.pop %v1500
  %v1869 = vmul.f32 %v1500, %v1868
  %v1870 = vsub.f32 1.0, %v1869
  %v1871 = vmul.f32 %v1868, %v1870
  %v1872 = vadd.f32 %v1868, %v1871
  %vm1873 = vweird.f32 %v1500
  %vm1874 = vweird.f32 %v1868
  %vm1875 = vmor %vm1873, %vm1874
  %v1876 = vsel %vm1875, %v1868, %v1872
  %v1877 = vand.u32 2147483647, %v1500
  %vm1878 = vcmp.eq.f32.partialorder %v1877, 8.507059e+37
  %v1879 = vand.u32 %v1500, 2147483648
  %v1880 = vor.u32 1.1754944e-38, %v1879
  %v1881 = vsel %vm1878, %v1880, %v1876
  %v1882 = vmul.f32 1.0, %v1881
  %v1883 = vrcp.pop %v1501
  %v1884 = vmul.f32 %v1501, %v1883
  %v1885 = vsub.f32 1.0, %v1884
  %v1886 = vmul.f32 %v1883, %v1885
  %v1887 = vadd.f32 %v1883, %v1886
  %vm1888 = vweird.f32 %v1501
  %vm1889 = vweird.f32 %v1883
  %vm1890 = vmor %vm1888, %vm1889
  %v1891 = vsel %vm1890, %v1883, %v1887
  %v1892 = vand.u32 2147483647, %v1501
  %vm1893 = vcmp.eq.f32.partialorder %v1892, 8.507059e+37
  %v1894 = vand.u32 %v1501, 2147483648
  %v1895 = vor.u32 1.1754944e-38, %v1894
  %v1896 = vsel %vm1893, %v1895, %v1891
  %v1897 = vmul.f32 1.0, %v1896
  %v1898 = vrcp.pop %v1502
  %v1899 = vmul.f32 %v1502, %v1898
  %v1900 = vsub.f32 1.0, %v1899
  %v1901 = vmul.f32 %v1898, %v1900
  %v1902 = vadd.f32 %v1898, %v1901
  %vm1903 = vweird.f32 %v1502
  %vm1904 = vweird.f32 %v1898
  %vm1905 = vmor %vm1903, %vm1904
  %v1906 = vsel %vm1905, %v1898, %v1902
  %v1907 = vand.u32 2147483647, %v1502
  %vm1908 = vcmp.eq.f32.partialorder %v1907, 8.507059e+37
  %v1909 = vand.u32 %v1502, 2147483648
  %v1910 = vor.u32 1.1754944e-38, %v1909
  %v1911 = vsel %vm1908, %v1910, %v1906
  %v1912 = vmul.f32 1.0, %v1911
  %v1913 = vrcp.pop %v1503
  %v1914 = vmul.f32 %v1503, %v1913
  %v1915 = vsub.f32 1.0, %v1914
  %v1916 = vmul.f32 %v1913, %v1915
  %v1917 = vadd.f32 %v1913, %v1916
  %vm1918 = vweird.f32 %v1503
  %vm1919 = vweird.f32 %v1913
  %vm1920 = vmor %vm1918, %vm1919
  %v1921 = vsel %vm1920, %v1913, %v1917
  %v1922 = vand.u32 2147483647, %v1503
  %vm1923 = vcmp.eq.f32.partialorder %v1922, 8.507059e+37
  %v1924 = vand.u32 %v1503, 2147483648
  %v1925 = vor.u32 1.1754944e-38, %v1924
  %v1926 = vsel %vm1923, %v1925, %v1921
  %v1927 = vmul.f32 1.0, %v1926
  %v1928 = vrcp.pop %v1504
  %v1929 = vmul.f32 %v1504, %v1928
  %v1930 = vsub.f32 1.0, %v1929
  %v1931 = vmul.f32 %v1928, %v1930
  %v1932 = vadd.f32 %v1928, %v1931
  %vm1933 = vweird.f32 %v1504
  %vm1934 = vweird.f32 %v1928
  %vm1935 = vmor %vm1933, %vm1934
  %v1936 = vsel %vm1935, %v1928, %v1932
  %v1937 = vand.u32 2147483647, %v1504
  %vm1938 = vcmp.eq.f32.partialorder %v1937, 8.507059e+37
  %v1939 = vand.u32 %v1504, 2147483648
  %v1940 = vor.u32 1.1754944e-38, %v1939
  %v1941 = vsel %vm1938, %v1940, %v1936
  %v1942 = vmul.f32 1.0, %v1941
  %v1943 = vrcp.pop %v1505
  %v1944 = vmul.f32 %v1505, %v1943
  %v1945 = vsub.f32 1.0, %v1944
  %v1946 = vmul.f32 %v1943, %v1945
  %v1947 = vadd.f32 %v1943, %v1946
  %vm1948 = vweird.f32 %v1505
  %vm1949 = vweird.f32 %v1943
  %vm1950 = vmor %vm1948, %vm1949
  %v1951 = vsel %vm1950, %v1943, %v1947
  %v1952 = vand.u32 2147483647, %v1505
  %vm1953 = vcmp.eq.f32.partialorder %v1952, 8.507059e+37
  %v1954 = vand.u32 %v1505, 2147483648
  %v1955 = vor.u32 1.1754944e-38, %v1954
  %v1956 = vsel %vm1953, %v1955, %v1951
  %v1957 = vmul.f32 1.0, %v1956
  %v1958 = vrcp.pop %v1506
  %v1959 = vmul.f32 %v1506, %v1958
  %v1960 = vsub.f32 1.0, %v1959
  %v1961 = vmul.f32 %v1958, %v1960
  %v1962 = vadd.f32 %v1958, %v1961
  %vm1963 = vweird.f32 %v1506
  %vm1964 = vweird.f32 %v1958
  %vm1965 = vmor %vm1963, %vm1964
  %v1966 = vsel %vm1965, %v1958, %v1962
  %v1967 = vand.u32 2147483647, %v1506
  %vm1968 = vcmp.eq.f32.partialorder %v1967, 8.507059e+37
  %v1969 = vand.u32 %v1506, 2147483648
  %v1970 = vor.u32 1.1754944e-38, %v1969
  %v1971 = vsel %vm1968, %v1970, %v1966
  %v1972 = vmul.f32 1.0, %v1971
  %v1973 = vrcp.pop %v1507
  %v1974 = vmul.f32 %v1507, %v1973
  %v1975 = vsub.f32 1.0, %v1974
  %v1976 = vmul.f32 %v1973, %v1975
  %v1977 = vadd.f32 %v1973, %v1976
  %vm1978 = vweird.f32 %v1507
  %vm1979 = vweird.f32 %v1973
  %vm1980 = vmor %vm1978, %vm1979
  %v1981 = vsel %vm1980, %v1973, %v1977
  %v1982 = vand.u32 2147483647, %v1507
  %vm1983 = vcmp.eq.f32.partialorder %v1982, 8.507059e+37
  %v1984 = vand.u32 %v1507, 2147483648
  %v1985 = vor.u32 1.1754944e-38, %v1984
  %v1986 = vsel %vm1983, %v1985, %v1981
  %v1987 = vmul.f32 1.0, %v1986
  %v1988 = vmul.f32 %v1254, %v1522
  %v1989 = vmul.f32 %v1258, %v1537
  %v1990 = vmul.f32 %v1262, %v1552
  %v1991 = vmul.f32 %v1266, %v1567
  %v1992 = vmul.f32 %v1270, %v1582
  %v1993 = vmul.f32 %v1274, %v1597
  %v1994 = vmul.f32 %v1278, %v1612
  %v1995 = vmul.f32 %v1282, %v1627
  %v1996 = vmul.f32 %v1286, %v1642
  %v1997 = vmul.f32 %v1290, %v1657
  %v1998 = vmul.f32 %v1294, %v1672
  %v1999 = vmul.f32 %v1298, %v1687
  %v2000 = vmul.f32 %v1302, %v1702
  %v2001 = vmul.f32 %v1306, %v1717
  %v2002 = vmul.f32 %v1310, %v1732
  %v2003 = vmul.f32 %v1314, %v1747
  %v2004 = vmul.f32 %v1318, %v1762
  %v2005 = vmul.f32 %v1322, %v1777
  %v2006 = vmul.f32 %v1326, %v1792
  %v2007 = vmul.f32 %v1330, %v1807
  %v2008 = vmul.f32 %v1334, %v1822
  %v2009 = vmul.f32 %v1338, %v1837
  %v2010 = vmul.f32 %v1342, %v1852
  %v2011 = vmul.f32 %v1346, %v1867
  %v2012 = vmul.f32 %v1350, %v1882
  %v2013 = vmul.f32 %v1354, %v1897
  %v2014 = vmul.f32 %v1358, %v1912
  %v2015 = vmul.f32 %v1362, %v1927
  %v2016 = vmul.f32 %v1366, %v1942
  %v2017 = vmul.f32 %v1370, %v1957
  %v2018 = vmul.f32 %v1374, %v1972
  %v2019 = vmul.f32 %v1378, %v1987
  %v2020 = vld [vmem:[%s3] sm:$0xff]
  %v2021 = vld [vmem:[%s3 + $0x8] sm:$0xff]
  %v2022 = vld [vmem:[%s3 + $0x10] sm:$0xff]
  %v2023 = vld [vmem:[%s3 + $0x18] sm:$0xff]
  %v2024 = vld [vmem:[%s3 + $0x20] sm:$0xff]
  %v2025 = vld [vmem:[%s3 + $0x28] sm:$0xff]
  %v2026 = vld [vmem:[%s3 + $0x30] sm:$0xff]
  %v2027 = vld [vmem:[%s3 + $0x38] sm:$0xff]
  %v2028 = vld [vmem:[%s3 + $0x40] sm:$0xff]
  %v2029 = vld [vmem:[%s3 + $0x48] sm:$0xff]
  %v2030 = vld [vmem:[%s3 + $0x50] sm:$0xff]
  %v2031 = vld [vmem:[%s3 + $0x58] sm:$0xff]
  %v2032 = vld [vmem:[%s3 + $0x60] sm:$0xff]
  %v2033 = vld [vmem:[%s3 + $0x68] sm:$0xff]
  %v2034 = vld [vmem:[%s3 + $0x70] sm:$0xff]
  %v2035 = vld [vmem:[%s3 + $0x78] sm:$0xff]
  %v2036 = vld [vmem:[%s4] sm:$0x1]
  %v2038 = vperm.slane %v2036, 0
  %v2040 = vand.u32 %v2035, 4294901760
  %2041 = vmatpush.msra.mxu0 %v2040
  %v2042 = vand.u32 %v2034, 4294901760
  %2043 = vmatpush.msra.mxu0 %v2042
  %v2044 = vand.u32 %v2033, 4294901760
  %2045 = vmatpush.msra.mxu0 %v2044
  %v2046 = vand.u32 %v2032, 4294901760
  %2047 = vmatpush.msra.mxu0 %v2046
  %v2048 = vand.u32 %v2031, 4294901760
  %2049 = vmatpush.msra.mxu0 %v2048
  %v2050 = vand.u32 %v2030, 4294901760
  %2051 = vmatpush.msra.mxu0 %v2050
  %v2052 = vand.u32 %v2029, 4294901760
  %2053 = vmatpush.msra.mxu0 %v2052
  %v2054 = vand.u32 %v2028, 4294901760
  %2055 = vmatpush.msra.mxu0 %v2054
  %v2056 = vand.u32 %v2027, 4294901760
  %2057 = vmatpush.msra.mxu0 %v2056
  %v2058 = vand.u32 %v2026, 4294901760
  %2059 = vmatpush.msra.mxu0 %v2058
  %v2060 = vand.u32 %v2025, 4294901760
  %2061 = vmatpush.msra.mxu0 %v2060
  %v2062 = vand.u32 %v2024, 4294901760
  %2063 = vmatpush.msra.mxu0 %v2062
  %v2064 = vand.u32 %v2023, 4294901760
  %2065 = vmatpush.msra.mxu0 %v2064
  %v2066 = vand.u32 %v2022, 4294901760
  %2067 = vmatpush.msra.mxu0 %v2066
  %v2068 = vand.u32 %v2021, 4294901760
  %2069 = vmatpush.msra.mxu0 %v2068
  %v2070 = vand.u32 %v2020, 4294901760
  %2071 = vmatpush.msra.mxu0 %v2070
  %v2072 = vand.u32 %v1988, 4294901760
  %v2073 = vsub.f32 %v1988, %v2072
  %v2074 = vand.u32 %v2073, 4294901760
  %v2075 = vsub.f32 %v2073, %v2074
  %v2076 = vand.u32 %v2075, 4294901760
  %2077 = vmatmul.f32.gmra.mxu0 %v2076
  %v2078 = vpop.f32.mrf.mxu0
  %v2079 = vadd.f32 %v2038, %v2078
  %v2080 = vand.u32 %v1989, 4294901760
  %v2081 = vsub.f32 %v1989, %v2080
  %v2082 = vand.u32 %v2081, 4294901760
  %v2083 = vsub.f32 %v2081, %v2082
  %v2084 = vand.u32 %v2083, 4294901760
  %2085 = vmatmul.f32.gmra.mxu0 %v2084
  %v2086 = vpop.f32.mrf.mxu0
  %v2087 = vadd.f32 %v2038, %v2086
  %v2088 = vand.u32 %v1990, 4294901760
  %v2089 = vsub.f32 %v1990, %v2088
  %v2090 = vand.u32 %v2089, 4294901760
  %v2091 = vsub.f32 %v2089, %v2090
  %v2092 = vand.u32 %v2091, 4294901760
  %2093 = vmatmul.f32.gmra.mxu0 %v2092
  %v2094 = vpop.f32.mrf.mxu0
  %v2095 = vadd.f32 %v2038, %v2094
  %v2096 = vand.u32 %v1991, 4294901760
  %v2097 = vsub.f32 %v1991, %v2096
  %v2098 = vand.u32 %v2097, 4294901760
  %v2099 = vsub.f32 %v2097, %v2098
  %v2100 = vand.u32 %v2099, 4294901760
  %2101 = vmatmul.f32.gmra.mxu0 %v2100
  %v2102 = vpop.f32.mrf.mxu0
  %v2103 = vadd.f32 %v2038, %v2102
  %v2104 = vand.u32 %v1992, 4294901760
  %v2105 = vsub.f32 %v1992, %v2104
  %v2106 = vand.u32 %v2105, 4294901760
  %v2107 = vsub.f32 %v2105, %v2106
  %v2108 = vand.u32 %v2107, 4294901760
  %2109 = vmatmul.f32.gmra.mxu0 %v2108
  %v2110 = vpop.f32.mrf.mxu0
  %v2111 = vadd.f32 %v2038, %v2110
  %v2112 = vand.u32 %v1993, 4294901760
  %v2113 = vsub.f32 %v1993, %v2112
  %v2114 = vand.u32 %v2113, 4294901760
  %v2115 = vsub.f32 %v2113, %v2114
  %v2116 = vand.u32 %v2115, 4294901760
  %2117 = vmatmul.f32.gmra.mxu0 %v2116
  %v2118 = vpop.f32.mrf.mxu0
  %v2119 = vadd.f32 %v2038, %v2118
  %v2120 = vand.u32 %v1994, 4294901760
  %v2121 = vsub.f32 %v1994, %v2120
  %v2122 = vand.u32 %v2121, 4294901760
  %v2123 = vsub.f32 %v2121, %v2122
  %v2124 = vand.u32 %v2123, 4294901760
  %2125 = vmatmul.f32.gmra.mxu0 %v2124
  %v2126 = vpop.f32.mrf.mxu0
  %v2127 = vadd.f32 %v2038, %v2126
  %v2128 = vand.u32 %v1995, 4294901760
  %v2129 = vsub.f32 %v1995, %v2128
  %v2130 = vand.u32 %v2129, 4294901760
  %v2131 = vsub.f32 %v2129, %v2130
  %v2132 = vand.u32 %v2131, 4294901760
  %2133 = vmatmul.f32.gmra.mxu0 %v2132
  %v2134 = vpop.f32.mrf.mxu0
  %v2135 = vadd.f32 %v2038, %v2134
  %v2136 = vand.u32 %v1996, 4294901760
  %v2137 = vsub.f32 %v1996, %v2136
  %v2138 = vand.u32 %v2137, 4294901760
  %v2139 = vsub.f32 %v2137, %v2138
  %v2140 = vand.u32 %v2139, 4294901760
  %2141 = vmatmul.f32.gmra.mxu0 %v2140
  %v2142 = vpop.f32.mrf.mxu0
  %v2143 = vadd.f32 %v2038, %v2142
  %v2144 = vand.u32 %v1997, 4294901760
  %v2145 = vsub.f32 %v1997, %v2144
  %v2146 = vand.u32 %v2145, 4294901760
  %v2147 = vsub.f32 %v2145, %v2146
  %v2148 = vand.u32 %v2147, 4294901760
  %2149 = vmatmul.f32.gmra.mxu0 %v2148
  %v2150 = vpop.f32.mrf.mxu0
  %v2151 = vadd.f32 %v2038, %v2150
  %v2152 = vand.u32 %v1998, 4294901760
  %v2153 = vsub.f32 %v1998, %v2152
  %v2154 = vand.u32 %v2153, 4294901760
  %v2155 = vsub.f32 %v2153, %v2154
  %v2156 = vand.u32 %v2155, 4294901760
  %2157 = vmatmul.f32.gmra.mxu0 %v2156
  %v2158 = vpop.f32.mrf.mxu0
  %v2159 = vadd.f32 %v2038, %v2158
  %v2160 = vand.u32 %v1999, 4294901760
  %v2161 = vsub.f32 %v1999, %v2160
  %v2162 = vand.u32 %v2161, 4294901760
  %v2163 = vsub.f32 %v2161, %v2162
  %v2164 = vand.u32 %v2163, 4294901760
  %2165 = vmatmul.f32.gmra.mxu0 %v2164
  %v2166 = vpop.f32.mrf.mxu0
  %v2167 = vadd.f32 %v2038, %v2166
  %v2168 = vand.u32 %v2000, 4294901760
  %v2169 = vsub.f32 %v2000, %v2168
  %v2170 = vand.u32 %v2169, 4294901760
  %v2171 = vsub.f32 %v2169, %v2170
  %v2172 = vand.u32 %v2171, 4294901760
  %2173 = vmatmul.f32.gmra.mxu0 %v2172
  %v2174 = vpop.f32.mrf.mxu0
  %v2175 = vadd.f32 %v2038, %v2174
  %v2176 = vand.u32 %v2001, 4294901760
  %v2177 = vsub.f32 %v2001, %v2176
  %v2178 = vand.u32 %v2177, 4294901760
  %v2179 = vsub.f32 %v2177, %v2178
  %v2180 = vand.u32 %v2179, 4294901760
  %2181 = vmatmul.f32.gmra.mxu0 %v2180
  %v2182 = vpop.f32.mrf.mxu0
  %v2183 = vadd.f32 %v2038, %v2182
  %v2184 = vand.u32 %v2002, 4294901760
  %v2185 = vsub.f32 %v2002, %v2184
  %v2186 = vand.u32 %v2185, 4294901760
  %v2187 = vsub.f32 %v2185, %v2186
  %v2188 = vand.u32 %v2187, 4294901760
  %2189 = vmatmul.f32.gmra.mxu0 %v2188
  %v2190 = vpop.f32.mrf.mxu0
  %v2191 = vadd.f32 %v2038, %v2190
  %v2192 = vand.u32 %v2003, 4294901760
  %v2193 = vsub.f32 %v2003, %v2192
  %v2194 = vand.u32 %v2193, 4294901760
  %v2195 = vsub.f32 %v2193, %v2194
  %v2196 = vand.u32 %v2195, 4294901760
  %2197 = vmatmul.f32.gmra.mxu0 %v2196
  %v2198 = vpop.f32.mrf.mxu0
  %v2199 = vadd.f32 %v2038, %v2198
  %v2200 = vand.u32 %v2004, 4294901760
  %v2201 = vsub.f32 %v2004, %v2200
  %v2202 = vand.u32 %v2201, 4294901760
  %v2203 = vsub.f32 %v2201, %v2202
  %v2204 = vand.u32 %v2203, 4294901760
  %2205 = vmatmul.f32.gmra.mxu0 %v2204
  %v2206 = vpop.f32.mrf.mxu0
  %v2207 = vadd.f32 %v2038, %v2206
  %v2208 = vand.u32 %v2005, 4294901760
  %v2209 = vsub.f32 %v2005, %v2208
  %v2210 = vand.u32 %v2209, 4294901760
  %v2211 = vsub.f32 %v2209, %v2210
  %v2212 = vand.u32 %v2211, 4294901760
  %2213 = vmatmul.f32.gmra.mxu0 %v2212
  %v2214 = vpop.f32.mrf.mxu0
  %v2215 = vadd.f32 %v2038, %v2214
  %v2216 = vand.u32 %v2006, 4294901760
  %v2217 = vsub.f32 %v2006, %v2216
  %v2218 = vand.u32 %v2217, 4294901760
  %v2219 = vsub.f32 %v2217, %v2218
  %v2220 = vand.u32 %v2219, 4294901760
  %2221 = vmatmul.f32.gmra.mxu0 %v2220
  %v2222 = vpop.f32.mrf.mxu0
  %v2223 = vadd.f32 %v2038, %v2222
  %v2224 = vand.u32 %v2007, 4294901760
  %v2225 = vsub.f32 %v2007, %v2224
  %v2226 = vand.u32 %v2225, 4294901760
  %v2227 = vsub.f32 %v2225, %v2226
  %v2228 = vand.u32 %v2227, 4294901760
  %2229 = vmatmul.f32.gmra.mxu0 %v2228
  %v2230 = vpop.f32.mrf.mxu0
  %v2231 = vadd.f32 %v2038, %v2230
  %v2232 = vand.u32 %v2008, 4294901760
  %v2233 = vsub.f32 %v2008, %v2232
  %v2234 = vand.u32 %v2233, 4294901760
  %v2235 = vsub.f32 %v2233, %v2234
  %v2236 = vand.u32 %v2235, 4294901760
  %2237 = vmatmul.f32.gmra.mxu0 %v2236
  %v2238 = vpop.f32.mrf.mxu0
  %v2239 = vadd.f32 %v2038, %v2238
  %v2240 = vand.u32 %v2009, 4294901760
  %v2241 = vsub.f32 %v2009, %v2240
  %v2242 = vand.u32 %v2241, 4294901760
  %v2243 = vsub.f32 %v2241, %v2242
  %v2244 = vand.u32 %v2243, 4294901760
  %2245 = vmatmul.f32.gmra.mxu0 %v2244
  %v2246 = vpop.f32.mrf.mxu0
  %v2247 = vadd.f32 %v2038, %v2246
  %v2248 = vand.u32 %v2010, 4294901760
  %v2249 = vsub.f32 %v2010, %v2248
  %v2250 = vand.u32 %v2249, 4294901760
  %v2251 = vsub.f32 %v2249, %v2250
  %v2252 = vand.u32 %v2251, 4294901760
  %2253 = vmatmul.f32.gmra.mxu0 %v2252
  %v2254 = vpop.f32.mrf.mxu0
  %v2255 = vadd.f32 %v2038, %v2254
  %v2256 = vand.u32 %v2011, 4294901760
  %v2257 = vsub.f32 %v2011, %v2256
  %v2258 = vand.u32 %v2257, 4294901760
  %v2259 = vsub.f32 %v2257, %v2258
  %v2260 = vand.u32 %v2259, 4294901760
  %2261 = vmatmul.f32.gmra.mxu0 %v2260
  %v2262 = vpop.f32.mrf.mxu0
  %v2263 = vadd.f32 %v2038, %v2262
  %v2264 = vand.u32 %v2012, 4294901760
  %v2265 = vsub.f32 %v2012, %v2264
  %v2266 = vand.u32 %v2265, 4294901760
  %v2267 = vsub.f32 %v2265, %v2266
  %v2268 = vand.u32 %v2267, 4294901760
  %2269 = vmatmul.f32.gmra.mxu0 %v2268
  %v2270 = vpop.f32.mrf.mxu0
  %v2271 = vadd.f32 %v2038, %v2270
  %v2272 = vand.u32 %v2013, 4294901760
  %v2273 = vsub.f32 %v2013, %v2272
  %v2274 = vand.u32 %v2273, 4294901760
  %v2275 = vsub.f32 %v2273, %v2274
  %v2276 = vand.u32 %v2275, 4294901760
  %2277 = vmatmul.f32.gmra.mxu0 %v2276
  %v2278 = vpop.f32.mrf.mxu0
  %v2279 = vadd.f32 %v2038, %v2278
  %v2280 = vand.u32 %v2014, 4294901760
  %v2281 = vsub.f32 %v2014, %v2280
  %v2282 = vand.u32 %v2281, 4294901760
  %v2283 = vsub.f32 %v2281, %v2282
  %v2284 = vand.u32 %v2283, 4294901760
  %2285 = vmatmul.f32.gmra.mxu0 %v2284
  %v2286 = vpop.f32.mrf.mxu0
  %v2287 = vadd.f32 %v2038, %v2286
  %v2288 = vand.u32 %v2015, 4294901760
  %v2289 = vsub.f32 %v2015, %v2288
  %v2290 = vand.u32 %v2289, 4294901760
  %v2291 = vsub.f32 %v2289, %v2290
  %v2292 = vand.u32 %v2291, 4294901760
  %2293 = vmatmul.f32.gmra.mxu0 %v2292
  %v2294 = vpop.f32.mrf.mxu0
  %v2295 = vadd.f32 %v2038, %v2294
  %v2296 = vand.u32 %v2016, 4294901760
  %v2297 = vsub.f32 %v2016, %v2296
  %v2298 = vand.u32 %v2297, 4294901760
  %v2299 = vsub.f32 %v2297, %v2298
  %v2300 = vand.u32 %v2299, 4294901760
  %2301 = vmatmul.f32.gmra.mxu0 %v2300
  %v2302 = vpop.f32.mrf.mxu0
  %v2303 = vadd.f32 %v2038, %v2302
  %v2304 = vand.u32 %v2017, 4294901760
  %v2305 = vsub.f32 %v2017, %v2304
  %v2306 = vand.u32 %v2305, 4294901760
  %v2307 = vsub.f32 %v2305, %v2306
  %v2308 = vand.u32 %v2307, 4294901760
  %2309 = vmatmul.f32.gmra.mxu0 %v2308
  %v2310 = vpop.f32.mrf.mxu0
  %v2311 = vadd.f32 %v2038, %v2310
  %v2312 = vand.u32 %v2018, 4294901760
  %v2313 = vsub.f32 %v2018, %v2312
  %v2314 = vand.u32 %v2313, 4294901760
  %v2315 = vsub.f32 %v2313, %v2314
  %v2316 = vand.u32 %v2315, 4294901760
  %2317 = vmatmul.f32.gmra.mxu0 %v2316
  %v2318 = vpop.f32.mrf.mxu0
  %v2319 = vadd.f32 %v2038, %v2318
  %v2320 = vand.u32 %v2019, 4294901760
  %v2321 = vsub.f32 %v2019, %v2320
  %v2322 = vand.u32 %v2321, 4294901760
  %v2323 = vsub.f32 %v2321, %v2322
  %v2324 = vand.u32 %v2323, 4294901760
  %2325 = vmatmul.f32.gmra.mxu0 %v2324
  %v2326 = vpop.f32.mrf.mxu0
  %v2327 = vadd.f32 %v2038, %v2326
  %2328 = vdwg.mxu0
  %v2329 = vand.u32 %v2035, 4294901760
  %v2330 = vsub.f32 %v2035, %v2329
  %v2331 = vand.u32 %v2330, 4294901760
  %v2332 = vsub.f32 %v2330, %v2331
  %v2333 = vand.u32 %v2332, 4294901760
  %2334 = vmatpush.msra.mxu0 %v2333
  %v2335 = vand.u32 %v2034, 4294901760
  %v2336 = vsub.f32 %v2034, %v2335
  %v2337 = vand.u32 %v2336, 4294901760
  %v2338 = vsub.f32 %v2336, %v2337
  %v2339 = vand.u32 %v2338, 4294901760
  %2340 = vmatpush.msra.mxu0 %v2339
  %v2341 = vand.u32 %v2033, 4294901760
  %v2342 = vsub.f32 %v2033, %v2341
  %v2343 = vand.u32 %v2342, 4294901760
  %v2344 = vsub.f32 %v2342, %v2343
  %v2345 = vand.u32 %v2344, 4294901760
  %2346 = vmatpush.msra.mxu0 %v2345
  %v2347 = vand.u32 %v2032, 4294901760
  %v2348 = vsub.f32 %v2032, %v2347
  %v2349 = vand.u32 %v2348, 4294901760
  %v2350 = vsub.f32 %v2348, %v2349
  %v2351 = vand.u32 %v2350, 4294901760
  %2352 = vmatpush.msra.mxu0 %v2351
  %v2353 = vand.u32 %v2031, 4294901760
  %v2354 = vsub.f32 %v2031, %v2353
  %v2355 = vand.u32 %v2354, 4294901760
  %v2356 = vsub.f32 %v2354, %v2355
  %v2357 = vand.u32 %v2356, 4294901760
  %2358 = vmatpush.msra.mxu0 %v2357
  %v2359 = vand.u32 %v2030, 4294901760
  %v2360 = vsub.f32 %v2030, %v2359
  %v2361 = vand.u32 %v2360, 4294901760
  %v2362 = vsub.f32 %v2360, %v2361
  %v2363 = vand.u32 %v2362, 4294901760
  %2364 = vmatpush.msra.mxu0 %v2363
  %v2365 = vand.u32 %v2029, 4294901760
  %v2366 = vsub.f32 %v2029, %v2365
  %v2367 = vand.u32 %v2366, 4294901760
  %v2368 = vsub.f32 %v2366, %v2367
  %v2369 = vand.u32 %v2368, 4294901760
  %2370 = vmatpush.msra.mxu0 %v2369
  %v2371 = vand.u32 %v2028, 4294901760
  %v2372 = vsub.f32 %v2028, %v2371
  %v2373 = vand.u32 %v2372, 4294901760
  %v2374 = vsub.f32 %v2372, %v2373
  %v2375 = vand.u32 %v2374, 4294901760
  %2376 = vmatpush.msra.mxu0 %v2375
  %v2377 = vand.u32 %v2027, 4294901760
  %v2378 = vsub.f32 %v2027, %v2377
  %v2379 = vand.u32 %v2378, 4294901760
  %v2380 = vsub.f32 %v2378, %v2379
  %v2381 = vand.u32 %v2380, 4294901760
  %2382 = vmatpush.msra.mxu0 %v2381
  %v2383 = vand.u32 %v2026, 4294901760
  %v2384 = vsub.f32 %v2026, %v2383
  %v2385 = vand.u32 %v2384, 4294901760
  %v2386 = vsub.f32 %v2384, %v2385
  %v2387 = vand.u32 %v2386, 4294901760
  %2388 = vmatpush.msra.mxu0 %v2387
  %v2389 = vand.u32 %v2025, 4294901760
  %v2390 = vsub.f32 %v2025, %v2389
  %v2391 = vand.u32 %v2390, 4294901760
  %v2392 = vsub.f32 %v2390, %v2391
  %v2393 = vand.u32 %v2392, 4294901760
  %2394 = vmatpush.msra.mxu0 %v2393
  %v2395 = vand.u32 %v2024, 4294901760
  %v2396 = vsub.f32 %v2024, %v2395
  %v2397 = vand.u32 %v2396, 4294901760
  %v2398 = vsub.f32 %v2396, %v2397
  %v2399 = vand.u32 %v2398, 4294901760
  %2400 = vmatpush.msra.mxu0 %v2399
  %v2401 = vand.u32 %v2023, 4294901760
  %v2402 = vsub.f32 %v2023, %v2401
  %v2403 = vand.u32 %v2402, 4294901760
  %v2404 = vsub.f32 %v2402, %v2403
  %v2405 = vand.u32 %v2404, 4294901760
  %2406 = vmatpush.msra.mxu0 %v2405
  %v2407 = vand.u32 %v2022, 4294901760
  %v2408 = vsub.f32 %v2022, %v2407
  %v2409 = vand.u32 %v2408, 4294901760
  %v2410 = vsub.f32 %v2408, %v2409
  %v2411 = vand.u32 %v2410, 4294901760
  %2412 = vmatpush.msra.mxu0 %v2411
  %v2413 = vand.u32 %v2021, 4294901760
  %v2414 = vsub.f32 %v2021, %v2413
  %v2415 = vand.u32 %v2414, 4294901760
  %v2416 = vsub.f32 %v2414, %v2415
  %v2417 = vand.u32 %v2416, 4294901760
  %2418 = vmatpush.msra.mxu0 %v2417
  %v2419 = vand.u32 %v2020, 4294901760
  %v2420 = vsub.f32 %v2020, %v2419
  %v2421 = vand.u32 %v2420, 4294901760
  %v2422 = vsub.f32 %v2420, %v2421
  %v2423 = vand.u32 %v2422, 4294901760
  %2424 = vmatpush.msra.mxu0 %v2423
  %v2425 = vand.u32 %v1988, 4294901760
  %2426 = vmatmul.f32.gmra.mxu0 %v2425
  %v2427 = vpop.f32.mrf.mxu0
  %v2428 = vadd.f32 %v2079, %v2427
  %v2429 = vand.u32 %v1989, 4294901760
  %2430 = vmatmul.f32.gmra.mxu0 %v2429
  %v2431 = vpop.f32.mrf.mxu0
  %v2432 = vadd.f32 %v2087, %v2431
  %v2433 = vand.u32 %v1990, 4294901760
  %2434 = vmatmul.f32.gmra.mxu0 %v2433
  %v2435 = vpop.f32.mrf.mxu0
  %v2436 = vadd.f32 %v2095, %v2435
  %v2437 = vand.u32 %v1991, 4294901760
  %2438 = vmatmul.f32.gmra.mxu0 %v2437
  %v2439 = vpop.f32.mrf.mxu0
  %v2440 = vadd.f32 %v2103, %v2439
  %v2441 = vand.u32 %v1992, 4294901760
  %2442 = vmatmul.f32.gmra.mxu0 %v2441
  %v2443 = vpop.f32.mrf.mxu0
  %v2444 = vadd.f32 %v2111, %v2443
  %v2445 = vand.u32 %v1993, 4294901760
  %2446 = vmatmul.f32.gmra.mxu0 %v2445
  %v2447 = vpop.f32.mrf.mxu0
  %v2448 = vadd.f32 %v2119, %v2447
  %v2449 = vand.u32 %v1994, 4294901760
  %2450 = vmatmul.f32.gmra.mxu0 %v2449
  %v2451 = vpop.f32.mrf.mxu0
  %v2452 = vadd.f32 %v2127, %v2451
  %v2453 = vand.u32 %v1995, 4294901760
  %2454 = vmatmul.f32.gmra.mxu0 %v2453
  %v2455 = vpop.f32.mrf.mxu0
  %v2456 = vadd.f32 %v2135, %v2455
  %v2457 = vand.u32 %v1996, 4294901760
  %2458 = vmatmul.f32.gmra.mxu0 %v2457
  %v2459 = vpop.f32.mrf.mxu0
  %v2460 = vadd.f32 %v2143, %v2459
  %v2461 = vand.u32 %v1997, 4294901760
  %2462 = vmatmul.f32.gmra.mxu0 %v2461
  %v2463 = vpop.f32.mrf.mxu0
  %v2464 = vadd.f32 %v2151, %v2463
  %v2465 = vand.u32 %v1998, 4294901760
  %2466 = vmatmul.f32.gmra.mxu0 %v2465
  %v2467 = vpop.f32.mrf.mxu0
  %v2468 = vadd.f32 %v2159, %v2467
  %v2469 = vand.u32 %v1999, 4294901760
  %2470 = vmatmul.f32.gmra.mxu0 %v2469
  %v2471 = vpop.f32.mrf.mxu0
  %v2472 = vadd.f32 %v2167, %v2471
  %v2473 = vand.u32 %v2000, 4294901760
  %2474 = vmatmul.f32.gmra.mxu0 %v2473
  %v2475 = vpop.f32.mrf.mxu0
  %v2476 = vadd.f32 %v2175, %v2475
  %v2477 = vand.u32 %v2001, 4294901760
  %2478 = vmatmul.f32.gmra.mxu0 %v2477
  %v2479 = vpop.f32.mrf.mxu0
  %v2480 = vadd.f32 %v2183, %v2479
  %v2481 = vand.u32 %v2002, 4294901760
  %2482 = vmatmul.f32.gmra.mxu0 %v2481
  %v2483 = vpop.f32.mrf.mxu0
  %v2484 = vadd.f32 %v2191, %v2483
  %v2485 = vand.u32 %v2003, 4294901760
  %2486 = vmatmul.f32.gmra.mxu0 %v2485
  %v2487 = vpop.f32.mrf.mxu0
  %v2488 = vadd.f32 %v2199, %v2487
  %v2489 = vand.u32 %v2004, 4294901760
  %2490 = vmatmul.f32.gmra.mxu0 %v2489
  %v2491 = vpop.f32.mrf.mxu0
  %v2492 = vadd.f32 %v2207, %v2491
  %v2493 = vand.u32 %v2005, 4294901760
  %2494 = vmatmul.f32.gmra.mxu0 %v2493
  %v2495 = vpop.f32.mrf.mxu0
  %v2496 = vadd.f32 %v2215, %v2495
  %v2497 = vand.u32 %v2006, 4294901760
  %2498 = vmatmul.f32.gmra.mxu0 %v2497
  %v2499 = vpop.f32.mrf.mxu0
  %v2500 = vadd.f32 %v2223, %v2499
  %v2501 = vand.u32 %v2007, 4294901760
  %2502 = vmatmul.f32.gmra.mxu0 %v2501
  %v2503 = vpop.f32.mrf.mxu0
  %v2504 = vadd.f32 %v2231, %v2503
  %v2505 = vand.u32 %v2008, 4294901760
  %2506 = vmatmul.f32.gmra.mxu0 %v2505
  %v2507 = vpop.f32.mrf.mxu0
  %v2508 = vadd.f32 %v2239, %v2507
  %v2509 = vand.u32 %v2009, 4294901760
  %2510 = vmatmul.f32.gmra.mxu0 %v2509
  %v2511 = vpop.f32.mrf.mxu0
  %v2512 = vadd.f32 %v2247, %v2511
  %v2513 = vand.u32 %v2010, 4294901760
  %2514 = vmatmul.f32.gmra.mxu0 %v2513
  %v2515 = vpop.f32.mrf.mxu0
  %v2516 = vadd.f32 %v2255, %v2515
  %v2517 = vand.u32 %v2011, 4294901760
  %2518 = vmatmul.f32.gmra.mxu0 %v2517
  %v2519 = vpop.f32.mrf.mxu0
  %v2520 = vadd.f32 %v2263, %v2519
  %v2521 = vand.u32 %v2012, 4294901760
  %2522 = vmatmul.f32.gmra.mxu0 %v2521
  %v2523 = vpop.f32.mrf.mxu0
  %v2524 = vadd.f32 %v2271, %v2523
  %v2525 = vand.u32 %v2013, 4294901760
  %2526 = vmatmul.f32.gmra.mxu0 %v2525
  %v2527 = vpop.f32.mrf.mxu0
  %v2528 = vadd.f32 %v2279, %v2527
  %v2529 = vand.u32 %v2014, 4294901760
  %2530 = vmatmul.f32.gmra.mxu0 %v2529
  %v2531 = vpop.f32.mrf.mxu0
  %v2532 = vadd.f32 %v2287, %v2531
  %v2533 = vand.u32 %v2015, 4294901760
  %2534 = vmatmul.f32.gmra.mxu0 %v2533
  %v2535 = vpop.f32.mrf.mxu0
  %v2536 = vadd.f32 %v2295, %v2535
  %v2537 = vand.u32 %v2016, 4294901760
  %2538 = vmatmul.f32.gmra.mxu0 %v2537
  %v2539 = vpop.f32.mrf.mxu0
  %v2540 = vadd.f32 %v2303, %v2539
  %v2541 = vand.u32 %v2017, 4294901760
  %2542 = vmatmul.f32.gmra.mxu0 %v2541
  %v2543 = vpop.f32.mrf.mxu0
  %v2544 = vadd.f32 %v2311, %v2543
  %v2545 = vand.u32 %v2018, 4294901760
  %2546 = vmatmul.f32.gmra.mxu0 %v2545
  %v2547 = vpop.f32.mrf.mxu0
  %v2548 = vadd.f32 %v2319, %v2547
  %v2549 = vand.u32 %v2019, 4294901760
  %2550 = vmatmul.f32.gmra.mxu0 %v2549
  %v2551 = vpop.f32.mrf.mxu0
  %v2552 = vadd.f32 %v2327, %v2551
  %2553 = vdwg.mxu0
  %v2554 = vand.u32 %v2035, 4294901760
  %v2555 = vsub.f32 %v2035, %v2554
  %2556 = vmatpush.msra.mxu0 %v2555
  %v2557 = vand.u32 %v2034, 4294901760
  %v2558 = vsub.f32 %v2034, %v2557
  %2559 = vmatpush.msra.mxu0 %v2558
  %v2560 = vand.u32 %v2033, 4294901760
  %v2561 = vsub.f32 %v2033, %v2560
  %2562 = vmatpush.msra.mxu0 %v2561
  %v2563 = vand.u32 %v2032, 4294901760
  %v2564 = vsub.f32 %v2032, %v2563
  %2565 = vmatpush.msra.mxu0 %v2564
  %v2566 = vand.u32 %v2031, 4294901760
  %v2567 = vsub.f32 %v2031, %v2566
  %2568 = vmatpush.msra.mxu0 %v2567
  %v2569 = vand.u32 %v2030, 4294901760
  %v2570 = vsub.f32 %v2030, %v2569
  %2571 = vmatpush.msra.mxu0 %v2570
  %v2572 = vand.u32 %v2029, 4294901760
  %v2573 = vsub.f32 %v2029, %v2572
  %2574 = vmatpush.msra.mxu0 %v2573
  %v2575 = vand.u32 %v2028, 4294901760
  %v2576 = vsub.f32 %v2028, %v2575
  %2577 = vmatpush.msra.mxu0 %v2576
  %v2578 = vand.u32 %v2027, 4294901760
  %v2579 = vsub.f32 %v2027, %v2578
  %2580 = vmatpush.msra.mxu0 %v2579
  %v2581 = vand.u32 %v2026, 4294901760
  %v2582 = vsub.f32 %v2026, %v2581
  %2583 = vmatpush.msra.mxu0 %v2582
  %v2584 = vand.u32 %v2025, 4294901760
  %v2585 = vsub.f32 %v2025, %v2584
  %2586 = vmatpush.msra.mxu0 %v2585
  %v2587 = vand.u32 %v2024, 4294901760
  %v2588 = vsub.f32 %v2024, %v2587
  %2589 = vmatpush.msra.mxu0 %v2588
  %v2590 = vand.u32 %v2023, 4294901760
  %v2591 = vsub.f32 %v2023, %v2590
  %2592 = vmatpush.msra.mxu0 %v2591
  %v2593 = vand.u32 %v2022, 4294901760
  %v2594 = vsub.f32 %v2022, %v2593
  %2595 = vmatpush.msra.mxu0 %v2594
  %v2596 = vand.u32 %v2021, 4294901760
  %v2597 = vsub.f32 %v2021, %v2596
  %2598 = vmatpush.msra.mxu0 %v2597
  %v2599 = vand.u32 %v2020, 4294901760
  %v2600 = vsub.f32 %v2020, %v2599
  %2601 = vmatpush.msra.mxu0 %v2600
  %v2602 = vand.u32 %v1988, 4294901760
  %v2603 = vsub.f32 %v1988, %v2602
  %2604 = vmatmul.f32.gmra.mxu0 %v2603
  %v2605 = vpop.f32.mrf.mxu0
  %v2606 = vadd.f32 %v2428, %v2605
  %v2607 = vand.u32 %v1989, 4294901760
  %v2608 = vsub.f32 %v1989, %v2607
  %2609 = vmatmul.f32.gmra.mxu0 %v2608
  %v2610 = vpop.f32.mrf.mxu0
  %v2611 = vadd.f32 %v2432, %v2610
  %v2612 = vand.u32 %v1990, 4294901760
  %v2613 = vsub.f32 %v1990, %v2612
  %2614 = vmatmul.f32.gmra.mxu0 %v2613
  %v2615 = vpop.f32.mrf.mxu0
  %v2616 = vadd.f32 %v2436, %v2615
  %v2617 = vand.u32 %v1991, 4294901760
  %v2618 = vsub.f32 %v1991, %v2617
  %2619 = vmatmul.f32.gmra.mxu0 %v2618
  %v2620 = vpop.f32.mrf.mxu0
  %v2621 = vadd.f32 %v2440, %v2620
  %v2622 = vand.u32 %v1992, 4294901760
  %v2623 = vsub.f32 %v1992, %v2622
  %2624 = vmatmul.f32.gmra.mxu0 %v2623
  %v2625 = vpop.f32.mrf.mxu0
  %v2626 = vadd.f32 %v2444, %v2625
  %v2627 = vand.u32 %v1993, 4294901760
  %v2628 = vsub.f32 %v1993, %v2627
  %2629 = vmatmul.f32.gmra.mxu0 %v2628
  %v2630 = vpop.f32.mrf.mxu0
  %v2631 = vadd.f32 %v2448, %v2630
  %v2632 = vand.u32 %v1994, 4294901760
  %v2633 = vsub.f32 %v1994, %v2632
  %2634 = vmatmul.f32.gmra.mxu0 %v2633
  %v2635 = vpop.f32.mrf.mxu0
  %v2636 = vadd.f32 %v2452, %v2635
  %v2637 = vand.u32 %v1995, 4294901760
  %v2638 = vsub.f32 %v1995, %v2637
  %2639 = vmatmul.f32.gmra.mxu0 %v2638
  %v2640 = vpop.f32.mrf.mxu0
  %v2641 = vadd.f32 %v2456, %v2640
  %v2642 = vand.u32 %v1996, 4294901760
  %v2643 = vsub.f32 %v1996, %v2642
  %2644 = vmatmul.f32.gmra.mxu0 %v2643
  %v2645 = vpop.f32.mrf.mxu0
  %v2646 = vadd.f32 %v2460, %v2645
  %v2647 = vand.u32 %v1997, 4294901760
  %v2648 = vsub.f32 %v1997, %v2647
  %2649 = vmatmul.f32.gmra.mxu0 %v2648
  %v2650 = vpop.f32.mrf.mxu0
  %v2651 = vadd.f32 %v2464, %v2650
  %v2652 = vand.u32 %v1998, 4294901760
  %v2653 = vsub.f32 %v1998, %v2652
  %2654 = vmatmul.f32.gmra.mxu0 %v2653
  %v2655 = vpop.f32.mrf.mxu0
  %v2656 = vadd.f32 %v2468, %v2655
  %v2657 = vand.u32 %v1999, 4294901760
  %v2658 = vsub.f32 %v1999, %v2657
  %2659 = vmatmul.f32.gmra.mxu0 %v2658
  %v2660 = vpop.f32.mrf.mxu0
  %v2661 = vadd.f32 %v2472, %v2660
  %v2662 = vand.u32 %v2000, 4294901760
  %v2663 = vsub.f32 %v2000, %v2662
  %2664 = vmatmul.f32.gmra.mxu0 %v2663
  %v2665 = vpop.f32.mrf.mxu0
  %v2666 = vadd.f32 %v2476, %v2665
  %v2667 = vand.u32 %v2001, 4294901760
  %v2668 = vsub.f32 %v2001, %v2667
  %2669 = vmatmul.f32.gmra.mxu0 %v2668
  %v2670 = vpop.f32.mrf.mxu0
  %v2671 = vadd.f32 %v2480, %v2670
  %v2672 = vand.u32 %v2002, 4294901760
  %v2673 = vsub.f32 %v2002, %v2672
  %2674 = vmatmul.f32.gmra.mxu0 %v2673
  %v2675 = vpop.f32.mrf.mxu0
  %v2676 = vadd.f32 %v2484, %v2675
  %v2677 = vand.u32 %v2003, 4294901760
  %v2678 = vsub.f32 %v2003, %v2677
  %2679 = vmatmul.f32.gmra.mxu0 %v2678
  %v2680 = vpop.f32.mrf.mxu0
  %v2681 = vadd.f32 %v2488, %v2680
  %v2682 = vand.u32 %v2004, 4294901760
  %v2683 = vsub.f32 %v2004, %v2682
  %2684 = vmatmul.f32.gmra.mxu0 %v2683
  %v2685 = vpop.f32.mrf.mxu0
  %v2686 = vadd.f32 %v2492, %v2685
  %v2687 = vand.u32 %v2005, 4294901760
  %v2688 = vsub.f32 %v2005, %v2687
  %2689 = vmatmul.f32.gmra.mxu0 %v2688
  %v2690 = vpop.f32.mrf.mxu0
  %v2691 = vadd.f32 %v2496, %v2690
  %v2692 = vand.u32 %v2006, 4294901760
  %v2693 = vsub.f32 %v2006, %v2692
  %2694 = vmatmul.f32.gmra.mxu0 %v2693
  %v2695 = vpop.f32.mrf.mxu0
  %v2696 = vadd.f32 %v2500, %v2695
  %v2697 = vand.u32 %v2007, 4294901760
  %v2698 = vsub.f32 %v2007, %v2697
  %2699 = vmatmul.f32.gmra.mxu0 %v2698
  %v2700 = vpop.f32.mrf.mxu0
  %v2701 = vadd.f32 %v2504, %v2700
  %v2702 = vand.u32 %v2008, 4294901760
  %v2703 = vsub.f32 %v2008, %v2702
  %2704 = vmatmul.f32.gmra.mxu0 %v2703
  %v2705 = vpop.f32.mrf.mxu0
  %v2706 = vadd.f32 %v2508, %v2705
  %v2707 = vand.u32 %v2009, 4294901760
  %v2708 = vsub.f32 %v2009, %v2707
  %2709 = vmatmul.f32.gmra.mxu0 %v2708
  %v2710 = vpop.f32.mrf.mxu0
  %v2711 = vadd.f32 %v2512, %v2710
  %v2712 = vand.u32 %v2010, 4294901760
  %v2713 = vsub.f32 %v2010, %v2712
  %2714 = vmatmul.f32.gmra.mxu0 %v2713
  %v2715 = vpop.f32.mrf.mxu0
  %v2716 = vadd.f32 %v2516, %v2715
  %v2717 = vand.u32 %v2011, 4294901760
  %v2718 = vsub.f32 %v2011, %v2717
  %2719 = vmatmul.f32.gmra.mxu0 %v2718
  %v2720 = vpop.f32.mrf.mxu0
  %v2721 = vadd.f32 %v2520, %v2720
  %v2722 = vand.u32 %v2012, 4294901760
  %v2723 = vsub.f32 %v2012, %v2722
  %2724 = vmatmul.f32.gmra.mxu0 %v2723
  %v2725 = vpop.f32.mrf.mxu0
  %v2726 = vadd.f32 %v2524, %v2725
  %v2727 = vand.u32 %v2013, 4294901760
  %v2728 = vsub.f32 %v2013, %v2727
  %2729 = vmatmul.f32.gmra.mxu0 %v2728
  %v2730 = vpop.f32.mrf.mxu0
  %v2731 = vadd.f32 %v2528, %v2730
  %v2732 = vand.u32 %v2014, 4294901760
  %v2733 = vsub.f32 %v2014, %v2732
  %2734 = vmatmul.f32.gmra.mxu0 %v2733
  %v2735 = vpop.f32.mrf.mxu0
  %v2736 = vadd.f32 %v2532, %v2735
  %v2737 = vand.u32 %v2015, 4294901760
  %v2738 = vsub.f32 %v2015, %v2737
  %2739 = vmatmul.f32.gmra.mxu0 %v2738
  %v2740 = vpop.f32.mrf.mxu0
  %v2741 = vadd.f32 %v2536, %v2740
  %v2742 = vand.u32 %v2016, 4294901760
  %v2743 = vsub.f32 %v2016, %v2742
  %2744 = vmatmul.f32.gmra.mxu0 %v2743
  %v2745 = vpop.f32.mrf.mxu0
  %v2746 = vadd.f32 %v2540, %v2745
  %v2747 = vand.u32 %v2017, 4294901760
  %v2748 = vsub.f32 %v2017, %v2747
  %2749 = vmatmul.f32.gmra.mxu0 %v2748
  %v2750 = vpop.f32.mrf.mxu0
  %v2751 = vadd.f32 %v2544, %v2750
  %v2752 = vand.u32 %v2018, 4294901760
  %v2753 = vsub.f32 %v2018, %v2752
  %2754 = vmatmul.f32.gmra.mxu0 %v2753
  %v2755 = vpop.f32.mrf.mxu0
  %v2756 = vadd.f32 %v2548, %v2755
  %v2757 = vand.u32 %v2019, 4294901760
  %v2758 = vsub.f32 %v2019, %v2757
  %2759 = vmatmul.f32.gmra.mxu0 %v2758
  %v2760 = vpop.f32.mrf.mxu0
  %v2761 = vadd.f32 %v2552, %v2760
  %2762 = vdwg.mxu0
  %v2763 = vand.u32 %v2035, 4294901760
  %2764 = vmatpush.msra.mxu0 %v2763
  %v2765 = vand.u32 %v2034, 4294901760
  %2766 = vmatpush.msra.mxu0 %v2765
  %v2767 = vand.u32 %v2033, 4294901760
  %2768 = vmatpush.msra.mxu0 %v2767
  %v2769 = vand.u32 %v2032, 4294901760
  %2770 = vmatpush.msra.mxu0 %v2769
  %v2771 = vand.u32 %v2031, 4294901760
  %2772 = vmatpush.msra.mxu0 %v2771
  %v2773 = vand.u32 %v2030, 4294901760
  %2774 = vmatpush.msra.mxu0 %v2773
  %v2775 = vand.u32 %v2029, 4294901760
  %2776 = vmatpush.msra.mxu0 %v2775
  %v2777 = vand.u32 %v2028, 4294901760
  %2778 = vmatpush.msra.mxu0 %v2777
  %v2779 = vand.u32 %v2027, 4294901760
  %2780 = vmatpush.msra.mxu0 %v2779
  %v2781 = vand.u32 %v2026, 4294901760
  %2782 = vmatpush.msra.mxu0 %v2781
  %v2783 = vand.u32 %v2025, 4294901760
  %2784 = vmatpush.msra.mxu0 %v2783
  %v2785 = vand.u32 %v2024, 4294901760
  %2786 = vmatpush.msra.mxu0 %v2785
  %v2787 = vand.u32 %v2023, 4294901760
  %2788 = vmatpush.msra.mxu0 %v2787
  %v2789 = vand.u32 %v2022, 4294901760
  %2790 = vmatpush.msra.mxu0 %v2789
  %v2791 = vand.u32 %v2021, 4294901760
  %2792 = vmatpush.msra.mxu0 %v2791
  %v2793 = vand.u32 %v2020, 4294901760
  %2794 = vmatpush.msra.mxu0 %v2793
  %v2795 = vand.u32 %v1988, 4294901760
  %v2796 = vsub.f32 %v1988, %v2795
  %v2797 = vand.u32 %v2796, 4294901760
  %2798 = vmatmul.f32.gmra.mxu0 %v2797
  %v2799 = vpop.f32.mrf.mxu0
  %v2800 = vadd.f32 %v2606, %v2799
  %v2801 = vand.u32 %v1989, 4294901760
  %v2802 = vsub.f32 %v1989, %v2801
  %v2803 = vand.u32 %v2802, 4294901760
  %2804 = vmatmul.f32.gmra.mxu0 %v2803
  %v2805 = vpop.f32.mrf.mxu0
  %v2806 = vadd.f32 %v2611, %v2805
  %v2807 = vand.u32 %v1990, 4294901760
  %v2808 = vsub.f32 %v1990, %v2807
  %v2809 = vand.u32 %v2808, 4294901760
  %2810 = vmatmul.f32.gmra.mxu0 %v2809
  %v2811 = vpop.f32.mrf.mxu0
  %v2812 = vadd.f32 %v2616, %v2811
  %v2813 = vand.u32 %v1991, 4294901760
  %v2814 = vsub.f32 %v1991, %v2813
  %v2815 = vand.u32 %v2814, 4294901760
  %2816 = vmatmul.f32.gmra.mxu0 %v2815
  %v2817 = vpop.f32.mrf.mxu0
  %v2818 = vadd.f32 %v2621, %v2817
  %v2819 = vand.u32 %v1992, 4294901760
  %v2820 = vsub.f32 %v1992, %v2819
  %v2821 = vand.u32 %v2820, 4294901760
  %2822 = vmatmul.f32.gmra.mxu0 %v2821
  %v2823 = vpop.f32.mrf.mxu0
  %v2824 = vadd.f32 %v2626, %v2823
  %v2825 = vand.u32 %v1993, 4294901760
  %v2826 = vsub.f32 %v1993, %v2825
  %v2827 = vand.u32 %v2826, 4294901760
  %2828 = vmatmul.f32.gmra.mxu0 %v2827
  %v2829 = vpop.f32.mrf.mxu0
  %v2830 = vadd.f32 %v2631, %v2829
  %v2831 = vand.u32 %v1994, 4294901760
  %v2832 = vsub.f32 %v1994, %v2831
  %v2833 = vand.u32 %v2832, 4294901760
  %2834 = vmatmul.f32.gmra.mxu0 %v2833
  %v2835 = vpop.f32.mrf.mxu0
  %v2836 = vadd.f32 %v2636, %v2835
  %v2837 = vand.u32 %v1995, 4294901760
  %v2838 = vsub.f32 %v1995, %v2837
  %v2839 = vand.u32 %v2838, 4294901760
  %2840 = vmatmul.f32.gmra.mxu0 %v2839
  %v2841 = vpop.f32.mrf.mxu0
  %v2842 = vadd.f32 %v2641, %v2841
  %v2843 = vand.u32 %v1996, 4294901760
  %v2844 = vsub.f32 %v1996, %v2843
  %v2845 = vand.u32 %v2844, 4294901760
  %2846 = vmatmul.f32.gmra.mxu0 %v2845
  %v2847 = vpop.f32.mrf.mxu0
  %v2848 = vadd.f32 %v2646, %v2847
  %v2849 = vand.u32 %v1997, 4294901760
  %v2850 = vsub.f32 %v1997, %v2849
  %v2851 = vand.u32 %v2850, 4294901760
  %2852 = vmatmul.f32.gmra.mxu0 %v2851
  %v2853 = vpop.f32.mrf.mxu0
  %v2854 = vadd.f32 %v2651, %v2853
  %v2855 = vand.u32 %v1998, 4294901760
  %v2856 = vsub.f32 %v1998, %v2855
  %v2857 = vand.u32 %v2856, 4294901760
  %2858 = vmatmul.f32.gmra.mxu0 %v2857
  %v2859 = vpop.f32.mrf.mxu0
  %v2860 = vadd.f32 %v2656, %v2859
  %v2861 = vand.u32 %v1999, 4294901760
  %v2862 = vsub.f32 %v1999, %v2861
  %v2863 = vand.u32 %v2862, 4294901760
  %2864 = vmatmul.f32.gmra.mxu0 %v2863
  %v2865 = vpop.f32.mrf.mxu0
  %v2866 = vadd.f32 %v2661, %v2865
  %v2867 = vand.u32 %v2000, 4294901760
  %v2868 = vsub.f32 %v2000, %v2867
  %v2869 = vand.u32 %v2868, 4294901760
  %2870 = vmatmul.f32.gmra.mxu0 %v2869
  %v2871 = vpop.f32.mrf.mxu0
  %v2872 = vadd.f32 %v2666, %v2871
  %v2873 = vand.u32 %v2001, 4294901760
  %v2874 = vsub.f32 %v2001, %v2873
  %v2875 = vand.u32 %v2874, 4294901760
  %2876 = vmatmul.f32.gmra.mxu0 %v2875
  %v2877 = vpop.f32.mrf.mxu0
  %v2878 = vadd.f32 %v2671, %v2877
  %v2879 = vand.u32 %v2002, 4294901760
  %v2880 = vsub.f32 %v2002, %v2879
  %v2881 = vand.u32 %v2880, 4294901760
  %2882 = vmatmul.f32.gmra.mxu0 %v2881
  %v2883 = vpop.f32.mrf.mxu0
  %v2884 = vadd.f32 %v2676, %v2883
  %v2885 = vand.u32 %v2003, 4294901760
  %v2886 = vsub.f32 %v2003, %v2885
  %v2887 = vand.u32 %v2886, 4294901760
  %2888 = vmatmul.f32.gmra.mxu0 %v2887
  %v2889 = vpop.f32.mrf.mxu0
  %v2890 = vadd.f32 %v2681, %v2889
  %v2891 = vand.u32 %v2004, 4294901760
  %v2892 = vsub.f32 %v2004, %v2891
  %v2893 = vand.u32 %v2892, 4294901760
  %2894 = vmatmul.f32.gmra.mxu0 %v2893
  %v2895 = vpop.f32.mrf.mxu0
  %v2896 = vadd.f32 %v2686, %v2895
  %v2897 = vand.u32 %v2005, 4294901760
  %v2898 = vsub.f32 %v2005, %v2897
  %v2899 = vand.u32 %v2898, 4294901760
  %2900 = vmatmul.f32.gmra.mxu0 %v2899
  %v2901 = vpop.f32.mrf.mxu0
  %v2902 = vadd.f32 %v2691, %v2901
  %v2903 = vand.u32 %v2006, 4294901760
  %v2904 = vsub.f32 %v2006, %v2903
  %v2905 = vand.u32 %v2904, 4294901760
  %2906 = vmatmul.f32.gmra.mxu0 %v2905
  %v2907 = vpop.f32.mrf.mxu0
  %v2908 = vadd.f32 %v2696, %v2907
  %v2909 = vand.u32 %v2007, 4294901760
  %v2910 = vsub.f32 %v2007, %v2909
  %v2911 = vand.u32 %v2910, 4294901760
  %2912 = vmatmul.f32.gmra.mxu0 %v2911
  %v2913 = vpop.f32.mrf.mxu0
  %v2914 = vadd.f32 %v2701, %v2913
  %v2915 = vand.u32 %v2008, 4294901760
  %v2916 = vsub.f32 %v2008, %v2915
  %v2917 = vand.u32 %v2916, 4294901760
  %2918 = vmatmul.f32.gmra.mxu0 %v2917
  %v2919 = vpop.f32.mrf.mxu0
  %v2920 = vadd.f32 %v2706, %v2919
  %v2921 = vand.u32 %v2009, 4294901760
  %v2922 = vsub.f32 %v2009, %v2921
  %v2923 = vand.u32 %v2922, 4294901760
  %2924 = vmatmul.f32.gmra.mxu0 %v2923
  %v2925 = vpop.f32.mrf.mxu0
  %v2926 = vadd.f32 %v2711, %v2925
  %v2927 = vand.u32 %v2010, 4294901760
  %v2928 = vsub.f32 %v2010, %v2927
  %v2929 = vand.u32 %v2928, 4294901760
  %2930 = vmatmul.f32.gmra.mxu0 %v2929
  %v2931 = vpop.f32.mrf.mxu0
  %v2932 = vadd.f32 %v2716, %v2931
  %v2933 = vand.u32 %v2011, 4294901760
  %v2934 = vsub.f32 %v2011, %v2933
  %v2935 = vand.u32 %v2934, 4294901760
  %2936 = vmatmul.f32.gmra.mxu0 %v2935
  %v2937 = vpop.f32.mrf.mxu0
  %v2938 = vadd.f32 %v2721, %v2937
  %v2939 = vand.u32 %v2012, 4294901760
  %v2940 = vsub.f32 %v2012, %v2939
  %v2941 = vand.u32 %v2940, 4294901760
  %2942 = vmatmul.f32.gmra.mxu0 %v2941
  %v2943 = vpop.f32.mrf.mxu0
  %v2944 = vadd.f32 %v2726, %v2943
  %v2945 = vand.u32 %v2013, 4294901760
  %v2946 = vsub.f32 %v2013, %v2945
  %v2947 = vand.u32 %v2946, 4294901760
  %2948 = vmatmul.f32.gmra.mxu0 %v2947
  %v2949 = vpop.f32.mrf.mxu0
  %v2950 = vadd.f32 %v2731, %v2949
  %v2951 = vand.u32 %v2014, 4294901760
  %v2952 = vsub.f32 %v2014, %v2951
  %v2953 = vand.u32 %v2952, 4294901760
  %2954 = vmatmul.f32.gmra.mxu0 %v2953
  %v2955 = vpop.f32.mrf.mxu0
  %v2956 = vadd.f32 %v2736, %v2955
  %v2957 = vand.u32 %v2015, 4294901760
  %v2958 = vsub.f32 %v2015, %v2957
  %v2959 = vand.u32 %v2958, 4294901760
  %2960 = vmatmul.f32.gmra.mxu0 %v2959
  %v2961 = vpop.f32.mrf.mxu0
  %v2962 = vadd.f32 %v2741, %v2961
  %v2963 = vand.u32 %v2016, 4294901760
  %v2964 = vsub.f32 %v2016, %v2963
  %v2965 = vand.u32 %v2964, 4294901760
  %2966 = vmatmul.f32.gmra.mxu0 %v2965
  %v2967 = vpop.f32.mrf.mxu0
  %v2968 = vadd.f32 %v2746, %v2967
  %v2969 = vand.u32 %v2017, 4294901760
  %v2970 = vsub.f32 %v2017, %v2969
  %v2971 = vand.u32 %v2970, 4294901760
  %2972 = vmatmul.f32.gmra.mxu0 %v2971
  %v2973 = vpop.f32.mrf.mxu0
  %v2974 = vadd.f32 %v2751, %v2973
  %v2975 = vand.u32 %v2018, 4294901760
  %v2976 = vsub.f32 %v2018, %v2975
  %v2977 = vand.u32 %v2976, 4294901760
  %2978 = vmatmul.f32.gmra.mxu0 %v2977
  %v2979 = vpop.f32.mrf.mxu0
  %v2980 = vadd.f32 %v2756, %v2979
  %v2981 = vand.u32 %v2019, 4294901760
  %v2982 = vsub.f32 %v2019, %v2981
  %v2983 = vand.u32 %v2982, 4294901760
  %2984 = vmatmul.f32.gmra.mxu0 %v2983
  %v2985 = vpop.f32.mrf.mxu0
  %v2986 = vadd.f32 %v2761, %v2985
  %2987 = vdwg.mxu0
  %v2988 = vand.u32 %v2035, 4294901760
  %v2989 = vsub.f32 %v2035, %v2988
  %v2990 = vand.u32 %v2989, 4294901760
  %2991 = vmatpush.msra.mxu0 %v2990
  %v2992 = vand.u32 %v2034, 4294901760
  %v2993 = vsub.f32 %v2034, %v2992
  %v2994 = vand.u32 %v2993, 4294901760
  %2995 = vmatpush.msra.mxu0 %v2994
  %v2996 = vand.u32 %v2033, 4294901760
  %v2997 = vsub.f32 %v2033, %v2996
  %v2998 = vand.u32 %v2997, 4294901760
  %2999 = vmatpush.msra.mxu0 %v2998
  %v3000 = vand.u32 %v2032, 4294901760
  %v3001 = vsub.f32 %v2032, %v3000
  %v3002 = vand.u32 %v3001, 4294901760
  %3003 = vmatpush.msra.mxu0 %v3002
  %v3004 = vand.u32 %v2031, 4294901760
  %v3005 = vsub.f32 %v2031, %v3004
  %v3006 = vand.u32 %v3005, 4294901760
  %3007 = vmatpush.msra.mxu0 %v3006
  %v3008 = vand.u32 %v2030, 4294901760
  %v3009 = vsub.f32 %v2030, %v3008
  %v3010 = vand.u32 %v3009, 4294901760
  %3011 = vmatpush.msra.mxu0 %v3010
  %v3012 = vand.u32 %v2029, 4294901760
  %v3013 = vsub.f32 %v2029, %v3012
  %v3014 = vand.u32 %v3013, 4294901760
  %3015 = vmatpush.msra.mxu0 %v3014
  %v3016 = vand.u32 %v2028, 4294901760
  %v3017 = vsub.f32 %v2028, %v3016
  %v3018 = vand.u32 %v3017, 4294901760
  %3019 = vmatpush.msra.mxu0 %v3018
  %v3020 = vand.u32 %v2027, 4294901760
  %v3021 = vsub.f32 %v2027, %v3020
  %v3022 = vand.u32 %v3021, 4294901760
  %3023 = vmatpush.msra.mxu0 %v3022
  %v3024 = vand.u32 %v2026, 4294901760
  %v3025 = vsub.f32 %v2026, %v3024
  %v3026 = vand.u32 %v3025, 4294901760
  %3027 = vmatpush.msra.mxu0 %v3026
  %v3028 = vand.u32 %v2025, 4294901760
  %v3029 = vsub.f32 %v2025, %v3028
  %v3030 = vand.u32 %v3029, 4294901760
  %3031 = vmatpush.msra.mxu0 %v3030
  %v3032 = vand.u32 %v2024, 4294901760
  %v3033 = vsub.f32 %v2024, %v3032
  %v3034 = vand.u32 %v3033, 4294901760
  %3035 = vmatpush.msra.mxu0 %v3034
  %v3036 = vand.u32 %v2023, 4294901760
  %v3037 = vsub.f32 %v2023, %v3036
  %v3038 = vand.u32 %v3037, 4294901760
  %3039 = vmatpush.msra.mxu0 %v3038
  %v3040 = vand.u32 %v2022, 4294901760
  %v3041 = vsub.f32 %v2022, %v3040
  %v3042 = vand.u32 %v3041, 4294901760
  %3043 = vmatpush.msra.mxu0 %v3042
  %v3044 = vand.u32 %v2021, 4294901760
  %v3045 = vsub.f32 %v2021, %v3044
  %v3046 = vand.u32 %v3045, 4294901760
  %3047 = vmatpush.msra.mxu0 %v3046
  %v3048 = vand.u32 %v2020, 4294901760
  %v3049 = vsub.f32 %v2020, %v3048
  %v3050 = vand.u32 %v3049, 4294901760
  %3051 = vmatpush.msra.mxu0 %v3050
  %v3052 = vand.u32 %v1988, 4294901760
  %3053 = vmatmul.f32.gmra.mxu0 %v3052
  %v3054 = vpop.f32.mrf.mxu0
  %v3055 = vadd.f32 %v2800, %v3054
  %v3056 = vand.u32 %v1989, 4294901760
  %3057 = vmatmul.f32.gmra.mxu0 %v3056
  %v3058 = vpop.f32.mrf.mxu0
  %v3059 = vadd.f32 %v2806, %v3058
  %v3060 = vand.u32 %v1990, 4294901760
  %3061 = vmatmul.f32.gmra.mxu0 %v3060
  %v3062 = vpop.f32.mrf.mxu0
  %v3063 = vadd.f32 %v2812, %v3062
  %v3064 = vand.u32 %v1991, 4294901760
  %3065 = vmatmul.f32.gmra.mxu0 %v3064
  %v3066 = vpop.f32.mrf.mxu0
  %v3067 = vadd.f32 %v2818, %v3066
  %v3068 = vand.u32 %v1992, 4294901760
  %3069 = vmatmul.f32.gmra.mxu0 %v3068
  %v3070 = vpop.f32.mrf.mxu0
  %v3071 = vadd.f32 %v2824, %v3070
  %v3072 = vand.u32 %v1993, 4294901760
  %3073 = vmatmul.f32.gmra.mxu0 %v3072
  %v3074 = vpop.f32.mrf.mxu0
  %v3075 = vadd.f32 %v2830, %v3074
  %v3076 = vand.u32 %v1994, 4294901760
  %3077 = vmatmul.f32.gmra.mxu0 %v3076
  %v3078 = vpop.f32.mrf.mxu0
  %v3079 = vadd.f32 %v2836, %v3078
  %v3080 = vand.u32 %v1995, 4294901760
  %3081 = vmatmul.f32.gmra.mxu0 %v3080
  %v3082 = vpop.f32.mrf.mxu0
  %v3083 = vadd.f32 %v2842, %v3082
  %v3084 = vand.u32 %v1996, 4294901760
  %3085 = vmatmul.f32.gmra.mxu0 %v3084
  %v3086 = vpop.f32.mrf.mxu0
  %v3087 = vadd.f32 %v2848, %v3086
  %v3088 = vand.u32 %v1997, 4294901760
  %3089 = vmatmul.f32.gmra.mxu0 %v3088
  %v3090 = vpop.f32.mrf.mxu0
  %v3091 = vadd.f32 %v2854, %v3090
  %v3092 = vand.u32 %v1998, 4294901760
  %3093 = vmatmul.f32.gmra.mxu0 %v3092
  %v3094 = vpop.f32.mrf.mxu0
  %v3095 = vadd.f32 %v2860, %v3094
  %v3096 = vand.u32 %v1999, 4294901760
  %3097 = vmatmul.f32.gmra.mxu0 %v3096
  %v3098 = vpop.f32.mrf.mxu0
  %v3099 = vadd.f32 %v2866, %v3098
  %v3100 = vand.u32 %v2000, 4294901760
  %3101 = vmatmul.f32.gmra.mxu0 %v3100
  %v3102 = vpop.f32.mrf.mxu0
  %v3103 = vadd.f32 %v2872, %v3102
  %v3104 = vand.u32 %v2001, 4294901760
  %3105 = vmatmul.f32.gmra.mxu0 %v3104
  %v3106 = vpop.f32.mrf.mxu0
  %v3107 = vadd.f32 %v2878, %v3106
  %v3108 = vand.u32 %v2002, 4294901760
  %3109 = vmatmul.f32.gmra.mxu0 %v3108
  %v3110 = vpop.f32.mrf.mxu0
  %v3111 = vadd.f32 %v2884, %v3110
  %v3112 = vand.u32 %v2003, 4294901760
  %3113 = vmatmul.f32.gmra.mxu0 %v3112
  %v3114 = vpop.f32.mrf.mxu0
  %v3115 = vadd.f32 %v2890, %v3114
  %v3116 = vand.u32 %v2004, 4294901760
  %3117 = vmatmul.f32.gmra.mxu0 %v3116
  %v3118 = vpop.f32.mrf.mxu0
  %v3119 = vadd.f32 %v2896, %v3118
  %v3120 = vand.u32 %v2005, 4294901760
  %3121 = vmatmul.f32.gmra.mxu0 %v3120
  %v3122 = vpop.f32.mrf.mxu0
  %v3123 = vadd.f32 %v2902, %v3122
  %v3124 = vand.u32 %v2006, 4294901760
  %3125 = vmatmul.f32.gmra.mxu0 %v3124
  %v3126 = vpop.f32.mrf.mxu0
  %v3127 = vadd.f32 %v2908, %v3126
  %v3128 = vand.u32 %v2007, 4294901760
  %3129 = vmatmul.f32.gmra.mxu0 %v3128
  %v3130 = vpop.f32.mrf.mxu0
  %v3131 = vadd.f32 %v2914, %v3130
  %v3132 = vand.u32 %v2008, 4294901760
  %3133 = vmatmul.f32.gmra.mxu0 %v3132
  %v3134 = vpop.f32.mrf.mxu0
  %v3135 = vadd.f32 %v2920, %v3134
  %v3136 = vand.u32 %v2009, 4294901760
  %3137 = vmatmul.f32.gmra.mxu0 %v3136
  %v3138 = vpop.f32.mrf.mxu0
  %v3139 = vadd.f32 %v2926, %v3138
  %v3140 = vand.u32 %v2010, 4294901760
  %3141 = vmatmul.f32.gmra.mxu0 %v3140
  %v3142 = vpop.f32.mrf.mxu0
  %v3143 = vadd.f32 %v2932, %v3142
  %v3144 = vand.u32 %v2011, 4294901760
  %3145 = vmatmul.f32.gmra.mxu0 %v3144
  %v3146 = vpop.f32.mrf.mxu0
  %v3147 = vadd.f32 %v2938, %v3146
  %v3148 = vand.u32 %v2012, 4294901760
  %3149 = vmatmul.f32.gmra.mxu0 %v3148
  %v3150 = vpop.f32.mrf.mxu0
  %v3151 = vadd.f32 %v2944, %v3150
  %v3152 = vand.u32 %v2013, 4294901760
  %3153 = vmatmul.f32.gmra.mxu0 %v3152
  %v3154 = vpop.f32.mrf.mxu0
  %v3155 = vadd.f32 %v2950, %v3154
  %v3156 = vand.u32 %v2014, 4294901760
  %3157 = vmatmul.f32.gmra.mxu0 %v3156
  %v3158 = vpop.f32.mrf.mxu0
  %v3159 = vadd.f32 %v2956, %v3158
  %v3160 = vand.u32 %v2015, 4294901760
  %3161 = vmatmul.f32.gmra.mxu0 %v3160
  %v3162 = vpop.f32.mrf.mxu0
  %v3163 = vadd.f32 %v2962, %v3162
  %v3164 = vand.u32 %v2016, 4294901760
  %3165 = vmatmul.f32.gmra.mxu0 %v3164
  %v3166 = vpop.f32.mrf.mxu0
  %v3167 = vadd.f32 %v2968, %v3166
  %v3168 = vand.u32 %v2017, 4294901760
  %3169 = vmatmul.f32.gmra.mxu0 %v3168
  %v3170 = vpop.f32.mrf.mxu0
  %v3171 = vadd.f32 %v2974, %v3170
  %v3172 = vand.u32 %v2018, 4294901760
  %3173 = vmatmul.f32.gmra.mxu0 %v3172
  %v3174 = vpop.f32.mrf.mxu0
  %v3175 = vadd.f32 %v2980, %v3174
  %v3176 = vand.u32 %v2019, 4294901760
  %3177 = vmatmul.f32.gmra.mxu0 %v3176
  %v3178 = vpop.f32.mrf.mxu0
  %v3179 = vadd.f32 %v2986, %v3178
  %3180 = vdwg.mxu0
  %v3181 = vand.u32 %v2035, 4294901760
  %3182 = vmatpush.msra.mxu0 %v3181
  %v3183 = vand.u32 %v2034, 4294901760
  %3184 = vmatpush.msra.mxu0 %v3183
  %v3185 = vand.u32 %v2033, 4294901760
  %3186 = vmatpush.msra.mxu0 %v3185
  %v3187 = vand.u32 %v2032, 4294901760
  %3188 = vmatpush.msra.mxu0 %v3187
  %v3189 = vand.u32 %v2031, 4294901760
  %3190 = vmatpush.msra.mxu0 %v3189
  %v3191 = vand.u32 %v2030, 4294901760
  %3192 = vmatpush.msra.mxu0 %v3191
  %v3193 = vand.u32 %v2029, 4294901760
  %3194 = vmatpush.msra.mxu0 %v3193
  %v3195 = vand.u32 %v2028, 4294901760
  %3196 = vmatpush.msra.mxu0 %v3195
  %v3197 = vand.u32 %v2027, 4294901760
  %3198 = vmatpush.msra.mxu0 %v3197
  %v3199 = vand.u32 %v2026, 4294901760
  %3200 = vmatpush.msra.mxu0 %v3199
  %v3201 = vand.u32 %v2025, 4294901760
  %3202 = vmatpush.msra.mxu0 %v3201
  %v3203 = vand.u32 %v2024, 4294901760
  %3204 = vmatpush.msra.mxu0 %v3203
  %v3205 = vand.u32 %v2023, 4294901760
  %3206 = vmatpush.msra.mxu0 %v3205
  %v3207 = vand.u32 %v2022, 4294901760
  %3208 = vmatpush.msra.mxu0 %v3207
  %v3209 = vand.u32 %v2021, 4294901760
  %3210 = vmatpush.msra.mxu0 %v3209
  %v3211 = vand.u32 %v2020, 4294901760
  %3212 = vmatpush.msra.mxu0 %v3211
  %v3213 = vand.u32 %v1988, 4294901760
  %3214 = vmatmul.f32.gmra.mxu0 %v3213
  %v3215 = vpop.f32.mrf.mxu0
  %v3216 = vadd.f32 %v3055, %v3215
  %v3217 = vand.u32 %v1989, 4294901760
  %3218 = vmatmul.f32.gmra.mxu0 %v3217
  %v3219 = vpop.f32.mrf.mxu0
  %v3220 = vadd.f32 %v3059, %v3219
  %v3221 = vand.u32 %v1990, 4294901760
  %3222 = vmatmul.f32.gmra.mxu0 %v3221
  %v3223 = vpop.f32.mrf.mxu0
  %v3224 = vadd.f32 %v3063, %v3223
  %v3225 = vand.u32 %v1991, 4294901760
  %3226 = vmatmul.f32.gmra.mxu0 %v3225
  %v3227 = vpop.f32.mrf.mxu0
  %v3228 = vadd.f32 %v3067, %v3227
  %v3229 = vand.u32 %v1992, 4294901760
  %3230 = vmatmul.f32.gmra.mxu0 %v3229
  %v3231 = vpop.f32.mrf.mxu0
  %v3232 = vadd.f32 %v3071, %v3231
  %v3233 = vand.u32 %v1993, 4294901760
  %3234 = vmatmul.f32.gmra.mxu0 %v3233
  %v3235 = vpop.f32.mrf.mxu0
  %v3236 = vadd.f32 %v3075, %v3235
  %v3237 = vand.u32 %v1994, 4294901760
  %3238 = vmatmul.f32.gmra.mxu0 %v3237
  %v3239 = vpop.f32.mrf.mxu0
  %v3240 = vadd.f32 %v3079, %v3239
  %v3241 = vand.u32 %v1995, 4294901760
  %3242 = vmatmul.f32.gmra.mxu0 %v3241
  %v3243 = vpop.f32.mrf.mxu0
  %v3244 = vadd.f32 %v3083, %v3243
  %v3245 = vand.u32 %v1996, 4294901760
  %3246 = vmatmul.f32.gmra.mxu0 %v3245
  %v3247 = vpop.f32.mrf.mxu0
  %v3248 = vadd.f32 %v3087, %v3247
  %v3249 = vand.u32 %v1997, 4294901760
  %3250 = vmatmul.f32.gmra.mxu0 %v3249
  %v3251 = vpop.f32.mrf.mxu0
  %v3252 = vadd.f32 %v3091, %v3251
  %v3253 = vand.u32 %v1998, 4294901760
  %3254 = vmatmul.f32.gmra.mxu0 %v3253
  %v3255 = vpop.f32.mrf.mxu0
  %v3256 = vadd.f32 %v3095, %v3255
  %v3257 = vand.u32 %v1999, 4294901760
  %3258 = vmatmul.f32.gmra.mxu0 %v3257
  %v3259 = vpop.f32.mrf.mxu0
  %v3260 = vadd.f32 %v3099, %v3259
  %v3261 = vand.u32 %v2000, 4294901760
  %3262 = vmatmul.f32.gmra.mxu0 %v3261
  %v3263 = vpop.f32.mrf.mxu0
  %v3264 = vadd.f32 %v3103, %v3263
  %v3265 = vand.u32 %v2001, 4294901760
  %3266 = vmatmul.f32.gmra.mxu0 %v3265
  %v3267 = vpop.f32.mrf.mxu0
  %v3268 = vadd.f32 %v3107, %v3267
  %v3269 = vand.u32 %v2002, 4294901760
  %3270 = vmatmul.f32.gmra.mxu0 %v3269
  %v3271 = vpop.f32.mrf.mxu0
  %v3272 = vadd.f32 %v3111, %v3271
  %v3273 = vand.u32 %v2003, 4294901760
  %3274 = vmatmul.f32.gmra.mxu0 %v3273
  %v3275 = vpop.f32.mrf.mxu0
  %v3276 = vadd.f32 %v3115, %v3275
  %v3277 = vand.u32 %v2004, 4294901760
  %3278 = vmatmul.f32.gmra.mxu0 %v3277
  %v3279 = vpop.f32.mrf.mxu0
  %v3280 = vadd.f32 %v3119, %v3279
  %v3281 = vand.u32 %v2005, 4294901760
  %3282 = vmatmul.f32.gmra.mxu0 %v3281
  %v3283 = vpop.f32.mrf.mxu0
  %v3284 = vadd.f32 %v3123, %v3283
  %v3285 = vand.u32 %v2006, 4294901760
  %3286 = vmatmul.f32.gmra.mxu0 %v3285
  %v3287 = vpop.f32.mrf.mxu0
  %v3288 = vadd.f32 %v3127, %v3287
  %v3289 = vand.u32 %v2007, 4294901760
  %3290 = vmatmul.f32.gmra.mxu0 %v3289
  %v3291 = vpop.f32.mrf.mxu0
  %v3292 = vadd.f32 %v3131, %v3291
  %v3293 = vand.u32 %v2008, 4294901760
  %3294 = vmatmul.f32.gmra.mxu0 %v3293
  %v3295 = vpop.f32.mrf.mxu0
  %v3296 = vadd.f32 %v3135, %v3295
  %v3297 = vand.u32 %v2009, 4294901760
  %3298 = vmatmul.f32.gmra.mxu0 %v3297
  %v3299 = vpop.f32.mrf.mxu0
  %v3300 = vadd.f32 %v3139, %v3299
  %v3301 = vand.u32 %v2010, 4294901760
  %3302 = vmatmul.f32.gmra.mxu0 %v3301
  %v3303 = vpop.f32.mrf.mxu0
  %v3304 = vadd.f32 %v3143, %v3303
  %v3305 = vand.u32 %v2011, 4294901760
  %3306 = vmatmul.f32.gmra.mxu0 %v3305
  %v3307 = vpop.f32.mrf.mxu0
  %v3308 = vadd.f32 %v3147, %v3307
  %v3309 = vand.u32 %v2012, 4294901760
  %3310 = vmatmul.f32.gmra.mxu0 %v3309
  %v3311 = vpop.f32.mrf.mxu0
  %v3312 = vadd.f32 %v3151, %v3311
  %v3313 = vand.u32 %v2013, 4294901760
  %3314 = vmatmul.f32.gmra.mxu0 %v3313
  %v3315 = vpop.f32.mrf.mxu0
  %v3316 = vadd.f32 %v3155, %v3315
  %v3317 = vand.u32 %v2014, 4294901760
  %3318 = vmatmul.f32.gmra.mxu0 %v3317
  %v3319 = vpop.f32.mrf.mxu0
  %v3320 = vadd.f32 %v3159, %v3319
  %v3321 = vand.u32 %v2015, 4294901760
  %3322 = vmatmul.f32.gmra.mxu0 %v3321
  %v3323 = vpop.f32.mrf.mxu0
  %v3324 = vadd.f32 %v3163, %v3323
  %v3325 = vand.u32 %v2016, 4294901760
  %3326 = vmatmul.f32.gmra.mxu0 %v3325
  %v3327 = vpop.f32.mrf.mxu0
  %v3328 = vadd.f32 %v3167, %v3327
  %v3329 = vand.u32 %v2017, 4294901760
  %3330 = vmatmul.f32.gmra.mxu0 %v3329
  %v3331 = vpop.f32.mrf.mxu0
  %v3332 = vadd.f32 %v3171, %v3331
  %v3333 = vand.u32 %v2018, 4294901760
  %3334 = vmatmul.f32.gmra.mxu0 %v3333
  %v3335 = vpop.f32.mrf.mxu0
  %v3336 = vadd.f32 %v3175, %v3335
  %v3337 = vand.u32 %v2019, 4294901760
  %3338 = vmatmul.f32.gmra.mxu0 %v3337
  %v3339 = vpop.f32.mrf.mxu0
  %v3340 = vadd.f32 %v3179, %v3339
  %3341 = vdwg.mxu0
  %v3342 = vxor.u32 %v3216, 2147483648
  %v3343 = vxor.u32 %v3220, 2147483648
  %v3344 = vxor.u32 %v3224, 2147483648
  %v3345 = vxor.u32 %v3228, 2147483648
  %v3346 = vxor.u32 %v3232, 2147483648
  %v3347 = vxor.u32 %v3236, 2147483648
  %v3348 = vxor.u32 %v3240, 2147483648
  %v3349 = vxor.u32 %v3244, 2147483648
  %v3350 = vxor.u32 %v3248, 2147483648
  %v3351 = vxor.u32 %v3252, 2147483648
  %v3352 = vxor.u32 %v3256, 2147483648
  %v3353 = vxor.u32 %v3260, 2147483648
  %v3354 = vxor.u32 %v3264, 2147483648
  %v3355 = vxor.u32 %v3268, 2147483648
  %v3356 = vxor.u32 %v3272, 2147483648
  %v3357 = vxor.u32 %v3276, 2147483648
  %v3358 = vxor.u32 %v3280, 2147483648
  %v3359 = vxor.u32 %v3284, 2147483648
  %v3360 = vxor.u32 %v3288, 2147483648
  %v3361 = vxor.u32 %v3292, 2147483648
  %v3362 = vxor.u32 %v3296, 2147483648
  %v3363 = vxor.u32 %v3300, 2147483648
  %v3364 = vxor.u32 %v3304, 2147483648
  %v3365 = vxor.u32 %v3308, 2147483648
  %v3366 = vxor.u32 %v3312, 2147483648
  %v3367 = vxor.u32 %v3316, 2147483648
  %v3368 = vxor.u32 %v3320, 2147483648
  %v3369 = vxor.u32 %v3324, 2147483648
  %v3370 = vxor.u32 %v3328, 2147483648
  %v3371 = vxor.u32 %v3332, 2147483648
  %v3372 = vxor.u32 %v3336, 2147483648
  %v3373 = vxor.u32 %v3340, 2147483648
  %v3374 = vmul.f32 %v3342, 1.442695
  %v3375 = vpow.pop %v3374
  %v3376 = vmul.f32 %v3343, 1.442695
  %v3377 = vpow.pop %v3376
  %v3378 = vmul.f32 %v3344, 1.442695
  %v3379 = vpow.pop %v3378
  %v3380 = vmul.f32 %v3345, 1.442695
  %v3381 = vpow.pop %v3380
  %v3382 = vmul.f32 %v3346, 1.442695
  %v3383 = vpow.pop %v3382
  %v3384 = vmul.f32 %v3347, 1.442695
  %v3385 = vpow.pop %v3384
  %v3386 = vmul.f32 %v3348, 1.442695
  %v3387 = vpow.pop %v3386
  %v3388 = vmul.f32 %v3349, 1.442695
  %v3389 = vpow.pop %v3388
  %v3390 = vmul.f32 %v3350, 1.442695
  %v3391 = vpow.pop %v3390
  %v3392 = vmul.f32 %v3351, 1.442695
  %v3393 = vpow.pop %v3392
  %v3394 = vmul.f32 %v3352, 1.442695
  %v3395 = vpow.pop %v3394
  %v3396 = vmul.f32 %v3353, 1.442695
  %v3397 = vpow.pop %v3396
  %v3398 = vmul.f32 %v3354, 1.442695
  %v3399 = vpow.pop %v3398
  %v3400 = vmul.f32 %v3355, 1.442695
  %v3401 = vpow.pop %v3400
  %v3402 = vmul.f32 %v3356, 1.442695
  %v3403 = vpow.pop %v3402
  %v3404 = vmul.f32 %v3357, 1.442695
  %v3405 = vpow.pop %v3404
  %v3406 = vmul.f32 %v3358, 1.442695
  %v3407 = vpow.pop %v3406
  %v3408 = vmul.f32 %v3359, 1.442695
  %v3409 = vpow.pop %v3408
  %v3410 = vmul.f32 %v3360, 1.442695
  %v3411 = vpow.pop %v3410
  %v3412 = vmul.f32 %v3361, 1.442695
  %v3413 = vpow.pop %v3412
  %v3414 = vmul.f32 %v3362, 1.442695
  %v3415 = vpow.pop %v3414
  %v3416 = vmul.f32 %v3363, 1.442695
  %v3417 = vpow.pop %v3416
  %v3418 = vmul.f32 %v3364, 1.442695
  %v3419 = vpow.pop %v3418
  %v3420 = vmul.f32 %v3365, 1.442695
  %v3421 = vpow.pop %v3420
  %v3422 = vmul.f32 %v3366, 1.442695
  %v3423 = vpow.pop %v3422
  %v3424 = vmul.f32 %v3367, 1.442695
  %v3425 = vpow.pop %v3424
  %v3426 = vmul.f32 %v3368, 1.442695
  %v3427 = vpow.pop %v3426
  %v3428 = vmul.f32 %v3369, 1.442695
  %v3429 = vpow.pop %v3428
  %v3430 = vmul.f32 %v3370, 1.442695
  %v3431 = vpow.pop %v3430
  %v3432 = vmul.f32 %v3371, 1.442695
  %v3433 = vpow.pop %v3432
  %v3434 = vmul.f32 %v3372, 1.442695
  %v3435 = vpow.pop %v3434
  %v3436 = vmul.f32 %v3373, 1.442695
  %v3437 = vpow.pop %v3436
  %v3438 = vadd.f32 %v3375, 1.0
  %v3439 = vadd.f32 %v3377, 1.0
  %v3440 = vadd.f32 %v3379, 1.0
  %v3441 = vadd.f32 %v3381, 1.0
  %v3442 = vadd.f32 %v3383, 1.0
  %v3443 = vadd.f32 %v3385, 1.0
  %v3444 = vadd.f32 %v3387, 1.0
  %v3445 = vadd.f32 %v3389, 1.0
  %v3446 = vadd.f32 %v3391, 1.0
  %v3447 = vadd.f32 %v3393, 1.0
  %v3448 = vadd.f32 %v3395, 1.0
  %v3449 = vadd.f32 %v3397, 1.0
  %v3450 = vadd.f32 %v3399, 1.0
  %v3451 = vadd.f32 %v3401, 1.0
  %v3452 = vadd.f32 %v3403, 1.0
  %v3453 = vadd.f32 %v3405, 1.0
  %v3454 = vadd.f32 %v3407, 1.0
  %v3455 = vadd.f32 %v3409, 1.0
  %v3456 = vadd.f32 %v3411, 1.0
  %v3457 = vadd.f32 %v3413, 1.0
  %v3458 = vadd.f32 %v3415, 1.0
  %v3459 = vadd.f32 %v3417, 1.0
  %v3460 = vadd.f32 %v3419, 1.0
  %v3461 = vadd.f32 %v3421, 1.0
  %v3462 = vadd.f32 %v3423, 1.0
  %v3463 = vadd.f32 %v3425, 1.0
  %v3464 = vadd.f32 %v3427, 1.0
  %v3465 = vadd.f32 %v3429, 1.0
  %v3466 = vadd.f32 %v3431, 1.0
  %v3467 = vadd.f32 %v3433, 1.0
  %v3468 = vadd.f32 %v3435, 1.0
  %v3469 = vadd.f32 %v3437, 1.0
  %v3470 = vrcp.pop %v3438
  %v3471 = vmul.f32 %v3438, %v3470
  %v3472 = vsub.f32 1.0, %v3471
  %v3473 = vmul.f32 %v3470, %v3472
  %v3474 = vadd.f32 %v3470, %v3473
  %vm3475 = vweird.f32 %v3438
  %vm3476 = vweird.f32 %v3470
  %vm3477 = vmor %vm3475, %vm3476
  %v3478 = vsel %vm3477, %v3470, %v3474
  %v3479 = vand.u32 2147483647, %v3438
  %vm3480 = vcmp.eq.f32.partialorder %v3479, 8.507059e+37
  %v3481 = vand.u32 %v3438, 2147483648
  %v3482 = vor.u32 1.1754944e-38, %v3481
  %v3483 = vsel %vm3480, %v3482, %v3478
  %v3484 = vmul.f32 1.0, %v3483
  %v3485 = vrcp.pop %v3439
  %v3486 = vmul.f32 %v3439, %v3485
  %v3487 = vsub.f32 1.0, %v3486
  %v3488 = vmul.f32 %v3485, %v3487
  %v3489 = vadd.f32 %v3485, %v3488
  %vm3490 = vweird.f32 %v3439
  %vm3491 = vweird.f32 %v3485
  %vm3492 = vmor %vm3490, %vm3491
  %v3493 = vsel %vm3492, %v3485, %v3489
  %v3494 = vand.u32 2147483647, %v3439
  %vm3495 = vcmp.eq.f32.partialorder %v3494, 8.507059e+37
  %v3496 = vand.u32 %v3439, 2147483648
  %v3497 = vor.u32 1.1754944e-38, %v3496
  %v3498 = vsel %vm3495, %v3497, %v3493
  %v3499 = vmul.f32 1.0, %v3498
  %v3500 = vrcp.pop %v3440
  %v3501 = vmul.f32 %v3440, %v3500
  %v3502 = vsub.f32 1.0, %v3501
  %v3503 = vmul.f32 %v3500, %v3502
  %v3504 = vadd.f32 %v3500, %v3503
  %vm3505 = vweird.f32 %v3440
  %vm3506 = vweird.f32 %v3500
  %vm3507 = vmor %vm3505, %vm3506
  %v3508 = vsel %vm3507, %v3500, %v3504
  %v3509 = vand.u32 2147483647, %v3440
  %vm3510 = vcmp.eq.f32.partialorder %v3509, 8.507059e+37
  %v3511 = vand.u32 %v3440, 2147483648
  %v3512 = vor.u32 1.1754944e-38, %v3511
  %v3513 = vsel %vm3510, %v3512, %v3508
  %v3514 = vmul.f32 1.0, %v3513
  %v3515 = vrcp.pop %v3441
  %v3516 = vmul.f32 %v3441, %v3515
  %v3517 = vsub.f32 1.0, %v3516
  %v3518 = vmul.f32 %v3515, %v3517
  %v3519 = vadd.f32 %v3515, %v3518
  %vm3520 = vweird.f32 %v3441
  %vm3521 = vweird.f32 %v3515
  %vm3522 = vmor %vm3520, %vm3521
  %v3523 = vsel %vm3522, %v3515, %v3519
  %v3524 = vand.u32 2147483647, %v3441
  %vm3525 = vcmp.eq.f32.partialorder %v3524, 8.507059e+37
  %v3526 = vand.u32 %v3441, 2147483648
  %v3527 = vor.u32 1.1754944e-38, %v3526
  %v3528 = vsel %vm3525, %v3527, %v3523
  %v3529 = vmul.f32 1.0, %v3528
  %v3530 = vrcp.pop %v3442
  %v3531 = vmul.f32 %v3442, %v3530
  %v3532 = vsub.f32 1.0, %v3531
  %v3533 = vmul.f32 %v3530, %v3532
  %v3534 = vadd.f32 %v3530, %v3533
  %vm3535 = vweird.f32 %v3442
  %vm3536 = vweird.f32 %v3530
  %vm3537 = vmor %vm3535, %vm3536
  %v3538 = vsel %vm3537, %v3530, %v3534
  %v3539 = vand.u32 2147483647, %v3442
  %vm3540 = vcmp.eq.f32.partialorder %v3539, 8.507059e+37
  %v3541 = vand.u32 %v3442, 2147483648
  %v3542 = vor.u32 1.1754944e-38, %v3541
  %v3543 = vsel %vm3540, %v3542, %v3538
  %v3544 = vmul.f32 1.0, %v3543
  %v3545 = vrcp.pop %v3443
  %v3546 = vmul.f32 %v3443, %v3545
  %v3547 = vsub.f32 1.0, %v3546
  %v3548 = vmul.f32 %v3545, %v3547
  %v3549 = vadd.f32 %v3545, %v3548
  %vm3550 = vweird.f32 %v3443
  %vm3551 = vweird.f32 %v3545
  %vm3552 = vmor %vm3550, %vm3551
  %v3553 = vsel %vm3552, %v3545, %v3549
  %v3554 = vand.u32 2147483647, %v3443
  %vm3555 = vcmp.eq.f32.partialorder %v3554, 8.507059e+37
  %v3556 = vand.u32 %v3443, 2147483648
  %v3557 = vor.u32 1.1754944e-38, %v3556
  %v3558 = vsel %vm3555, %v3557, %v3553
  %v3559 = vmul.f32 1.0, %v3558
  %v3560 = vrcp.pop %v3444
  %v3561 = vmul.f32 %v3444, %v3560
  %v3562 = vsub.f32 1.0, %v3561
  %v3563 = vmul.f32 %v3560, %v3562
  %v3564 = vadd.f32 %v3560, %v3563
  %vm3565 = vweird.f32 %v3444
  %vm3566 = vweird.f32 %v3560
  %vm3567 = vmor %vm3565, %vm3566
  %v3568 = vsel %vm3567, %v3560, %v3564
  %v3569 = vand.u32 2147483647, %v3444
  %vm3570 = vcmp.eq.f32.partialorder %v3569, 8.507059e+37
  %v3571 = vand.u32 %v3444, 2147483648
  %v3572 = vor.u32 1.1754944e-38, %v3571
  %v3573 = vsel %vm3570, %v3572, %v3568
  %v3574 = vmul.f32 1.0, %v3573
  %v3575 = vrcp.pop %v3445
  %v3576 = vmul.f32 %v3445, %v3575
  %v3577 = vsub.f32 1.0, %v3576
  %v3578 = vmul.f32 %v3575, %v3577
  %v3579 = vadd.f32 %v3575, %v3578
  %vm3580 = vweird.f32 %v3445
  %vm3581 = vweird.f32 %v3575
  %vm3582 = vmor %vm3580, %vm3581
  %v3583 = vsel %vm3582, %v3575, %v3579
  %v3584 = vand.u32 2147483647, %v3445
  %vm3585 = vcmp.eq.f32.partialorder %v3584, 8.507059e+37
  %v3586 = vand.u32 %v3445, 2147483648
  %v3587 = vor.u32 1.1754944e-38, %v3586
  %v3588 = vsel %vm3585, %v3587, %v3583
  %v3589 = vmul.f32 1.0, %v3588
  %v3590 = vrcp.pop %v3446
  %v3591 = vmul.f32 %v3446, %v3590
  %v3592 = vsub.f32 1.0, %v3591
  %v3593 = vmul.f32 %v3590, %v3592
  %v3594 = vadd.f32 %v3590, %v3593
  %vm3595 = vweird.f32 %v3446
  %vm3596 = vweird.f32 %v3590
  %vm3597 = vmor %vm3595, %vm3596
  %v3598 = vsel %vm3597, %v3590, %v3594
  %v3599 = vand.u32 2147483647, %v3446
  %vm3600 = vcmp.eq.f32.partialorder %v3599, 8.507059e+37
  %v3601 = vand.u32 %v3446, 2147483648
  %v3602 = vor.u32 1.1754944e-38, %v3601
  %v3603 = vsel %vm3600, %v3602, %v3598
  %v3604 = vmul.f32 1.0, %v3603
  %v3605 = vrcp.pop %v3447
  %v3606 = vmul.f32 %v3447, %v3605
  %v3607 = vsub.f32 1.0, %v3606
  %v3608 = vmul.f32 %v3605, %v3607
  %v3609 = vadd.f32 %v3605, %v3608
  %vm3610 = vweird.f32 %v3447
  %vm3611 = vweird.f32 %v3605
  %vm3612 = vmor %vm3610, %vm3611
  %v3613 = vsel %vm3612, %v3605, %v3609
  %v3614 = vand.u32 2147483647, %v3447
  %vm3615 = vcmp.eq.f32.partialorder %v3614, 8.507059e+37
  %v3616 = vand.u32 %v3447, 2147483648
  %v3617 = vor.u32 1.1754944e-38, %v3616
  %v3618 = vsel %vm3615, %v3617, %v3613
  %v3619 = vmul.f32 1.0, %v3618
  %v3620 = vrcp.pop %v3448
  %v3621 = vmul.f32 %v3448, %v3620
  %v3622 = vsub.f32 1.0, %v3621
  %v3623 = vmul.f32 %v3620, %v3622
  %v3624 = vadd.f32 %v3620, %v3623
  %vm3625 = vweird.f32 %v3448
  %vm3626 = vweird.f32 %v3620
  %vm3627 = vmor %vm3625, %vm3626
  %v3628 = vsel %vm3627, %v3620, %v3624
  %v3629 = vand.u32 2147483647, %v3448
  %vm3630 = vcmp.eq.f32.partialorder %v3629, 8.507059e+37
  %v3631 = vand.u32 %v3448, 2147483648
  %v3632 = vor.u32 1.1754944e-38, %v3631
  %v3633 = vsel %vm3630, %v3632, %v3628
  %v3634 = vmul.f32 1.0, %v3633
  %v3635 = vrcp.pop %v3449
  %v3636 = vmul.f32 %v3449, %v3635
  %v3637 = vsub.f32 1.0, %v3636
  %v3638 = vmul.f32 %v3635, %v3637
  %v3639 = vadd.f32 %v3635, %v3638
  %vm3640 = vweird.f32 %v3449
  %vm3641 = vweird.f32 %v3635
  %vm3642 = vmor %vm3640, %vm3641
  %v3643 = vsel %vm3642, %v3635, %v3639
  %v3644 = vand.u32 2147483647, %v3449
  %vm3645 = vcmp.eq.f32.partialorder %v3644, 8.507059e+37
  %v3646 = vand.u32 %v3449, 2147483648
  %v3647 = vor.u32 1.1754944e-38, %v3646
  %v3648 = vsel %vm3645, %v3647, %v3643
  %v3649 = vmul.f32 1.0, %v3648
  %v3650 = vrcp.pop %v3450
  %v3651 = vmul.f32 %v3450, %v3650
  %v3652 = vsub.f32 1.0, %v3651
  %v3653 = vmul.f32 %v3650, %v3652
  %v3654 = vadd.f32 %v3650, %v3653
  %vm3655 = vweird.f32 %v3450
  %vm3656 = vweird.f32 %v3650
  %vm3657 = vmor %vm3655, %vm3656
  %v3658 = vsel %vm3657, %v3650, %v3654
  %v3659 = vand.u32 2147483647, %v3450
  %vm3660 = vcmp.eq.f32.partialorder %v3659, 8.507059e+37
  %v3661 = vand.u32 %v3450, 2147483648
  %v3662 = vor.u32 1.1754944e-38, %v3661
  %v3663 = vsel %vm3660, %v3662, %v3658
  %v3664 = vmul.f32 1.0, %v3663
  %v3665 = vrcp.pop %v3451
  %v3666 = vmul.f32 %v3451, %v3665
  %v3667 = vsub.f32 1.0, %v3666
  %v3668 = vmul.f32 %v3665, %v3667
  %v3669 = vadd.f32 %v3665, %v3668
  %vm3670 = vweird.f32 %v3451
  %vm3671 = vweird.f32 %v3665
  %vm3672 = vmor %vm3670, %vm3671
  %v3673 = vsel %vm3672, %v3665, %v3669
  %v3674 = vand.u32 2147483647, %v3451
  %vm3675 = vcmp.eq.f32.partialorder %v3674, 8.507059e+37
  %v3676 = vand.u32 %v3451, 2147483648
  %v3677 = vor.u32 1.1754944e-38, %v3676
  %v3678 = vsel %vm3675, %v3677, %v3673
  %v3679 = vmul.f32 1.0, %v3678
  %v3680 = vrcp.pop %v3452
  %v3681 = vmul.f32 %v3452, %v3680
  %v3682 = vsub.f32 1.0, %v3681
  %v3683 = vmul.f32 %v3680, %v3682
  %v3684 = vadd.f32 %v3680, %v3683
  %vm3685 = vweird.f32 %v3452
  %vm3686 = vweird.f32 %v3680
  %vm3687 = vmor %vm3685, %vm3686
  %v3688 = vsel %vm3687, %v3680, %v3684
  %v3689 = vand.u32 2147483647, %v3452
  %vm3690 = vcmp.eq.f32.partialorder %v3689, 8.507059e+37
  %v3691 = vand.u32 %v3452, 2147483648
  %v3692 = vor.u32 1.1754944e-38, %v3691
  %v3693 = vsel %vm3690, %v3692, %v3688
  %v3694 = vmul.f32 1.0, %v3693
  %v3695 = vrcp.pop %v3453
  %v3696 = vmul.f32 %v3453, %v3695
  %v3697 = vsub.f32 1.0, %v3696
  %v3698 = vmul.f32 %v3695, %v3697
  %v3699 = vadd.f32 %v3695, %v3698
  %vm3700 = vweird.f32 %v3453
  %vm3701 = vweird.f32 %v3695
  %vm3702 = vmor %vm3700, %vm3701
  %v3703 = vsel %vm3702, %v3695, %v3699
  %v3704 = vand.u32 2147483647, %v3453
  %vm3705 = vcmp.eq.f32.partialorder %v3704, 8.507059e+37
  %v3706 = vand.u32 %v3453, 2147483648
  %v3707 = vor.u32 1.1754944e-38, %v3706
  %v3708 = vsel %vm3705, %v3707, %v3703
  %v3709 = vmul.f32 1.0, %v3708
  %v3710 = vrcp.pop %v3454
  %v3711 = vmul.f32 %v3454, %v3710
  %v3712 = vsub.f32 1.0, %v3711
  %v3713 = vmul.f32 %v3710, %v3712
  %v3714 = vadd.f32 %v3710, %v3713
  %vm3715 = vweird.f32 %v3454
  %vm3716 = vweird.f32 %v3710
  %vm3717 = vmor %vm3715, %vm3716
  %v3718 = vsel %vm3717, %v3710, %v3714
  %v3719 = vand.u32 2147483647, %v3454
  %vm3720 = vcmp.eq.f32.partialorder %v3719, 8.507059e+37
  %v3721 = vand.u32 %v3454, 2147483648
  %v3722 = vor.u32 1.1754944e-38, %v3721
  %v3723 = vsel %vm3720, %v3722, %v3718
  %v3724 = vmul.f32 1.0, %v3723
  %v3725 = vrcp.pop %v3455
  %v3726 = vmul.f32 %v3455, %v3725
  %v3727 = vsub.f32 1.0, %v3726
  %v3728 = vmul.f32 %v3725, %v3727
  %v3729 = vadd.f32 %v3725, %v3728
  %vm3730 = vweird.f32 %v3455
  %vm3731 = vweird.f32 %v3725
  %vm3732 = vmor %vm3730, %vm3731
  %v3733 = vsel %vm3732, %v3725, %v3729
  %v3734 = vand.u32 2147483647, %v3455
  %vm3735 = vcmp.eq.f32.partialorder %v3734, 8.507059e+37
  %v3736 = vand.u32 %v3455, 2147483648
  %v3737 = vor.u32 1.1754944e-38, %v3736
  %v3738 = vsel %vm3735, %v3737, %v3733
  %v3739 = vmul.f32 1.0, %v3738
  %v3740 = vrcp.pop %v3456
  %v3741 = vmul.f32 %v3456, %v3740
  %v3742 = vsub.f32 1.0, %v3741
  %v3743 = vmul.f32 %v3740, %v3742
  %v3744 = vadd.f32 %v3740, %v3743
  %vm3745 = vweird.f32 %v3456
  %vm3746 = vweird.f32 %v3740
  %vm3747 = vmor %vm3745, %vm3746
  %v3748 = vsel %vm3747, %v3740, %v3744
  %v3749 = vand.u32 2147483647, %v3456
  %vm3750 = vcmp.eq.f32.partialorder %v3749, 8.507059e+37
  %v3751 = vand.u32 %v3456, 2147483648
  %v3752 = vor.u32 1.1754944e-38, %v3751
  %v3753 = vsel %vm3750, %v3752, %v3748
  %v3754 = vmul.f32 1.0, %v3753
  %v3755 = vrcp.pop %v3457
  %v3756 = vmul.f32 %v3457, %v3755
  %v3757 = vsub.f32 1.0, %v3756
  %v3758 = vmul.f32 %v3755, %v3757
  %v3759 = vadd.f32 %v3755, %v3758
  %vm3760 = vweird.f32 %v3457
  %vm3761 = vweird.f32 %v3755
  %vm3762 = vmor %vm3760, %vm3761
  %v3763 = vsel %vm3762, %v3755, %v3759
  %v3764 = vand.u32 2147483647, %v3457
  %vm3765 = vcmp.eq.f32.partialorder %v3764, 8.507059e+37
  %v3766 = vand.u32 %v3457, 2147483648
  %v3767 = vor.u32 1.1754944e-38, %v3766
  %v3768 = vsel %vm3765, %v3767, %v3763
  %v3769 = vmul.f32 1.0, %v3768
  %v3770 = vrcp.pop %v3458
  %v3771 = vmul.f32 %v3458, %v3770
  %v3772 = vsub.f32 1.0, %v3771
  %v3773 = vmul.f32 %v3770, %v3772
  %v3774 = vadd.f32 %v3770, %v3773
  %vm3775 = vweird.f32 %v3458
  %vm3776 = vweird.f32 %v3770
  %vm3777 = vmor %vm3775, %vm3776
  %v3778 = vsel %vm3777, %v3770, %v3774
  %v3779 = vand.u32 2147483647, %v3458
  %vm3780 = vcmp.eq.f32.partialorder %v3779, 8.507059e+37
  %v3781 = vand.u32 %v3458, 2147483648
  %v3782 = vor.u32 1.1754944e-38, %v3781
  %v3783 = vsel %vm3780, %v3782, %v3778
  %v3784 = vmul.f32 1.0, %v3783
  %v3785 = vrcp.pop %v3459
  %v3786 = vmul.f32 %v3459, %v3785
  %v3787 = vsub.f32 1.0, %v3786
  %v3788 = vmul.f32 %v3785, %v3787
  %v3789 = vadd.f32 %v3785, %v3788
  %vm3790 = vweird.f32 %v3459
  %vm3791 = vweird.f32 %v3785
  %vm3792 = vmor %vm3790, %vm3791
  %v3793 = vsel %vm3792, %v3785, %v3789
  %v3794 = vand.u32 2147483647, %v3459
  %vm3795 = vcmp.eq.f32.partialorder %v3794, 8.507059e+37
  %v3796 = vand.u32 %v3459, 2147483648
  %v3797 = vor.u32 1.1754944e-38, %v3796
  %v3798 = vsel %vm3795, %v3797, %v3793
  %v3799 = vmul.f32 1.0, %v3798
  %v3800 = vrcp.pop %v3460
  %v3801 = vmul.f32 %v3460, %v3800
  %v3802 = vsub.f32 1.0, %v3801
  %v3803 = vmul.f32 %v3800, %v3802
  %v3804 = vadd.f32 %v3800, %v3803
  %vm3805 = vweird.f32 %v3460
  %vm3806 = vweird.f32 %v3800
  %vm3807 = vmor %vm3805, %vm3806
  %v3808 = vsel %vm3807, %v3800, %v3804
  %v3809 = vand.u32 2147483647, %v3460
  %vm3810 = vcmp.eq.f32.partialorder %v3809, 8.507059e+37
  %v3811 = vand.u32 %v3460, 2147483648
  %v3812 = vor.u32 1.1754944e-38, %v3811
  %v3813 = vsel %vm3810, %v3812, %v3808
  %v3814 = vmul.f32 1.0, %v3813
  %v3815 = vrcp.pop %v3461
  %v3816 = vmul.f32 %v3461, %v3815
  %v3817 = vsub.f32 1.0, %v3816
  %v3818 = vmul.f32 %v3815, %v3817
  %v3819 = vadd.f32 %v3815, %v3818
  %vm3820 = vweird.f32 %v3461
  %vm3821 = vweird.f32 %v3815
  %vm3822 = vmor %vm3820, %vm3821
  %v3823 = vsel %vm3822, %v3815, %v3819
  %v3824 = vand.u32 2147483647, %v3461
  %vm3825 = vcmp.eq.f32.partialorder %v3824, 8.507059e+37
  %v3826 = vand.u32 %v3461, 2147483648
  %v3827 = vor.u32 1.1754944e-38, %v3826
  %v3828 = vsel %vm3825, %v3827, %v3823
  %v3829 = vmul.f32 1.0, %v3828
  %v3830 = vrcp.pop %v3462
  %v3831 = vmul.f32 %v3462, %v3830
  %v3832 = vsub.f32 1.0, %v3831
  %v3833 = vmul.f32 %v3830, %v3832
  %v3834 = vadd.f32 %v3830, %v3833
  %vm3835 = vweird.f32 %v3462
  %vm3836 = vweird.f32 %v3830
  %vm3837 = vmor %vm3835, %vm3836
  %v3838 = vsel %vm3837, %v3830, %v3834
  %v3839 = vand.u32 2147483647, %v3462
  %vm3840 = vcmp.eq.f32.partialorder %v3839, 8.507059e+37
  %v3841 = vand.u32 %v3462, 2147483648
  %v3842 = vor.u32 1.1754944e-38, %v3841
  %v3843 = vsel %vm3840, %v3842, %v3838
  %v3844 = vmul.f32 1.0, %v3843
  %v3845 = vrcp.pop %v3463
  %v3846 = vmul.f32 %v3463, %v3845
  %v3847 = vsub.f32 1.0, %v3846
  %v3848 = vmul.f32 %v3845, %v3847
  %v3849 = vadd.f32 %v3845, %v3848
  %vm3850 = vweird.f32 %v3463
  %vm3851 = vweird.f32 %v3845
  %vm3852 = vmor %vm3850, %vm3851
  %v3853 = vsel %vm3852, %v3845, %v3849
  %v3854 = vand.u32 2147483647, %v3463
  %vm3855 = vcmp.eq.f32.partialorder %v3854, 8.507059e+37
  %v3856 = vand.u32 %v3463, 2147483648
  %v3857 = vor.u32 1.1754944e-38, %v3856
  %v3858 = vsel %vm3855, %v3857, %v3853
  %v3859 = vmul.f32 1.0, %v3858
  %v3860 = vrcp.pop %v3464
  %v3861 = vmul.f32 %v3464, %v3860
  %v3862 = vsub.f32 1.0, %v3861
  %v3863 = vmul.f32 %v3860, %v3862
  %v3864 = vadd.f32 %v3860, %v3863
  %vm3865 = vweird.f32 %v3464
  %vm3866 = vweird.f32 %v3860
  %vm3867 = vmor %vm3865, %vm3866
  %v3868 = vsel %vm3867, %v3860, %v3864
  %v3869 = vand.u32 2147483647, %v3464
  %vm3870 = vcmp.eq.f32.partialorder %v3869, 8.507059e+37
  %v3871 = vand.u32 %v3464, 2147483648
  %v3872 = vor.u32 1.1754944e-38, %v3871
  %v3873 = vsel %vm3870, %v3872, %v3868
  %v3874 = vmul.f32 1.0, %v3873
  %v3875 = vrcp.pop %v3465
  %v3876 = vmul.f32 %v3465, %v3875
  %v3877 = vsub.f32 1.0, %v3876
  %v3878 = vmul.f32 %v3875, %v3877
  %v3879 = vadd.f32 %v3875, %v3878
  %vm3880 = vweird.f32 %v3465
  %vm3881 = vweird.f32 %v3875
  %vm3882 = vmor %vm3880, %vm3881
  %v3883 = vsel %vm3882, %v3875, %v3879
  %v3884 = vand.u32 2147483647, %v3465
  %vm3885 = vcmp.eq.f32.partialorder %v3884, 8.507059e+37
  %v3886 = vand.u32 %v3465, 2147483648
  %v3887 = vor.u32 1.1754944e-38, %v3886
  %v3888 = vsel %vm3885, %v3887, %v3883
  %v3889 = vmul.f32 1.0, %v3888
  %v3890 = vrcp.pop %v3466
  %v3891 = vmul.f32 %v3466, %v3890
  %v3892 = vsub.f32 1.0, %v3891
  %v3893 = vmul.f32 %v3890, %v3892
  %v3894 = vadd.f32 %v3890, %v3893
  %vm3895 = vweird.f32 %v3466
  %vm3896 = vweird.f32 %v3890
  %vm3897 = vmor %vm3895, %vm3896
  %v3898 = vsel %vm3897, %v3890, %v3894
  %v3899 = vand.u32 2147483647, %v3466
  %vm3900 = vcmp.eq.f32.partialorder %v3899, 8.507059e+37
  %v3901 = vand.u32 %v3466, 2147483648
  %v3902 = vor.u32 1.1754944e-38, %v3901
  %v3903 = vsel %vm3900, %v3902, %v3898
  %v3904 = vmul.f32 1.0, %v3903
  %v3905 = vrcp.pop %v3467
  %v3906 = vmul.f32 %v3467, %v3905
  %v3907 = vsub.f32 1.0, %v3906
  %v3908 = vmul.f32 %v3905, %v3907
  %v3909 = vadd.f32 %v3905, %v3908
  %vm3910 = vweird.f32 %v3467
  %vm3911 = vweird.f32 %v3905
  %vm3912 = vmor %vm3910, %vm3911
  %v3913 = vsel %vm3912, %v3905, %v3909
  %v3914 = vand.u32 2147483647, %v3467
  %vm3915 = vcmp.eq.f32.partialorder %v3914, 8.507059e+37
  %v3916 = vand.u32 %v3467, 2147483648
  %v3917 = vor.u32 1.1754944e-38, %v3916
  %v3918 = vsel %vm3915, %v3917, %v3913
  %v3919 = vmul.f32 1.0, %v3918
  %v3920 = vrcp.pop %v3468
  %v3921 = vmul.f32 %v3468, %v3920
  %v3922 = vsub.f32 1.0, %v3921
  %v3923 = vmul.f32 %v3920, %v3922
  %v3924 = vadd.f32 %v3920, %v3923
  %vm3925 = vweird.f32 %v3468
  %vm3926 = vweird.f32 %v3920
  %vm3927 = vmor %vm3925, %vm3926
  %v3928 = vsel %vm3927, %v3920, %v3924
  %v3929 = vand.u32 2147483647, %v3468
  %vm3930 = vcmp.eq.f32.partialorder %v3929, 8.507059e+37
  %v3931 = vand.u32 %v3468, 2147483648
  %v3932 = vor.u32 1.1754944e-38, %v3931
  %v3933 = vsel %vm3930, %v3932, %v3928
  %v3934 = vmul.f32 1.0, %v3933
  %v3935 = vrcp.pop %v3469
  %v3936 = vmul.f32 %v3469, %v3935
  %v3937 = vsub.f32 1.0, %v3936
  %v3938 = vmul.f32 %v3935, %v3937
  %v3939 = vadd.f32 %v3935, %v3938
  %vm3940 = vweird.f32 %v3469
  %vm3941 = vweird.f32 %v3935
  %vm3942 = vmor %vm3940, %vm3941
  %v3943 = vsel %vm3942, %v3935, %v3939
  %v3944 = vand.u32 2147483647, %v3469
  %vm3945 = vcmp.eq.f32.partialorder %v3944, 8.507059e+37
  %v3946 = vand.u32 %v3469, 2147483648
  %v3947 = vor.u32 1.1754944e-38, %v3946
  %v3948 = vsel %vm3945, %v3947, %v3943
  %v3949 = vmul.f32 1.0, %v3948
  %v3950 = vmul.f32 %v3216, %v3484
  %v3951 = vmul.f32 %v3220, %v3499
  %v3952 = vmul.f32 %v3224, %v3514
  %v3953 = vmul.f32 %v3228, %v3529
  %v3954 = vmul.f32 %v3232, %v3544
  %v3955 = vmul.f32 %v3236, %v3559
  %v3956 = vmul.f32 %v3240, %v3574
  %v3957 = vmul.f32 %v3244, %v3589
  %v3958 = vmul.f32 %v3248, %v3604
  %v3959 = vmul.f32 %v3252, %v3619
  %v3960 = vmul.f32 %v3256, %v3634
  %v3961 = vmul.f32 %v3260, %v3649
  %v3962 = vmul.f32 %v3264, %v3664
  %v3963 = vmul.f32 %v3268, %v3679
  %v3964 = vmul.f32 %v3272, %v3694
  %v3965 = vmul.f32 %v3276, %v3709
  %v3966 = vmul.f32 %v3280, %v3724
  %v3967 = vmul.f32 %v3284, %v3739
  %v3968 = vmul.f32 %v3288, %v3754
  %v3969 = vmul.f32 %v3292, %v3769
  %v3970 = vmul.f32 %v3296, %v3784
  %v3971 = vmul.f32 %v3300, %v3799
  %v3972 = vmul.f32 %v3304, %v3814
  %v3973 = vmul.f32 %v3308, %v3829
  %v3974 = vmul.f32 %v3312, %v3844
  %v3975 = vmul.f32 %v3316, %v3859
  %v3976 = vmul.f32 %v3320, %v3874
  %v3977 = vmul.f32 %v3324, %v3889
  %v3978 = vmul.f32 %v3328, %v3904
  %v3979 = vmul.f32 %v3332, %v3919
  %v3980 = vmul.f32 %v3336, %v3934
  %v3981 = vmul.f32 %v3340, %v3949
  %v3982 = vld [vmem:[%s5] sm:$0xff]
  %v3983 = vld [vmem:[%s5 + $0x8] sm:$0xff]
  %v3984 = vld [vmem:[%s5 + $0x10] sm:$0xff]
  %v3985 = vld [vmem:[%s5 + $0x18] sm:$0xff]
  %v3986 = vld [vmem:[%s5 + $0x20] sm:$0xff]
  %v3987 = vld [vmem:[%s5 + $0x28] sm:$0xff]
  %v3988 = vld [vmem:[%s5 + $0x30] sm:$0xff]
  %v3989 = vld [vmem:[%s5 + $0x38] sm:$0xff]
  %v3990 = vld [vmem:[%s5 + $0x40] sm:$0xff]
  %v3991 = vld [vmem:[%s5 + $0x48] sm:$0xff]
  %v3992 = vld [vmem:[%s5 + $0x50] sm:$0xff]
  %v3993 = vld [vmem:[%s5 + $0x58] sm:$0xff]
  %v3994 = vld [vmem:[%s5 + $0x60] sm:$0xff]
  %v3995 = vld [vmem:[%s5 + $0x68] sm:$0xff]
  %v3996 = vld [vmem:[%s5 + $0x70] sm:$0xff]
  %v3997 = vld [vmem:[%s5 + $0x78] sm:$0xff]
  %v3998 = vld [vmem:[%s6] sm:$0x1]
  %v4000 = vperm.slane %v3998, 0
  %v4002 = vand.u32 %v3997, 4294901760
  %4003 = vmatpush.msra.mxu0 %v4002
  %v4004 = vand.u32 %v3996, 4294901760
  %4005 = vmatpush.msra.mxu0 %v4004
  %v4006 = vand.u32 %v3995, 4294901760
  %4007 = vmatpush.msra.mxu0 %v4006
  %v4008 = vand.u32 %v3994, 4294901760
  %4009 = vmatpush.msra.mxu0 %v4008
  %v4010 = vand.u32 %v3993, 4294901760
  %4011 = vmatpush.msra.mxu0 %v4010
  %v4012 = vand.u32 %v3992, 4294901760
  %4013 = vmatpush.msra.mxu0 %v4012
  %v4014 = vand.u32 %v3991, 4294901760
  %4015 = vmatpush.msra.mxu0 %v4014
  %v4016 = vand.u32 %v3990, 4294901760
  %4017 = vmatpush.msra.mxu0 %v4016
  %v4018 = vand.u32 %v3989, 4294901760
  %4019 = vmatpush.msra.mxu0 %v4018
  %v4020 = vand.u32 %v3988, 4294901760
  %4021 = vmatpush.msra.mxu0 %v4020
  %v4022 = vand.u32 %v3987, 4294901760
  %4023 = vmatpush.msra.mxu0 %v4022
  %v4024 = vand.u32 %v3986, 4294901760
  %4025 = vmatpush.msra.mxu0 %v4024
  %v4026 = vand.u32 %v3985, 4294901760
  %4027 = vmatpush.msra.mxu0 %v4026
  %v4028 = vand.u32 %v3984, 4294901760
  %4029 = vmatpush.msra.mxu0 %v4028
  %v4030 = vand.u32 %v3983, 4294901760
  %4031 = vmatpush.msra.mxu0 %v4030
  %v4032 = vand.u32 %v3982, 4294901760
  %4033 = vmatpush.msra.mxu0 %v4032
  %v4034 = vand.u32 %v3950, 4294901760
  %v4035 = vsub.f32 %v3950, %v4034
  %v4036 = vand.u32 %v4035, 4294901760
  %v4037 = vsub.f32 %v4035, %v4036
  %v4038 = vand.u32 %v4037, 4294901760
  %4039 = vmatmul.f32.gmra.mxu0 %v4038
  %v4040 = vpop.f32.mrf.mxu0
  %v4041 = vadd.f32 %v4000, %v4040
  %v4042 = vand.u32 %v3951, 4294901760
  %v4043 = vsub.f32 %v3951, %v4042
  %v4044 = vand.u32 %v4043, 4294901760
  %v4045 = vsub.f32 %v4043, %v4044
  %v4046 = vand.u32 %v4045, 4294901760
  %4047 = vmatmul.f32.gmra.mxu0 %v4046
  %v4048 = vpop.f32.mrf.mxu0
  %v4049 = vadd.f32 %v4000, %v4048
  %v4050 = vand.u32 %v3952, 4294901760
  %v4051 = vsub.f32 %v3952, %v4050
  %v4052 = vand.u32 %v4051, 4294901760
  %v4053 = vsub.f32 %v4051, %v4052
  %v4054 = vand.u32 %v4053, 4294901760
  %4055 = vmatmul.f32.gmra.mxu0 %v4054
  %v4056 = vpop.f32.mrf.mxu0
  %v4057 = vadd.f32 %v4000, %v4056
  %v4058 = vand.u32 %v3953, 4294901760
  %v4059 = vsub.f32 %v3953, %v4058
  %v4060 = vand.u32 %v4059, 4294901760
  %v4061 = vsub.f32 %v4059, %v4060
  %v4062 = vand.u32 %v4061, 4294901760
  %4063 = vmatmul.f32.gmra.mxu0 %v4062
  %v4064 = vpop.f32.mrf.mxu0
  %v4065 = vadd.f32 %v4000, %v4064
  %v4066 = vand.u32 %v3954, 4294901760
  %v4067 = vsub.f32 %v3954, %v4066
  %v4068 = vand.u32 %v4067, 4294901760
  %v4069 = vsub.f32 %v4067, %v4068
  %v4070 = vand.u32 %v4069, 4294901760
  %4071 = vmatmul.f32.gmra.mxu0 %v4070
  %v4072 = vpop.f32.mrf.mxu0
  %v4073 = vadd.f32 %v4000, %v4072
  %v4074 = vand.u32 %v3955, 4294901760
  %v4075 = vsub.f32 %v3955, %v4074
  %v4076 = vand.u32 %v4075, 4294901760
  %v4077 = vsub.f32 %v4075, %v4076
  %v4078 = vand.u32 %v4077, 4294901760
  %4079 = vmatmul.f32.gmra.mxu0 %v4078
  %v4080 = vpop.f32.mrf.mxu0
  %v4081 = vadd.f32 %v4000, %v4080
  %v4082 = vand.u32 %v3956, 4294901760
  %v4083 = vsub.f32 %v3956, %v4082
  %v4084 = vand.u32 %v4083, 4294901760
  %v4085 = vsub.f32 %v4083, %v4084
  %v4086 = vand.u32 %v4085, 4294901760
  %4087 = vmatmul.f32.gmra.mxu0 %v4086
  %v4088 = vpop.f32.mrf.mxu0
  %v4089 = vadd.f32 %v4000, %v4088
  %v4090 = vand.u32 %v3957, 4294901760
  %v4091 = vsub.f32 %v3957, %v4090
  %v4092 = vand.u32 %v4091, 4294901760
  %v4093 = vsub.f32 %v4091, %v4092
  %v4094 = vand.u32 %v4093, 4294901760
  %4095 = vmatmul.f32.gmra.mxu0 %v4094
  %v4096 = vpop.f32.mrf.mxu0
  %v4097 = vadd.f32 %v4000, %v4096
  %v4098 = vand.u32 %v3958, 4294901760
  %v4099 = vsub.f32 %v3958, %v4098
  %v4100 = vand.u32 %v4099, 4294901760
  %v4101 = vsub.f32 %v4099, %v4100
  %v4102 = vand.u32 %v4101, 4294901760
  %4103 = vmatmul.f32.gmra.mxu0 %v4102
  %v4104 = vpop.f32.mrf.mxu0
  %v4105 = vadd.f32 %v4000, %v4104
  %v4106 = vand.u32 %v3959, 4294901760
  %v4107 = vsub.f32 %v3959, %v4106
  %v4108 = vand.u32 %v4107, 4294901760
  %v4109 = vsub.f32 %v4107, %v4108
  %v4110 = vand.u32 %v4109, 4294901760
  %4111 = vmatmul.f32.gmra.mxu0 %v4110
  %v4112 = vpop.f32.mrf.mxu0
  %v4113 = vadd.f32 %v4000, %v4112
  %v4114 = vand.u32 %v3960, 4294901760
  %v4115 = vsub.f32 %v3960, %v4114
  %v4116 = vand.u32 %v4115, 4294901760
  %v4117 = vsub.f32 %v4115, %v4116
  %v4118 = vand.u32 %v4117, 4294901760
  %4119 = vmatmul.f32.gmra.mxu0 %v4118
  %v4120 = vpop.f32.mrf.mxu0
  %v4121 = vadd.f32 %v4000, %v4120
  %v4122 = vand.u32 %v3961, 4294901760
  %v4123 = vsub.f32 %v3961, %v4122
  %v4124 = vand.u32 %v4123, 4294901760
  %v4125 = vsub.f32 %v4123, %v4124
  %v4126 = vand.u32 %v4125, 4294901760
  %4127 = vmatmul.f32.gmra.mxu0 %v4126
  %v4128 = vpop.f32.mrf.mxu0
  %v4129 = vadd.f32 %v4000, %v4128
  %v4130 = vand.u32 %v3962, 4294901760
  %v4131 = vsub.f32 %v3962, %v4130
  %v4132 = vand.u32 %v4131, 4294901760
  %v4133 = vsub.f32 %v4131, %v4132
  %v4134 = vand.u32 %v4133, 4294901760
  %4135 = vmatmul.f32.gmra.mxu0 %v4134
  %v4136 = vpop.f32.mrf.mxu0
  %v4137 = vadd.f32 %v4000, %v4136
  %v4138 = vand.u32 %v3963, 4294901760
  %v4139 = vsub.f32 %v3963, %v4138
  %v4140 = vand.u32 %v4139, 4294901760
  %v4141 = vsub.f32 %v4139, %v4140
  %v4142 = vand.u32 %v4141, 4294901760
  %4143 = vmatmul.f32.gmra.mxu0 %v4142
  %v4144 = vpop.f32.mrf.mxu0
  %v4145 = vadd.f32 %v4000, %v4144
  %v4146 = vand.u32 %v3964, 4294901760
  %v4147 = vsub.f32 %v3964, %v4146
  %v4148 = vand.u32 %v4147, 4294901760
  %v4149 = vsub.f32 %v4147, %v4148
  %v4150 = vand.u32 %v4149, 4294901760
  %4151 = vmatmul.f32.gmra.mxu0 %v4150
  %v4152 = vpop.f32.mrf.mxu0
  %v4153 = vadd.f32 %v4000, %v4152
  %v4154 = vand.u32 %v3965, 4294901760
  %v4155 = vsub.f32 %v3965, %v4154
  %v4156 = vand.u32 %v4155, 4294901760
  %v4157 = vsub.f32 %v4155, %v4156
  %v4158 = vand.u32 %v4157, 4294901760
  %4159 = vmatmul.f32.gmra.mxu0 %v4158
  %v4160 = vpop.f32.mrf.mxu0
  %v4161 = vadd.f32 %v4000, %v4160
  %v4162 = vand.u32 %v3966, 4294901760
  %v4163 = vsub.f32 %v3966, %v4162
  %v4164 = vand.u32 %v4163, 4294901760
  %v4165 = vsub.f32 %v4163, %v4164
  %v4166 = vand.u32 %v4165, 4294901760
  %4167 = vmatmul.f32.gmra.mxu0 %v4166
  %v4168 = vpop.f32.mrf.mxu0
  %v4169 = vadd.f32 %v4000, %v4168
  %v4170 = vand.u32 %v3967, 4294901760
  %v4171 = vsub.f32 %v3967, %v4170
  %v4172 = vand.u32 %v4171, 4294901760
  %v4173 = vsub.f32 %v4171, %v4172
  %v4174 = vand.u32 %v4173, 4294901760
  %4175 = vmatmul.f32.gmra.mxu0 %v4174
  %v4176 = vpop.f32.mrf.mxu0
  %v4177 = vadd.f32 %v4000, %v4176
  %v4178 = vand.u32 %v3968, 4294901760
  %v4179 = vsub.f32 %v3968, %v4178
  %v4180 = vand.u32 %v4179, 4294901760
  %v4181 = vsub.f32 %v4179, %v4180
  %v4182 = vand.u32 %v4181, 4294901760
  %4183 = vmatmul.f32.gmra.mxu0 %v4182
  %v4184 = vpop.f32.mrf.mxu0
  %v4185 = vadd.f32 %v4000, %v4184
  %v4186 = vand.u32 %v3969, 4294901760
  %v4187 = vsub.f32 %v3969, %v4186
  %v4188 = vand.u32 %v4187, 4294901760
  %v4189 = vsub.f32 %v4187, %v4188
  %v4190 = vand.u32 %v4189, 4294901760
  %4191 = vmatmul.f32.gmra.mxu0 %v4190
  %v4192 = vpop.f32.mrf.mxu0
  %v4193 = vadd.f32 %v4000, %v4192
  %v4194 = vand.u32 %v3970, 4294901760
  %v4195 = vsub.f32 %v3970, %v4194
  %v4196 = vand.u32 %v4195, 4294901760
  %v4197 = vsub.f32 %v4195, %v4196
  %v4198 = vand.u32 %v4197, 4294901760
  %4199 = vmatmul.f32.gmra.mxu0 %v4198
  %v4200 = vpop.f32.mrf.mxu0
  %v4201 = vadd.f32 %v4000, %v4200
  %v4202 = vand.u32 %v3971, 4294901760
  %v4203 = vsub.f32 %v3971, %v4202
  %v4204 = vand.u32 %v4203, 4294901760
  %v4205 = vsub.f32 %v4203, %v4204
  %v4206 = vand.u32 %v4205, 4294901760
  %4207 = vmatmul.f32.gmra.mxu0 %v4206
  %v4208 = vpop.f32.mrf.mxu0
  %v4209 = vadd.f32 %v4000, %v4208
  %v4210 = vand.u32 %v3972, 4294901760
  %v4211 = vsub.f32 %v3972, %v4210
  %v4212 = vand.u32 %v4211, 4294901760
  %v4213 = vsub.f32 %v4211, %v4212
  %v4214 = vand.u32 %v4213, 4294901760
  %4215 = vmatmul.f32.gmra.mxu0 %v4214
  %v4216 = vpop.f32.mrf.mxu0
  %v4217 = vadd.f32 %v4000, %v4216
  %v4218 = vand.u32 %v3973, 4294901760
  %v4219 = vsub.f32 %v3973, %v4218
  %v4220 = vand.u32 %v4219, 4294901760
  %v4221 = vsub.f32 %v4219, %v4220
  %v4222 = vand.u32 %v4221, 4294901760
  %4223 = vmatmul.f32.gmra.mxu0 %v4222
  %v4224 = vpop.f32.mrf.mxu0
  %v4225 = vadd.f32 %v4000, %v4224
  %v4226 = vand.u32 %v3974, 4294901760
  %v4227 = vsub.f32 %v3974, %v4226
  %v4228 = vand.u32 %v4227, 4294901760
  %v4229 = vsub.f32 %v4227, %v4228
  %v4230 = vand.u32 %v4229, 4294901760
  %4231 = vmatmul.f32.gmra.mxu0 %v4230
  %v4232 = vpop.f32.mrf.mxu0
  %v4233 = vadd.f32 %v4000, %v4232
  %v4234 = vand.u32 %v3975, 4294901760
  %v4235 = vsub.f32 %v3975, %v4234
  %v4236 = vand.u32 %v4235, 4294901760
  %v4237 = vsub.f32 %v4235, %v4236
  %v4238 = vand.u32 %v4237, 4294901760
  %4239 = vmatmul.f32.gmra.mxu0 %v4238
  %v4240 = vpop.f32.mrf.mxu0
  %v4241 = vadd.f32 %v4000, %v4240
  %v4242 = vand.u32 %v3976, 4294901760
  %v4243 = vsub.f32 %v3976, %v4242
  %v4244 = vand.u32 %v4243, 4294901760
  %v4245 = vsub.f32 %v4243, %v4244
  %v4246 = vand.u32 %v4245, 4294901760
  %4247 = vmatmul.f32.gmra.mxu0 %v4246
  %v4248 = vpop.f32.mrf.mxu0
  %v4249 = vadd.f32 %v4000, %v4248
  %v4250 = vand.u32 %v3977, 4294901760
  %v4251 = vsub.f32 %v3977, %v4250
  %v4252 = vand.u32 %v4251, 4294901760
  %v4253 = vsub.f32 %v4251, %v4252
  %v4254 = vand.u32 %v4253, 4294901760
  %4255 = vmatmul.f32.gmra.mxu0 %v4254
  %v4256 = vpop.f32.mrf.mxu0
  %v4257 = vadd.f32 %v4000, %v4256
  %v4258 = vand.u32 %v3978, 4294901760
  %v4259 = vsub.f32 %v3978, %v4258
  %v4260 = vand.u32 %v4259, 4294901760
  %v4261 = vsub.f32 %v4259, %v4260
  %v4262 = vand.u32 %v4261, 4294901760
  %4263 = vmatmul.f32.gmra.mxu0 %v4262
  %v4264 = vpop.f32.mrf.mxu0
  %v4265 = vadd.f32 %v4000, %v4264
  %v4266 = vand.u32 %v3979, 4294901760
  %v4267 = vsub.f32 %v3979, %v4266
  %v4268 = vand.u32 %v4267, 4294901760
  %v4269 = vsub.f32 %v4267, %v4268
  %v4270 = vand.u32 %v4269, 4294901760
  %4271 = vmatmul.f32.gmra.mxu0 %v4270
  %v4272 = vpop.f32.mrf.mxu0
  %v4273 = vadd.f32 %v4000, %v4272
  %v4274 = vand.u32 %v3980, 4294901760
  %v4275 = vsub.f32 %v3980, %v4274
  %v4276 = vand.u32 %v4275, 4294901760
  %v4277 = vsub.f32 %v4275, %v4276
  %v4278 = vand.u32 %v4277, 4294901760
  %4279 = vmatmul.f32.gmra.mxu0 %v4278
  %v4280 = vpop.f32.mrf.mxu0
  %v4281 = vadd.f32 %v4000, %v4280
  %v4282 = vand.u32 %v3981, 4294901760
  %v4283 = vsub.f32 %v3981, %v4282
  %v4284 = vand.u32 %v4283, 4294901760
  %v4285 = vsub.f32 %v4283, %v4284
  %v4286 = vand.u32 %v4285, 4294901760
  %4287 = vmatmul.f32.gmra.mxu0 %v4286
  %v4288 = vpop.f32.mrf.mxu0
  %v4289 = vadd.f32 %v4000, %v4288
  %4290 = vdwg.mxu0
  %v4291 = vand.u32 %v3997, 4294901760
  %v4292 = vsub.f32 %v3997, %v4291
  %v4293 = vand.u32 %v4292, 4294901760
  %v4294 = vsub.f32 %v4292, %v4293
  %v4295 = vand.u32 %v4294, 4294901760
  %4296 = vmatpush.msra.mxu0 %v4295
  %v4297 = vand.u32 %v3996, 4294901760
  %v4298 = vsub.f32 %v3996, %v4297
  %v4299 = vand.u32 %v4298, 4294901760
  %v4300 = vsub.f32 %v4298, %v4299
  %v4301 = vand.u32 %v4300, 4294901760
  %4302 = vmatpush.msra.mxu0 %v4301
  %v4303 = vand.u32 %v3995, 4294901760
  %v4304 = vsub.f32 %v3995, %v4303
  %v4305 = vand.u32 %v4304, 4294901760
  %v4306 = vsub.f32 %v4304, %v4305
  %v4307 = vand.u32 %v4306, 4294901760
  %4308 = vmatpush.msra.mxu0 %v4307
  %v4309 = vand.u32 %v3994, 4294901760
  %v4310 = vsub.f32 %v3994, %v4309
  %v4311 = vand.u32 %v4310, 4294901760
  %v4312 = vsub.f32 %v4310, %v4311
  %v4313 = vand.u32 %v4312, 4294901760
  %4314 = vmatpush.msra.mxu0 %v4313
  %v4315 = vand.u32 %v3993, 4294901760
  %v4316 = vsub.f32 %v3993, %v4315
  %v4317 = vand.u32 %v4316, 4294901760
  %v4318 = vsub.f32 %v4316, %v4317
  %v4319 = vand.u32 %v4318, 4294901760
  %4320 = vmatpush.msra.mxu0 %v4319
  %v4321 = vand.u32 %v3992, 4294901760
  %v4322 = vsub.f32 %v3992, %v4321
  %v4323 = vand.u32 %v4322, 4294901760
  %v4324 = vsub.f32 %v4322, %v4323
  %v4325 = vand.u32 %v4324, 4294901760
  %4326 = vmatpush.msra.mxu0 %v4325
  %v4327 = vand.u32 %v3991, 4294901760
  %v4328 = vsub.f32 %v3991, %v4327
  %v4329 = vand.u32 %v4328, 4294901760
  %v4330 = vsub.f32 %v4328, %v4329
  %v4331 = vand.u32 %v4330, 4294901760
  %4332 = vmatpush.msra.mxu0 %v4331
  %v4333 = vand.u32 %v3990, 4294901760
  %v4334 = vsub.f32 %v3990, %v4333
  %v4335 = vand.u32 %v4334, 4294901760
  %v4336 = vsub.f32 %v4334, %v4335
  %v4337 = vand.u32 %v4336, 4294901760
  %4338 = vmatpush.msra.mxu0 %v4337
  %v4339 = vand.u32 %v3989, 4294901760
  %v4340 = vsub.f32 %v3989, %v4339
  %v4341 = vand.u32 %v4340, 4294901760
  %v4342 = vsub.f32 %v4340, %v4341
  %v4343 = vand.u32 %v4342, 4294901760
  %4344 = vmatpush.msra.mxu0 %v4343
  %v4345 = vand.u32 %v3988, 4294901760
  %v4346 = vsub.f32 %v3988, %v4345
  %v4347 = vand.u32 %v4346, 4294901760
  %v4348 = vsub.f32 %v4346, %v4347
  %v4349 = vand.u32 %v4348, 4294901760
  %4350 = vmatpush.msra.mxu0 %v4349
  %v4351 = vand.u32 %v3987, 4294901760
  %v4352 = vsub.f32 %v3987, %v4351
  %v4353 = vand.u32 %v4352, 4294901760
  %v4354 = vsub.f32 %v4352, %v4353
  %v4355 = vand.u32 %v4354, 4294901760
  %4356 = vmatpush.msra.mxu0 %v4355
  %v4357 = vand.u32 %v3986, 4294901760
  %v4358 = vsub.f32 %v3986, %v4357
  %v4359 = vand.u32 %v4358, 4294901760
  %v4360 = vsub.f32 %v4358, %v4359
  %v4361 = vand.u32 %v4360, 4294901760
  %4362 = vmatpush.msra.mxu0 %v4361
  %v4363 = vand.u32 %v3985, 4294901760
  %v4364 = vsub.f32 %v3985, %v4363
  %v4365 = vand.u32 %v4364, 4294901760
  %v4366 = vsub.f32 %v4364, %v4365
  %v4367 = vand.u32 %v4366, 4294901760
  %4368 = vmatpush.msra.mxu0 %v4367
  %v4369 = vand.u32 %v3984, 4294901760
  %v4370 = vsub.f32 %v3984, %v4369
  %v4371 = vand.u32 %v4370, 4294901760
  %v4372 = vsub.f32 %v4370, %v4371
  %v4373 = vand.u32 %v4372, 4294901760
  %4374 = vmatpush.msra.mxu0 %v4373
  %v4375 = vand.u32 %v3983, 4294901760
  %v4376 = vsub.f32 %v3983, %v4375
  %v4377 = vand.u32 %v4376, 4294901760
  %v4378 = vsub.f32 %v4376, %v4377
  %v4379 = vand.u32 %v4378, 4294901760
  %4380 = vmatpush.msra.mxu0 %v4379
  %v4381 = vand.u32 %v3982, 4294901760
  %v4382 = vsub.f32 %v3982, %v4381
  %v4383 = vand.u32 %v4382, 4294901760
  %v4384 = vsub.f32 %v4382, %v4383
  %v4385 = vand.u32 %v4384, 4294901760
  %4386 = vmatpush.msra.mxu0 %v4385
  %v4387 = vand.u32 %v3950, 4294901760
  %4388 = vmatmul.f32.gmra.mxu0 %v4387
  %v4389 = vpop.f32.mrf.mxu0
  %v4390 = vadd.f32 %v4041, %v4389
  %v4391 = vand.u32 %v3951, 4294901760
  %4392 = vmatmul.f32.gmra.mxu0 %v4391
  %v4393 = vpop.f32.mrf.mxu0
  %v4394 = vadd.f32 %v4049, %v4393
  %v4395 = vand.u32 %v3952, 4294901760
  %4396 = vmatmul.f32.gmra.mxu0 %v4395
  %v4397 = vpop.f32.mrf.mxu0
  %v4398 = vadd.f32 %v4057, %v4397
  %v4399 = vand.u32 %v3953, 4294901760
  %4400 = vmatmul.f32.gmra.mxu0 %v4399
  %v4401 = vpop.f32.mrf.mxu0
  %v4402 = vadd.f32 %v4065, %v4401
  %v4403 = vand.u32 %v3954, 4294901760
  %4404 = vmatmul.f32.gmra.mxu0 %v4403
  %v4405 = vpop.f32.mrf.mxu0
  %v4406 = vadd.f32 %v4073, %v4405
  %v4407 = vand.u32 %v3955, 4294901760
  %4408 = vmatmul.f32.gmra.mxu0 %v4407
  %v4409 = vpop.f32.mrf.mxu0
  %v4410 = vadd.f32 %v4081, %v4409
  %v4411 = vand.u32 %v3956, 4294901760
  %4412 = vmatmul.f32.gmra.mxu0 %v4411
  %v4413 = vpop.f32.mrf.mxu0
  %v4414 = vadd.f32 %v4089, %v4413
  %v4415 = vand.u32 %v3957, 4294901760
  %4416 = vmatmul.f32.gmra.mxu0 %v4415
  %v4417 = vpop.f32.mrf.mxu0
  %v4418 = vadd.f32 %v4097, %v4417
  %v4419 = vand.u32 %v3958, 4294901760
  %4420 = vmatmul.f32.gmra.mxu0 %v4419
  %v4421 = vpop.f32.mrf.mxu0
  %v4422 = vadd.f32 %v4105, %v4421
  %v4423 = vand.u32 %v3959, 4294901760
  %4424 = vmatmul.f32.gmra.mxu0 %v4423
  %v4425 = vpop.f32.mrf.mxu0
  %v4426 = vadd.f32 %v4113, %v4425
  %v4427 = vand.u32 %v3960, 4294901760
  %4428 = vmatmul.f32.gmra.mxu0 %v4427
  %v4429 = vpop.f32.mrf.mxu0
  %v4430 = vadd.f32 %v4121, %v4429
  %v4431 = vand.u32 %v3961, 4294901760
  %4432 = vmatmul.f32.gmra.mxu0 %v4431
  %v4433 = vpop.f32.mrf.mxu0
  %v4434 = vadd.f32 %v4129, %v4433
  %v4435 = vand.u32 %v3962, 4294901760
  %4436 = vmatmul.f32.gmra.mxu0 %v4435
  %v4437 = vpop.f32.mrf.mxu0
  %v4438 = vadd.f32 %v4137, %v4437
  %v4439 = vand.u32 %v3963, 4294901760
  %4440 = vmatmul.f32.gmra.mxu0 %v4439
  %v4441 = vpop.f32.mrf.mxu0
  %v4442 = vadd.f32 %v4145, %v4441
  %v4443 = vand.u32 %v3964, 4294901760
  %4444 = vmatmul.f32.gmra.mxu0 %v4443
  %v4445 = vpop.f32.mrf.mxu0
  %v4446 = vadd.f32 %v4153, %v4445
  %v4447 = vand.u32 %v3965, 4294901760
  %4448 = vmatmul.f32.gmra.mxu0 %v4447
  %v4449 = vpop.f32.mrf.mxu0
  %v4450 = vadd.f32 %v4161, %v4449
  %v4451 = vand.u32 %v3966, 4294901760
  %4452 = vmatmul.f32.gmra.mxu0 %v4451
  %v4453 = vpop.f32.mrf.mxu0
  %v4454 = vadd.f32 %v4169, %v4453
  %v4455 = vand.u32 %v3967, 4294901760
  %4456 = vmatmul.f32.gmra.mxu0 %v4455
  %v4457 = vpop.f32.mrf.mxu0
  %v4458 = vadd.f32 %v4177, %v4457
  %v4459 = vand.u32 %v3968, 4294901760
  %4460 = vmatmul.f32.gmra.mxu0 %v4459
  %v4461 = vpop.f32.mrf.mxu0
  %v4462 = vadd.f32 %v4185, %v4461
  %v4463 = vand.u32 %v3969, 4294901760
  %4464 = vmatmul.f32.gmra.mxu0 %v4463
  %v4465 = vpop.f32.mrf.mxu0
  %v4466 = vadd.f32 %v4193, %v4465
  %v4467 = vand.u32 %v3970, 4294901760
  %4468 = vmatmul.f32.gmra.mxu0 %v4467
  %v4469 = vpop.f32.mrf.mxu0
  %v4470 = vadd.f32 %v4201, %v4469
  %v4471 = vand.u32 %v3971, 4294901760
  %4472 = vmatmul.f32.gmra.mxu0 %v4471
  %v4473 = vpop.f32.mrf.mxu0
  %v4474 = vadd.f32 %v4209, %v4473
  %v4475 = vand.u32 %v3972, 4294901760
  %4476 = vmatmul.f32.gmra.mxu0 %v4475
  %v4477 = vpop.f32.mrf.mxu0
  %v4478 = vadd.f32 %v4217, %v4477
  %v4479 = vand.u32 %v3973, 4294901760
  %4480 = vmatmul.f32.gmra.mxu0 %v4479
  %v4481 = vpop.f32.mrf.mxu0
  %v4482 = vadd.f32 %v4225, %v4481
  %v4483 = vand.u32 %v3974, 4294901760
  %4484 = vmatmul.f32.gmra.mxu0 %v4483
  %v4485 = vpop.f32.mrf.mxu0
  %v4486 = vadd.f32 %v4233, %v4485
  %v4487 = vand.u32 %v3975, 4294901760
  %4488 = vmatmul.f32.gmra.mxu0 %v4487
  %v4489 = vpop.f32.mrf.mxu0
  %v4490 = vadd.f32 %v4241, %v4489
  %v4491 = vand.u32 %v3976, 4294901760
  %4492 = vmatmul.f32.gmra.mxu0 %v4491
  %v4493 = vpop.f32.mrf.mxu0
  %v4494 = vadd.f32 %v4249, %v4493
  %v4495 = vand.u32 %v3977, 4294901760
  %4496 = vmatmul.f32.gmra.mxu0 %v4495
  %v4497 = vpop.f32.mrf.mxu0
  %v4498 = vadd.f32 %v4257, %v4497
  %v4499 = vand.u32 %v3978, 4294901760
  %4500 = vmatmul.f32.gmra.mxu0 %v4499
  %v4501 = vpop.f32.mrf.mxu0
  %v4502 = vadd.f32 %v4265, %v4501
  %v4503 = vand.u32 %v3979, 4294901760
  %4504 = vmatmul.f32.gmra.mxu0 %v4503
  %v4505 = vpop.f32.mrf.mxu0
  %v4506 = vadd.f32 %v4273, %v4505
  %v4507 = vand.u32 %v3980, 4294901760
  %4508 = vmatmul.f32.gmra.mxu0 %v4507
  %v4509 = vpop.f32.mrf.mxu0
  %v4510 = vadd.f32 %v4281, %v4509
  %v4511 = vand.u32 %v3981, 4294901760
  %4512 = vmatmul.f32.gmra.mxu0 %v4511
  %v4513 = vpop.f32.mrf.mxu0
  %v4514 = vadd.f32 %v4289, %v4513
  %4515 = vdwg.mxu0
  %v4516 = vand.u32 %v3997, 4294901760
  %v4517 = vsub.f32 %v3997, %v4516
  %4518 = vmatpush.msra.mxu0 %v4517
  %v4519 = vand.u32 %v3996, 4294901760
  %v4520 = vsub.f32 %v3996, %v4519
  %4521 = vmatpush.msra.mxu0 %v4520
  %v4522 = vand.u32 %v3995, 4294901760
  %v4523 = vsub.f32 %v3995, %v4522
  %4524 = vmatpush.msra.mxu0 %v4523
  %v4525 = vand.u32 %v3994, 4294901760
  %v4526 = vsub.f32 %v3994, %v4525
  %4527 = vmatpush.msra.mxu0 %v4526
  %v4528 = vand.u32 %v3993, 4294901760
  %v4529 = vsub.f32 %v3993, %v4528
  %4530 = vmatpush.msra.mxu0 %v4529
  %v4531 = vand.u32 %v3992, 4294901760
  %v4532 = vsub.f32 %v3992, %v4531
  %4533 = vmatpush.msra.mxu0 %v4532
  %v4534 = vand.u32 %v3991, 4294901760
  %v4535 = vsub.f32 %v3991, %v4534
  %4536 = vmatpush.msra.mxu0 %v4535
  %v4537 = vand.u32 %v3990, 4294901760
  %v4538 = vsub.f32 %v3990, %v4537
  %4539 = vmatpush.msra.mxu0 %v4538
  %v4540 = vand.u32 %v3989, 4294901760
  %v4541 = vsub.f32 %v3989, %v4540
  %4542 = vmatpush.msra.mxu0 %v4541
  %v4543 = vand.u32 %v3988, 4294901760
  %v4544 = vsub.f32 %v3988, %v4543
  %4545 = vmatpush.msra.mxu0 %v4544
  %v4546 = vand.u32 %v3987, 4294901760
  %v4547 = vsub.f32 %v3987, %v4546
  %4548 = vmatpush.msra.mxu0 %v4547
  %v4549 = vand.u32 %v3986, 4294901760
  %v4550 = vsub.f32 %v3986, %v4549
  %4551 = vmatpush.msra.mxu0 %v4550
  %v4552 = vand.u32 %v3985, 4294901760
  %v4553 = vsub.f32 %v3985, %v4552
  %4554 = vmatpush.msra.mxu0 %v4553
  %v4555 = vand.u32 %v3984, 4294901760
  %v4556 = vsub.f32 %v3984, %v4555
  %4557 = vmatpush.msra.mxu0 %v4556
  %v4558 = vand.u32 %v3983, 4294901760
  %v4559 = vsub.f32 %v3983, %v4558
  %4560 = vmatpush.msra.mxu0 %v4559
  %v4561 = vand.u32 %v3982, 4294901760
  %v4562 = vsub.f32 %v3982, %v4561
  %4563 = vmatpush.msra.mxu0 %v4562
  %v4564 = vand.u32 %v3950, 4294901760
  %v4565 = vsub.f32 %v3950, %v4564
  %4566 = vmatmul.f32.gmra.mxu0 %v4565
  %v4567 = vpop.f32.mrf.mxu0
  %v4568 = vadd.f32 %v4390, %v4567
  %v4569 = vand.u32 %v3951, 4294901760
  %v4570 = vsub.f32 %v3951, %v4569
  %4571 = vmatmul.f32.gmra.mxu0 %v4570
  %v4572 = vpop.f32.mrf.mxu0
  %v4573 = vadd.f32 %v4394, %v4572
  %v4574 = vand.u32 %v3952, 4294901760
  %v4575 = vsub.f32 %v3952, %v4574
  %4576 = vmatmul.f32.gmra.mxu0 %v4575
  %v4577 = vpop.f32.mrf.mxu0
  %v4578 = vadd.f32 %v4398, %v4577
  %v4579 = vand.u32 %v3953, 4294901760
  %v4580 = vsub.f32 %v3953, %v4579
  %4581 = vmatmul.f32.gmra.mxu0 %v4580
  %v4582 = vpop.f32.mrf.mxu0
  %v4583 = vadd.f32 %v4402, %v4582
  %v4584 = vand.u32 %v3954, 4294901760
  %v4585 = vsub.f32 %v3954, %v4584
  %4586 = vmatmul.f32.gmra.mxu0 %v4585
  %v4587 = vpop.f32.mrf.mxu0
  %v4588 = vadd.f32 %v4406, %v4587
  %v4589 = vand.u32 %v3955, 4294901760
  %v4590 = vsub.f32 %v3955, %v4589
  %4591 = vmatmul.f32.gmra.mxu0 %v4590
  %v4592 = vpop.f32.mrf.mxu0
  %v4593 = vadd.f32 %v4410, %v4592
  %v4594 = vand.u32 %v3956, 4294901760
  %v4595 = vsub.f32 %v3956, %v4594
  %4596 = vmatmul.f32.gmra.mxu0 %v4595
  %v4597 = vpop.f32.mrf.mxu0
  %v4598 = vadd.f32 %v4414, %v4597
  %v4599 = vand.u32 %v3957, 4294901760
  %v4600 = vsub.f32 %v3957, %v4599
  %4601 = vmatmul.f32.gmra.mxu0 %v4600
  %v4602 = vpop.f32.mrf.mxu0
  %v4603 = vadd.f32 %v4418, %v4602
  %v4604 = vand.u32 %v3958, 4294901760
  %v4605 = vsub.f32 %v3958, %v4604
  %4606 = vmatmul.f32.gmra.mxu0 %v4605
  %v4607 = vpop.f32.mrf.mxu0
  %v4608 = vadd.f32 %v4422, %v4607
  %v4609 = vand.u32 %v3959, 4294901760
  %v4610 = vsub.f32 %v3959, %v4609
  %4611 = vmatmul.f32.gmra.mxu0 %v4610
  %v4612 = vpop.f32.mrf.mxu0
  %v4613 = vadd.f32 %v4426, %v4612
  %v4614 = vand.u32 %v3960, 4294901760
  %v4615 = vsub.f32 %v3960, %v4614
  %4616 = vmatmul.f32.gmra.mxu0 %v4615
  %v4617 = vpop.f32.mrf.mxu0
  %v4618 = vadd.f32 %v4430, %v4617
  %v4619 = vand.u32 %v3961, 4294901760
  %v4620 = vsub.f32 %v3961, %v4619
  %4621 = vmatmul.f32.gmra.mxu0 %v4620
  %v4622 = vpop.f32.mrf.mxu0
  %v4623 = vadd.f32 %v4434, %v4622
  %v4624 = vand.u32 %v3962, 4294901760
  %v4625 = vsub.f32 %v3962, %v4624
  %4626 = vmatmul.f32.gmra.mxu0 %v4625
  %v4627 = vpop.f32.mrf.mxu0
  %v4628 = vadd.f32 %v4438, %v4627
  %v4629 = vand.u32 %v3963, 4294901760
  %v4630 = vsub.f32 %v3963, %v4629
  %4631 = vmatmul.f32.gmra.mxu0 %v4630
  %v4632 = vpop.f32.mrf.mxu0
  %v4633 = vadd.f32 %v4442, %v4632
  %v4634 = vand.u32 %v3964, 4294901760
  %v4635 = vsub.f32 %v3964, %v4634
  %4636 = vmatmul.f32.gmra.mxu0 %v4635
  %v4637 = vpop.f32.mrf.mxu0
  %v4638 = vadd.f32 %v4446, %v4637
  %v4639 = vand.u32 %v3965, 4294901760
  %v4640 = vsub.f32 %v3965, %v4639
  %4641 = vmatmul.f32.gmra.mxu0 %v4640
  %v4642 = vpop.f32.mrf.mxu0
  %v4643 = vadd.f32 %v4450, %v4642
  %v4644 = vand.u32 %v3966, 4294901760
  %v4645 = vsub.f32 %v3966, %v4644
  %4646 = vmatmul.f32.gmra.mxu0 %v4645
  %v4647 = vpop.f32.mrf.mxu0
  %v4648 = vadd.f32 %v4454, %v4647
  %v4649 = vand.u32 %v3967, 4294901760
  %v4650 = vsub.f32 %v3967, %v4649
  %4651 = vmatmul.f32.gmra.mxu0 %v4650
  %v4652 = vpop.f32.mrf.mxu0
  %v4653 = vadd.f32 %v4458, %v4652
  %v4654 = vand.u32 %v3968, 4294901760
  %v4655 = vsub.f32 %v3968, %v4654
  %4656 = vmatmul.f32.gmra.mxu0 %v4655
  %v4657 = vpop.f32.mrf.mxu0
  %v4658 = vadd.f32 %v4462, %v4657
  %v4659 = vand.u32 %v3969, 4294901760
  %v4660 = vsub.f32 %v3969, %v4659
  %4661 = vmatmul.f32.gmra.mxu0 %v4660
  %v4662 = vpop.f32.mrf.mxu0
  %v4663 = vadd.f32 %v4466, %v4662
  %v4664 = vand.u32 %v3970, 4294901760
  %v4665 = vsub.f32 %v3970, %v4664
  %4666 = vmatmul.f32.gmra.mxu0 %v4665
  %v4667 = vpop.f32.mrf.mxu0
  %v4668 = vadd.f32 %v4470, %v4667
  %v4669 = vand.u32 %v3971, 4294901760
  %v4670 = vsub.f32 %v3971, %v4669
  %4671 = vmatmul.f32.gmra.mxu0 %v4670
  %v4672 = vpop.f32.mrf.mxu0
  %v4673 = vadd.f32 %v4474, %v4672
  %v4674 = vand.u32 %v3972, 4294901760
  %v4675 = vsub.f32 %v3972, %v4674
  %4676 = vmatmul.f32.gmra.mxu0 %v4675
  %v4677 = vpop.f32.mrf.mxu0
  %v4678 = vadd.f32 %v4478, %v4677
  %v4679 = vand.u32 %v3973, 4294901760
  %v4680 = vsub.f32 %v3973, %v4679
  %4681 = vmatmul.f32.gmra.mxu0 %v4680
  %v4682 = vpop.f32.mrf.mxu0
  %v4683 = vadd.f32 %v4482, %v4682
  %v4684 = vand.u32 %v3974, 4294901760
  %v4685 = vsub.f32 %v3974, %v4684
  %4686 = vmatmul.f32.gmra.mxu0 %v4685
  %v4687 = vpop.f32.mrf.mxu0
  %v4688 = vadd.f32 %v4486, %v4687
  %v4689 = vand.u32 %v3975, 4294901760
  %v4690 = vsub.f32 %v3975, %v4689
  %4691 = vmatmul.f32.gmra.mxu0 %v4690
  %v4692 = vpop.f32.mrf.mxu0
  %v4693 = vadd.f32 %v4490, %v4692
  %v4694 = vand.u32 %v3976, 4294901760
  %v4695 = vsub.f32 %v3976, %v4694
  %4696 = vmatmul.f32.gmra.mxu0 %v4695
  %v4697 = vpop.f32.mrf.mxu0
  %v4698 = vadd.f32 %v4494, %v4697
  %v4699 = vand.u32 %v3977, 4294901760
  %v4700 = vsub.f32 %v3977, %v4699
  %4701 = vmatmul.f32.gmra.mxu0 %v4700
  %v4702 = vpop.f32.mrf.mxu0
  %v4703 = vadd.f32 %v4498, %v4702
  %v4704 = vand.u32 %v3978, 4294901760
  %v4705 = vsub.f32 %v3978, %v4704
  %4706 = vmatmul.f32.gmra.mxu0 %v4705
  %v4707 = vpop.f32.mrf.mxu0
  %v4708 = vadd.f32 %v4502, %v4707
  %v4709 = vand.u32 %v3979, 4294901760
  %v4710 = vsub.f32 %v3979, %v4709
  %4711 = vmatmul.f32.gmra.mxu0 %v4710
  %v4712 = vpop.f32.mrf.mxu0
  %v4713 = vadd.f32 %v4506, %v4712
  %v4714 = vand.u32 %v3980, 4294901760
  %v4715 = vsub.f32 %v3980, %v4714
  %4716 = vmatmul.f32.gmra.mxu0 %v4715
  %v4717 = vpop.f32.mrf.mxu0
  %v4718 = vadd.f32 %v4510, %v4717
  %v4719 = vand.u32 %v3981, 4294901760
  %v4720 = vsub.f32 %v3981, %v4719
  %4721 = vmatmul.f32.gmra.mxu0 %v4720
  %v4722 = vpop.f32.mrf.mxu0
  %v4723 = vadd.f32 %v4514, %v4722
  %4724 = vdwg.mxu0
  %v4725 = vand.u32 %v3997, 4294901760
  %4726 = vmatpush.msra.mxu0 %v4725
  %v4727 = vand.u32 %v3996, 4294901760
  %4728 = vmatpush.msra.mxu0 %v4727
  %v4729 = vand.u32 %v3995, 4294901760
  %4730 = vmatpush.msra.mxu0 %v4729
  %v4731 = vand.u32 %v3994, 4294901760
  %4732 = vmatpush.msra.mxu0 %v4731
  %v4733 = vand.u32 %v3993, 4294901760
  %4734 = vmatpush.msra.mxu0 %v4733
  %v4735 = vand.u32 %v3992, 4294901760
  %4736 = vmatpush.msra.mxu0 %v4735
  %v4737 = vand.u32 %v3991, 4294901760
  %4738 = vmatpush.msra.mxu0 %v4737
  %v4739 = vand.u32 %v3990, 4294901760
  %4740 = vmatpush.msra.mxu0 %v4739
  %v4741 = vand.u32 %v3989, 4294901760
  %4742 = vmatpush.msra.mxu0 %v4741
  %v4743 = vand.u32 %v3988, 4294901760
  %4744 = vmatpush.msra.mxu0 %v4743
  %v4745 = vand.u32 %v3987, 4294901760
  %4746 = vmatpush.msra.mxu0 %v4745
  %v4747 = vand.u32 %v3986, 4294901760
  %4748 = vmatpush.msra.mxu0 %v4747
  %v4749 = vand.u32 %v3985, 4294901760
  %4750 = vmatpush.msra.mxu0 %v4749
  %v4751 = vand.u32 %v3984, 4294901760
  %4752 = vmatpush.msra.mxu0 %v4751
  %v4753 = vand.u32 %v3983, 4294901760
  %4754 = vmatpush.msra.mxu0 %v4753
  %v4755 = vand.u32 %v3982, 4294901760
  %4756 = vmatpush.msra.mxu0 %v4755
  %v4757 = vand.u32 %v3950, 4294901760
  %v4758 = vsub.f32 %v3950, %v4757
  %v4759 = vand.u32 %v4758, 4294901760
  %4760 = vmatmul.f32.gmra.mxu0 %v4759
  %v4761 = vpop.f32.mrf.mxu0
  %v4762 = vadd.f32 %v4568, %v4761
  %v4763 = vand.u32 %v3951, 4294901760
  %v4764 = vsub.f32 %v3951, %v4763
  %v4765 = vand.u32 %v4764, 4294901760
  %4766 = vmatmul.f32.gmra.mxu0 %v4765
  %v4767 = vpop.f32.mrf.mxu0
  %v4768 = vadd.f32 %v4573, %v4767
  %v4769 = vand.u32 %v3952, 4294901760
  %v4770 = vsub.f32 %v3952, %v4769
  %v4771 = vand.u32 %v4770, 4294901760
  %4772 = vmatmul.f32.gmra.mxu0 %v4771
  %v4773 = vpop.f32.mrf.mxu0
  %v4774 = vadd.f32 %v4578, %v4773
  %v4775 = vand.u32 %v3953, 4294901760
  %v4776 = vsub.f32 %v3953, %v4775
  %v4777 = vand.u32 %v4776, 4294901760
  %4778 = vmatmul.f32.gmra.mxu0 %v4777
  %v4779 = vpop.f32.mrf.mxu0
  %v4780 = vadd.f32 %v4583, %v4779
  %v4781 = vand.u32 %v3954, 4294901760
  %v4782 = vsub.f32 %v3954, %v4781
  %v4783 = vand.u32 %v4782, 4294901760
  %4784 = vmatmul.f32.gmra.mxu0 %v4783
  %v4785 = vpop.f32.mrf.mxu0
  %v4786 = vadd.f32 %v4588, %v4785
  %v4787 = vand.u32 %v3955, 4294901760
  %v4788 = vsub.f32 %v3955, %v4787
  %v4789 = vand.u32 %v4788, 4294901760
  %4790 = vmatmul.f32.gmra.mxu0 %v4789
  %v4791 = vpop.f32.mrf.mxu0
  %v4792 = vadd.f32 %v4593, %v4791
  %v4793 = vand.u32 %v3956, 4294901760
  %v4794 = vsub.f32 %v3956, %v4793
  %v4795 = vand.u32 %v4794, 4294901760
  %4796 = vmatmul.f32.gmra.mxu0 %v4795
  %v4797 = vpop.f32.mrf.mxu0
  %v4798 = vadd.f32 %v4598, %v4797
  %v4799 = vand.u32 %v3957, 4294901760
  %v4800 = vsub.f32 %v3957, %v4799
  %v4801 = vand.u32 %v4800, 4294901760
  %4802 = vmatmul.f32.gmra.mxu0 %v4801
  %v4803 = vpop.f32.mrf.mxu0
  %v4804 = vadd.f32 %v4603, %v4803
  %v4805 = vand.u32 %v3958, 4294901760
  %v4806 = vsub.f32 %v3958, %v4805
  %v4807 = vand.u32 %v4806, 4294901760
  %4808 = vmatmul.f32.gmra.mxu0 %v4807
  %v4809 = vpop.f32.mrf.mxu0
  %v4810 = vadd.f32 %v4608, %v4809
  %v4811 = vand.u32 %v3959, 4294901760
  %v4812 = vsub.f32 %v3959, %v4811
  %v4813 = vand.u32 %v4812, 4294901760
  %4814 = vmatmul.f32.gmra.mxu0 %v4813
  %v4815 = vpop.f32.mrf.mxu0
  %v4816 = vadd.f32 %v4613, %v4815
  %v4817 = vand.u32 %v3960, 4294901760
  %v4818 = vsub.f32 %v3960, %v4817
  %v4819 = vand.u32 %v4818, 4294901760
  %4820 = vmatmul.f32.gmra.mxu0 %v4819
  %v4821 = vpop.f32.mrf.mxu0
  %v4822 = vadd.f32 %v4618, %v4821
  %v4823 = vand.u32 %v3961, 4294901760
  %v4824 = vsub.f32 %v3961, %v4823
  %v4825 = vand.u32 %v4824, 4294901760
  %4826 = vmatmul.f32.gmra.mxu0 %v4825
  %v4827 = vpop.f32.mrf.mxu0
  %v4828 = vadd.f32 %v4623, %v4827
  %v4829 = vand.u32 %v3962, 4294901760
  %v4830 = vsub.f32 %v3962, %v4829
  %v4831 = vand.u32 %v4830, 4294901760
  %4832 = vmatmul.f32.gmra.mxu0 %v4831
  %v4833 = vpop.f32.mrf.mxu0
  %v4834 = vadd.f32 %v4628, %v4833
  %v4835 = vand.u32 %v3963, 4294901760
  %v4836 = vsub.f32 %v3963, %v4835
  %v4837 = vand.u32 %v4836, 4294901760
  %4838 = vmatmul.f32.gmra.mxu0 %v4837
  %v4839 = vpop.f32.mrf.mxu0
  %v4840 = vadd.f32 %v4633, %v4839
  %v4841 = vand.u32 %v3964, 4294901760
  %v4842 = vsub.f32 %v3964, %v4841
  %v4843 = vand.u32 %v4842, 4294901760
  %4844 = vmatmul.f32.gmra.mxu0 %v4843
  %v4845 = vpop.f32.mrf.mxu0
  %v4846 = vadd.f32 %v4638, %v4845
  %v4847 = vand.u32 %v3965, 4294901760
  %v4848 = vsub.f32 %v3965, %v4847
  %v4849 = vand.u32 %v4848, 4294901760
  %4850 = vmatmul.f32.gmra.mxu0 %v4849
  %v4851 = vpop.f32.mrf.mxu0
  %v4852 = vadd.f32 %v4643, %v4851
  %v4853 = vand.u32 %v3966, 4294901760
  %v4854 = vsub.f32 %v3966, %v4853
  %v4855 = vand.u32 %v4854, 4294901760
  %4856 = vmatmul.f32.gmra.mxu0 %v4855
  %v4857 = vpop.f32.mrf.mxu0
  %v4858 = vadd.f32 %v4648, %v4857
  %v4859 = vand.u32 %v3967, 4294901760
  %v4860 = vsub.f32 %v3967, %v4859
  %v4861 = vand.u32 %v4860, 4294901760
  %4862 = vmatmul.f32.gmra.mxu0 %v4861
  %v4863 = vpop.f32.mrf.mxu0
  %v4864 = vadd.f32 %v4653, %v4863
  %v4865 = vand.u32 %v3968, 4294901760
  %v4866 = vsub.f32 %v3968, %v4865
  %v4867 = vand.u32 %v4866, 4294901760
  %4868 = vmatmul.f32.gmra.mxu0 %v4867
  %v4869 = vpop.f32.mrf.mxu0
  %v4870 = vadd.f32 %v4658, %v4869
  %v4871 = vand.u32 %v3969, 4294901760
  %v4872 = vsub.f32 %v3969, %v4871
  %v4873 = vand.u32 %v4872, 4294901760
  %4874 = vmatmul.f32.gmra.mxu0 %v4873
  %v4875 = vpop.f32.mrf.mxu0
  %v4876 = vadd.f32 %v4663, %v4875
  %v4877 = vand.u32 %v3970, 4294901760
  %v4878 = vsub.f32 %v3970, %v4877
  %v4879 = vand.u32 %v4878, 4294901760
  %4880 = vmatmul.f32.gmra.mxu0 %v4879
  %v4881 = vpop.f32.mrf.mxu0
  %v4882 = vadd.f32 %v4668, %v4881
  %v4883 = vand.u32 %v3971, 4294901760
  %v4884 = vsub.f32 %v3971, %v4883
  %v4885 = vand.u32 %v4884, 4294901760
  %4886 = vmatmul.f32.gmra.mxu0 %v4885
  %v4887 = vpop.f32.mrf.mxu0
  %v4888 = vadd.f32 %v4673, %v4887
  %v4889 = vand.u32 %v3972, 4294901760
  %v4890 = vsub.f32 %v3972, %v4889
  %v4891 = vand.u32 %v4890, 4294901760
  %4892 = vmatmul.f32.gmra.mxu0 %v4891
  %v4893 = vpop.f32.mrf.mxu0
  %v4894 = vadd.f32 %v4678, %v4893
  %v4895 = vand.u32 %v3973, 4294901760
  %v4896 = vsub.f32 %v3973, %v4895
  %v4897 = vand.u32 %v4896, 4294901760
  %4898 = vmatmul.f32.gmra.mxu0 %v4897
  %v4899 = vpop.f32.mrf.mxu0
  %v4900 = vadd.f32 %v4683, %v4899
  %v4901 = vand.u32 %v3974, 4294901760
  %v4902 = vsub.f32 %v3974, %v4901
  %v4903 = vand.u32 %v4902, 4294901760
  %4904 = vmatmul.f32.gmra.mxu0 %v4903
  %v4905 = vpop.f32.mrf.mxu0
  %v4906 = vadd.f32 %v4688, %v4905
  %v4907 = vand.u32 %v3975, 4294901760
  %v4908 = vsub.f32 %v3975, %v4907
  %v4909 = vand.u32 %v4908, 4294901760
  %4910 = vmatmul.f32.gmra.mxu0 %v4909
  %v4911 = vpop.f32.mrf.mxu0
  %v4912 = vadd.f32 %v4693, %v4911
  %v4913 = vand.u32 %v3976, 4294901760
  %v4914 = vsub.f32 %v3976, %v4913
  %v4915 = vand.u32 %v4914, 4294901760
  %4916 = vmatmul.f32.gmra.mxu0 %v4915
  %v4917 = vpop.f32.mrf.mxu0
  %v4918 = vadd.f32 %v4698, %v4917
  %v4919 = vand.u32 %v3977, 4294901760
  %v4920 = vsub.f32 %v3977, %v4919
  %v4921 = vand.u32 %v4920, 4294901760
  %4922 = vmatmul.f32.gmra.mxu0 %v4921
  %v4923 = vpop.f32.mrf.mxu0
  %v4924 = vadd.f32 %v4703, %v4923
  %v4925 = vand.u32 %v3978, 4294901760
  %v4926 = vsub.f32 %v3978, %v4925
  %v4927 = vand.u32 %v4926, 4294901760
  %4928 = vmatmul.f32.gmra.mxu0 %v4927
  %v4929 = vpop.f32.mrf.mxu0
  %v4930 = vadd.f32 %v4708, %v4929
  %v4931 = vand.u32 %v3979, 4294901760
  %v4932 = vsub.f32 %v3979, %v4931
  %v4933 = vand.u32 %v4932, 4294901760
  %4934 = vmatmul.f32.gmra.mxu0 %v4933
  %v4935 = vpop.f32.mrf.mxu0
  %v4936 = vadd.f32 %v4713, %v4935
  %v4937 = vand.u32 %v3980, 4294901760
  %v4938 = vsub.f32 %v3980, %v4937
  %v4939 = vand.u32 %v4938, 4294901760
  %4940 = vmatmul.f32.gmra.mxu0 %v4939
  %v4941 = vpop.f32.mrf.mxu0
  %v4942 = vadd.f32 %v4718, %v4941
  %v4943 = vand.u32 %v3981, 4294901760
  %v4944 = vsub.f32 %v3981, %v4943
  %v4945 = vand.u32 %v4944, 4294901760
  %4946 = vmatmul.f32.gmra.mxu0 %v4945
  %v4947 = vpop.f32.mrf.mxu0
  %v4948 = vadd.f32 %v4723, %v4947
  %4949 = vdwg.mxu0
  %v4950 = vand.u32 %v3997, 4294901760
  %v4951 = vsub.f32 %v3997, %v4950
  %v4952 = vand.u32 %v4951, 4294901760
  %4953 = vmatpush.msra.mxu0 %v4952
  %v4954 = vand.u32 %v3996, 4294901760
  %v4955 = vsub.f32 %v3996, %v4954
  %v4956 = vand.u32 %v4955, 4294901760
  %4957 = vmatpush.msra.mxu0 %v4956
  %v4958 = vand.u32 %v3995, 4294901760
  %v4959 = vsub.f32 %v3995, %v4958
  %v4960 = vand.u32 %v4959, 4294901760
  %4961 = vmatpush.msra.mxu0 %v4960
  %v4962 = vand.u32 %v3994, 4294901760
  %v4963 = vsub.f32 %v3994, %v4962
  %v4964 = vand.u32 %v4963, 4294901760
  %4965 = vmatpush.msra.mxu0 %v4964
  %v4966 = vand.u32 %v3993, 4294901760
  %v4967 = vsub.f32 %v3993, %v4966
  %v4968 = vand.u32 %v4967, 4294901760
  %4969 = vmatpush.msra.mxu0 %v4968
  %v4970 = vand.u32 %v3992, 4294901760
  %v4971 = vsub.f32 %v3992, %v4970
  %v4972 = vand.u32 %v4971, 4294901760
  %4973 = vmatpush.msra.mxu0 %v4972
  %v4974 = vand.u32 %v3991, 4294901760
  %v4975 = vsub.f32 %v3991, %v4974
  %v4976 = vand.u32 %v4975, 4294901760
  %4977 = vmatpush.msra.mxu0 %v4976
  %v4978 = vand.u32 %v3990, 4294901760
  %v4979 = vsub.f32 %v3990, %v4978
  %v4980 = vand.u32 %v4979, 4294901760
  %4981 = vmatpush.msra.mxu0 %v4980
  %v4982 = vand.u32 %v3989, 4294901760
  %v4983 = vsub.f32 %v3989, %v4982
  %v4984 = vand.u32 %v4983, 4294901760
  %4985 = vmatpush.msra.mxu0 %v4984
  %v4986 = vand.u32 %v3988, 4294901760
  %v4987 = vsub.f32 %v3988, %v4986
  %v4988 = vand.u32 %v4987, 4294901760
  %4989 = vmatpush.msra.mxu0 %v4988
  %v4990 = vand.u32 %v3987, 4294901760
  %v4991 = vsub.f32 %v3987, %v4990
  %v4992 = vand.u32 %v4991, 4294901760
  %4993 = vmatpush.msra.mxu0 %v4992
  %v4994 = vand.u32 %v3986, 4294901760
  %v4995 = vsub.f32 %v3986, %v4994
  %v4996 = vand.u32 %v4995, 4294901760
  %4997 = vmatpush.msra.mxu0 %v4996
  %v4998 = vand.u32 %v3985, 4294901760
  %v4999 = vsub.f32 %v3985, %v4998
  %v5000 = vand.u32 %v4999, 4294901760
  %5001 = vmatpush.msra.mxu0 %v5000
  %v5002 = vand.u32 %v3984, 4294901760
  %v5003 = vsub.f32 %v3984, %v5002
  %v5004 = vand.u32 %v5003, 4294901760
  %5005 = vmatpush.msra.mxu0 %v5004
  %v5006 = vand.u32 %v3983, 4294901760
  %v5007 = vsub.f32 %v3983, %v5006
  %v5008 = vand.u32 %v5007, 4294901760
  %5009 = vmatpush.msra.mxu0 %v5008
  %v5010 = vand.u32 %v3982, 4294901760
  %v5011 = vsub.f32 %v3982, %v5010
  %v5012 = vand.u32 %v5011, 4294901760
  %5013 = vmatpush.msra.mxu0 %v5012
  %v5014 = vand.u32 %v3950, 4294901760
  %5015 = vmatmul.f32.gmra.mxu0 %v5014
  %v5016 = vpop.f32.mrf.mxu0
  %v5017 = vadd.f32 %v4762, %v5016
  %v5018 = vand.u32 %v3951, 4294901760
  %5019 = vmatmul.f32.gmra.mxu0 %v5018
  %v5020 = vpop.f32.mrf.mxu0
  %v5021 = vadd.f32 %v4768, %v5020
  %v5022 = vand.u32 %v3952, 4294901760
  %5023 = vmatmul.f32.gmra.mxu0 %v5022
  %v5024 = vpop.f32.mrf.mxu0
  %v5025 = vadd.f32 %v4774, %v5024
  %v5026 = vand.u32 %v3953, 4294901760
  %5027 = vmatmul.f32.gmra.mxu0 %v5026
  %v5028 = vpop.f32.mrf.mxu0
  %v5029 = vadd.f32 %v4780, %v5028
  %v5030 = vand.u32 %v3954, 4294901760
  %5031 = vmatmul.f32.gmra.mxu0 %v5030
  %v5032 = vpop.f32.mrf.mxu0
  %v5033 = vadd.f32 %v4786, %v5032
  %v5034 = vand.u32 %v3955, 4294901760
  %5035 = vmatmul.f32.gmra.mxu0 %v5034
  %v5036 = vpop.f32.mrf.mxu0
  %v5037 = vadd.f32 %v4792, %v5036
  %v5038 = vand.u32 %v3956, 4294901760
  %5039 = vmatmul.f32.gmra.mxu0 %v5038
  %v5040 = vpop.f32.mrf.mxu0
  %v5041 = vadd.f32 %v4798, %v5040
  %v5042 = vand.u32 %v3957, 4294901760
  %5043 = vmatmul.f32.gmra.mxu0 %v5042
  %v5044 = vpop.f32.mrf.mxu0
  %v5045 = vadd.f32 %v4804, %v5044
  %v5046 = vand.u32 %v3958, 4294901760
  %5047 = vmatmul.f32.gmra.mxu0 %v5046
  %v5048 = vpop.f32.mrf.mxu0
  %v5049 = vadd.f32 %v4810, %v5048
  %v5050 = vand.u32 %v3959, 4294901760
  %5051 = vmatmul.f32.gmra.mxu0 %v5050
  %v5052 = vpop.f32.mrf.mxu0
  %v5053 = vadd.f32 %v4816, %v5052
  %v5054 = vand.u32 %v3960, 4294901760
  %5055 = vmatmul.f32.gmra.mxu0 %v5054
  %v5056 = vpop.f32.mrf.mxu0
  %v5057 = vadd.f32 %v4822, %v5056
  %v5058 = vand.u32 %v3961, 4294901760
  %5059 = vmatmul.f32.gmra.mxu0 %v5058
  %v5060 = vpop.f32.mrf.mxu0
  %v5061 = vadd.f32 %v4828, %v5060
  %v5062 = vand.u32 %v3962, 4294901760
  %5063 = vmatmul.f32.gmra.mxu0 %v5062
  %v5064 = vpop.f32.mrf.mxu0
  %v5065 = vadd.f32 %v4834, %v5064
  %v5066 = vand.u32 %v3963, 4294901760
  %5067 = vmatmul.f32.gmra.mxu0 %v5066
  %v5068 = vpop.f32.mrf.mxu0
  %v5069 = vadd.f32 %v4840, %v5068
  %v5070 = vand.u32 %v3964, 4294901760
  %5071 = vmatmul.f32.gmra.mxu0 %v5070
  %v5072 = vpop.f32.mrf.mxu0
  %v5073 = vadd.f32 %v4846, %v5072
  %v5074 = vand.u32 %v3965, 4294901760
  %5075 = vmatmul.f32.gmra.mxu0 %v5074
  %v5076 = vpop.f32.mrf.mxu0
  %v5077 = vadd.f32 %v4852, %v5076
  %v5078 = vand.u32 %v3966, 4294901760
  %5079 = vmatmul.f32.gmra.mxu0 %v5078
  %v5080 = vpop.f32.mrf.mxu0
  %v5081 = vadd.f32 %v4858, %v5080
  %v5082 = vand.u32 %v3967, 4294901760
  %5083 = vmatmul.f32.gmra.mxu0 %v5082
  %v5084 = vpop.f32.mrf.mxu0
  %v5085 = vadd.f32 %v4864, %v5084
  %v5086 = vand.u32 %v3968, 4294901760
  %5087 = vmatmul.f32.gmra.mxu0 %v5086
  %v5088 = vpop.f32.mrf.mxu0
  %v5089 = vadd.f32 %v4870, %v5088
  %v5090 = vand.u32 %v3969, 4294901760
  %5091 = vmatmul.f32.gmra.mxu0 %v5090
  %v5092 = vpop.f32.mrf.mxu0
  %v5093 = vadd.f32 %v4876, %v5092
  %v5094 = vand.u32 %v3970, 4294901760
  %5095 = vmatmul.f32.gmra.mxu0 %v5094
  %v5096 = vpop.f32.mrf.mxu0
  %v5097 = vadd.f32 %v4882, %v5096
  %v5098 = vand.u32 %v3971, 4294901760
  %5099 = vmatmul.f32.gmra.mxu0 %v5098
  %v5100 = vpop.f32.mrf.mxu0
  %v5101 = vadd.f32 %v4888, %v5100
  %v5102 = vand.u32 %v3972, 4294901760
  %5103 = vmatmul.f32.gmra.mxu0 %v5102
  %v5104 = vpop.f32.mrf.mxu0
  %v5105 = vadd.f32 %v4894, %v5104
  %v5106 = vand.u32 %v3973, 4294901760
  %5107 = vmatmul.f32.gmra.mxu0 %v5106
  %v5108 = vpop.f32.mrf.mxu0
  %v5109 = vadd.f32 %v4900, %v5108
  %v5110 = vand.u32 %v3974, 4294901760
  %5111 = vmatmul.f32.gmra.mxu0 %v5110
  %v5112 = vpop.f32.mrf.mxu0
  %v5113 = vadd.f32 %v4906, %v5112
  %v5114 = vand.u32 %v3975, 4294901760
  %5115 = vmatmul.f32.gmra.mxu0 %v5114
  %v5116 = vpop.f32.mrf.mxu0
  %v5117 = vadd.f32 %v4912, %v5116
  %v5118 = vand.u32 %v3976, 4294901760
  %5119 = vmatmul.f32.gmra.mxu0 %v5118
  %v5120 = vpop.f32.mrf.mxu0
  %v5121 = vadd.f32 %v4918, %v5120
  %v5122 = vand.u32 %v3977, 4294901760
  %5123 = vmatmul.f32.gmra.mxu0 %v5122
  %v5124 = vpop.f32.mrf.mxu0
  %v5125 = vadd.f32 %v4924, %v5124
  %v5126 = vand.u32 %v3978, 4294901760
  %5127 = vmatmul.f32.gmra.mxu0 %v5126
  %v5128 = vpop.f32.mrf.mxu0
  %v5129 = vadd.f32 %v4930, %v5128
  %v5130 = vand.u32 %v3979, 4294901760
  %5131 = vmatmul.f32.gmra.mxu0 %v5130
  %v5132 = vpop.f32.mrf.mxu0
  %v5133 = vadd.f32 %v4936, %v5132
  %v5134 = vand.u32 %v3980, 4294901760
  %5135 = vmatmul.f32.gmra.mxu0 %v5134
  %v5136 = vpop.f32.mrf.mxu0
  %v5137 = vadd.f32 %v4942, %v5136
  %v5138 = vand.u32 %v3981, 4294901760
  %5139 = vmatmul.f32.gmra.mxu0 %v5138
  %v5140 = vpop.f32.mrf.mxu0
  %v5141 = vadd.f32 %v4948, %v5140
  %5142 = vdwg.mxu0
  %v5143 = vand.u32 %v3997, 4294901760
  %5144 = vmatpush.msra.mxu0 %v5143
  %v5145 = vand.u32 %v3996, 4294901760
  %5146 = vmatpush.msra.mxu0 %v5145
  %v5147 = vand.u32 %v3995, 4294901760
  %5148 = vmatpush.msra.mxu0 %v5147
  %v5149 = vand.u32 %v3994, 4294901760
  %5150 = vmatpush.msra.mxu0 %v5149
  %v5151 = vand.u32 %v3993, 4294901760
  %5152 = vmatpush.msra.mxu0 %v5151
  %v5153 = vand.u32 %v3992, 4294901760
  %5154 = vmatpush.msra.mxu0 %v5153
  %v5155 = vand.u32 %v3991, 4294901760
  %5156 = vmatpush.msra.mxu0 %v5155
  %v5157 = vand.u32 %v3990, 4294901760
  %5158 = vmatpush.msra.mxu0 %v5157
  %v5159 = vand.u32 %v3989, 4294901760
  %5160 = vmatpush.msra.mxu0 %v5159
  %v5161 = vand.u32 %v3988, 4294901760
  %5162 = vmatpush.msra.mxu0 %v5161
  %v5163 = vand.u32 %v3987, 4294901760
  %5164 = vmatpush.msra.mxu0 %v5163
  %v5165 = vand.u32 %v3986, 4294901760
  %5166 = vmatpush.msra.mxu0 %v5165
  %v5167 = vand.u32 %v3985, 4294901760
  %5168 = vmatpush.msra.mxu0 %v5167
  %v5169 = vand.u32 %v3984, 4294901760
  %5170 = vmatpush.msra.mxu0 %v5169
  %v5171 = vand.u32 %v3983, 4294901760
  %5172 = vmatpush.msra.mxu0 %v5171
  %v5173 = vand.u32 %v3982, 4294901760
  %5174 = vmatpush.msra.mxu0 %v5173
  %v5175 = vand.u32 %v3950, 4294901760
  %5176 = vmatmul.f32.gmra.mxu0 %v5175
  %v5177 = vpop.f32.mrf.mxu0
  %v5178 = vadd.f32 %v5017, %v5177
  %v5179 = vand.u32 %v3951, 4294901760
  %5180 = vmatmul.f32.gmra.mxu0 %v5179
  %v5181 = vpop.f32.mrf.mxu0
  %v5182 = vadd.f32 %v5021, %v5181
  %v5183 = vand.u32 %v3952, 4294901760
  %5184 = vmatmul.f32.gmra.mxu0 %v5183
  %v5185 = vpop.f32.mrf.mxu0
  %v5186 = vadd.f32 %v5025, %v5185
  %v5187 = vand.u32 %v3953, 4294901760
  %5188 = vmatmul.f32.gmra.mxu0 %v5187
  %v5189 = vpop.f32.mrf.mxu0
  %v5190 = vadd.f32 %v5029, %v5189
  %v5191 = vand.u32 %v3954, 4294901760
  %5192 = vmatmul.f32.gmra.mxu0 %v5191
  %v5193 = vpop.f32.mrf.mxu0
  %v5194 = vadd.f32 %v5033, %v5193
  %v5195 = vand.u32 %v3955, 4294901760
  %5196 = vmatmul.f32.gmra.mxu0 %v5195
  %v5197 = vpop.f32.mrf.mxu0
  %v5198 = vadd.f32 %v5037, %v5197
  %v5199 = vand.u32 %v3956, 4294901760
  %5200 = vmatmul.f32.gmra.mxu0 %v5199
  %v5201 = vpop.f32.mrf.mxu0
  %v5202 = vadd.f32 %v5041, %v5201
  %v5203 = vand.u32 %v3957, 4294901760
  %5204 = vmatmul.f32.gmra.mxu0 %v5203
  %v5205 = vpop.f32.mrf.mxu0
  %v5206 = vadd.f32 %v5045, %v5205
  %v5207 = vand.u32 %v3958, 4294901760
  %5208 = vmatmul.f32.gmra.mxu0 %v5207
  %v5209 = vpop.f32.mrf.mxu0
  %v5210 = vadd.f32 %v5049, %v5209
  %v5211 = vand.u32 %v3959, 4294901760
  %5212 = vmatmul.f32.gmra.mxu0 %v5211
  %v5213 = vpop.f32.mrf.mxu0
  %v5214 = vadd.f32 %v5053, %v5213
  %v5215 = vand.u32 %v3960, 4294901760
  %5216 = vmatmul.f32.gmra.mxu0 %v5215
  %v5217 = vpop.f32.mrf.mxu0
  %v5218 = vadd.f32 %v5057, %v5217
  %v5219 = vand.u32 %v3961, 4294901760
  %5220 = vmatmul.f32.gmra.mxu0 %v5219
  %v5221 = vpop.f32.mrf.mxu0
  %v5222 = vadd.f32 %v5061, %v5221
  %v5223 = vand.u32 %v3962, 4294901760
  %5224 = vmatmul.f32.gmra.mxu0 %v5223
  %v5225 = vpop.f32.mrf.mxu0
  %v5226 = vadd.f32 %v5065, %v5225
  %v5227 = vand.u32 %v3963, 4294901760
  %5228 = vmatmul.f32.gmra.mxu0 %v5227
  %v5229 = vpop.f32.mrf.mxu0
  %v5230 = vadd.f32 %v5069, %v5229
  %v5231 = vand.u32 %v3964, 4294901760
  %5232 = vmatmul.f32.gmra.mxu0 %v5231
  %v5233 = vpop.f32.mrf.mxu0
  %v5234 = vadd.f32 %v5073, %v5233
  %v5235 = vand.u32 %v3965, 4294901760
  %5236 = vmatmul.f32.gmra.mxu0 %v5235
  %v5237 = vpop.f32.mrf.mxu0
  %v5238 = vadd.f32 %v5077, %v5237
  %v5239 = vand.u32 %v3966, 4294901760
  %5240 = vmatmul.f32.gmra.mxu0 %v5239
  %v5241 = vpop.f32.mrf.mxu0
  %v5242 = vadd.f32 %v5081, %v5241
  %v5243 = vand.u32 %v3967, 4294901760
  %5244 = vmatmul.f32.gmra.mxu0 %v5243
  %v5245 = vpop.f32.mrf.mxu0
  %v5246 = vadd.f32 %v5085, %v5245
  %v5247 = vand.u32 %v3968, 4294901760
  %5248 = vmatmul.f32.gmra.mxu0 %v5247
  %v5249 = vpop.f32.mrf.mxu0
  %v5250 = vadd.f32 %v5089, %v5249
  %v5251 = vand.u32 %v3969, 4294901760
  %5252 = vmatmul.f32.gmra.mxu0 %v5251
  %v5253 = vpop.f32.mrf.mxu0
  %v5254 = vadd.f32 %v5093, %v5253
  %v5255 = vand.u32 %v3970, 4294901760
  %5256 = vmatmul.f32.gmra.mxu0 %v5255
  %v5257 = vpop.f32.mrf.mxu0
  %v5258 = vadd.f32 %v5097, %v5257
  %v5259 = vand.u32 %v3971, 4294901760
  %5260 = vmatmul.f32.gmra.mxu0 %v5259
  %v5261 = vpop.f32.mrf.mxu0
  %v5262 = vadd.f32 %v5101, %v5261
  %v5263 = vand.u32 %v3972, 4294901760
  %5264 = vmatmul.f32.gmra.mxu0 %v5263
  %v5265 = vpop.f32.mrf.mxu0
  %v5266 = vadd.f32 %v5105, %v5265
  %v5267 = vand.u32 %v3973, 4294901760
  %5268 = vmatmul.f32.gmra.mxu0 %v5267
  %v5269 = vpop.f32.mrf.mxu0
  %v5270 = vadd.f32 %v5109, %v5269
  %v5271 = vand.u32 %v3974, 4294901760
  %5272 = vmatmul.f32.gmra.mxu0 %v5271
  %v5273 = vpop.f32.mrf.mxu0
  %v5274 = vadd.f32 %v5113, %v5273
  %v5275 = vand.u32 %v3975, 4294901760
  %5276 = vmatmul.f32.gmra.mxu0 %v5275
  %v5277 = vpop.f32.mrf.mxu0
  %v5278 = vadd.f32 %v5117, %v5277
  %v5279 = vand.u32 %v3976, 4294901760
  %5280 = vmatmul.f32.gmra.mxu0 %v5279
  %v5281 = vpop.f32.mrf.mxu0
  %v5282 = vadd.f32 %v5121, %v5281
  %v5283 = vand.u32 %v3977, 4294901760
  %5284 = vmatmul.f32.gmra.mxu0 %v5283
  %v5285 = vpop.f32.mrf.mxu0
  %v5286 = vadd.f32 %v5125, %v5285
  %v5287 = vand.u32 %v3978, 4294901760
  %5288 = vmatmul.f32.gmra.mxu0 %v5287
  %v5289 = vpop.f32.mrf.mxu0
  %v5290 = vadd.f32 %v5129, %v5289
  %v5291 = vand.u32 %v3979, 4294901760
  %5292 = vmatmul.f32.gmra.mxu0 %v5291
  %v5293 = vpop.f32.mrf.mxu0
  %v5294 = vadd.f32 %v5133, %v5293
  %v5295 = vand.u32 %v3980, 4294901760
  %5296 = vmatmul.f32.gmra.mxu0 %v5295
  %v5297 = vpop.f32.mrf.mxu0
  %v5298 = vadd.f32 %v5137, %v5297
  %v5299 = vand.u32 %v3981, 4294901760
  %5300 = vmatmul.f32.gmra.mxu0 %v5299
  %v5301 = vpop.f32.mrf.mxu0
  %v5302 = vadd.f32 %v5141, %v5301
  %5303 = vdwg.mxu0
  %5304 = vst [vmem:[%s7] sm:$0xff] %v5178
  %5305 = vst [vmem:[%s7 + $0x8] sm:$0xff] %v5182
  %5306 = vst [vmem:[%s7 + $0x10] sm:$0xff] %v5186
  %5307 = vst [vmem:[%s7 + $0x18] sm:$0xff] %v5190
  %5308 = vst [vmem:[%s7 + $0x20] sm:$0xff] %v5194
  %5309 = vst [vmem:[%s7 + $0x28] sm:$0xff] %v5198
  %5310 = vst [vmem:[%s7 + $0x30] sm:$0xff] %v5202
  %5311 = vst [vmem:[%s7 + $0x38] sm:$0xff] %v5206
  %5312 = vst [vmem:[%s7 + $0x40] sm:$0xff] %v5210
  %5313 = vst [vmem:[%s7 + $0x48] sm:$0xff] %v5214
  %5314 = vst [vmem:[%s7 + $0x50] sm:$0xff] %v5218
  %5315 = vst [vmem:[%s7 + $0x58] sm:$0xff] %v5222
  %5316 = vst [vmem:[%s7 + $0x60] sm:$0xff] %v5226
  %5317 = vst [vmem:[%s7 + $0x68] sm:$0xff] %v5230
  %5318 = vst [vmem:[%s7 + $0x70] sm:$0xff] %v5234
  %5319 = vst [vmem:[%s7 + $0x78] sm:$0xff] %v5238
  %5320 = vst [vmem:[%s7 + $0x80] sm:$0xff] %v5242
  %5321 = vst [vmem:[%s7 + $0x88] sm:$0xff] %v5246
  %5322 = vst [vmem:[%s7 + $0x90] sm:$0xff] %v5250
  %5323 = vst [vmem:[%s7 + $0x98] sm:$0xff] %v5254
  %5324 = vst [vmem:[%s7 + $0xa0] sm:$0xff] %v5258
  %5325 = vst [vmem:[%s7 + $0xa8] sm:$0xff] %v5262
  %5326 = vst [vmem:[%s7 + $0xb0] sm:$0xff] %v5266
  %5327 = vst [vmem:[%s7 + $0xb8] sm:$0xff] %v5270
  %5328 = vst [vmem:[%s7 + $0xc0] sm:$0xff] %v5274
  %5329 = vst [vmem:[%s7 + $0xc8] sm:$0xff] %v5278
  %5330 = vst [vmem:[%s7 + $0xd0] sm:$0xff] %v5282
  %5331 = vst [vmem:[%s7 + $0xd8] sm:$0xff] %v5286
  %5332 = vst [vmem:[%s7 + $0xe0] sm:$0xff] %v5290
  %5333 = vst [vmem:[%s7 + $0xe8] sm:$0xff] %v5294
  %5334 = vst [vmem:[%s7 + $0xf0] sm:$0xff] %v5298
  %5335 = vst [vmem:[%s7 + $0xf8] sm:$0xff] %v5302
  // Predicated region
  $region30: #{_forward_impl.1} parent=0 // pred_check
    _
  $region31: #{_forward_impl.1} parent=0 // pred_check_branch
    %5337 = sbr.rel (0) target = $region33
  $region32: #{_forward_impl.1} parent=0 // pred_region
    _
  $region33: #{_forward_impl.1} parent=0 // pred_fallthru
    _
  // Predicated region
  $region34: #{_forward_impl.1} parent=0 // pred_check
    _
  $region35: #{_forward_impl.1} parent=0 // pred_check_branch
    %5339 = sbr.rel (0) target = $region37
  $region36: #{_forward_impl.1} parent=0 // pred_region
    _
  $region37: #{_forward_impl.1} parent=0 // pred_fallthru
    _

</llo_original>
